<compile_context>
chip_gen: v6e
topology: v6e:2x2x1
jax: 0.10.0
libtpu: 0.0.40
codegen_flags: <defaults>
</compile_context>

<pallas_src>
import functools

import jax
import jax.numpy as jnp
from jax.experimental import pallas as pl
from jax.experimental.pallas import tpu as pltpu


LANE = 128                       # channel padding target (TPU lane width)
PADL = 8                         # left halo width (keeps interior stores sublane-aligned)
C_FEAT, C_PAF, C_HM = 32, 8, 8   # reduced synthetic Body() widths
C_BR = C_PAF + C_HM              # fused branch width (paf || heatmap)


# -----------------------------------------------------------------------------
# Fused Body() kernel (one batch element per grid step)
# -----------------------------------------------------------------------------
def _conv3x3(pad_ref, h, w, w_ref, b_ref, relu):
    """3x3 'same' conv reading a zero-haloed VMEM scratch.

    pad_ref: (h + 2, w + 2*PADL, LANE) f32, interior at rows [1, h+1) and
             columns [PADL, PADL + w); the 1-pixel halo around it is zero.
    Nine shifted (h*w, LANE) @ (LANE, LANE) bf16 MXU matmuls, f32 accumulate,
    f32 bias / ReLU epilogue.  Returns an (h, w, LANE) f32 value.
    """
    acc = jnp.zeros((h * w, LANE), jnp.float32)
    for dy in range(3):
        for dx in range(3):
            c0 = PADL - 1 + dx
            patch = pad_ref[dy:dy + h, c0:c0 + w, :]
            patch = patch.reshape(h * w, LANE).astype(jnp.bfloat16)
            acc = acc + jnp.dot(patch, w_ref[dy, dx, :, :],
                                preferred_element_type=jnp.float32)
    acc = acc + b_ref[...]                       # (1, LANE) broadcasts over rows
    if relu:
        acc = jnp.maximum(acc, 0.0)
    return acc.reshape(h, w, LANE)


def _body_kernel(x_ref, w1_ref, b1_ref, w2_ref, b2_ref,
                 wb1_ref, bb1_ref, wb2_ref, bb2_ref,
                 o_ref, pad1, rowbuf, pad2, *, H, W):
    """Whole Body() forward for one image; all intermediates stay in VMEM."""
    Hp, Wp = H // 2, W // 2

    # Zero the padded scratch; layers only write the interior, so the 1-pixel
    # halo stays zero ('same' padding without any HBM jnp.pad round trip).
    pad1[...] = jnp.zeros_like(pad1)
    pad2[...] = jnp.zeros_like(pad2)

    # Network input (lane-packed BGR; the BGR->RGB flip is folded into conv1's
    # Cin ordering) -> interior of the stage-1 padded activation buffer.
    pad1[1:H + 1, PADL:PADL + W, :] = x_ref[0]

    # Backbone: conv1 + ReLU, conv2 + ReLU.
    feat1 = _conv3x3(pad1, H, W, w1_ref, b1_ref, relu=True)
    pad1[1:H + 1, PADL:PADL + W, :] = feat1
    feat2 = _conv3x3(pad1, H, W, w2_ref, b2_ref, relu=True)

    # 2x2 / stride-2 max-pool fused into conv2's epilogue: row pairs via a
    # leading-dim-only reshape, column pairs via sublane-strided ref loads.
    rowbuf[...] = feat2.reshape(Hp, 2, W, LANE).max(axis=1)
    pooled = jnp.maximum(rowbuf[:, pl.ds(0, Wp, 2), :],
                         rowbuf[:, pl.ds(1, Wp, 2), :])
    pad2[1:Hp + 1, PADL:PADL + Wp, :] = pooled     # feat -> lanes [0, C_FEAT)

    # Stage-1 branches fused into ONE conv: paf1 -> lanes [C_FEAT, C_FEAT+C_PAF),
    # hm1 -> lanes [C_FEAT+C_PAF, C_FEAT+C_BR).  `cat = [feat, paf1, hm1]` is a
    # lane-disjoint add (no jnp.concatenate, no extra HBM traffic).
    br1 = _conv3x3(pad2, Hp, Wp, wb1_ref, bb1_ref, relu=False)
    pad2[1:Hp + 1, PADL:PADL + Wp, :] = pad2[1:Hp + 1, PADL:PADL + Wp, :] + br1

    # Stage-2 branches fused into ONE conv: paf2 -> lanes [0, C_PAF),
    # hm2 -> lanes [C_PAF, C_BR).  Lane-dense (128-wide) output store.
    br2 = _conv3x3(pad2, Hp, Wp, wb2_ref, bb2_ref, relu=False)
    o_ref[0] = br2


# -----------------------------------------------------------------------------
# pallas_call wrapper
# -----------------------------------------------------------------------------
def body_forward(x_lane_packed, packed_params):
    """Fused Body() CNN.  x: (B, H, W, LANE) f32 -> (B, H/2, W/2, LANE) f32."""
    B, H, W, _ = x_lane_packed.shape
    Hp, Wp = H // 2, W // 2
    w1, b1, w2, b2, wb1, bb1, wb2, bb2 = packed_params

    w_spec = pl.BlockSpec((3, 3, LANE, LANE), lambda b: (0, 0, 0, 0))
    b_spec = pl.BlockSpec((1, LANE), lambda b: (0, 0))
    kernel = functools.partial(_body_kernel, H=H, W=W)

    return pl.pallas_call(
        kernel,
        out_shape=jax.ShapeDtypeStruct((B, Hp, Wp, LANE), jnp.float32),
        grid=(B,),
        in_specs=[
            pl.BlockSpec((1, H, W, LANE), lambda b: (b, 0, 0, 0)),
            w_spec, b_spec, w_spec, b_spec, w_spec, b_spec, w_spec, b_spec,
        ],
        out_specs=pl.BlockSpec((1, Hp, Wp, LANE), lambda b: (b, 0, 0, 0)),
        scratch_shapes=[
            pltpu.VMEM((H + 2, W + 2 * PADL, LANE), jnp.float32),    # stage-1 padded acts
            pltpu.VMEM((Hp, W, LANE), jnp.float32),                  # row-pooled buffer
            pltpu.VMEM((Hp + 2, Wp + 2 * PADL, LANE), jnp.float32),  # stage-2 padded acts
        ],
        compiler_params=pltpu.CompilerParams(
            dimension_semantics=("parallel",)),      # batch axis -> both TCs on v7x
    )(x_lane_packed, w1, b1, w2, b2, wb1, bb1, wb2, bb2)


# -----------------------------------------------------------------------------
# Synthetic, deterministic parameters for a reduced Body() network.
# (Real openpose: VGG-19 backbone, 128 feature / 38 PAF / 19 heatmap channels,
#  6 refinement stages; this keeps the structure at reduced width — no
#  checkpoint is read.)
# -----------------------------------------------------------------------------
def _make_conv_params(key, cin, cout):
    kw, kb = jax.random.split(key)
    w = jax.random.normal(kw, (3, 3, cin, cout), jnp.float32) / jnp.sqrt(9.0 * cin)
    b = 0.01 * jax.random.normal(kb, (1, cout), jnp.float32)
    return w, b


def make_params(key):
    keys = jax.random.split(key, 6)
    cat = C_FEAT + C_PAF + C_HM
    return {
        "conv1": _make_conv_params(keys[0], 3, C_FEAT),
        "conv2": _make_conv_params(keys[1], C_FEAT, C_FEAT),
        "paf1":  _make_conv_params(keys[2], C_FEAT, C_PAF),
        "hm1":   _make_conv_params(keys[3], C_FEAT, C_HM),
        "paf2":  _make_conv_params(keys[4], cat, C_PAF),
        "hm2":   _make_conv_params(keys[5], cat, C_HM),
    }


def _pad_wb(w, b, cout_off):
    """Zero-pad a (3,3,cin,cout) conv to (3,3,LANE,LANE) bf16 (+ f32 bias),
    placing its outputs at lane offset `cout_off`.  Padded output lanes get
    zero weight AND zero bias, so they stay exactly 0 through the network."""
    _, _, cin, cout = w.shape
    wp = jnp.zeros((3, 3, LANE, LANE), jnp.float32)
    wp = wp.at[:, :, :cin, cout_off:cout_off + cout].set(w)
    bp = jnp.zeros((1, LANE), jnp.float32)
    bp = bp.at[:, cout_off:cout_off + cout].set(b)
    return wp.astype(jnp.bfloat16), bp


def pack_params(params):
    """Fuse branch pairs along Cout and pad everything to LANE channels."""
    w1, b1 = params["conv1"]
    w1 = w1[:, :, ::-1, :]                        # fold BGR->RGB flip into Cin order
    w1p, b1p = _pad_wb(w1, b1, 0)
    w2p, b2p = _pad_wb(*params["conv2"], 0)
    # paf1 || hm1 fused along Cout, landing at lanes [C_FEAT, C_FEAT + C_BR).
    wb1 = jnp.concatenate([params["paf1"][0], params["hm1"][0]], axis=-1)
    bb1 = jnp.concatenate([params["paf1"][1], params["hm1"][1]], axis=-1)
    wb1p, bb1p = _pad_wb(wb1, bb1, C_FEAT)
    # paf2 || hm2 fused along Cout, landing at lanes [0, C_BR).
    wb2 = jnp.concatenate([params["paf2"][0], params["hm2"][0]], axis=-1)
    bb2 = jnp.concatenate([params["paf2"][1], params["hm2"][1]], axis=-1)
    wb2p, bb2p = _pad_wb(wb2, bb2, 0)
    return (w1p, b1p, w2p, b2p, wb1p, bb1p, wb2p, bb2p)


# -----------------------------------------------------------------------------
# Forward pass (mirrors OpenposeInference.forward, eval mode)
# -----------------------------------------------------------------------------
def openpose_inference_forward(x_bgr, params):
    """x_bgr: (B, H, W, 3) f32 'BGR' image batch.  Returns a canvas of same shape."""
    packed = pack_params(params)                  # weight fuse/pad; constant-folded under jit
    # One-time lane packing of the 3-channel network input (tiny); all
    # per-layer activation padding / concatenation happens inside the kernel.
    x = jnp.pad(x_bgr, ((0, 0), (0, 0), (0, 0), (0, LANE - 3)))
    stage2 = body_forward(x, packed)              # (B, H/2, W/2, LANE)

    # TODO(synk): peak NMS, PAF bipartite matching (candidate/subset) and cv2
    # draw_bodypose / cvtColor are host-side cv2/NumPy code with no Pallas
    # equivalent; render a simplified heatmap overlay onto the zero canvas.
    hm2 = stage2[..., C_PAF:C_PAF + C_HM]         # keypoint heatmaps (B, H/2, W/2, C_HM)
    vis = jnp.max(hm2, axis=-1, keepdims=True)
    vis = jnp.repeat(jnp.repeat(vis, 2, axis=1), 2, axis=2)   # back to (B, H, W, 1)
    canvas = jnp.zeros_like(x_bgr) + jnp.broadcast_to(vis, x_bgr.shape)
    return canvas[..., ::-1]                      # final cv2.COLOR_RGB2BGR channel flip


if __name__ == "__main__":
    key = jax.random.PRNGKey(0)
    k_x, k_p = jax.random.split(key)
    x = jax.random.uniform(k_x, (2, 16, 16, 3), jnp.float32)   # small (B, H, W, 3) batch
    params = make_params(k_p)

    canvas = jax.jit(openpose_inference_forward)(x, params)
    jax.block_until_ready(canvas)
    assert canvas.shape == x.shape and canvas.dtype == jnp.float32
    print("KERNEL_OK")
</pallas_src>

<mosaic_0001>
module attributes {stable_mosaic.version = 11 : i64} {
  func.func @_body_kernel(%arg0: i32, %arg1: memref<1x16x16x128xf32, #tpu.memory_space<vmem>>, %arg2: memref<3x3x128x128xbf16, #tpu.memory_space<vmem>>, %arg3: memref<1x128xf32, #tpu.memory_space<vmem>>, %arg4: memref<3x3x128x128xbf16, #tpu.memory_space<vmem>>, %arg5: memref<1x128xf32, #tpu.memory_space<vmem>>, %arg6: memref<3x3x128x128xbf16, #tpu.memory_space<vmem>>, %arg7: memref<1x128xf32, #tpu.memory_space<vmem>>, %arg8: memref<3x3x128x128xbf16, #tpu.memory_space<vmem>>, %arg9: memref<1x128xf32, #tpu.memory_space<vmem>>, %arg10: memref<1x8x8x128xf32, #tpu.memory_space<vmem>>, %arg11: memref<18x32x128xf32, #tpu.memory_space<vmem>>, %arg12: memref<8x16x128xf32, #tpu.memory_space<vmem>>, %arg13: memref<10x24x128xf32, #tpu.memory_space<vmem>>) attributes {dimension_semantics = [#tpu.dimension_semantics<parallel>], iteration_bounds = array<i64: 2>, scalar_prefetch = 0 : i64, scratch_operands = 3 : i64, tpu.core_type = #tpu.core_type<tc>, window_params = [{transform_indices = @transform_0, window_bounds = array<i64: 1, 16, 16, 128>}, {pipeline_mode = #tpu.pipeline_mode<synchronous>, transform_indices = @transform_1, window_bounds = array<i64: 3, 3, 128, 128>}, {pipeline_mode = #tpu.pipeline_mode<synchronous>, transform_indices = @transform_2, window_bounds = array<i64: 1, 128>}, {pipeline_mode = #tpu.pipeline_mode<synchronous>, transform_indices = @transform_3, window_bounds = array<i64: 3, 3, 128, 128>}, {pipeline_mode = #tpu.pipeline_mode<synchronous>, transform_indices = @transform_4, window_bounds = array<i64: 1, 128>}, {pipeline_mode = #tpu.pipeline_mode<synchronous>, transform_indices = @transform_5, window_bounds = array<i64: 3, 3, 128, 128>}, {pipeline_mode = #tpu.pipeline_mode<synchronous>, transform_indices = @transform_6, window_bounds = array<i64: 1, 128>}, {pipeline_mode = #tpu.pipeline_mode<synchronous>, transform_indices = @transform_7, window_bounds = array<i64: 3, 3, 128, 128>}, {pipeline_mode = #tpu.pipeline_mode<synchronous>, transform_indices = @transform_8, window_bounds = array<i64: 1, 128>}, {transform_indices = @transform_9, window_bounds = array<i64: 1, 8, 8, 128>}]} {
    %cst = arith.constant 0.000000e+00 : f32
    %0 = vector.broadcast %cst : f32 to vector<18x32x128xf32>
    %c0 = arith.constant 0 : index
    %c0_0 = arith.constant 0 : index
    %c0_1 = arith.constant 0 : index
    %1 = vector.load %arg11[%c0, %c0_0, %c0_1] : memref<18x32x128xf32, #tpu.memory_space<vmem>>, vector<18x32x128xf32>
    tpu.vector_store %arg11[%c0, %c0_0, %c0_1], %0 {strides = array<i32>} : memref<18x32x128xf32, #tpu.memory_space<vmem>>, vector<18x32x128xf32>,
    %cst_2 = arith.constant 0.000000e+00 : f32
    %2 = vector.broadcast %cst_2 : f32 to vector<10x24x128xf32>
    %c0_3 = arith.constant 0 : index
    %c0_4 = arith.constant 0 : index
    %c0_5 = arith.constant 0 : index
    %3 = vector.load %arg13[%c0_3, %c0_4, %c0_5] : memref<10x24x128xf32, #tpu.memory_space<vmem>>, vector<10x24x128xf32>
    tpu.vector_store %arg13[%c0_3, %c0_4, %c0_5], %2 {strides = array<i32>} : memref<10x24x128xf32, #tpu.memory_space<vmem>>, vector<10x24x128xf32>,
    %c0_6 = arith.constant 0 : index
    %c0_7 = arith.constant 0 : index
    %c0_8 = arith.constant 0 : index
    %c0_9 = arith.constant 0 : index
    %4 = vector.load %arg1[%c0_6, %c0_7, %c0_8, %c0_9] : memref<1x16x16x128xf32, #tpu.memory_space<vmem>>, vector<1x16x16x128xf32>
    %5 = vector.shape_cast %4 : vector<1x16x16x128xf32> to vector<16x16x128xf32>
    %c1 = arith.constant 1 : index
    %c8 = arith.constant 8 : index
    %c0_10 = arith.constant 0 : index
    %6 = vector.load %arg11[%c1, %c8, %c0_10] : memref<18x32x128xf32, #tpu.memory_space<vmem>>, vector<16x16x128xf32>
    tpu.vector_store %arg11[%c1, %c8, %c0_10], %5 {strides = array<i32>} : memref<18x32x128xf32, #tpu.memory_space<vmem>>, vector<16x16x128xf32>,
    %cst_11 = arith.constant 0.000000e+00 : f32
    %7 = vector.broadcast %cst_11 : f32 to vector<256x128xf32>
    %c0_12 = arith.constant 0 : index
    %c7 = arith.constant 7 : index
    %c0_13 = arith.constant 0 : index
    %8 = vector.load %arg11[%c0_12, %c7, %c0_13] : memref<18x32x128xf32, #tpu.memory_space<vmem>>, vector<16x16x128xf32>
    %9 = vector.shape_cast %8 : vector<16x16x128xf32> to vector<256x128xf32>
    %10 = arith.truncf %9 : vector<256x128xf32> to vector<256x128xbf16>
    %c0_14 = arith.constant 0 : index
    %c0_15 = arith.constant 0 : index
    %c0_16 = arith.constant 0 : index
    %c0_17 = arith.constant 0 : index
    %11 = vector.load %arg2[%c0_14, %c0_15, %c0_16, %c0_17] : memref<3x3x128x128xbf16, #tpu.memory_space<vmem>>, vector<1x1x128x128xbf16>
    %12 = vector.shape_cast %11 : vector<1x1x128x128xbf16> to vector<128x128xbf16>
    %cst_18 = arith.constant dense<0.000000e+00> : vector<256x128xf32>
    %13 = tpu.matmul %10, %12, %cst_18 {dimension_numbers = #tpu.dot_dimension_numbers<[1], [0], [0], [1], [0, 0, 1, 1], [], []>} : vector<256x128xbf16>, vector<128x128xbf16>, vector<256x128xf32> -> vector<256x128xf32>
    %14 = arith.addf %7, %13 : vector<256x128xf32>
    %c0_19 = arith.constant 0 : index
    %c8_20 = arith.constant 8 : index
    %c0_21 = arith.constant 0 : index
    %15 = vector.load %arg11[%c0_19, %c8_20, %c0_21] : memref<18x32x128xf32, #tpu.memory_space<vmem>>, vector<16x16x128xf32>
    %16 = vector.shape_cast %15 : vector<16x16x128xf32> to vector<256x128xf32>
    %17 = arith.truncf %16 : vector<256x128xf32> to vector<256x128xbf16>
    %c0_22 = arith.constant 0 : index
    %c1_23 = arith.constant 1 : index
    %c0_24 = arith.constant 0 : index
    %c0_25 = arith.constant 0 : index
    %18 = vector.load %arg2[%c0_22, %c1_23, %c0_24, %c0_25] : memref<3x3x128x128xbf16, #tpu.memory_space<vmem>>, vector<1x1x128x128xbf16>
    %19 = vector.shape_cast %18 : vector<1x1x128x128xbf16> to vector<128x128xbf16>
    %cst_26 = arith.constant dense<0.000000e+00> : vector<256x128xf32>
    %20 = tpu.matmul %17, %19, %cst_26 {dimension_numbers = #tpu.dot_dimension_numbers<[1], [0], [0], [1], [0, 0, 1, 1], [], []>} : vector<256x128xbf16>, vector<128x128xbf16>, vector<256x128xf32> -> vector<256x128xf32>
    %21 = arith.addf %14, %20 : vector<256x128xf32>
    %c0_27 = arith.constant 0 : index
    %c9 = arith.constant 9 : index
    %c0_28 = arith.constant 0 : index
    %22 = vector.load %arg11[%c0_27, %c9, %c0_28] : memref<18x32x128xf32, #tpu.memory_space<vmem>>, vector<16x16x128xf32>
    %23 = vector.shape_cast %22 : vector<16x16x128xf32> to vector<256x128xf32>
    %24 = arith.truncf %23 : vector<256x128xf32> to vector<256x128xbf16>
    %c0_29 = arith.constant 0 : index
    %c2 = arith.constant 2 : index
    %c0_30 = arith.constant 0 : index
    %c0_31 = arith.constant 0 : index
    %25 = vector.load %arg2[%c0_29, %c2, %c0_30, %c0_31] : memref<3x3x128x128xbf16, #tpu.memory_space<vmem>>, vector<1x1x128x128xbf16>
    %26 = vector.shape_cast %25 : vector<1x1x128x128xbf16> to vector<128x128xbf16>
    %cst_32 = arith.constant dense<0.000000e+00> : vector<256x128xf32>
    %27 = tpu.matmul %24, %26, %cst_32 {dimension_numbers = #tpu.dot_dimension_numbers<[1], [0], [0], [1], [0, 0, 1, 1], [], []>} : vector<256x128xbf16>, vector<128x128xbf16>, vector<256x128xf32> -> vector<256x128xf32>
    %28 = arith.addf %21, %27 : vector<256x128xf32>
    %c1_33 = arith.constant 1 : index
    %c7_34 = arith.constant 7 : index
    %c0_35 = arith.constant 0 : index
    %29 = vector.load %arg11[%c1_33, %c7_34, %c0_35] : memref<18x32x128xf32, #tpu.memory_space<vmem>>, vector<16x16x128xf32>
    %30 = vector.shape_cast %29 : vector<16x16x128xf32> to vector<256x128xf32>
    %31 = arith.truncf %30 : vector<256x128xf32> to vector<256x128xbf16>
    %c1_36 = arith.constant 1 : index
    %c0_37 = arith.constant 0 : index
    %c0_38 = arith.constant 0 : index
    %c0_39 = arith.constant 0 : index
    %32 = vector.load %arg2[%c1_36, %c0_37, %c0_38, %c0_39] : memref<3x3x128x128xbf16, #tpu.memory_space<vmem>>, vector<1x1x128x128xbf16>
    %33 = vector.shape_cast %32 : vector<1x1x128x128xbf16> to vector<128x128xbf16>
    %cst_40 = arith.constant dense<0.000000e+00> : vector<256x128xf32>
    %34 = tpu.matmul %31, %33, %cst_40 {dimension_numbers = #tpu.dot_dimension_numbers<[1], [0], [0], [1], [0, 0, 1, 1], [], []>} : vector<256x128xbf16>, vector<128x128xbf16>, vector<256x128xf32> -> vector<256x128xf32>
    %35 = arith.addf %28, %34 : vector<256x128xf32>
    %c1_41 = arith.constant 1 : index
    %c8_42 = arith.constant 8 : index
    %c0_43 = arith.constant 0 : index
    %36 = vector.load %arg11[%c1_41, %c8_42, %c0_43] : memref<18x32x128xf32, #tpu.memory_space<vmem>>, vector<16x16x128xf32>
    %37 = vector.shape_cast %36 : vector<16x16x128xf32> to vector<256x128xf32>
    %38 = arith.truncf %37 : vector<256x128xf32> to vector<256x128xbf16>
    %c1_44 = arith.constant 1 : index
    %c1_45 = arith.constant 1 : index
    %c0_46 = arith.constant 0 : index
    %c0_47 = arith.constant 0 : index
    %39 = vector.load %arg2[%c1_44, %c1_45, %c0_46, %c0_47] : memref<3x3x128x128xbf16, #tpu.memory_space<vmem>>, vector<1x1x128x128xbf16>
    %40 = vector.shape_cast %39 : vector<1x1x128x128xbf16> to vector<128x128xbf16>
    %cst_48 = arith.constant dense<0.000000e+00> : vector<256x128xf32>
    %41 = tpu.matmul %38, %40, %cst_48 {dimension_numbers = #tpu.dot_dimension_numbers<[1], [0], [0], [1], [0, 0, 1, 1], [], []>} : vector<256x128xbf16>, vector<128x128xbf16>, vector<256x128xf32> -> vector<256x128xf32>
    %42 = arith.addf %35, %41 : vector<256x128xf32>
    %c1_49 = arith.constant 1 : index
    %c9_50 = arith.constant 9 : index
    %c0_51 = arith.constant 0 : index
    %43 = vector.load %arg11[%c1_49, %c9_50, %c0_51] : memref<18x32x128xf32, #tpu.memory_space<vmem>>, vector<16x16x128xf32>
    %44 = vector.shape_cast %43 : vector<16x16x128xf32> to vector<256x128xf32>
    %45 = arith.truncf %44 : vector<256x128xf32> to vector<256x128xbf16>
    %c1_52 = arith.constant 1 : index
    %c2_53 = arith.constant 2 : index
    %c0_54 = arith.constant 0 : index
    %c0_55 = arith.constant 0 : index
    %46 = vector.load %arg2[%c1_52, %c2_53, %c0_54, %c0_55] : memref<3x3x128x128xbf16, #tpu.memory_space<vmem>>, vector<1x1x128x128xbf16>
    %47 = vector.shape_cast %46 : vector<1x1x128x128xbf16> to vector<128x128xbf16>
    %cst_56 = arith.constant dense<0.000000e+00> : vector<256x128xf32>
    %48 = tpu.matmul %45, %47, %cst_56 {dimension_numbers = #tpu.dot_dimension_numbers<[1], [0], [0], [1], [0, 0, 1, 1], [], []>} : vector<256x128xbf16>, vector<128x128xbf16>, vector<256x128xf32> -> vector<256x128xf32>
    %49 = arith.addf %42, %48 : vector<256x128xf32>
    %c2_57 = arith.constant 2 : index
    %c7_58 = arith.constant 7 : index
    %c0_59 = arith.constant 0 : index
    %50 = vector.load %arg11[%c2_57, %c7_58, %c0_59] : memref<18x32x128xf32, #tpu.memory_space<vmem>>, vector<16x16x128xf32>
    %51 = vector.shape_cast %50 : vector<16x16x128xf32> to vector<256x128xf32>
    %52 = arith.truncf %51 : vector<256x128xf32> to vector<256x128xbf16>
    %c2_60 = arith.constant 2 : index
    %c0_61 = arith.constant 0 : index
    %c0_62 = arith.constant 0 : index
    %c0_63 = arith.constant 0 : index
    %53 = vector.load %arg2[%c2_60, %c0_61, %c0_62, %c0_63] : memref<3x3x128x128xbf16, #tpu.memory_space<vmem>>, vector<1x1x128x128xbf16>
    %54 = vector.shape_cast %53 : vector<1x1x128x128xbf16> to vector<128x128xbf16>
    %cst_64 = arith.constant dense<0.000000e+00> : vector<256x128xf32>
    %55 = tpu.matmul %52, %54, %cst_64 {dimension_numbers = #tpu.dot_dimension_numbers<[1], [0], [0], [1], [0, 0, 1, 1], [], []>} : vector<256x128xbf16>, vector<128x128xbf16>, vector<256x128xf32> -> vector<256x128xf32>
    %56 = arith.addf %49, %55 : vector<256x128xf32>
    %c2_65 = arith.constant 2 : index
    %c8_66 = arith.constant 8 : index
    %c0_67 = arith.constant 0 : index
    %57 = vector.load %arg11[%c2_65, %c8_66, %c0_67] : memref<18x32x128xf32, #tpu.memory_space<vmem>>, vector<16x16x128xf32>
    %58 = vector.shape_cast %57 : vector<16x16x128xf32> to vector<256x128xf32>
    %59 = arith.truncf %58 : vector<256x128xf32> to vector<256x128xbf16>
    %c2_68 = arith.constant 2 : index
    %c1_69 = arith.constant 1 : index
    %c0_70 = arith.constant 0 : index
    %c0_71 = arith.constant 0 : index
    %60 = vector.load %arg2[%c2_68, %c1_69, %c0_70, %c0_71] : memref<3x3x128x128xbf16, #tpu.memory_space<vmem>>, vector<1x1x128x128xbf16>
    %61 = vector.shape_cast %60 : vector<1x1x128x128xbf16> to vector<128x128xbf16>
    %cst_72 = arith.constant dense<0.000000e+00> : vector<256x128xf32>
    %62 = tpu.matmul %59, %61, %cst_72 {dimension_numbers = #tpu.dot_dimension_numbers<[1], [0], [0], [1], [0, 0, 1, 1], [], []>} : vector<256x128xbf16>, vector<128x128xbf16>, vector<256x128xf32> -> vector<256x128xf32>
    %63 = arith.addf %56, %62 : vector<256x128xf32>
    %c2_73 = arith.constant 2 : index
    %c9_74 = arith.constant 9 : index
    %c0_75 = arith.constant 0 : index
    %64 = vector.load %arg11[%c2_73, %c9_74, %c0_75] : memref<18x32x128xf32, #tpu.memory_space<vmem>>, vector<16x16x128xf32>
    %65 = vector.shape_cast %64 : vector<16x16x128xf32> to vector<256x128xf32>
    %66 = arith.truncf %65 : vector<256x128xf32> to vector<256x128xbf16>
    %c2_76 = arith.constant 2 : index
    %c2_77 = arith.constant 2 : index
    %c0_78 = arith.constant 0 : index
    %c0_79 = arith.constant 0 : index
    %67 = vector.load %arg2[%c2_76, %c2_77, %c0_78, %c0_79] : memref<3x3x128x128xbf16, #tpu.memory_space<vmem>>, vector<1x1x128x128xbf16>
    %68 = vector.shape_cast %67 : vector<1x1x128x128xbf16> to vector<128x128xbf16>
    %cst_80 = arith.constant dense<0.000000e+00> : vector<256x128xf32>
    %69 = tpu.matmul %66, %68, %cst_80 {dimension_numbers = #tpu.dot_dimension_numbers<[1], [0], [0], [1], [0, 0, 1, 1], [], []>} : vector<256x128xbf16>, vector<128x128xbf16>, vector<256x128xf32> -> vector<256x128xf32>
    %70 = arith.addf %63, %69 : vector<256x128xf32>
    %c0_81 = arith.constant 0 : index
    %c0_82 = arith.constant 0 : index
    %71 = vector.load %arg3[%c0_81, %c0_82] : memref<1x128xf32, #tpu.memory_space<vmem>>, vector<1x128xf32>
    %72 = vector.broadcast %71 : vector<1x128xf32> to vector<256x128xf32>
    %73 = arith.addf %70, %72 : vector<256x128xf32>
    %cst_83 = arith.constant 0.000000e+00 : f32
    %74 = vector.broadcast %cst_83 : f32 to vector<256x128xf32>
    %75 = arith.maximumf %73, %74 : vector<256x128xf32>
    %76 = vector.shape_cast %75 : vector<256x128xf32> to vector<16x16x128xf32>
    %c1_84 = arith.constant 1 : index
    %c8_85 = arith.constant 8 : index
    %c0_86 = arith.constant 0 : index
    %77 = vector.load %arg11[%c1_84, %c8_85, %c0_86] : memref<18x32x128xf32, #tpu.memory_space<vmem>>, vector<16x16x128xf32>
    tpu.vector_store %arg11[%c1_84, %c8_85, %c0_86], %76 {strides = array<i32>} : memref<18x32x128xf32, #tpu.memory_space<vmem>>, vector<16x16x128xf32>,
    %cst_87 = arith.constant 0.000000e+00 : f32
    %78 = vector.broadcast %cst_87 : f32 to vector<256x128xf32>
    %c0_88 = arith.constant 0 : index
    %c7_89 = arith.constant 7 : index
    %c0_90 = arith.constant 0 : index
    %79 = vector.load %arg11[%c0_88, %c7_89, %c0_90] : memref<18x32x128xf32, #tpu.memory_space<vmem>>, vector<16x16x128xf32>
    %80 = vector.shape_cast %79 : vector<16x16x128xf32> to vector<256x128xf32>
    %81 = arith.truncf %80 : vector<256x128xf32> to vector<256x128xbf16>
    %c0_91 = arith.constant 0 : index
    %c0_92 = arith.constant 0 : index
    %c0_93 = arith.constant 0 : index
    %c0_94 = arith.constant 0 : index
    %82 = vector.load %arg4[%c0_91, %c0_92, %c0_93, %c0_94] : memref<3x3x128x128xbf16, #tpu.memory_space<vmem>>, vector<1x1x128x128xbf16>
    %83 = vector.shape_cast %82 : vector<1x1x128x128xbf16> to vector<128x128xbf16>
    %cst_95 = arith.constant dense<0.000000e+00> : vector<256x128xf32>
    %84 = tpu.matmul %81, %83, %cst_95 {dimension_numbers = #tpu.dot_dimension_numbers<[1], [0], [0], [1], [0, 0, 1, 1], [], []>} : vector<256x128xbf16>, vector<128x128xbf16>, vector<256x128xf32> -> vector<256x128xf32>
    %85 = arith.addf %78, %84 : vector<256x128xf32>
    %c0_96 = arith.constant 0 : index
    %c8_97 = arith.constant 8 : index
    %c0_98 = arith.constant 0 : index
    %86 = vector.load %arg11[%c0_96, %c8_97, %c0_98] : memref<18x32x128xf32, #tpu.memory_space<vmem>>, vector<16x16x128xf32>
    %87 = vector.shape_cast %86 : vector<16x16x128xf32> to vector<256x128xf32>
    %88 = arith.truncf %87 : vector<256x128xf32> to vector<256x128xbf16>
    %c0_99 = arith.constant 0 : index
    %c1_100 = arith.constant 1 : index
    %c0_101 = arith.constant 0 : index
    %c0_102 = arith.constant 0 : index
    %89 = vector.load %arg4[%c0_99, %c1_100, %c0_101, %c0_102] : memref<3x3x128x128xbf16, #tpu.memory_space<vmem>>, vector<1x1x128x128xbf16>
    %90 = vector.shape_cast %89 : vector<1x1x128x128xbf16> to vector<128x128xbf16>
    %cst_103 = arith.constant dense<0.000000e+00> : vector<256x128xf32>
    %91 = tpu.matmul %88, %90, %cst_103 {dimension_numbers = #tpu.dot_dimension_numbers<[1], [0], [0], [1], [0, 0, 1, 1], [], []>} : vector<256x128xbf16>, vector<128x128xbf16>, vector<256x128xf32> -> vector<256x128xf32>
    %92 = arith.addf %85, %91 : vector<256x128xf32>
    %c0_104 = arith.constant 0 : index
    %c9_105 = arith.constant 9 : index
    %c0_106 = arith.constant 0 : index
    %93 = vector.load %arg11[%c0_104, %c9_105, %c0_106] : memref<18x32x128xf32, #tpu.memory_space<vmem>>, vector<16x16x128xf32>
    %94 = vector.shape_cast %93 : vector<16x16x128xf32> to vector<256x128xf32>
    %95 = arith.truncf %94 : vector<256x128xf32> to vector<256x128xbf16>
    %c0_107 = arith.constant 0 : index
    %c2_108 = arith.constant 2 : index
    %c0_109 = arith.constant 0 : index
    %c0_110 = arith.constant 0 : index
    %96 = vector.load %arg4[%c0_107, %c2_108, %c0_109, %c0_110] : memref<3x3x128x128xbf16, #tpu.memory_space<vmem>>, vector<1x1x128x128xbf16>
    %97 = vector.shape_cast %96 : vector<1x1x128x128xbf16> to vector<128x128xbf16>
    %cst_111 = arith.constant dense<0.000000e+00> : vector<256x128xf32>
    %98 = tpu.matmul %95, %97, %cst_111 {dimension_numbers = #tpu.dot_dimension_numbers<[1], [0], [0], [1], [0, 0, 1, 1], [], []>} : vector<256x128xbf16>, vector<128x128xbf16>, vector<256x128xf32> -> vector<256x128xf32>
    %99 = arith.addf %92, %98 : vector<256x128xf32>
    %c1_112 = arith.constant 1 : index
    %c7_113 = arith.constant 7 : index
    %c0_114 = arith.constant 0 : index
    %100 = vector.load %arg11[%c1_112, %c7_113, %c0_114] : memref<18x32x128xf32, #tpu.memory_space<vmem>>, vector<16x16x128xf32>
    %101 = vector.shape_cast %100 : vector<16x16x128xf32> to vector<256x128xf32>
    %102 = arith.truncf %101 : vector<256x128xf32> to vector<256x128xbf16>
    %c1_115 = arith.constant 1 : index
    %c0_116 = arith.constant 0 : index
    %c0_117 = arith.constant 0 : index
    %c0_118 = arith.constant 0 : index
    %103 = vector.load %arg4[%c1_115, %c0_116, %c0_117, %c0_118] : memref<3x3x128x128xbf16, #tpu.memory_space<vmem>>, vector<1x1x128x128xbf16>
    %104 = vector.shape_cast %103 : vector<1x1x128x128xbf16> to vector<128x128xbf16>
    %cst_119 = arith.constant dense<0.000000e+00> : vector<256x128xf32>
    %105 = tpu.matmul %102, %104, %cst_119 {dimension_numbers = #tpu.dot_dimension_numbers<[1], [0], [0], [1], [0, 0, 1, 1], [], []>} : vector<256x128xbf16>, vector<128x128xbf16>, vector<256x128xf32> -> vector<256x128xf32>
    %106 = arith.addf %99, %105 : vector<256x128xf32>
    %c1_120 = arith.constant 1 : index
    %c8_121 = arith.constant 8 : index
    %c0_122 = arith.constant 0 : index
    %107 = vector.load %arg11[%c1_120, %c8_121, %c0_122] : memref<18x32x128xf32, #tpu.memory_space<vmem>>, vector<16x16x128xf32>
    %108 = vector.shape_cast %107 : vector<16x16x128xf32> to vector<256x128xf32>
    %109 = arith.truncf %108 : vector<256x128xf32> to vector<256x128xbf16>
    %c1_123 = arith.constant 1 : index
    %c1_124 = arith.constant 1 : index
    %c0_125 = arith.constant 0 : index
    %c0_126 = arith.constant 0 : index
    %110 = vector.load %arg4[%c1_123, %c1_124, %c0_125, %c0_126] : memref<3x3x128x128xbf16, #tpu.memory_space<vmem>>, vector<1x1x128x128xbf16>
    %111 = vector.shape_cast %110 : vector<1x1x128x128xbf16> to vector<128x128xbf16>
    %cst_127 = arith.constant dense<0.000000e+00> : vector<256x128xf32>
    %112 = tpu.matmul %109, %111, %cst_127 {dimension_numbers = #tpu.dot_dimension_numbers<[1], [0], [0], [1], [0, 0, 1, 1], [], []>} : vector<256x128xbf16>, vector<128x128xbf16>, vector<256x128xf32> -> vector<256x128xf32>
    %113 = arith.addf %106, %112 : vector<256x128xf32>
    %c1_128 = arith.constant 1 : index
    %c9_129 = arith.constant 9 : index
    %c0_130 = arith.constant 0 : index
    %114 = vector.load %arg11[%c1_128, %c9_129, %c0_130] : memref<18x32x128xf32, #tpu.memory_space<vmem>>, vector<16x16x128xf32>
    %115 = vector.shape_cast %114 : vector<16x16x128xf32> to vector<256x128xf32>
    %116 = arith.truncf %115 : vector<256x128xf32> to vector<256x128xbf16>
    %c1_131 = arith.constant 1 : index
    %c2_132 = arith.constant 2 : index
    %c0_133 = arith.constant 0 : index
    %c0_134 = arith.constant 0 : index
    %117 = vector.load %arg4[%c1_131, %c2_132, %c0_133, %c0_134] : memref<3x3x128x128xbf16, #tpu.memory_space<vmem>>, vector<1x1x128x128xbf16>
    %118 = vector.shape_cast %117 : vector<1x1x128x128xbf16> to vector<128x128xbf16>
    %cst_135 = arith.constant dense<0.000000e+00> : vector<256x128xf32>
    %119 = tpu.matmul %116, %118, %cst_135 {dimension_numbers = #tpu.dot_dimension_numbers<[1], [0], [0], [1], [0, 0, 1, 1], [], []>} : vector<256x128xbf16>, vector<128x128xbf16>, vector<256x128xf32> -> vector<256x128xf32>
    %120 = arith.addf %113, %119 : vector<256x128xf32>
    %c2_136 = arith.constant 2 : index
    %c7_137 = arith.constant 7 : index
    %c0_138 = arith.constant 0 : index
    %121 = vector.load %arg11[%c2_136, %c7_137, %c0_138] : memref<18x32x128xf32, #tpu.memory_space<vmem>>, vector<16x16x128xf32>
    %122 = vector.shape_cast %121 : vector<16x16x128xf32> to vector<256x128xf32>
    %123 = arith.truncf %122 : vector<256x128xf32> to vector<256x128xbf16>
    %c2_139 = arith.constant 2 : index
    %c0_140 = arith.constant 0 : index
    %c0_141 = arith.constant 0 : index
    %c0_142 = arith.constant 0 : index
    %124 = vector.load %arg4[%c2_139, %c0_140, %c0_141, %c0_142] : memref<3x3x128x128xbf16, #tpu.memory_space<vmem>>, vector<1x1x128x128xbf16>
    %125 = vector.shape_cast %124 : vector<1x1x128x128xbf16> to vector<128x128xbf16>
    %cst_143 = arith.constant dense<0.000000e+00> : vector<256x128xf32>
    %126 = tpu.matmul %123, %125, %cst_143 {dimension_numbers = #tpu.dot_dimension_numbers<[1], [0], [0], [1], [0, 0, 1, 1], [], []>} : vector<256x128xbf16>, vector<128x128xbf16>, vector<256x128xf32> -> vector<256x128xf32>
    %127 = arith.addf %120, %126 : vector<256x128xf32>
    %c2_144 = arith.constant 2 : index
    %c8_145 = arith.constant 8 : index
    %c0_146 = arith.constant 0 : index
    %128 = vector.load %arg11[%c2_144, %c8_145, %c0_146] : memref<18x32x128xf32, #tpu.memory_space<vmem>>, vector<16x16x128xf32>
    %129 = vector.shape_cast %128 : vector<16x16x128xf32> to vector<256x128xf32>
    %130 = arith.truncf %129 : vector<256x128xf32> to vector<256x128xbf16>
    %c2_147 = arith.constant 2 : index
    %c1_148 = arith.constant 1 : index
    %c0_149 = arith.constant 0 : index
    %c0_150 = arith.constant 0 : index
    %131 = vector.load %arg4[%c2_147, %c1_148, %c0_149, %c0_150] : memref<3x3x128x128xbf16, #tpu.memory_space<vmem>>, vector<1x1x128x128xbf16>
    %132 = vector.shape_cast %131 : vector<1x1x128x128xbf16> to vector<128x128xbf16>
    %cst_151 = arith.constant dense<0.000000e+00> : vector<256x128xf32>
    %133 = tpu.matmul %130, %132, %cst_151 {dimension_numbers = #tpu.dot_dimension_numbers<[1], [0], [0], [1], [0, 0, 1, 1], [], []>} : vector<256x128xbf16>, vector<128x128xbf16>, vector<256x128xf32> -> vector<256x128xf32>
    %134 = arith.addf %127, %133 : vector<256x128xf32>
    %c2_152 = arith.constant 2 : index
    %c9_153 = arith.constant 9 : index
    %c0_154 = arith.constant 0 : index
    %135 = vector.load %arg11[%c2_152, %c9_153, %c0_154] : memref<18x32x128xf32, #tpu.memory_space<vmem>>, vector<16x16x128xf32>
    %136 = vector.shape_cast %135 : vector<16x16x128xf32> to vector<256x128xf32>
    %137 = arith.truncf %136 : vector<256x128xf32> to vector<256x128xbf16>
    %c2_155 = arith.constant 2 : index
    %c2_156 = arith.constant 2 : index
    %c0_157 = arith.constant 0 : index
    %c0_158 = arith.constant 0 : index
    %138 = vector.load %arg4[%c2_155, %c2_156, %c0_157, %c0_158] : memref<3x3x128x128xbf16, #tpu.memory_space<vmem>>, vector<1x1x128x128xbf16>
    %139 = vector.shape_cast %138 : vector<1x1x128x128xbf16> to vector<128x128xbf16>
    %cst_159 = arith.constant dense<0.000000e+00> : vector<256x128xf32>
    %140 = tpu.matmul %137, %139, %cst_159 {dimension_numbers = #tpu.dot_dimension_numbers<[1], [0], [0], [1], [0, 0, 1, 1], [], []>} : vector<256x128xbf16>, vector<128x128xbf16>, vector<256x128xf32> -> vector<256x128xf32>
    %141 = arith.addf %134, %140 : vector<256x128xf32>
    %c0_160 = arith.constant 0 : index
    %c0_161 = arith.constant 0 : index
    %142 = vector.load %arg5[%c0_160, %c0_161] : memref<1x128xf32, #tpu.memory_space<vmem>>, vector<1x128xf32>
    %143 = vector.broadcast %142 : vector<1x128xf32> to vector<256x128xf32>
    %144 = arith.addf %141, %143 : vector<256x128xf32>
    %cst_162 = arith.constant 0.000000e+00 : f32
    %145 = vector.broadcast %cst_162 : f32 to vector<256x128xf32>
    %146 = arith.maximumf %144, %145 : vector<256x128xf32>
    %147 = vector.shape_cast %146 : vector<256x128xf32> to vector<16x16x128xf32>
    %148 = vector.shape_cast %147 : vector<16x16x128xf32> to vector<8x2x16x128xf32>
    %cst_163 = arith.constant dense<0xFF800000> : vector<8x16x128xf32>
    %149 = vector.multi_reduction <maximumf>, %148, %cst_163 [1] : vector<8x2x16x128xf32> to vector<8x16x128xf32>
    %c0_164 = arith.constant 0 : index
    %c0_165 = arith.constant 0 : index
    %c0_166 = arith.constant 0 : index
    %150 = vector.load %arg12[%c0_164, %c0_165, %c0_166] : memref<8x16x128xf32, #tpu.memory_space<vmem>>, vector<8x16x128xf32>
    tpu.vector_store %arg12[%c0_164, %c0_165, %c0_166], %149 {strides = array<i32>} : memref<8x16x128xf32, #tpu.memory_space<vmem>>, vector<8x16x128xf32>,
    %c0_167 = arith.constant 0 : index
    %c0_168 = arith.constant 0 : index
    %c0_169 = arith.constant 0 : index
    %151 = tpu.strided_load %arg12[%c0_167, %c0_168, %c0_169] {strides = array<i32: 1, 2, 1>} : memref<8x16x128xf32, #tpu.memory_space<vmem>>, vector<8x8x128xf32>
    %c0_170 = arith.constant 0 : index
    %c1_171 = arith.constant 1 : index
    %c0_172 = arith.constant 0 : index
    %152 = tpu.strided_load %arg12[%c0_170, %c1_171, %c0_172] {strides = array<i32: 1, 2, 1>} : memref<8x16x128xf32, #tpu.memory_space<vmem>>, vector<8x8x128xf32>
    %153 = arith.maximumf %151, %152 : vector<8x8x128xf32>
    %c1_173 = arith.constant 1 : index
    %c8_174 = arith.constant 8 : index
    %c0_175 = arith.constant 0 : index
    %154 = vector.load %arg13[%c1_173, %c8_174, %c0_175] : memref<10x24x128xf32, #tpu.memory_space<vmem>>, vector<8x8x128xf32>
    tpu.vector_store %arg13[%c1_173, %c8_174, %c0_175], %153 {strides = array<i32>} : memref<10x24x128xf32, #tpu.memory_space<vmem>>, vector<8x8x128xf32>,
    %cst_176 = arith.constant 0.000000e+00 : f32
    %155 = vector.broadcast %cst_176 : f32 to vector<64x128xf32>
    %c0_177 = arith.constant 0 : index
    %c7_178 = arith.constant 7 : index
    %c0_179 = arith.constant 0 : index
    %156 = vector.load %arg13[%c0_177, %c7_178, %c0_179] : memref<10x24x128xf32, #tpu.memory_space<vmem>>, vector<8x8x128xf32>
    %157 = vector.shape_cast %156 : vector<8x8x128xf32> to vector<64x128xf32>
    %158 = arith.truncf %157 : vector<64x128xf32> to vector<64x128xbf16>
    %c0_180 = arith.constant 0 : index
    %c0_181 = arith.constant 0 : index
    %c0_182 = arith.constant 0 : index
    %c0_183 = arith.constant 0 : index
    %159 = vector.load %arg6[%c0_180, %c0_181, %c0_182, %c0_183] : memref<3x3x128x128xbf16, #tpu.memory_space<vmem>>, vector<1x1x128x128xbf16>
    %160 = vector.shape_cast %159 : vector<1x1x128x128xbf16> to vector<128x128xbf16>
    %cst_184 = arith.constant dense<0.000000e+00> : vector<64x128xf32>
    %161 = tpu.matmul %158, %160, %cst_184 {dimension_numbers = #tpu.dot_dimension_numbers<[1], [0], [0], [1], [0, 0, 1, 1], [], []>} : vector<64x128xbf16>, vector<128x128xbf16>, vector<64x128xf32> -> vector<64x128xf32>
    %162 = arith.addf %155, %161 : vector<64x128xf32>
    %c0_185 = arith.constant 0 : index
    %c8_186 = arith.constant 8 : index
    %c0_187 = arith.constant 0 : index
    %163 = vector.load %arg13[%c0_185, %c8_186, %c0_187] : memref<10x24x128xf32, #tpu.memory_space<vmem>>, vector<8x8x128xf32>
    %164 = vector.shape_cast %163 : vector<8x8x128xf32> to vector<64x128xf32>
    %165 = arith.truncf %164 : vector<64x128xf32> to vector<64x128xbf16>
    %c0_188 = arith.constant 0 : index
    %c1_189 = arith.constant 1 : index
    %c0_190 = arith.constant 0 : index
    %c0_191 = arith.constant 0 : index
    %166 = vector.load %arg6[%c0_188, %c1_189, %c0_190, %c0_191] : memref<3x3x128x128xbf16, #tpu.memory_space<vmem>>, vector<1x1x128x128xbf16>
    %167 = vector.shape_cast %166 : vector<1x1x128x128xbf16> to vector<128x128xbf16>
    %cst_192 = arith.constant dense<0.000000e+00> : vector<64x128xf32>
    %168 = tpu.matmul %165, %167, %cst_192 {dimension_numbers = #tpu.dot_dimension_numbers<[1], [0], [0], [1], [0, 0, 1, 1], [], []>} : vector<64x128xbf16>, vector<128x128xbf16>, vector<64x128xf32> -> vector<64x128xf32>
    %169 = arith.addf %162, %168 : vector<64x128xf32>
    %c0_193 = arith.constant 0 : index
    %c9_194 = arith.constant 9 : index
    %c0_195 = arith.constant 0 : index
    %170 = vector.load %arg13[%c0_193, %c9_194, %c0_195] : memref<10x24x128xf32, #tpu.memory_space<vmem>>, vector<8x8x128xf32>
    %171 = vector.shape_cast %170 : vector<8x8x128xf32> to vector<64x128xf32>
    %172 = arith.truncf %171 : vector<64x128xf32> to vector<64x128xbf16>
    %c0_196 = arith.constant 0 : index
    %c2_197 = arith.constant 2 : index
    %c0_198 = arith.constant 0 : index
    %c0_199 = arith.constant 0 : index
    %173 = vector.load %arg6[%c0_196, %c2_197, %c0_198, %c0_199] : memref<3x3x128x128xbf16, #tpu.memory_space<vmem>>, vector<1x1x128x128xbf16>
    %174 = vector.shape_cast %173 : vector<1x1x128x128xbf16> to vector<128x128xbf16>
    %cst_200 = arith.constant dense<0.000000e+00> : vector<64x128xf32>
    %175 = tpu.matmul %172, %174, %cst_200 {dimension_numbers = #tpu.dot_dimension_numbers<[1], [0], [0], [1], [0, 0, 1, 1], [], []>} : vector<64x128xbf16>, vector<128x128xbf16>, vector<64x128xf32> -> vector<64x128xf32>
    %176 = arith.addf %169, %175 : vector<64x128xf32>
    %c1_201 = arith.constant 1 : index
    %c7_202 = arith.constant 7 : index
    %c0_203 = arith.constant 0 : index
    %177 = vector.load %arg13[%c1_201, %c7_202, %c0_203] : memref<10x24x128xf32, #tpu.memory_space<vmem>>, vector<8x8x128xf32>
    %178 = vector.shape_cast %177 : vector<8x8x128xf32> to vector<64x128xf32>
    %179 = arith.truncf %178 : vector<64x128xf32> to vector<64x128xbf16>
    %c1_204 = arith.constant 1 : index
    %c0_205 = arith.constant 0 : index
    %c0_206 = arith.constant 0 : index
    %c0_207 = arith.constant 0 : index
    %180 = vector.load %arg6[%c1_204, %c0_205, %c0_206, %c0_207] : memref<3x3x128x128xbf16, #tpu.memory_space<vmem>>, vector<1x1x128x128xbf16>
    %181 = vector.shape_cast %180 : vector<1x1x128x128xbf16> to vector<128x128xbf16>
    %cst_208 = arith.constant dense<0.000000e+00> : vector<64x128xf32>
    %182 = tpu.matmul %179, %181, %cst_208 {dimension_numbers = #tpu.dot_dimension_numbers<[1], [0], [0], [1], [0, 0, 1, 1], [], []>} : vector<64x128xbf16>, vector<128x128xbf16>, vector<64x128xf32> -> vector<64x128xf32>
    %183 = arith.addf %176, %182 : vector<64x128xf32>
    %c1_209 = arith.constant 1 : index
    %c8_210 = arith.constant 8 : index
    %c0_211 = arith.constant 0 : index
    %184 = vector.load %arg13[%c1_209, %c8_210, %c0_211] : memref<10x24x128xf32, #tpu.memory_space<vmem>>, vector<8x8x128xf32>
    %185 = vector.shape_cast %184 : vector<8x8x128xf32> to vector<64x128xf32>
    %186 = arith.truncf %185 : vector<64x128xf32> to vector<64x128xbf16>
    %c1_212 = arith.constant 1 : index
    %c1_213 = arith.constant 1 : index
    %c0_214 = arith.constant 0 : index
    %c0_215 = arith.constant 0 : index
    %187 = vector.load %arg6[%c1_212, %c1_213, %c0_214, %c0_215] : memref<3x3x128x128xbf16, #tpu.memory_space<vmem>>, vector<1x1x128x128xbf16>
    %188 = vector.shape_cast %187 : vector<1x1x128x128xbf16> to vector<128x128xbf16>
    %cst_216 = arith.constant dense<0.000000e+00> : vector<64x128xf32>
    %189 = tpu.matmul %186, %188, %cst_216 {dimension_numbers = #tpu.dot_dimension_numbers<[1], [0], [0], [1], [0, 0, 1, 1], [], []>} : vector<64x128xbf16>, vector<128x128xbf16>, vector<64x128xf32> -> vector<64x128xf32>
    %190 = arith.addf %183, %189 : vector<64x128xf32>
    %c1_217 = arith.constant 1 : index
    %c9_218 = arith.constant 9 : index
    %c0_219 = arith.constant 0 : index
    %191 = vector.load %arg13[%c1_217, %c9_218, %c0_219] : memref<10x24x128xf32, #tpu.memory_space<vmem>>, vector<8x8x128xf32>
    %192 = vector.shape_cast %191 : vector<8x8x128xf32> to vector<64x128xf32>
    %193 = arith.truncf %192 : vector<64x128xf32> to vector<64x128xbf16>
    %c1_220 = arith.constant 1 : index
    %c2_221 = arith.constant 2 : index
    %c0_222 = arith.constant 0 : index
    %c0_223 = arith.constant 0 : index
    %194 = vector.load %arg6[%c1_220, %c2_221, %c0_222, %c0_223] : memref<3x3x128x128xbf16, #tpu.memory_space<vmem>>, vector<1x1x128x128xbf16>
    %195 = vector.shape_cast %194 : vector<1x1x128x128xbf16> to vector<128x128xbf16>
    %cst_224 = arith.constant dense<0.000000e+00> : vector<64x128xf32>
    %196 = tpu.matmul %193, %195, %cst_224 {dimension_numbers = #tpu.dot_dimension_numbers<[1], [0], [0], [1], [0, 0, 1, 1], [], []>} : vector<64x128xbf16>, vector<128x128xbf16>, vector<64x128xf32> -> vector<64x128xf32>
    %197 = arith.addf %190, %196 : vector<64x128xf32>
    %c2_225 = arith.constant 2 : index
    %c7_226 = arith.constant 7 : index
    %c0_227 = arith.constant 0 : index
    %198 = vector.load %arg13[%c2_225, %c7_226, %c0_227] : memref<10x24x128xf32, #tpu.memory_space<vmem>>, vector<8x8x128xf32>
    %199 = vector.shape_cast %198 : vector<8x8x128xf32> to vector<64x128xf32>
    %200 = arith.truncf %199 : vector<64x128xf32> to vector<64x128xbf16>
    %c2_228 = arith.constant 2 : index
    %c0_229 = arith.constant 0 : index
    %c0_230 = arith.constant 0 : index
    %c0_231 = arith.constant 0 : index
    %201 = vector.load %arg6[%c2_228, %c0_229, %c0_230, %c0_231] : memref<3x3x128x128xbf16, #tpu.memory_space<vmem>>, vector<1x1x128x128xbf16>
    %202 = vector.shape_cast %201 : vector<1x1x128x128xbf16> to vector<128x128xbf16>
    %cst_232 = arith.constant dense<0.000000e+00> : vector<64x128xf32>
    %203 = tpu.matmul %200, %202, %cst_232 {dimension_numbers = #tpu.dot_dimension_numbers<[1], [0], [0], [1], [0, 0, 1, 1], [], []>} : vector<64x128xbf16>, vector<128x128xbf16>, vector<64x128xf32> -> vector<64x128xf32>
    %204 = arith.addf %197, %203 : vector<64x128xf32>
    %c2_233 = arith.constant 2 : index
    %c8_234 = arith.constant 8 : index
    %c0_235 = arith.constant 0 : index
    %205 = vector.load %arg13[%c2_233, %c8_234, %c0_235] : memref<10x24x128xf32, #tpu.memory_space<vmem>>, vector<8x8x128xf32>
    %206 = vector.shape_cast %205 : vector<8x8x128xf32> to vector<64x128xf32>
    %207 = arith.truncf %206 : vector<64x128xf32> to vector<64x128xbf16>
    %c2_236 = arith.constant 2 : index
    %c1_237 = arith.constant 1 : index
    %c0_238 = arith.constant 0 : index
    %c0_239 = arith.constant 0 : index
    %208 = vector.load %arg6[%c2_236, %c1_237, %c0_238, %c0_239] : memref<3x3x128x128xbf16, #tpu.memory_space<vmem>>, vector<1x1x128x128xbf16>
    %209 = vector.shape_cast %208 : vector<1x1x128x128xbf16> to vector<128x128xbf16>
    %cst_240 = arith.constant dense<0.000000e+00> : vector<64x128xf32>
    %210 = tpu.matmul %207, %209, %cst_240 {dimension_numbers = #tpu.dot_dimension_numbers<[1], [0], [0], [1], [0, 0, 1, 1], [], []>} : vector<64x128xbf16>, vector<128x128xbf16>, vector<64x128xf32> -> vector<64x128xf32>
    %211 = arith.addf %204, %210 : vector<64x128xf32>
    %c2_241 = arith.constant 2 : index
    %c9_242 = arith.constant 9 : index
    %c0_243 = arith.constant 0 : index
    %212 = vector.load %arg13[%c2_241, %c9_242, %c0_243] : memref<10x24x128xf32, #tpu.memory_space<vmem>>, vector<8x8x128xf32>
    %213 = vector.shape_cast %212 : vector<8x8x128xf32> to vector<64x128xf32>
    %214 = arith.truncf %213 : vector<64x128xf32> to vector<64x128xbf16>
    %c2_244 = arith.constant 2 : index
    %c2_245 = arith.constant 2 : index
    %c0_246 = arith.constant 0 : index
    %c0_247 = arith.constant 0 : index
    %215 = vector.load %arg6[%c2_244, %c2_245, %c0_246, %c0_247] : memref<3x3x128x128xbf16, #tpu.memory_space<vmem>>, vector<1x1x128x128xbf16>
    %216 = vector.shape_cast %215 : vector<1x1x128x128xbf16> to vector<128x128xbf16>
    %cst_248 = arith.constant dense<0.000000e+00> : vector<64x128xf32>
    %217 = tpu.matmul %214, %216, %cst_248 {dimension_numbers = #tpu.dot_dimension_numbers<[1], [0], [0], [1], [0, 0, 1, 1], [], []>} : vector<64x128xbf16>, vector<128x128xbf16>, vector<64x128xf32> -> vector<64x128xf32>
    %218 = arith.addf %211, %217 : vector<64x128xf32>
    %c0_249 = arith.constant 0 : index
    %c0_250 = arith.constant 0 : index
    %219 = vector.load %arg7[%c0_249, %c0_250] : memref<1x128xf32, #tpu.memory_space<vmem>>, vector<1x128xf32>
    %220 = vector.broadcast %219 : vector<1x128xf32> to vector<64x128xf32>
    %221 = arith.addf %218, %220 : vector<64x128xf32>
    %222 = vector.shape_cast %221 : vector<64x128xf32> to vector<8x8x128xf32>
    %c1_251 = arith.constant 1 : index
    %c8_252 = arith.constant 8 : index
    %c0_253 = arith.constant 0 : index
    %223 = vector.load %arg13[%c1_251, %c8_252, %c0_253] : memref<10x24x128xf32, #tpu.memory_space<vmem>>, vector<8x8x128xf32>
    %224 = arith.addf %223, %222 : vector<8x8x128xf32>
    %c1_254 = arith.constant 1 : index
    %c8_255 = arith.constant 8 : index
    %c0_256 = arith.constant 0 : index
    %225 = vector.load %arg13[%c1_254, %c8_255, %c0_256] : memref<10x24x128xf32, #tpu.memory_space<vmem>>, vector<8x8x128xf32>
    tpu.vector_store %arg13[%c1_254, %c8_255, %c0_256], %224 {strides = array<i32>} : memref<10x24x128xf32, #tpu.memory_space<vmem>>, vector<8x8x128xf32>,
    %cst_257 = arith.constant 0.000000e+00 : f32
    %226 = vector.broadcast %cst_257 : f32 to vector<64x128xf32>
    %c0_258 = arith.constant 0 : index
    %c7_259 = arith.constant 7 : index
    %c0_260 = arith.constant 0 : index
    %227 = vector.load %arg13[%c0_258, %c7_259, %c0_260] : memref<10x24x128xf32, #tpu.memory_space<vmem>>, vector<8x8x128xf32>
    %228 = vector.shape_cast %227 : vector<8x8x128xf32> to vector<64x128xf32>
    %229 = arith.truncf %228 : vector<64x128xf32> to vector<64x128xbf16>
    %c0_261 = arith.constant 0 : index
    %c0_262 = arith.constant 0 : index
    %c0_263 = arith.constant 0 : index
    %c0_264 = arith.constant 0 : index
    %230 = vector.load %arg8[%c0_261, %c0_262, %c0_263, %c0_264] : memref<3x3x128x128xbf16, #tpu.memory_space<vmem>>, vector<1x1x128x128xbf16>
    %231 = vector.shape_cast %230 : vector<1x1x128x128xbf16> to vector<128x128xbf16>
    %cst_265 = arith.constant dense<0.000000e+00> : vector<64x128xf32>
    %232 = tpu.matmul %229, %231, %cst_265 {dimension_numbers = #tpu.dot_dimension_numbers<[1], [0], [0], [1], [0, 0, 1, 1], [], []>} : vector<64x128xbf16>, vector<128x128xbf16>, vector<64x128xf32> -> vector<64x128xf32>
    %233 = arith.addf %226, %232 : vector<64x128xf32>
    %c0_266 = arith.constant 0 : index
    %c8_267 = arith.constant 8 : index
    %c0_268 = arith.constant 0 : index
    %234 = vector.load %arg13[%c0_266, %c8_267, %c0_268] : memref<10x24x128xf32, #tpu.memory_space<vmem>>, vector<8x8x128xf32>
    %235 = vector.shape_cast %234 : vector<8x8x128xf32> to vector<64x128xf32>
    %236 = arith.truncf %235 : vector<64x128xf32> to vector<64x128xbf16>
    %c0_269 = arith.constant 0 : index
    %c1_270 = arith.constant 1 : index
    %c0_271 = arith.constant 0 : index
    %c0_272 = arith.constant 0 : index
    %237 = vector.load %arg8[%c0_269, %c1_270, %c0_271, %c0_272] : memref<3x3x128x128xbf16, #tpu.memory_space<vmem>>, vector<1x1x128x128xbf16>
    %238 = vector.shape_cast %237 : vector<1x1x128x128xbf16> to vector<128x128xbf16>
    %cst_273 = arith.constant dense<0.000000e+00> : vector<64x128xf32>
    %239 = tpu.matmul %236, %238, %cst_273 {dimension_numbers = #tpu.dot_dimension_numbers<[1], [0], [0], [1], [0, 0, 1, 1], [], []>} : vector<64x128xbf16>, vector<128x128xbf16>, vector<64x128xf32> -> vector<64x128xf32>
    %240 = arith.addf %233, %239 : vector<64x128xf32>
    %c0_274 = arith.constant 0 : index
    %c9_275 = arith.constant 9 : index
    %c0_276 = arith.constant 0 : index
    %241 = vector.load %arg13[%c0_274, %c9_275, %c0_276] : memref<10x24x128xf32, #tpu.memory_space<vmem>>, vector<8x8x128xf32>
    %242 = vector.shape_cast %241 : vector<8x8x128xf32> to vector<64x128xf32>
    %243 = arith.truncf %242 : vector<64x128xf32> to vector<64x128xbf16>
    %c0_277 = arith.constant 0 : index
    %c2_278 = arith.constant 2 : index
    %c0_279 = arith.constant 0 : index
    %c0_280 = arith.constant 0 : index
    %244 = vector.load %arg8[%c0_277, %c2_278, %c0_279, %c0_280] : memref<3x3x128x128xbf16, #tpu.memory_space<vmem>>, vector<1x1x128x128xbf16>
    %245 = vector.shape_cast %244 : vector<1x1x128x128xbf16> to vector<128x128xbf16>
    %cst_281 = arith.constant dense<0.000000e+00> : vector<64x128xf32>
    %246 = tpu.matmul %243, %245, %cst_281 {dimension_numbers = #tpu.dot_dimension_numbers<[1], [0], [0], [1], [0, 0, 1, 1], [], []>} : vector<64x128xbf16>, vector<128x128xbf16>, vector<64x128xf32> -> vector<64x128xf32>
    %247 = arith.addf %240, %246 : vector<64x128xf32>
    %c1_282 = arith.constant 1 : index
    %c7_283 = arith.constant 7 : index
    %c0_284 = arith.constant 0 : index
    %248 = vector.load %arg13[%c1_282, %c7_283, %c0_284] : memref<10x24x128xf32, #tpu.memory_space<vmem>>, vector<8x8x128xf32>
    %249 = vector.shape_cast %248 : vector<8x8x128xf32> to vector<64x128xf32>
    %250 = arith.truncf %249 : vector<64x128xf32> to vector<64x128xbf16>
    %c1_285 = arith.constant 1 : index
    %c0_286 = arith.constant 0 : index
    %c0_287 = arith.constant 0 : index
    %c0_288 = arith.constant 0 : index
    %251 = vector.load %arg8[%c1_285, %c0_286, %c0_287, %c0_288] : memref<3x3x128x128xbf16, #tpu.memory_space<vmem>>, vector<1x1x128x128xbf16>
    %252 = vector.shape_cast %251 : vector<1x1x128x128xbf16> to vector<128x128xbf16>
    %cst_289 = arith.constant dense<0.000000e+00> : vector<64x128xf32>
    %253 = tpu.matmul %250, %252, %cst_289 {dimension_numbers = #tpu.dot_dimension_numbers<[1], [0], [0], [1], [0, 0, 1, 1], [], []>} : vector<64x128xbf16>, vector<128x128xbf16>, vector<64x128xf32> -> vector<64x128xf32>
    %254 = arith.addf %247, %253 : vector<64x128xf32>
    %c1_290 = arith.constant 1 : index
    %c8_291 = arith.constant 8 : index
    %c0_292 = arith.constant 0 : index
    %255 = vector.load %arg13[%c1_290, %c8_291, %c0_292] : memref<10x24x128xf32, #tpu.memory_space<vmem>>, vector<8x8x128xf32>
    %256 = vector.shape_cast %255 : vector<8x8x128xf32> to vector<64x128xf32>
    %257 = arith.truncf %256 : vector<64x128xf32> to vector<64x128xbf16>
    %c1_293 = arith.constant 1 : index
    %c1_294 = arith.constant 1 : index
    %c0_295 = arith.constant 0 : index
    %c0_296 = arith.constant 0 : index
    %258 = vector.load %arg8[%c1_293, %c1_294, %c0_295, %c0_296] : memref<3x3x128x128xbf16, #tpu.memory_space<vmem>>, vector<1x1x128x128xbf16>
    %259 = vector.shape_cast %258 : vector<1x1x128x128xbf16> to vector<128x128xbf16>
    %cst_297 = arith.constant dense<0.000000e+00> : vector<64x128xf32>
    %260 = tpu.matmul %257, %259, %cst_297 {dimension_numbers = #tpu.dot_dimension_numbers<[1], [0], [0], [1], [0, 0, 1, 1], [], []>} : vector<64x128xbf16>, vector<128x128xbf16>, vector<64x128xf32> -> vector<64x128xf32>
    %261 = arith.addf %254, %260 : vector<64x128xf32>
    %c1_298 = arith.constant 1 : index
    %c9_299 = arith.constant 9 : index
    %c0_300 = arith.constant 0 : index
    %262 = vector.load %arg13[%c1_298, %c9_299, %c0_300] : memref<10x24x128xf32, #tpu.memory_space<vmem>>, vector<8x8x128xf32>
    %263 = vector.shape_cast %262 : vector<8x8x128xf32> to vector<64x128xf32>
    %264 = arith.truncf %263 : vector<64x128xf32> to vector<64x128xbf16>
    %c1_301 = arith.constant 1 : index
    %c2_302 = arith.constant 2 : index
    %c0_303 = arith.constant 0 : index
    %c0_304 = arith.constant 0 : index
    %265 = vector.load %arg8[%c1_301, %c2_302, %c0_303, %c0_304] : memref<3x3x128x128xbf16, #tpu.memory_space<vmem>>, vector<1x1x128x128xbf16>
    %266 = vector.shape_cast %265 : vector<1x1x128x128xbf16> to vector<128x128xbf16>
    %cst_305 = arith.constant dense<0.000000e+00> : vector<64x128xf32>
    %267 = tpu.matmul %264, %266, %cst_305 {dimension_numbers = #tpu.dot_dimension_numbers<[1], [0], [0], [1], [0, 0, 1, 1], [], []>} : vector<64x128xbf16>, vector<128x128xbf16>, vector<64x128xf32> -> vector<64x128xf32>
    %268 = arith.addf %261, %267 : vector<64x128xf32>
    %c2_306 = arith.constant 2 : index
    %c7_307 = arith.constant 7 : index
    %c0_308 = arith.constant 0 : index
    %269 = vector.load %arg13[%c2_306, %c7_307, %c0_308] : memref<10x24x128xf32, #tpu.memory_space<vmem>>, vector<8x8x128xf32>
    %270 = vector.shape_cast %269 : vector<8x8x128xf32> to vector<64x128xf32>
    %271 = arith.truncf %270 : vector<64x128xf32> to vector<64x128xbf16>
    %c2_309 = arith.constant 2 : index
    %c0_310 = arith.constant 0 : index
    %c0_311 = arith.constant 0 : index
    %c0_312 = arith.constant 0 : index
    %272 = vector.load %arg8[%c2_309, %c0_310, %c0_311, %c0_312] : memref<3x3x128x128xbf16, #tpu.memory_space<vmem>>, vector<1x1x128x128xbf16>
    %273 = vector.shape_cast %272 : vector<1x1x128x128xbf16> to vector<128x128xbf16>
    %cst_313 = arith.constant dense<0.000000e+00> : vector<64x128xf32>
    %274 = tpu.matmul %271, %273, %cst_313 {dimension_numbers = #tpu.dot_dimension_numbers<[1], [0], [0], [1], [0, 0, 1, 1], [], []>} : vector<64x128xbf16>, vector<128x128xbf16>, vector<64x128xf32> -> vector<64x128xf32>
    %275 = arith.addf %268, %274 : vector<64x128xf32>
    %c2_314 = arith.constant 2 : index
    %c8_315 = arith.constant 8 : index
    %c0_316 = arith.constant 0 : index
    %276 = vector.load %arg13[%c2_314, %c8_315, %c0_316] : memref<10x24x128xf32, #tpu.memory_space<vmem>>, vector<8x8x128xf32>
    %277 = vector.shape_cast %276 : vector<8x8x128xf32> to vector<64x128xf32>
    %278 = arith.truncf %277 : vector<64x128xf32> to vector<64x128xbf16>
    %c2_317 = arith.constant 2 : index
    %c1_318 = arith.constant 1 : index
    %c0_319 = arith.constant 0 : index
    %c0_320 = arith.constant 0 : index
    %279 = vector.load %arg8[%c2_317, %c1_318, %c0_319, %c0_320] : memref<3x3x128x128xbf16, #tpu.memory_space<vmem>>, vector<1x1x128x128xbf16>
    %280 = vector.shape_cast %279 : vector<1x1x128x128xbf16> to vector<128x128xbf16>
    %cst_321 = arith.constant dense<0.000000e+00> : vector<64x128xf32>
    %281 = tpu.matmul %278, %280, %cst_321 {dimension_numbers = #tpu.dot_dimension_numbers<[1], [0], [0], [1], [0, 0, 1, 1], [], []>} : vector<64x128xbf16>, vector<128x128xbf16>, vector<64x128xf32> -> vector<64x128xf32>
    %282 = arith.addf %275, %281 : vector<64x128xf32>
    %c2_322 = arith.constant 2 : index
    %c9_323 = arith.constant 9 : index
    %c0_324 = arith.constant 0 : index
    %283 = vector.load %arg13[%c2_322, %c9_323, %c0_324] : memref<10x24x128xf32, #tpu.memory_space<vmem>>, vector<8x8x128xf32>
    %284 = vector.shape_cast %283 : vector<8x8x128xf32> to vector<64x128xf32>
    %285 = arith.truncf %284 : vector<64x128xf32> to vector<64x128xbf16>
    %c2_325 = arith.constant 2 : index
    %c2_326 = arith.constant 2 : index
    %c0_327 = arith.constant 0 : index
    %c0_328 = arith.constant 0 : index
    %286 = vector.load %arg8[%c2_325, %c2_326, %c0_327, %c0_328] : memref<3x3x128x128xbf16, #tpu.memory_space<vmem>>, vector<1x1x128x128xbf16>
    %287 = vector.shape_cast %286 : vector<1x1x128x128xbf16> to vector<128x128xbf16>
    %cst_329 = arith.constant dense<0.000000e+00> : vector<64x128xf32>
    %288 = tpu.matmul %285, %287, %cst_329 {dimension_numbers = #tpu.dot_dimension_numbers<[1], [0], [0], [1], [0, 0, 1, 1], [], []>} : vector<64x128xbf16>, vector<128x128xbf16>, vector<64x128xf32> -> vector<64x128xf32>
    %289 = arith.addf %282, %288 : vector<64x128xf32>
    %c0_330 = arith.constant 0 : index
    %c0_331 = arith.constant 0 : index
    %290 = vector.load %arg9[%c0_330, %c0_331] : memref<1x128xf32, #tpu.memory_space<vmem>>, vector<1x128xf32>
    %291 = vector.broadcast %290 : vector<1x128xf32> to vector<64x128xf32>
    %292 = arith.addf %289, %291 : vector<64x128xf32>
    %293 = vector.shape_cast %292 : vector<64x128xf32> to vector<8x8x128xf32>
    %c0_332 = arith.constant 0 : index
    %c0_333 = arith.constant 0 : index
    %c0_334 = arith.constant 0 : index
    %c0_335 = arith.constant 0 : index
    %294 = vector.load %arg10[%c0_332, %c0_333, %c0_334, %c0_335] : memref<1x8x8x128xf32, #tpu.memory_space<vmem>>, vector<1x8x8x128xf32>
    %295 = vector.shape_cast %294 : vector<1x8x8x128xf32> to vector<8x8x128xf32>
    %296 = vector.shape_cast %293 : vector<8x8x128xf32> to vector<1x8x8x128xf32>
    tpu.vector_store %arg10[%c0_332, %c0_333, %c0_334, %c0_335], %296 {strides = array<i32>} : memref<1x8x8x128xf32, #tpu.memory_space<vmem>>, vector<1x8x8x128xf32>,
    return
  }
  func.func @transform_0(%arg0: i32) -> (i32, i32, i32, i32) {
    %c0_i32 = arith.constant 0 : i32
    %c0_i32_0 = arith.constant 0 : i32
    %c0_i32_1 = arith.constant 0 : i32
    %c0_i32_2 = arith.constant 0 : i32
    return %arg0, %c0_i32, %c0_i32_0, %c0_i32_1 : i32, i32, i32, i32
  }
  func.func @transform_1(%arg0: i32) -> (i32, i32, i32, i32) {
    %c0_i32 = arith.constant 0 : i32
    %c0_i32_0 = arith.constant 0 : i32
    %c0_i32_1 = arith.constant 0 : i32
    %c0_i32_2 = arith.constant 0 : i32
    %c0_i32_3 = arith.constant 0 : i32
    return %c0_i32, %c0_i32_0, %c0_i32_1, %c0_i32_2 : i32, i32, i32, i32
  }
  func.func @transform_2(%arg0: i32) -> (i32, i32) {
    %c0_i32 = arith.constant 0 : i32
    %c0_i32_0 = arith.constant 0 : i32
    %c0_i32_1 = arith.constant 0 : i32
    return %c0_i32, %c0_i32_0 : i32, i32
  }
  func.func @transform_3(%arg0: i32) -> (i32, i32, i32, i32) {
    %c0_i32 = arith.constant 0 : i32
    %c0_i32_0 = arith.constant 0 : i32
    %c0_i32_1 = arith.constant 0 : i32
    %c0_i32_2 = arith.constant 0 : i32
    %c0_i32_3 = arith.constant 0 : i32
    return %c0_i32, %c0_i32_0, %c0_i32_1, %c0_i32_2 : i32, i32, i32, i32
  }
  func.func @transform_4(%arg0: i32) -> (i32, i32) {
    %c0_i32 = arith.constant 0 : i32
    %c0_i32_0 = arith.constant 0 : i32
    %c0_i32_1 = arith.constant 0 : i32
    return %c0_i32, %c0_i32_0 : i32, i32
  }
  func.func @transform_5(%arg0: i32) -> (i32, i32, i32, i32) {
    %c0_i32 = arith.constant 0 : i32
    %c0_i32_0 = arith.constant 0 : i32
    %c0_i32_1 = arith.constant 0 : i32
    %c0_i32_2 = arith.constant 0 : i32
    %c0_i32_3 = arith.constant 0 : i32
    return %c0_i32, %c0_i32_0, %c0_i32_1, %c0_i32_2 : i32, i32, i32, i32
  }
  func.func @transform_6(%arg0: i32) -> (i32, i32) {
    %c0_i32 = arith.constant 0 : i32
    %c0_i32_0 = arith.constant 0 : i32
    %c0_i32_1 = arith.constant 0 : i32
    return %c0_i32, %c0_i32_0 : i32, i32
  }
  func.func @transform_7(%arg0: i32) -> (i32, i32, i32, i32) {
    %c0_i32 = arith.constant 0 : i32
    %c0_i32_0 = arith.constant 0 : i32
    %c0_i32_1 = arith.constant 0 : i32
    %c0_i32_2 = arith.constant 0 : i32
    %c0_i32_3 = arith.constant 0 : i32
    return %c0_i32, %c0_i32_0, %c0_i32_1, %c0_i32_2 : i32, i32, i32, i32
  }
  func.func @transform_8(%arg0: i32) -> (i32, i32) {
    %c0_i32 = arith.constant 0 : i32
    %c0_i32_0 = arith.constant 0 : i32
    %c0_i32_1 = arith.constant 0 : i32
    return %c0_i32, %c0_i32_0 : i32, i32
  }
  func.func @transform_9(%arg0: i32) -> (i32, i32, i32, i32) {
    %c0_i32 = arith.constant 0 : i32
    %c0_i32_0 = arith.constant 0 : i32
    %c0_i32_1 = arith.constant 0 : i32
    %c0_i32_2 = arith.constant 0 : i32
    return %arg0, %c0_i32, %c0_i32_0, %c0_i32_1 : i32, i32, i32, i32
  }
}

</mosaic_0001>

<llo_original>
// kernel: openpose_inference_forward.1
$region0: #{openpose_inference_forward.1}
  #allocation0 [shape = 'u32[]', space=smem, size = 0x4, offset = 0x4, fixed_abs, tag = 'smem constant byte address 0x4 - core index']
  #allocation1 [shape = 'u32[144,128]{1,0:T(1,128)}', space=vmem, size = 0x12000, scoped, tag = 'internal scratch']
  #allocation2 [shape = 'f32[18,32,128]{2,1,0:T(8,128)}', space=vmem, size = 0x48000, scoped, tag = 'scratch operand']
  #allocation3 [shape = 'f32[8,16,128]{2,1,0:T(8,128)}', space=vmem, size = 0x10000, scoped, tag = 'scratch operand']
  #allocation4 [shape = 'f32[10,24,128]{2,1,0:T(8,128)}', space=vmem, size = 0x1e000, scoped, tag = 'scratch operand']
  %s0 = inlined_call_operand.vmem [shape: f32[2,16,16,128], index: 0, kind: input, shape index: {}]
  %s1 = inlined_call_operand.vmem [shape: bf16[3,3,128,128], index: 1, kind: input, shape index: {}]
  %s2 = inlined_call_operand.vmem [shape: f32[1,128], index: 2, kind: input, shape index: {}]
  %s3 = inlined_call_operand.vmem [shape: bf16[3,3,128,128], index: 3, kind: input, shape index: {}]
  %s4 = inlined_call_operand.vmem [shape: f32[1,128], index: 4, kind: input, shape index: {}]
  %s5 = inlined_call_operand.vmem [shape: bf16[3,3,128,128], index: 5, kind: input, shape index: {}]
  %s6 = inlined_call_operand.vmem [shape: f32[1,128], index: 6, kind: input, shape index: {}]
  %s7 = inlined_call_operand.vmem [shape: bf16[3,3,128,128], index: 7, kind: input, shape index: {}]
  %s8 = inlined_call_operand.vmem [shape: f32[1,128], index: 8, kind: input, shape index: {}]
  %s9 = inlined_call_operand.vmem [shape: f32[2,8,8,128], index: 9, kind: output, shape index: {}]
  %s10 = sld [smem:[#allocation0]]
  $region69: #{openpose_inference_forward.1} parent=0
    _
  %s12 = ssub.s32 1, %s10
  %s13 = scalar_select 0, %s12, %s10
  loop: start=0, step=1, limit=4
  $region2: #{openpose_inference_forward.1} parent=0 // loop_pre_header
    _
  $region3: #{openpose_inference_forward.1} parent=0 // loop_header
    %s15 = sphi 0, %s19
    %p16 = scmp.ge.s32.totalorder %s15, 4
    %s25 = sphi 0, %s27
    %s28 = sphi 0, %s25
    %s29 = sphi 0, %s28
    %s45 = sphi 0, %s29
    %s49 = sphi 0, %s49
    %s51 = sphi 0, %s49
    %s52 = sphi 0, %s51
    %s66 = sphi 0, %s52
    %s70 = sphi 0, %s70
    %s72 = sphi 0, %s70
    %s73 = sphi 0, %s72
    %s87 = sphi 0, %s73
    %s91 = sphi 0, %s91
    %s93 = sphi 0, %s91
    %s94 = sphi 0, %s93
    %s108 = sphi 0, %s94
    %s112 = sphi 0, %s112
    %s114 = sphi 0, %s112
    %s115 = sphi 0, %s114
    %s129 = sphi 0, %s115
    %s133 = sphi 0, %s133
    %s135 = sphi 0, %s133
    %s136 = sphi 0, %s135
    %s150 = sphi 0, %s136
    %s154 = sphi 0, %s154
    %s156 = sphi 0, %s154
    %s157 = sphi 0, %s156
    %s171 = sphi 0, %s157
    %s175 = sphi 0, %s175
    %s177 = sphi 0, %s175
    %s178 = sphi 0, %s177
    %s192 = sphi 0, %s178
    %s196 = sphi 0, %s196
    %s198 = sphi 0, %s196
    %s199 = sphi 0, %s198
    %s213 = sphi 0, %s199
    %s219 = sphi 0, %s221
    %s222 = sphi 0, %s219
    %s223 = sphi 0, %s222
    %s239 = sphi 0, %s223
  $region4: #{openpose_inference_forward.1} parent=0 // loop_header_branch
    %18 = sbr.rel (%p16) target = $region8
  $region5: #{openpose_inference_forward.1} parent=0 // loop_body
    %s20 = ssub.s32 %s15, 1
    %s21 = ssub.s32 %s15, 2
    %s22 = sadd.s32 %s15, 1
    %s23 = ssub.s32 %s15, %s22
    %p24 = scmp.eq.s32.totalorder %s23, 0
    %s26 = sadd.s32 %s25, 1
    %s27 = scalar_select %p24, %s25, %s26
    %p30 = pneg %p24
    %p31 = scmp.eq.s32.totalorder %s15, 1
    %p32 = por %p30, %p31
    %p33 = scmp.ne.s32.totalorder %s25, %s28
    %p34 = scmp.eq.s32.totalorder %s15, 0
    %p35 = por %p33, %p34
    %p36 = scmp.ne.s32.totalorder %s25, %s28
    %p37 = scmp.eq.s32.totalorder %s20, 1
    %p38 = por %p36, %p37
    %p39 = scmp.ne.s32.totalorder %s28, %s29
    %p40 = scmp.eq.s32.totalorder %s20, 0
    %p41 = por %p39, %p40
    %p42 = scmp.ne.s32.totalorder %s28, %s29
    %p43 = scmp.eq.s32.totalorder %s21, 1
    %p44 = por %p42, %p43
    %p46 = scmp.ne.s32.totalorder %s29, %s45
    %p47 = scmp.eq.s32.totalorder %s21, 0
    %p48 = por %p46, %p47
    %s50 = sadd.s32 %s49, 1
    %p53 = scmp.eq.s32.totalorder %s15, 1
    %p54 = scmp.ne.s32.totalorder %s49, %s51
    %p55 = scmp.eq.s32.totalorder %s15, 0
    %p56 = por %p54, %p55
    %p57 = scmp.ne.s32.totalorder %s49, %s51
    %p58 = scmp.eq.s32.totalorder %s20, 1
    %p59 = por %p57, %p58
    %p60 = scmp.ne.s32.totalorder %s51, %s52
    %p61 = scmp.eq.s32.totalorder %s20, 0
    %p62 = por %p60, %p61
    %p63 = scmp.ne.s32.totalorder %s51, %s52
    %p64 = scmp.eq.s32.totalorder %s21, 1
    %p65 = por %p63, %p64
    %p67 = scmp.ne.s32.totalorder %s52, %s66
    %p68 = scmp.eq.s32.totalorder %s21, 0
    %p69 = por %p67, %p68
    %s71 = sadd.s32 %s70, 1
    %p74 = scmp.eq.s32.totalorder %s15, 1
    %p75 = scmp.ne.s32.totalorder %s70, %s72
    %p76 = scmp.eq.s32.totalorder %s15, 0
    %p77 = por %p75, %p76
    %p78 = scmp.ne.s32.totalorder %s70, %s72
    %p79 = scmp.eq.s32.totalorder %s20, 1
    %p80 = por %p78, %p79
    %p81 = scmp.ne.s32.totalorder %s72, %s73
    %p82 = scmp.eq.s32.totalorder %s20, 0
    %p83 = por %p81, %p82
    %p84 = scmp.ne.s32.totalorder %s72, %s73
    %p85 = scmp.eq.s32.totalorder %s21, 1
    %p86 = por %p84, %p85
    %p88 = scmp.ne.s32.totalorder %s73, %s87
    %p89 = scmp.eq.s32.totalorder %s21, 0
    %p90 = por %p88, %p89
    %s92 = sadd.s32 %s91, 1
    %p95 = scmp.eq.s32.totalorder %s15, 1
    %p96 = scmp.ne.s32.totalorder %s91, %s93
    %p97 = scmp.eq.s32.totalorder %s15, 0
    %p98 = por %p96, %p97
    %p99 = scmp.ne.s32.totalorder %s91, %s93
    %p100 = scmp.eq.s32.totalorder %s20, 1
    %p101 = por %p99, %p100
    %p102 = scmp.ne.s32.totalorder %s93, %s94
    %p103 = scmp.eq.s32.totalorder %s20, 0
    %p104 = por %p102, %p103
    %p105 = scmp.ne.s32.totalorder %s93, %s94
    %p106 = scmp.eq.s32.totalorder %s21, 1
    %p107 = por %p105, %p106
    %p109 = scmp.ne.s32.totalorder %s94, %s108
    %p110 = scmp.eq.s32.totalorder %s21, 0
    %p111 = por %p109, %p110
    %s113 = sadd.s32 %s112, 1
    %p116 = scmp.eq.s32.totalorder %s15, 1
    %p117 = scmp.ne.s32.totalorder %s112, %s114
    %p118 = scmp.eq.s32.totalorder %s15, 0
    %p119 = por %p117, %p118
    %p120 = scmp.ne.s32.totalorder %s112, %s114
    %p121 = scmp.eq.s32.totalorder %s20, 1
    %p122 = por %p120, %p121
    %p123 = scmp.ne.s32.totalorder %s114, %s115
    %p124 = scmp.eq.s32.totalorder %s20, 0
    %p125 = por %p123, %p124
    %p126 = scmp.ne.s32.totalorder %s114, %s115
    %p127 = scmp.eq.s32.totalorder %s21, 1
    %p128 = por %p126, %p127
    %p130 = scmp.ne.s32.totalorder %s115, %s129
    %p131 = scmp.eq.s32.totalorder %s21, 0
    %p132 = por %p130, %p131
    %s134 = sadd.s32 %s133, 1
    %p137 = scmp.eq.s32.totalorder %s15, 1
    %p138 = scmp.ne.s32.totalorder %s133, %s135
    %p139 = scmp.eq.s32.totalorder %s15, 0
    %p140 = por %p138, %p139
    %p141 = scmp.ne.s32.totalorder %s133, %s135
    %p142 = scmp.eq.s32.totalorder %s20, 1
    %p143 = por %p141, %p142
    %p144 = scmp.ne.s32.totalorder %s135, %s136
    %p145 = scmp.eq.s32.totalorder %s20, 0
    %p146 = por %p144, %p145
    %p147 = scmp.ne.s32.totalorder %s135, %s136
    %p148 = scmp.eq.s32.totalorder %s21, 1
    %p149 = por %p147, %p148
    %p151 = scmp.ne.s32.totalorder %s136, %s150
    %p152 = scmp.eq.s32.totalorder %s21, 0
    %p153 = por %p151, %p152
    %s155 = sadd.s32 %s154, 1
    %p158 = scmp.eq.s32.totalorder %s15, 1
    %p159 = scmp.ne.s32.totalorder %s154, %s156
    %p160 = scmp.eq.s32.totalorder %s15, 0
    %p161 = por %p159, %p160
    %p162 = scmp.ne.s32.totalorder %s154, %s156
    %p163 = scmp.eq.s32.totalorder %s20, 1
    %p164 = por %p162, %p163
    %p165 = scmp.ne.s32.totalorder %s156, %s157
    %p166 = scmp.eq.s32.totalorder %s20, 0
    %p167 = por %p165, %p166
    %p168 = scmp.ne.s32.totalorder %s156, %s157
    %p169 = scmp.eq.s32.totalorder %s21, 1
    %p170 = por %p168, %p169
    %p172 = scmp.ne.s32.totalorder %s157, %s171
    %p173 = scmp.eq.s32.totalorder %s21, 0
    %p174 = por %p172, %p173
    %s176 = sadd.s32 %s175, 1
    %p179 = scmp.eq.s32.totalorder %s15, 1
    %p180 = scmp.ne.s32.totalorder %s175, %s177
    %p181 = scmp.eq.s32.totalorder %s15, 0
    %p182 = por %p180, %p181
    %p183 = scmp.ne.s32.totalorder %s175, %s177
    %p184 = scmp.eq.s32.totalorder %s20, 1
    %p185 = por %p183, %p184
    %p186 = scmp.ne.s32.totalorder %s177, %s178
    %p187 = scmp.eq.s32.totalorder %s20, 0
    %p188 = por %p186, %p187
    %p189 = scmp.ne.s32.totalorder %s177, %s178
    %p190 = scmp.eq.s32.totalorder %s21, 1
    %p191 = por %p189, %p190
    %p193 = scmp.ne.s32.totalorder %s178, %s192
    %p194 = scmp.eq.s32.totalorder %s21, 0
    %p195 = por %p193, %p194
    %s197 = sadd.s32 %s196, 1
    %p200 = scmp.eq.s32.totalorder %s15, 1
    %p201 = scmp.ne.s32.totalorder %s196, %s198
    %p202 = scmp.eq.s32.totalorder %s15, 0
    %p203 = por %p201, %p202
    %p204 = scmp.ne.s32.totalorder %s196, %s198
    %p205 = scmp.eq.s32.totalorder %s20, 1
    %p206 = por %p204, %p205
    %p207 = scmp.ne.s32.totalorder %s198, %s199
    %p208 = scmp.eq.s32.totalorder %s20, 0
    %p209 = por %p207, %p208
    %p210 = scmp.ne.s32.totalorder %s198, %s199
    %p211 = scmp.eq.s32.totalorder %s21, 1
    %p212 = por %p210, %p211
    %p214 = scmp.ne.s32.totalorder %s199, %s213
    %p215 = scmp.eq.s32.totalorder %s21, 0
    %p216 = por %p214, %p215
    %s217 = ssub.s32 %s15, %s22
    %p218 = scmp.eq.s32.totalorder %s217, 0
    %s220 = sadd.s32 %s219, 1
    %s221 = scalar_select %p218, %s219, %s220
    %p224 = pneg %p218
    %p225 = scmp.eq.s32.totalorder %s15, 1
    %p226 = por %p224, %p225
    %p227 = scmp.ne.s32.totalorder %s219, %s222
    %p228 = scmp.eq.s32.totalorder %s15, 0
    %p229 = por %p227, %p228
    %p230 = scmp.ne.s32.totalorder %s219, %s222
    %p231 = scmp.eq.s32.totalorder %s20, 1
    %p232 = por %p230, %p231
    %p233 = scmp.ne.s32.totalorder %s222, %s223
    %p234 = scmp.eq.s32.totalorder %s20, 0
    %p235 = por %p233, %p234
    %p236 = scmp.ne.s32.totalorder %s222, %s223
    %p237 = scmp.eq.s32.totalorder %s21, 1
    %p238 = por %p236, %p237
    %p240 = scmp.ne.s32.totalorder %s223, %s239
    %p241 = scmp.eq.s32.totalorder %s21, 0
    %p242 = por %p240, %p241
    %p243 = scmp.le.s32.totalorder 1, %s15
    %p244 = scmp.lt.s32.totalorder %s15, 3
    %p245 = pnand %p243, %p244
    %p246 = pneg %p245
    // Predicated region
    $region9: #{openpose_inference_forward.1} parent=5 // pred_check
      _
    $region10: #{openpose_inference_forward.1} parent=5 // pred_check_branch
      %248 = sbr.rel (%p245) target = $region12
    $region11: #{openpose_inference_forward.1} parent=5 // pred_region
      %s249 = ssub.s32 %s15, 1
      // Predicated region
      $region13: #{openpose_inference_forward.1} parent=11 // pred_check
        %p250 = pneg %p62
      $region14: #{openpose_inference_forward.1} parent=11 // pred_check_branch
        %252 = sbr.rel (%p250) target = $region16
      $region15: #{openpose_inference_forward.1} parent=11 // pred_region
        _
      $region16: #{openpose_inference_forward.1} parent=11 // pred_fallthru
        _
      // Predicated region
      $region17: #{openpose_inference_forward.1} parent=11 // pred_check
        %p253 = pneg %p83
      $region18: #{openpose_inference_forward.1} parent=11 // pred_check_branch
        %255 = sbr.rel (%p253) target = $region20
      $region19: #{openpose_inference_forward.1} parent=11 // pred_region
        _
      $region20: #{openpose_inference_forward.1} parent=11 // pred_fallthru
        _
      // Predicated region
      $region21: #{openpose_inference_forward.1} parent=11 // pred_check
        %p256 = pneg %p104
      $region22: #{openpose_inference_forward.1} parent=11 // pred_check_branch
        %258 = sbr.rel (%p256) target = $region24
      $region23: #{openpose_inference_forward.1} parent=11 // pred_region
        _
      $region24: #{openpose_inference_forward.1} parent=11 // pred_fallthru
        _
      // Predicated region
      $region25: #{openpose_inference_forward.1} parent=11 // pred_check
        %p259 = pneg %p125
      $region26: #{openpose_inference_forward.1} parent=11 // pred_check_branch
        %261 = sbr.rel (%p259) target = $region28
      $region27: #{openpose_inference_forward.1} parent=11 // pred_region
        _
      $region28: #{openpose_inference_forward.1} parent=11 // pred_fallthru
        _
      // Predicated region
      $region29: #{openpose_inference_forward.1} parent=11 // pred_check
        %p262 = pneg %p146
      $region30: #{openpose_inference_forward.1} parent=11 // pred_check_branch
        %264 = sbr.rel (%p262) target = $region32
      $region31: #{openpose_inference_forward.1} parent=11 // pred_region
        _
      $region32: #{openpose_inference_forward.1} parent=11 // pred_fallthru
        _
      // Predicated region
      $region33: #{openpose_inference_forward.1} parent=11 // pred_check
        %p265 = pneg %p167
      $region34: #{openpose_inference_forward.1} parent=11 // pred_check_branch
        %267 = sbr.rel (%p265) target = $region36
      $region35: #{openpose_inference_forward.1} parent=11 // pred_region
        _
      $region36: #{openpose_inference_forward.1} parent=11 // pred_fallthru
        _
      // Predicated region
      $region37: #{openpose_inference_forward.1} parent=11 // pred_check
        %p268 = pneg %p188
      $region38: #{openpose_inference_forward.1} parent=11 // pred_check_branch
        %270 = sbr.rel (%p268) target = $region40
      $region39: #{openpose_inference_forward.1} parent=11 // pred_region
        _
      $region40: #{openpose_inference_forward.1} parent=11 // pred_fallthru
        _
      // Predicated region
      $region41: #{openpose_inference_forward.1} parent=11 // pred_check
        %p271 = pneg %p209
      $region42: #{openpose_inference_forward.1} parent=11 // pred_check_branch
        %273 = sbr.rel (%p271) target = $region44
      $region43: #{openpose_inference_forward.1} parent=11 // pred_region
        _
      $region44: #{openpose_inference_forward.1} parent=11 // pred_fallthru
        _
    $region12: #{openpose_inference_forward.1} parent=5 // pred_fallthru
      _
    %p274 = scmp.lt.s32.totalorder %s15, 2
    // Predicated region
    $region45: #{openpose_inference_forward.1} parent=5 // pred_check
      %p275 = pneg %p274
    $region46: #{openpose_inference_forward.1} parent=5 // pred_check_branch
      %277 = sbr.rel (%p275) target = $region48
    $region47: #{openpose_inference_forward.1} parent=5 // pred_region
      // Predicated region
      $region49: #{openpose_inference_forward.1} parent=47 // pred_check
        %p278 = pneg %p35
      $region50: #{openpose_inference_forward.1} parent=47 // pred_check_branch
        %280 = sbr.rel (%p278) target = $region52
      $region51: #{openpose_inference_forward.1} parent=47 // pred_region
        %p281 = scmp.lt.s32.totalorder %s15, 1
        %s282 = scalar_select %p281, %s15, 1
        %s283 = smul.addr %s282, 32
        %s284 = smul.addr %s283, 8
        %s285 = scalar_lea.vmem %s0, %s284
      $region52: #{openpose_inference_forward.1} parent=47 // pred_fallthru
        _
    $region48: #{openpose_inference_forward.1} parent=5 // pred_fallthru
      _
    %p286 = scmp.le.s32.totalorder 1, %s15
    %p287 = scmp.lt.s32.totalorder %s15, 3
    %p288 = pnand %p286, %p287
    %p289 = pneg %p288
    // Predicated region
    $region53: #{openpose_inference_forward.1} parent=5 // pred_check
      _
    $region54: #{openpose_inference_forward.1} parent=5 // pred_check_branch
      %291 = sbr.rel (%p288) target = $region56
    $region55: #{openpose_inference_forward.1} parent=5 // pred_region
      %s292 = ssub.s32 %s15, 1
      %p293 = scmp.lt.s32.totalorder %s20, 1
      %s294 = scalar_select %p293, %s20, 1
      %s295 = smul.addr %s294, 32
      %s296 = smul.addr %s295, 8
      %s297 = scalar_lea.vmem %s0, %s296
      %p298 = pneg %p41
      %p299 = pneg %p38
      %p300 = pneg %p62
      %p301 = pneg %p59
      %p302 = pneg %p83
      %p303 = pneg %p80
      %p304 = pneg %p104
      %p305 = pneg %p101
      %p306 = pneg %p125
      %p307 = pneg %p122
      %p308 = pneg %p146
      %p309 = pneg %p143
      %p310 = pneg %p167
      %p311 = pneg %p164
      %p312 = pneg %p188
      %p313 = pneg %p185
      %p314 = pneg %p209
      %p315 = pneg %p206
      %p316 = pneg %p235
      %p317 = pneg %p232
      %p318 = scmp.lt.s32.totalorder %s20, 1
      %s319 = scalar_select %p318, %s20, 1
      %s320 = smul.addr %s319, 8
      %s321 = smul.addr %s320, 8
      %s322 = scalar_lea.vmem %s9, %s321
      %p323 = scmp.lt.s32.totalorder %s20, 1
      %s324 = scalar_select %p323, %s20, 1
      %s325 = smul.addr %s324, 32
      %s326 = smul.addr %s325, 8
      %s327 = scalar_lea.vmem %s0, %s326
      %p328 = scmp.lt.s32.totalorder %s20, 1
      %s329 = scalar_select %p328, %s20, 1
      %s330 = smul.addr %s329, 8
      %s331 = smul.addr %s330, 8
      %s332 = scalar_lea.vmem %s9, %s331
      %334 = vst [vmem:[#allocation2] sm:$0xff] 0.0
      %335 = vst [vmem:[#allocation2 + $0x8] sm:$0xff] 0.0
      %336 = vst [vmem:[#allocation2 + $0x10] sm:$0xff] 0.0
      %337 = vst [vmem:[#allocation2 + $0x18] sm:$0xff] 0.0
      %338 = vst [vmem:[#allocation2 + $0x20] sm:$0xff] 0.0
      %339 = vst [vmem:[#allocation2 + $0x28] sm:$0xff] 0.0
      %340 = vst [vmem:[#allocation2 + $0x30] sm:$0xff] 0.0
      %341 = vst [vmem:[#allocation2 + $0x38] sm:$0xff] 0.0
      %342 = vst [vmem:[#allocation2 + $0x40] sm:$0xff] 0.0
      %343 = vst [vmem:[#allocation2 + $0x48] sm:$0xff] 0.0
      %344 = vst [vmem:[#allocation2 + $0x50] sm:$0xff] 0.0
      %345 = vst [vmem:[#allocation2 + $0x58] sm:$0xff] 0.0
      %346 = vst [vmem:[#allocation2 + $0x60] sm:$0xff] 0.0
      %347 = vst [vmem:[#allocation2 + $0x68] sm:$0xff] 0.0
      %348 = vst [vmem:[#allocation2 + $0x70] sm:$0xff] 0.0
      %349 = vst [vmem:[#allocation2 + $0x78] sm:$0xff] 0.0
      %350 = vst [vmem:[#allocation2 + $0x80] sm:$0xff] 0.0
      %351 = vst [vmem:[#allocation2 + $0x88] sm:$0xff] 0.0
      %352 = vst [vmem:[#allocation2 + $0x90] sm:$0xff] 0.0
      %353 = vst [vmem:[#allocation2 + $0x98] sm:$0xff] 0.0
      %354 = vst [vmem:[#allocation2 + $0xa0] sm:$0xff] 0.0
      %355 = vst [vmem:[#allocation2 + $0xa8] sm:$0xff] 0.0
      %356 = vst [vmem:[#allocation2 + $0xb0] sm:$0xff] 0.0
      %357 = vst [vmem:[#allocation2 + $0xb8] sm:$0xff] 0.0
      %358 = vst [vmem:[#allocation2 + $0xc0] sm:$0xff] 0.0
      %359 = vst [vmem:[#allocation2 + $0xc8] sm:$0xff] 0.0
      %360 = vst [vmem:[#allocation2 + $0xd0] sm:$0xff] 0.0
      %361 = vst [vmem:[#allocation2 + $0xd8] sm:$0xff] 0.0
      %362 = vst [vmem:[#allocation2 + $0xe0] sm:$0xff] 0.0
      %363 = vst [vmem:[#allocation2 + $0xe8] sm:$0xff] 0.0
      %364 = vst [vmem:[#allocation2 + $0xf0] sm:$0xff] 0.0
      %365 = vst [vmem:[#allocation2 + $0xf8] sm:$0xff] 0.0
      %366 = vst [vmem:[#allocation2 + $0x100] sm:$0xff] 0.0
      %367 = vst [vmem:[#allocation2 + $0x108] sm:$0xff] 0.0
      %368 = vst [vmem:[#allocation2 + $0x110] sm:$0xff] 0.0
      %369 = vst [vmem:[#allocation2 + $0x118] sm:$0xff] 0.0
      %370 = vst [vmem:[#allocation2 + $0x120] sm:$0xff] 0.0
      %371 = vst [vmem:[#allocation2 + $0x128] sm:$0xff] 0.0
      %372 = vst [vmem:[#allocation2 + $0x130] sm:$0xff] 0.0
      %373 = vst [vmem:[#allocation2 + $0x138] sm:$0xff] 0.0
      %374 = vst [vmem:[#allocation2 + $0x140] sm:$0xff] 0.0
      %375 = vst [vmem:[#allocation2 + $0x148] sm:$0xff] 0.0
      %376 = vst [vmem:[#allocation2 + $0x150] sm:$0xff] 0.0
      %377 = vst [vmem:[#allocation2 + $0x158] sm:$0xff] 0.0
      %378 = vst [vmem:[#allocation2 + $0x160] sm:$0xff] 0.0
      %379 = vst [vmem:[#allocation2 + $0x168] sm:$0xff] 0.0
      %380 = vst [vmem:[#allocation2 + $0x170] sm:$0xff] 0.0
      %381 = vst [vmem:[#allocation2 + $0x178] sm:$0xff] 0.0
      %382 = vst [vmem:[#allocation2 + $0x180] sm:$0xff] 0.0
      %383 = vst [vmem:[#allocation2 + $0x188] sm:$0xff] 0.0
      %384 = vst [vmem:[#allocation2 + $0x190] sm:$0xff] 0.0
      %385 = vst [vmem:[#allocation2 + $0x198] sm:$0xff] 0.0
      %386 = vst [vmem:[#allocation2 + $0x1a0] sm:$0xff] 0.0
      %387 = vst [vmem:[#allocation2 + $0x1a8] sm:$0xff] 0.0
      %388 = vst [vmem:[#allocation2 + $0x1b0] sm:$0xff] 0.0
      %389 = vst [vmem:[#allocation2 + $0x1b8] sm:$0xff] 0.0
      %390 = vst [vmem:[#allocation2 + $0x1c0] sm:$0xff] 0.0
      %391 = vst [vmem:[#allocation2 + $0x1c8] sm:$0xff] 0.0
      %392 = vst [vmem:[#allocation2 + $0x1d0] sm:$0xff] 0.0
      %393 = vst [vmem:[#allocation2 + $0x1d8] sm:$0xff] 0.0
      %394 = vst [vmem:[#allocation2 + $0x1e0] sm:$0xff] 0.0
      %395 = vst [vmem:[#allocation2 + $0x1e8] sm:$0xff] 0.0
      %396 = vst [vmem:[#allocation2 + $0x1f0] sm:$0xff] 0.0
      %397 = vst [vmem:[#allocation2 + $0x1f8] sm:$0xff] 0.0
      %398 = vst [vmem:[#allocation2 + $0x200] sm:$0xff] 0.0
      %399 = vst [vmem:[#allocation2 + $0x208] sm:$0xff] 0.0
      %400 = vst [vmem:[#allocation2 + $0x210] sm:$0xff] 0.0
      %401 = vst [vmem:[#allocation2 + $0x218] sm:$0xff] 0.0
      %402 = vst [vmem:[#allocation2 + $0x220] sm:$0xff] 0.0
      %403 = vst [vmem:[#allocation2 + $0x228] sm:$0xff] 0.0
      %404 = vst [vmem:[#allocation2 + $0x230] sm:$0xff] 0.0
      %405 = vst [vmem:[#allocation2 + $0x238] sm:$0xff] 0.0
      %406 = vst [vmem:[#allocation4] sm:$0xff] 0.0
      %407 = vst [vmem:[#allocation4 + $0x8] sm:$0xff] 0.0
      %408 = vst [vmem:[#allocation4 + $0x10] sm:$0xff] 0.0
      %409 = vst [vmem:[#allocation4 + $0x18] sm:$0xff] 0.0
      %410 = vst [vmem:[#allocation4 + $0x20] sm:$0xff] 0.0
      %411 = vst [vmem:[#allocation4 + $0x28] sm:$0xff] 0.0
      %412 = vst [vmem:[#allocation4 + $0x30] sm:$0xff] 0.0
      %413 = vst [vmem:[#allocation4 + $0x38] sm:$0xff] 0.0
      %414 = vst [vmem:[#allocation4 + $0x40] sm:$0xff] 0.0
      %415 = vst [vmem:[#allocation4 + $0x48] sm:$0xff] 0.0
      %416 = vst [vmem:[#allocation4 + $0x50] sm:$0xff] 0.0
      %417 = vst [vmem:[#allocation4 + $0x58] sm:$0xff] 0.0
      %418 = vst [vmem:[#allocation4 + $0x60] sm:$0xff] 0.0
      %419 = vst [vmem:[#allocation4 + $0x68] sm:$0xff] 0.0
      %420 = vst [vmem:[#allocation4 + $0x70] sm:$0xff] 0.0
      %421 = vst [vmem:[#allocation4 + $0x78] sm:$0xff] 0.0
      %422 = vst [vmem:[#allocation4 + $0x80] sm:$0xff] 0.0
      %423 = vst [vmem:[#allocation4 + $0x88] sm:$0xff] 0.0
      %424 = vst [vmem:[#allocation4 + $0x90] sm:$0xff] 0.0
      %425 = vst [vmem:[#allocation4 + $0x98] sm:$0xff] 0.0
      %426 = vst [vmem:[#allocation4 + $0xa0] sm:$0xff] 0.0
      %427 = vst [vmem:[#allocation4 + $0xa8] sm:$0xff] 0.0
      %428 = vst [vmem:[#allocation4 + $0xb0] sm:$0xff] 0.0
      %429 = vst [vmem:[#allocation4 + $0xb8] sm:$0xff] 0.0
      %430 = vst [vmem:[#allocation4 + $0xc0] sm:$0xff] 0.0
      %431 = vst [vmem:[#allocation4 + $0xc8] sm:$0xff] 0.0
      %432 = vst [vmem:[#allocation4 + $0xd0] sm:$0xff] 0.0
      %433 = vst [vmem:[#allocation4 + $0xd8] sm:$0xff] 0.0
      %434 = vst [vmem:[#allocation4 + $0xe0] sm:$0xff] 0.0
      %435 = vst [vmem:[#allocation4 + $0xe8] sm:$0xff] 0.0
      %v436 = vld [vmem:[%s327] sm:$0xff]
      %v437 = vld [vmem:[%s327 + $0x8] sm:$0xff]
      %v438 = vld [vmem:[%s327 + $0x10] sm:$0xff]
      %v439 = vld [vmem:[%s327 + $0x18] sm:$0xff]
      %v440 = vld [vmem:[%s327 + $0x20] sm:$0xff]
      %v441 = vld [vmem:[%s327 + $0x28] sm:$0xff]
      %v442 = vld [vmem:[%s327 + $0x30] sm:$0xff]
      %v443 = vld [vmem:[%s327 + $0x38] sm:$0xff]
      %v444 = vld [vmem:[%s327 + $0x40] sm:$0xff]
      %v445 = vld [vmem:[%s327 + $0x48] sm:$0xff]
      %v446 = vld [vmem:[%s327 + $0x50] sm:$0xff]
      %v447 = vld [vmem:[%s327 + $0x58] sm:$0xff]
      %v448 = vld [vmem:[%s327 + $0x60] sm:$0xff]
      %v449 = vld [vmem:[%s327 + $0x68] sm:$0xff]
      %v450 = vld [vmem:[%s327 + $0x70] sm:$0xff]
      %v451 = vld [vmem:[%s327 + $0x78] sm:$0xff]
      %v452 = vld [vmem:[%s327 + $0x80] sm:$0xff]
      %v453 = vld [vmem:[%s327 + $0x88] sm:$0xff]
      %v454 = vld [vmem:[%s327 + $0x90] sm:$0xff]
      %v455 = vld [vmem:[%s327 + $0x98] sm:$0xff]
      %v456 = vld [vmem:[%s327 + $0xa0] sm:$0xff]
      %v457 = vld [vmem:[%s327 + $0xa8] sm:$0xff]
      %v458 = vld [vmem:[%s327 + $0xb0] sm:$0xff]
      %v459 = vld [vmem:[%s327 + $0xb8] sm:$0xff]
      %v460 = vld [vmem:[%s327 + $0xc0] sm:$0xff]
      %v461 = vld [vmem:[%s327 + $0xc8] sm:$0xff]
      %v462 = vld [vmem:[%s327 + $0xd0] sm:$0xff]
      %v463 = vld [vmem:[%s327 + $0xd8] sm:$0xff]
      %v464 = vld [vmem:[%s327 + $0xe0] sm:$0xff]
      %v465 = vld [vmem:[%s327 + $0xe8] sm:$0xff]
      %v466 = vld [vmem:[%s327 + $0xf0] sm:$0xff]
      %v467 = vld [vmem:[%s327 + $0xf8] sm:$0xff]
      %s468 = scalar_lea.vmem [#allocation2], 32
      %469 = vst [vmem:[%s468 + $0x8] sm:$0xff] %v436
      %470 = vst [vmem:[%s468 + $0x10] sm:$0xff] %v437
      %471 = vst [vmem:[%s468 + $0x28] sm:$0xff] %v438
      %472 = vst [vmem:[%s468 + $0x30] sm:$0xff] %v439
      %473 = vst [vmem:[%s468 + $0x48] sm:$0xff] %v440
      %474 = vst [vmem:[%s468 + $0x50] sm:$0xff] %v441
      %475 = vst [vmem:[%s468 + $0x68] sm:$0xff] %v442
      %476 = vst [vmem:[%s468 + $0x70] sm:$0xff] %v443
      %477 = vst [vmem:[%s468 + $0x88] sm:$0xff] %v444
      %478 = vst [vmem:[%s468 + $0x90] sm:$0xff] %v445
      %479 = vst [vmem:[%s468 + $0xa8] sm:$0xff] %v446
      %480 = vst [vmem:[%s468 + $0xb0] sm:$0xff] %v447
      %481 = vst [vmem:[%s468 + $0xc8] sm:$0xff] %v448
      %482 = vst [vmem:[%s468 + $0xd0] sm:$0xff] %v449
      %483 = vst [vmem:[%s468 + $0xe8] sm:$0xff] %v450
      %484 = vst [vmem:[%s468 + $0xf0] sm:$0xff] %v451
      %485 = vst [vmem:[%s468 + $0x108] sm:$0xff] %v452
      %486 = vst [vmem:[%s468 + $0x110] sm:$0xff] %v453
      %487 = vst [vmem:[%s468 + $0x128] sm:$0xff] %v454
      %488 = vst [vmem:[%s468 + $0x130] sm:$0xff] %v455
      %489 = vst [vmem:[%s468 + $0x148] sm:$0xff] %v456
      %490 = vst [vmem:[%s468 + $0x150] sm:$0xff] %v457
      %491 = vst [vmem:[%s468 + $0x168] sm:$0xff] %v458
      %492 = vst [vmem:[%s468 + $0x170] sm:$0xff] %v459
      %493 = vst [vmem:[%s468 + $0x188] sm:$0xff] %v460
      %494 = vst [vmem:[%s468 + $0x190] sm:$0xff] %v461
      %495 = vst [vmem:[%s468 + $0x1a8] sm:$0xff] %v462
      %496 = vst [vmem:[%s468 + $0x1b0] sm:$0xff] %v463
      %497 = vst [vmem:[%s468 + $0x1c8] sm:$0xff] %v464
      %498 = vst [vmem:[%s468 + $0x1d0] sm:$0xff] %v465
      %499 = vst [vmem:[%s468 + $0x1e8] sm:$0xff] %v466
      %500 = vst [vmem:[%s468 + $0x1f0] sm:$0xff] %v467
      %v501 = vld [vmem:[#allocation2 + $0x7] sm:$0xff]
      %v502 = vld [vmem:[#allocation2 + $0xf] sm:$0xff]
      %v503 = vld [vmem:[#allocation2 + $0x27] sm:$0xff]
      %v504 = vld [vmem:[#allocation2 + $0x2f] sm:$0xff]
      %v505 = vld [vmem:[#allocation2 + $0x47] sm:$0xff]
      %v506 = vld [vmem:[#allocation2 + $0x4f] sm:$0xff]
      %v507 = vld [vmem:[#allocation2 + $0x67] sm:$0xff]
      %v508 = vld [vmem:[#allocation2 + $0x6f] sm:$0xff]
      %v509 = vld [vmem:[#allocation2 + $0x87] sm:$0xff]
      %v510 = vld [vmem:[#allocation2 + $0x8f] sm:$0xff]
      %v511 = vld [vmem:[#allocation2 + $0xa7] sm:$0xff]
      %v512 = vld [vmem:[#allocation2 + $0xaf] sm:$0xff]
      %v513 = vld [vmem:[#allocation2 + $0xc7] sm:$0xff]
      %v514 = vld [vmem:[#allocation2 + $0xcf] sm:$0xff]
      %v515 = vld [vmem:[#allocation2 + $0xe7] sm:$0xff]
      %v516 = vld [vmem:[#allocation2 + $0xef] sm:$0xff]
      %v517 = vld [vmem:[#allocation2 + $0x107] sm:$0xff]
      %v518 = vld [vmem:[#allocation2 + $0x10f] sm:$0xff]
      %v519 = vld [vmem:[#allocation2 + $0x127] sm:$0xff]
      %v520 = vld [vmem:[#allocation2 + $0x12f] sm:$0xff]
      %v521 = vld [vmem:[#allocation2 + $0x147] sm:$0xff]
      %v522 = vld [vmem:[#allocation2 + $0x14f] sm:$0xff]
      %v523 = vld [vmem:[#allocation2 + $0x167] sm:$0xff]
      %v524 = vld [vmem:[#allocation2 + $0x16f] sm:$0xff]
      %v525 = vld [vmem:[#allocation2 + $0x187] sm:$0xff]
      %v526 = vld [vmem:[#allocation2 + $0x18f] sm:$0xff]
      %v527 = vld [vmem:[#allocation2 + $0x1a7] sm:$0xff]
      %v528 = vld [vmem:[#allocation2 + $0x1af] sm:$0xff]
      %v529 = vld [vmem:[#allocation2 + $0x1c7] sm:$0xff]
      %v530 = vld [vmem:[#allocation2 + $0x1cf] sm:$0xff]
      %v531 = vld [vmem:[#allocation2 + $0x1e7] sm:$0xff]
      %v532 = vld [vmem:[#allocation2 + $0x1ef] sm:$0xff]
      %v533 = vpack.c.bf16 %v502, %v501
      %v534 = vpack.c.bf16 %v504, %v503
      %v535 = vpack.c.bf16 %v506, %v505
      %v536 = vpack.c.bf16 %v508, %v507
      %v537 = vpack.c.bf16 %v510, %v509
      %v538 = vpack.c.bf16 %v512, %v511
      %v539 = vpack.c.bf16 %v514, %v513
      %v540 = vpack.c.bf16 %v516, %v515
      %v541 = vpack.c.bf16 %v518, %v517
      %v542 = vpack.c.bf16 %v520, %v519
      %v543 = vpack.c.bf16 %v522, %v521
      %v544 = vpack.c.bf16 %v524, %v523
      %v545 = vpack.c.bf16 %v526, %v525
      %v546 = vpack.c.bf16 %v528, %v527
      %v547 = vpack.c.bf16 %v530, %v529
      %v548 = vpack.c.bf16 %v532, %v531
      %v549 = vld [vmem:[%s1] sm:$0xf]
      %v550 = vld [vmem:[%s1 + $0x4] sm:$0xf]
      %v551 = vld [vmem:[%s1 + $0x8] sm:$0xf]
      %v552 = vld [vmem:[%s1 + $0xc] sm:$0xf]
      %v553 = vld [vmem:[%s1 + $0x10] sm:$0xf]
      %v554 = vld [vmem:[%s1 + $0x14] sm:$0xf]
      %v555 = vld [vmem:[%s1 + $0x18] sm:$0xf]
      %v556 = vld [vmem:[%s1 + $0x1c] sm:$0xf]
      %v557 = vld [vmem:[%s1 + $0x20] sm:$0xf]
      %v558 = vld [vmem:[%s1 + $0x24] sm:$0xf]
      %v559 = vld [vmem:[%s1 + $0x28] sm:$0xf]
      %v560 = vld [vmem:[%s1 + $0x2c] sm:$0xf]
      %v561 = vld [vmem:[%s1 + $0x30] sm:$0xf]
      %v562 = vld [vmem:[%s1 + $0x34] sm:$0xf]
      %v563 = vld [vmem:[%s1 + $0x38] sm:$0xf]
      %v564 = vld [vmem:[%s1 + $0x3c] sm:$0xf]
      %v565 = vld [vmem:[#allocation2 + $0x8] sm:$0xff]
      %v566 = vld [vmem:[#allocation2 + $0x10] sm:$0xff]
      %v567 = vld [vmem:[#allocation2 + $0x28] sm:$0xff]
      %v568 = vld [vmem:[#allocation2 + $0x30] sm:$0xff]
      %v569 = vld [vmem:[#allocation2 + $0x48] sm:$0xff]
      %v570 = vld [vmem:[#allocation2 + $0x50] sm:$0xff]
      %v571 = vld [vmem:[#allocation2 + $0x68] sm:$0xff]
      %v572 = vld [vmem:[#allocation2 + $0x70] sm:$0xff]
      %v573 = vld [vmem:[#allocation2 + $0x88] sm:$0xff]
      %v574 = vld [vmem:[#allocation2 + $0x90] sm:$0xff]
      %v575 = vld [vmem:[#allocation2 + $0xa8] sm:$0xff]
      %v576 = vld [vmem:[#allocation2 + $0xb0] sm:$0xff]
      %v577 = vld [vmem:[#allocation2 + $0xc8] sm:$0xff]
      %v578 = vld [vmem:[#allocation2 + $0xd0] sm:$0xff]
      %v579 = vld [vmem:[#allocation2 + $0xe8] sm:$0xff]
      %v580 = vld [vmem:[#allocation2 + $0xf0] sm:$0xff]
      %v581 = vld [vmem:[#allocation2 + $0x108] sm:$0xff]
      %v582 = vld [vmem:[#allocation2 + $0x110] sm:$0xff]
      %v583 = vld [vmem:[#allocation2 + $0x128] sm:$0xff]
      %v584 = vld [vmem:[#allocation2 + $0x130] sm:$0xff]
      %v585 = vld [vmem:[#allocation2 + $0x148] sm:$0xff]
      %v586 = vld [vmem:[#allocation2 + $0x150] sm:$0xff]
      %v587 = vld [vmem:[#allocation2 + $0x168] sm:$0xff]
      %v588 = vld [vmem:[#allocation2 + $0x170] sm:$0xff]
      %v589 = vld [vmem:[#allocation2 + $0x188] sm:$0xff]
      %v590 = vld [vmem:[#allocation2 + $0x190] sm:$0xff]
      %v591 = vld [vmem:[#allocation2 + $0x1a8] sm:$0xff]
      %v592 = vld [vmem:[#allocation2 + $0x1b0] sm:$0xff]
      %v593 = vld [vmem:[#allocation2 + $0x1c8] sm:$0xff]
      %v594 = vld [vmem:[#allocation2 + $0x1d0] sm:$0xff]
      %v595 = vld [vmem:[#allocation2 + $0x1e8] sm:$0xff]
      %v596 = vld [vmem:[#allocation2 + $0x1f0] sm:$0xff]
      %v597 = vpack.c.bf16 %v566, %v565
      %v598 = vpack.c.bf16 %v568, %v567
      %v599 = vpack.c.bf16 %v570, %v569
      %v600 = vpack.c.bf16 %v572, %v571
      %v601 = vpack.c.bf16 %v574, %v573
      %v602 = vpack.c.bf16 %v576, %v575
      %v603 = vpack.c.bf16 %v578, %v577
      %v604 = vpack.c.bf16 %v580, %v579
      %v605 = vpack.c.bf16 %v582, %v581
      %v606 = vpack.c.bf16 %v584, %v583
      %v607 = vpack.c.bf16 %v586, %v585
      %v608 = vpack.c.bf16 %v588, %v587
      %v609 = vpack.c.bf16 %v590, %v589
      %v610 = vpack.c.bf16 %v592, %v591
      %v611 = vpack.c.bf16 %v594, %v593
      %v612 = vpack.c.bf16 %v596, %v595
      %s613 = scalar_lea.vmem %s1, 64
      %v614 = vld [vmem:[%s613] sm:$0xf]
      %v615 = vld [vmem:[%s613 + $0x4] sm:$0xf]
      %v616 = vld [vmem:[%s613 + $0x8] sm:$0xf]
      %v617 = vld [vmem:[%s613 + $0xc] sm:$0xf]
      %v618 = vld [vmem:[%s613 + $0x10] sm:$0xf]
      %v619 = vld [vmem:[%s613 + $0x14] sm:$0xf]
      %v620 = vld [vmem:[%s613 + $0x18] sm:$0xf]
      %v621 = vld [vmem:[%s613 + $0x1c] sm:$0xf]
      %v622 = vld [vmem:[%s613 + $0x20] sm:$0xf]
      %v623 = vld [vmem:[%s613 + $0x24] sm:$0xf]
      %v624 = vld [vmem:[%s613 + $0x28] sm:$0xf]
      %v625 = vld [vmem:[%s613 + $0x2c] sm:$0xf]
      %v626 = vld [vmem:[%s613 + $0x30] sm:$0xf]
      %v627 = vld [vmem:[%s613 + $0x34] sm:$0xf]
      %v628 = vld [vmem:[%s613 + $0x38] sm:$0xf]
      %v629 = vld [vmem:[%s613 + $0x3c] sm:$0xf]
      %v646 = vunpack.c.l.b16 %v614
      %v647 = vunpack.c.l.b16 %v615
      %v648 = vunpack.c.l.b16 %v616
      %v649 = vunpack.c.l.b16 %v617
      %v650 = vunpack.c.l.b16 %v618
      %v651 = vunpack.c.l.b16 %v619
      %v652 = vunpack.c.l.b16 %v620
      %v653 = vunpack.c.l.b16 %v621
      %v654 = vunpack.c.l.b16 %v622
      %v655 = vunpack.c.l.b16 %v623
      %v656 = vunpack.c.l.b16 %v624
      %v657 = vunpack.c.l.b16 %v625
      %v658 = vunpack.c.l.b16 %v626
      %v659 = vunpack.c.l.b16 %v627
      %v660 = vunpack.c.l.b16 %v628
      %v661 = vunpack.c.l.b16 %v629
      %v662 = vpack.c.b16 %v647, %v646
      %v663 = vpack.c.b16 %v649, %v648
      %v664 = vpack.c.b16 %v651, %v650
      %v665 = vpack.c.b16 %v653, %v652
      %v666 = vpack.c.b16 %v655, %v654
      %v667 = vpack.c.b16 %v657, %v656
      %v668 = vpack.c.b16 %v659, %v658
      %v669 = vpack.c.b16 %v661, %v660
      %678 = vmatprep.subr.bf16.mxu0 0
      %679 = vmatpush1.bf16.msra.mxu0 %v669
      %680 = vmatprep.subr.bf16.mxu0 0
      %681 = vmatpush1.bf16.msra.mxu0 %v668
      %682 = vmatprep.subr.bf16.mxu0 0
      %683 = vmatpush1.bf16.msra.mxu0 %v667
      %684 = vmatprep.subr.bf16.mxu0 0
      %685 = vmatpush1.bf16.msra.mxu0 %v666
      %686 = vmatprep.subr.bf16.mxu0 0
      %687 = vmatpush1.bf16.msra.mxu0 %v665
      %688 = vmatprep.subr.bf16.mxu0 0
      %689 = vmatpush1.bf16.msra.mxu0 %v664
      %690 = vmatprep.subr.bf16.mxu0 0
      %691 = vmatpush1.bf16.msra.mxu0 %v663
      %692 = vmatprep.subr.bf16.mxu0 0
      %693 = vmatpush1.bf16.msra.mxu0 %v662
      %694 = vmatprep.subr.bf16.mxu0 0
      %695 = vmatpush2.bf16.msra.mxu0 0
      %696 = vmatprep.subr.bf16.mxu0 0
      %697 = vmatpush2.bf16.msra.mxu0 0
      %698 = vmatprep.subr.bf16.mxu0 0
      %699 = vmatpush2.bf16.msra.mxu0 0
      %700 = vmatprep.subr.bf16.mxu0 0
      %701 = vmatpush2.bf16.msra.mxu0 0
      %702 = vmatprep.subr.bf16.mxu0 0
      %703 = vmatpush2.bf16.msra.mxu0 0
      %704 = vmatprep.subr.bf16.mxu0 0
      %705 = vmatpush2.bf16.msra.mxu0 0
      %706 = vmatprep.subr.bf16.mxu0 0
      %707 = vmatpush2.bf16.msra.mxu0 0
      %708 = vmatprep.subr.bf16.mxu0 0
      %709 = vmatpush2.bf16.msra.mxu0 0
      %710 = vmatprep.mubr.bf16.mxu0 0
      %711 = vmatmul.mubr.bf16.gmra.mxu0 %v597
      %v712 = vpop.f32.mrf.mxu0
      %v713 = vadd.f32 0.0, %v712
      %v714 = vpop.f32.mrf.mxu0
      %v715 = vpop.f32.mrf.mxu0
      %v716 = vadd.f32 0.0, %v715
      %v717 = vpop.f32.mrf.mxu0
      %718 = vmatprep.mubr.bf16.mxu0 0
      %719 = vmatmul.mubr.bf16.gmra.mxu0 %v598
      %v720 = vpop.f32.mrf.mxu0
      %v721 = vadd.f32 0.0, %v720
      %v722 = vpop.f32.mrf.mxu0
      %v723 = vpop.f32.mrf.mxu0
      %v724 = vadd.f32 0.0, %v723
      %v725 = vpop.f32.mrf.mxu0
      %726 = vmatprep.mubr.bf16.mxu0 0
      %727 = vmatmul.mubr.bf16.gmra.mxu0 %v599
      %v728 = vpop.f32.mrf.mxu0
      %v729 = vadd.f32 0.0, %v728
      %v730 = vpop.f32.mrf.mxu0
      %v731 = vpop.f32.mrf.mxu0
      %v732 = vadd.f32 0.0, %v731
      %v733 = vpop.f32.mrf.mxu0
      %734 = vmatprep.mubr.bf16.mxu0 0
      %735 = vmatmul.mubr.bf16.gmra.mxu0 %v600
      %v736 = vpop.f32.mrf.mxu0
      %v737 = vadd.f32 0.0, %v736
      %v738 = vpop.f32.mrf.mxu0
      %v739 = vpop.f32.mrf.mxu0
      %v740 = vadd.f32 0.0, %v739
      %v741 = vpop.f32.mrf.mxu0
      %742 = vmatprep.mubr.bf16.mxu0 0
      %743 = vmatmul.mubr.bf16.gmra.mxu0 %v601
      %v744 = vpop.f32.mrf.mxu0
      %v745 = vadd.f32 0.0, %v744
      %v746 = vpop.f32.mrf.mxu0
      %v747 = vpop.f32.mrf.mxu0
      %v748 = vadd.f32 0.0, %v747
      %v749 = vpop.f32.mrf.mxu0
      %750 = vmatprep.mubr.bf16.mxu0 0
      %751 = vmatmul.mubr.bf16.gmra.mxu0 %v602
      %v752 = vpop.f32.mrf.mxu0
      %v753 = vadd.f32 0.0, %v752
      %v754 = vpop.f32.mrf.mxu0
      %v755 = vpop.f32.mrf.mxu0
      %v756 = vadd.f32 0.0, %v755
      %v757 = vpop.f32.mrf.mxu0
      %758 = vmatprep.mubr.bf16.mxu0 0
      %759 = vmatmul.mubr.bf16.gmra.mxu0 %v603
      %v760 = vpop.f32.mrf.mxu0
      %v761 = vadd.f32 0.0, %v760
      %v762 = vpop.f32.mrf.mxu0
      %v763 = vpop.f32.mrf.mxu0
      %v764 = vadd.f32 0.0, %v763
      %v765 = vpop.f32.mrf.mxu0
      %766 = vmatprep.mubr.bf16.mxu0 0
      %767 = vmatmul.mubr.bf16.gmra.mxu0 %v604
      %v768 = vpop.f32.mrf.mxu0
      %v769 = vadd.f32 0.0, %v768
      %v770 = vpop.f32.mrf.mxu0
      %v771 = vpop.f32.mrf.mxu0
      %v772 = vadd.f32 0.0, %v771
      %v773 = vpop.f32.mrf.mxu0
      %774 = vmatprep.mubr.bf16.mxu0 0
      %775 = vmatmul.mubr.bf16.gmra.mxu0 %v605
      %v776 = vpop.f32.mrf.mxu0
      %v777 = vadd.f32 0.0, %v776
      %v778 = vpop.f32.mrf.mxu0
      %v779 = vpop.f32.mrf.mxu0
      %v780 = vadd.f32 0.0, %v779
      %v781 = vpop.f32.mrf.mxu0
      %782 = vmatprep.mubr.bf16.mxu0 0
      %783 = vmatmul.mubr.bf16.gmra.mxu0 %v606
      %v784 = vpop.f32.mrf.mxu0
      %v785 = vadd.f32 0.0, %v784
      %v786 = vpop.f32.mrf.mxu0
      %v787 = vpop.f32.mrf.mxu0
      %v788 = vadd.f32 0.0, %v787
      %v789 = vpop.f32.mrf.mxu0
      %790 = vmatprep.mubr.bf16.mxu0 0
      %791 = vmatmul.mubr.bf16.gmra.mxu0 %v607
      %v792 = vpop.f32.mrf.mxu0
      %v793 = vadd.f32 0.0, %v792
      %v794 = vpop.f32.mrf.mxu0
      %v795 = vpop.f32.mrf.mxu0
      %v796 = vadd.f32 0.0, %v795
      %v797 = vpop.f32.mrf.mxu0
      %798 = vmatprep.mubr.bf16.mxu0 0
      %799 = vmatmul.mubr.bf16.gmra.mxu0 %v608
      %v800 = vpop.f32.mrf.mxu0
      %v801 = vadd.f32 0.0, %v800
      %v802 = vpop.f32.mrf.mxu0
      %v803 = vpop.f32.mrf.mxu0
      %v804 = vadd.f32 0.0, %v803
      %v805 = vpop.f32.mrf.mxu0
      %806 = vmatprep.mubr.bf16.mxu0 0
      %807 = vmatmul.mubr.bf16.gmra.mxu0 %v609
      %v808 = vpop.f32.mrf.mxu0
      %v809 = vadd.f32 0.0, %v808
      %v810 = vpop.f32.mrf.mxu0
      %v811 = vpop.f32.mrf.mxu0
      %v812 = vadd.f32 0.0, %v811
      %v813 = vpop.f32.mrf.mxu0
      %814 = vmatprep.mubr.bf16.mxu0 0
      %815 = vmatmul.mubr.bf16.gmra.mxu0 %v610
      %v816 = vpop.f32.mrf.mxu0
      %v817 = vadd.f32 0.0, %v816
      %v818 = vpop.f32.mrf.mxu0
      %v819 = vpop.f32.mrf.mxu0
      %v820 = vadd.f32 0.0, %v819
      %v821 = vpop.f32.mrf.mxu0
      %822 = vmatprep.mubr.bf16.mxu0 0
      %823 = vmatmul.mubr.bf16.gmra.mxu0 %v611
      %v824 = vpop.f32.mrf.mxu0
      %v825 = vadd.f32 0.0, %v824
      %v826 = vpop.f32.mrf.mxu0
      %v827 = vpop.f32.mrf.mxu0
      %v828 = vadd.f32 0.0, %v827
      %v829 = vpop.f32.mrf.mxu0
      %830 = vmatprep.mubr.bf16.mxu0 0
      %831 = vmatmul.mubr.bf16.gmra.mxu0 %v612
      %v832 = vpop.f32.mrf.mxu0
      %v833 = vadd.f32 0.0, %v832
      %v834 = vpop.f32.mrf.mxu0
      %v835 = vpop.f32.mrf.mxu0
      %v836 = vadd.f32 0.0, %v835
      %v837 = vpop.f32.mrf.mxu0
      %838 = vdwg.mxu0
      %v855 = vunpack.c.l.b16 %v549
      %v856 = vunpack.c.l.b16 %v550
      %v857 = vunpack.c.l.b16 %v551
      %v858 = vunpack.c.l.b16 %v552
      %v859 = vunpack.c.l.b16 %v553
      %v860 = vunpack.c.l.b16 %v554
      %v861 = vunpack.c.l.b16 %v555
      %v862 = vunpack.c.l.b16 %v556
      %v863 = vunpack.c.l.b16 %v557
      %v864 = vunpack.c.l.b16 %v558
      %v865 = vunpack.c.l.b16 %v559
      %v866 = vunpack.c.l.b16 %v560
      %v867 = vunpack.c.l.b16 %v561
      %v868 = vunpack.c.l.b16 %v562
      %v869 = vunpack.c.l.b16 %v563
      %v870 = vunpack.c.l.b16 %v564
      %v871 = vpack.c.b16 %v856, %v855
      %v872 = vpack.c.b16 %v858, %v857
      %v873 = vpack.c.b16 %v860, %v859
      %v874 = vpack.c.b16 %v862, %v861
      %v875 = vpack.c.b16 %v864, %v863
      %v876 = vpack.c.b16 %v866, %v865
      %v877 = vpack.c.b16 %v868, %v867
      %v878 = vpack.c.b16 %v870, %v869
      %887 = vmatprep.subr.bf16.mxu0 0
      %888 = vmatpush1.bf16.msra.mxu0 %v878
      %889 = vmatprep.subr.bf16.mxu0 0
      %890 = vmatpush1.bf16.msra.mxu0 %v877
      %891 = vmatprep.subr.bf16.mxu0 0
      %892 = vmatpush1.bf16.msra.mxu0 %v876
      %893 = vmatprep.subr.bf16.mxu0 0
      %894 = vmatpush1.bf16.msra.mxu0 %v875
      %895 = vmatprep.subr.bf16.mxu0 0
      %896 = vmatpush1.bf16.msra.mxu0 %v874
      %897 = vmatprep.subr.bf16.mxu0 0
      %898 = vmatpush1.bf16.msra.mxu0 %v873
      %899 = vmatprep.subr.bf16.mxu0 0
      %900 = vmatpush1.bf16.msra.mxu0 %v872
      %901 = vmatprep.subr.bf16.mxu0 0
      %902 = vmatpush1.bf16.msra.mxu0 %v871
      %903 = vmatprep.subr.bf16.mxu0 0
      %904 = vmatpush2.bf16.msra.mxu0 0
      %905 = vmatprep.subr.bf16.mxu0 0
      %906 = vmatpush2.bf16.msra.mxu0 0
      %907 = vmatprep.subr.bf16.mxu0 0
      %908 = vmatpush2.bf16.msra.mxu0 0
      %909 = vmatprep.subr.bf16.mxu0 0
      %910 = vmatpush2.bf16.msra.mxu0 0
      %911 = vmatprep.subr.bf16.mxu0 0
      %912 = vmatpush2.bf16.msra.mxu0 0
      %913 = vmatprep.subr.bf16.mxu0 0
      %914 = vmatpush2.bf16.msra.mxu0 0
      %915 = vmatprep.subr.bf16.mxu0 0
      %916 = vmatpush2.bf16.msra.mxu0 0
      %917 = vmatprep.subr.bf16.mxu0 0
      %918 = vmatpush2.bf16.msra.mxu0 0
      %919 = vmatprep.mubr.bf16.mxu0 0
      %920 = vmatmul.mubr.bf16.gmra.mxu0 %v533
      %v921 = vpop.f32.mrf.mxu0
      %v922 = vadd.f32 %v713, %v921
      %v923 = vpop.f32.mrf.mxu0
      %v924 = vpop.f32.mrf.mxu0
      %v925 = vadd.f32 %v716, %v924
      %v926 = vpop.f32.mrf.mxu0
      %927 = vmatprep.mubr.bf16.mxu0 0
      %928 = vmatmul.mubr.bf16.gmra.mxu0 %v534
      %v929 = vpop.f32.mrf.mxu0
      %v930 = vadd.f32 %v721, %v929
      %v931 = vpop.f32.mrf.mxu0
      %v932 = vpop.f32.mrf.mxu0
      %v933 = vadd.f32 %v724, %v932
      %v934 = vpop.f32.mrf.mxu0
      %935 = vmatprep.mubr.bf16.mxu0 0
      %936 = vmatmul.mubr.bf16.gmra.mxu0 %v535
      %v937 = vpop.f32.mrf.mxu0
      %v938 = vadd.f32 %v729, %v937
      %v939 = vpop.f32.mrf.mxu0
      %v940 = vpop.f32.mrf.mxu0
      %v941 = vadd.f32 %v732, %v940
      %v942 = vpop.f32.mrf.mxu0
      %943 = vmatprep.mubr.bf16.mxu0 0
      %944 = vmatmul.mubr.bf16.gmra.mxu0 %v536
      %v945 = vpop.f32.mrf.mxu0
      %v946 = vadd.f32 %v737, %v945
      %v947 = vpop.f32.mrf.mxu0
      %v948 = vpop.f32.mrf.mxu0
      %v949 = vadd.f32 %v740, %v948
      %v950 = vpop.f32.mrf.mxu0
      %951 = vmatprep.mubr.bf16.mxu0 0
      %952 = vmatmul.mubr.bf16.gmra.mxu0 %v537
      %v953 = vpop.f32.mrf.mxu0
      %v954 = vadd.f32 %v745, %v953
      %v955 = vpop.f32.mrf.mxu0
      %v956 = vpop.f32.mrf.mxu0
      %v957 = vadd.f32 %v748, %v956
      %v958 = vpop.f32.mrf.mxu0
      %959 = vmatprep.mubr.bf16.mxu0 0
      %960 = vmatmul.mubr.bf16.gmra.mxu0 %v538
      %v961 = vpop.f32.mrf.mxu0
      %v962 = vadd.f32 %v753, %v961
      %v963 = vpop.f32.mrf.mxu0
      %v964 = vpop.f32.mrf.mxu0
      %v965 = vadd.f32 %v756, %v964
      %v966 = vpop.f32.mrf.mxu0
      %967 = vmatprep.mubr.bf16.mxu0 0
      %968 = vmatmul.mubr.bf16.gmra.mxu0 %v539
      %v969 = vpop.f32.mrf.mxu0
      %v970 = vadd.f32 %v761, %v969
      %v971 = vpop.f32.mrf.mxu0
      %v972 = vpop.f32.mrf.mxu0
      %v973 = vadd.f32 %v764, %v972
      %v974 = vpop.f32.mrf.mxu0
      %975 = vmatprep.mubr.bf16.mxu0 0
      %976 = vmatmul.mubr.bf16.gmra.mxu0 %v540
      %v977 = vpop.f32.mrf.mxu0
      %v978 = vadd.f32 %v769, %v977
      %v979 = vpop.f32.mrf.mxu0
      %v980 = vpop.f32.mrf.mxu0
      %v981 = vadd.f32 %v772, %v980
      %v982 = vpop.f32.mrf.mxu0
      %983 = vmatprep.mubr.bf16.mxu0 0
      %984 = vmatmul.mubr.bf16.gmra.mxu0 %v541
      %v985 = vpop.f32.mrf.mxu0
      %v986 = vadd.f32 %v777, %v985
      %v987 = vpop.f32.mrf.mxu0
      %v988 = vpop.f32.mrf.mxu0
      %v989 = vadd.f32 %v780, %v988
      %v990 = vpop.f32.mrf.mxu0
      %991 = vmatprep.mubr.bf16.mxu0 0
      %992 = vmatmul.mubr.bf16.gmra.mxu0 %v542
      %v993 = vpop.f32.mrf.mxu0
      %v994 = vadd.f32 %v785, %v993
      %v995 = vpop.f32.mrf.mxu0
      %v996 = vpop.f32.mrf.mxu0
      %v997 = vadd.f32 %v788, %v996
      %v998 = vpop.f32.mrf.mxu0
      %999 = vmatprep.mubr.bf16.mxu0 0
      %1000 = vmatmul.mubr.bf16.gmra.mxu0 %v543
      %v1001 = vpop.f32.mrf.mxu0
      %v1002 = vadd.f32 %v793, %v1001
      %v1003 = vpop.f32.mrf.mxu0
      %v1004 = vpop.f32.mrf.mxu0
      %v1005 = vadd.f32 %v796, %v1004
      %v1006 = vpop.f32.mrf.mxu0
      %1007 = vmatprep.mubr.bf16.mxu0 0
      %1008 = vmatmul.mubr.bf16.gmra.mxu0 %v544
      %v1009 = vpop.f32.mrf.mxu0
      %v1010 = vadd.f32 %v801, %v1009
      %v1011 = vpop.f32.mrf.mxu0
      %v1012 = vpop.f32.mrf.mxu0
      %v1013 = vadd.f32 %v804, %v1012
      %v1014 = vpop.f32.mrf.mxu0
      %1015 = vmatprep.mubr.bf16.mxu0 0
      %1016 = vmatmul.mubr.bf16.gmra.mxu0 %v545
      %v1017 = vpop.f32.mrf.mxu0
      %v1018 = vadd.f32 %v809, %v1017
      %v1019 = vpop.f32.mrf.mxu0
      %v1020 = vpop.f32.mrf.mxu0
      %v1021 = vadd.f32 %v812, %v1020
      %v1022 = vpop.f32.mrf.mxu0
      %1023 = vmatprep.mubr.bf16.mxu0 0
      %1024 = vmatmul.mubr.bf16.gmra.mxu0 %v546
      %v1025 = vpop.f32.mrf.mxu0
      %v1026 = vadd.f32 %v817, %v1025
      %v1027 = vpop.f32.mrf.mxu0
      %v1028 = vpop.f32.mrf.mxu0
      %v1029 = vadd.f32 %v820, %v1028
      %v1030 = vpop.f32.mrf.mxu0
      %1031 = vmatprep.mubr.bf16.mxu0 0
      %1032 = vmatmul.mubr.bf16.gmra.mxu0 %v547
      %v1033 = vpop.f32.mrf.mxu0
      %v1034 = vadd.f32 %v825, %v1033
      %v1035 = vpop.f32.mrf.mxu0
      %v1036 = vpop.f32.mrf.mxu0
      %v1037 = vadd.f32 %v828, %v1036
      %v1038 = vpop.f32.mrf.mxu0
      %1039 = vmatprep.mubr.bf16.mxu0 0
      %1040 = vmatmul.mubr.bf16.gmra.mxu0 %v548
      %v1041 = vpop.f32.mrf.mxu0
      %v1042 = vadd.f32 %v833, %v1041
      %v1043 = vpop.f32.mrf.mxu0
      %v1044 = vpop.f32.mrf.mxu0
      %v1045 = vadd.f32 %v836, %v1044
      %v1046 = vpop.f32.mrf.mxu0
      %1047 = vdwg.mxu0
      %v1048 = vld [vmem:[#allocation2 + $0x9] sm:$0xff]
      %v1049 = vld [vmem:[#allocation2 + $0x11] sm:$0xff]
      %v1050 = vld [vmem:[#allocation2 + $0x29] sm:$0xff]
      %v1051 = vld [vmem:[#allocation2 + $0x31] sm:$0xff]
      %v1052 = vld [vmem:[#allocation2 + $0x49] sm:$0xff]
      %v1053 = vld [vmem:[#allocation2 + $0x51] sm:$0xff]
      %v1054 = vld [vmem:[#allocation2 + $0x69] sm:$0xff]
      %v1055 = vld [vmem:[#allocation2 + $0x71] sm:$0xff]
      %v1056 = vld [vmem:[#allocation2 + $0x89] sm:$0xff]
      %v1057 = vld [vmem:[#allocation2 + $0x91] sm:$0xff]
      %v1058 = vld [vmem:[#allocation2 + $0xa9] sm:$0xff]
      %v1059 = vld [vmem:[#allocation2 + $0xb1] sm:$0xff]
      %v1060 = vld [vmem:[#allocation2 + $0xc9] sm:$0xff]
      %v1061 = vld [vmem:[#allocation2 + $0xd1] sm:$0xff]
      %v1062 = vld [vmem:[#allocation2 + $0xe9] sm:$0xff]
      %v1063 = vld [vmem:[#allocation2 + $0xf1] sm:$0xff]
      %v1064 = vld [vmem:[#allocation2 + $0x109] sm:$0xff]
      %v1065 = vld [vmem:[#allocation2 + $0x111] sm:$0xff]
      %v1066 = vld [vmem:[#allocation2 + $0x129] sm:$0xff]
      %v1067 = vld [vmem:[#allocation2 + $0x131] sm:$0xff]
      %v1068 = vld [vmem:[#allocation2 + $0x149] sm:$0xff]
      %v1069 = vld [vmem:[#allocation2 + $0x151] sm:$0xff]
      %v1070 = vld [vmem:[#allocation2 + $0x169] sm:$0xff]
      %v1071 = vld [vmem:[#allocation2 + $0x171] sm:$0xff]
      %v1072 = vld [vmem:[#allocation2 + $0x189] sm:$0xff]
      %v1073 = vld [vmem:[#allocation2 + $0x191] sm:$0xff]
      %v1074 = vld [vmem:[#allocation2 + $0x1a9] sm:$0xff]
      %v1075 = vld [vmem:[#allocation2 + $0x1b1] sm:$0xff]
      %v1076 = vld [vmem:[#allocation2 + $0x1c9] sm:$0xff]
      %v1077 = vld [vmem:[#allocation2 + $0x1d1] sm:$0xff]
      %v1078 = vld [vmem:[#allocation2 + $0x1e9] sm:$0xff]
      %v1079 = vld [vmem:[#allocation2 + $0x1f1] sm:$0xff]
      %v1080 = vpack.c.bf16 %v1049, %v1048
      %v1081 = vpack.c.bf16 %v1051, %v1050
      %v1082 = vpack.c.bf16 %v1053, %v1052
      %v1083 = vpack.c.bf16 %v1055, %v1054
      %v1084 = vpack.c.bf16 %v1057, %v1056
      %v1085 = vpack.c.bf16 %v1059, %v1058
      %v1086 = vpack.c.bf16 %v1061, %v1060
      %v1087 = vpack.c.bf16 %v1063, %v1062
      %v1088 = vpack.c.bf16 %v1065, %v1064
      %v1089 = vpack.c.bf16 %v1067, %v1066
      %v1090 = vpack.c.bf16 %v1069, %v1068
      %v1091 = vpack.c.bf16 %v1071, %v1070
      %v1092 = vpack.c.bf16 %v1073, %v1072
      %v1093 = vpack.c.bf16 %v1075, %v1074
      %v1094 = vpack.c.bf16 %v1077, %v1076
      %v1095 = vpack.c.bf16 %v1079, %v1078
      %s1096 = scalar_lea.vmem %s1, 128
      %v1097 = vld [vmem:[%s1096] sm:$0xf]
      %v1098 = vld [vmem:[%s1096 + $0x4] sm:$0xf]
      %v1099 = vld [vmem:[%s1096 + $0x8] sm:$0xf]
      %v1100 = vld [vmem:[%s1096 + $0xc] sm:$0xf]
      %v1101 = vld [vmem:[%s1096 + $0x10] sm:$0xf]
      %v1102 = vld [vmem:[%s1096 + $0x14] sm:$0xf]
      %v1103 = vld [vmem:[%s1096 + $0x18] sm:$0xf]
      %v1104 = vld [vmem:[%s1096 + $0x1c] sm:$0xf]
      %v1105 = vld [vmem:[%s1096 + $0x20] sm:$0xf]
      %v1106 = vld [vmem:[%s1096 + $0x24] sm:$0xf]
      %v1107 = vld [vmem:[%s1096 + $0x28] sm:$0xf]
      %v1108 = vld [vmem:[%s1096 + $0x2c] sm:$0xf]
      %v1109 = vld [vmem:[%s1096 + $0x30] sm:$0xf]
      %v1110 = vld [vmem:[%s1096 + $0x34] sm:$0xf]
      %v1111 = vld [vmem:[%s1096 + $0x38] sm:$0xf]
      %v1112 = vld [vmem:[%s1096 + $0x3c] sm:$0xf]
      %v1129 = vunpack.c.l.b16 %v1097
      %v1130 = vunpack.c.l.b16 %v1098
      %v1131 = vunpack.c.l.b16 %v1099
      %v1132 = vunpack.c.l.b16 %v1100
      %v1133 = vunpack.c.l.b16 %v1101
      %v1134 = vunpack.c.l.b16 %v1102
      %v1135 = vunpack.c.l.b16 %v1103
      %v1136 = vunpack.c.l.b16 %v1104
      %v1137 = vunpack.c.l.b16 %v1105
      %v1138 = vunpack.c.l.b16 %v1106
      %v1139 = vunpack.c.l.b16 %v1107
      %v1140 = vunpack.c.l.b16 %v1108
      %v1141 = vunpack.c.l.b16 %v1109
      %v1142 = vunpack.c.l.b16 %v1110
      %v1143 = vunpack.c.l.b16 %v1111
      %v1144 = vunpack.c.l.b16 %v1112
      %v1145 = vpack.c.b16 %v1130, %v1129
      %v1146 = vpack.c.b16 %v1132, %v1131
      %v1147 = vpack.c.b16 %v1134, %v1133
      %v1148 = vpack.c.b16 %v1136, %v1135
      %v1149 = vpack.c.b16 %v1138, %v1137
      %v1150 = vpack.c.b16 %v1140, %v1139
      %v1151 = vpack.c.b16 %v1142, %v1141
      %v1152 = vpack.c.b16 %v1144, %v1143
      %1161 = vmatprep.subr.bf16.mxu0 0
      %1162 = vmatpush1.bf16.msra.mxu0 %v1152
      %1163 = vmatprep.subr.bf16.mxu0 0
      %1164 = vmatpush1.bf16.msra.mxu0 %v1151
      %1165 = vmatprep.subr.bf16.mxu0 0
      %1166 = vmatpush1.bf16.msra.mxu0 %v1150
      %1167 = vmatprep.subr.bf16.mxu0 0
      %1168 = vmatpush1.bf16.msra.mxu0 %v1149
      %1169 = vmatprep.subr.bf16.mxu0 0
      %1170 = vmatpush1.bf16.msra.mxu0 %v1148
      %1171 = vmatprep.subr.bf16.mxu0 0
      %1172 = vmatpush1.bf16.msra.mxu0 %v1147
      %1173 = vmatprep.subr.bf16.mxu0 0
      %1174 = vmatpush1.bf16.msra.mxu0 %v1146
      %1175 = vmatprep.subr.bf16.mxu0 0
      %1176 = vmatpush1.bf16.msra.mxu0 %v1145
      %1177 = vmatprep.subr.bf16.mxu0 0
      %1178 = vmatpush2.bf16.msra.mxu0 0
      %1179 = vmatprep.subr.bf16.mxu0 0
      %1180 = vmatpush2.bf16.msra.mxu0 0
      %1181 = vmatprep.subr.bf16.mxu0 0
      %1182 = vmatpush2.bf16.msra.mxu0 0
      %1183 = vmatprep.subr.bf16.mxu0 0
      %1184 = vmatpush2.bf16.msra.mxu0 0
      %1185 = vmatprep.subr.bf16.mxu0 0
      %1186 = vmatpush2.bf16.msra.mxu0 0
      %1187 = vmatprep.subr.bf16.mxu0 0
      %1188 = vmatpush2.bf16.msra.mxu0 0
      %1189 = vmatprep.subr.bf16.mxu0 0
      %1190 = vmatpush2.bf16.msra.mxu0 0
      %1191 = vmatprep.subr.bf16.mxu0 0
      %1192 = vmatpush2.bf16.msra.mxu0 0
      %1193 = vmatprep.mubr.bf16.mxu0 0
      %1194 = vmatmul.mubr.bf16.gmra.mxu0 %v1080
      %v1195 = vpop.f32.mrf.mxu0
      %v1196 = vadd.f32 0.0, %v1195
      %v1197 = vpop.f32.mrf.mxu0
      %v1198 = vpop.f32.mrf.mxu0
      %v1199 = vadd.f32 0.0, %v1198
      %v1200 = vpop.f32.mrf.mxu0
      %1201 = vmatprep.mubr.bf16.mxu0 0
      %1202 = vmatmul.mubr.bf16.gmra.mxu0 %v1081
      %v1203 = vpop.f32.mrf.mxu0
      %v1204 = vadd.f32 0.0, %v1203
      %v1205 = vpop.f32.mrf.mxu0
      %v1206 = vpop.f32.mrf.mxu0
      %v1207 = vadd.f32 0.0, %v1206
      %v1208 = vpop.f32.mrf.mxu0
      %1209 = vmatprep.mubr.bf16.mxu0 0
      %1210 = vmatmul.mubr.bf16.gmra.mxu0 %v1082
      %v1211 = vpop.f32.mrf.mxu0
      %v1212 = vadd.f32 0.0, %v1211
      %v1213 = vpop.f32.mrf.mxu0
      %v1214 = vpop.f32.mrf.mxu0
      %v1215 = vadd.f32 0.0, %v1214
      %v1216 = vpop.f32.mrf.mxu0
      %1217 = vmatprep.mubr.bf16.mxu0 0
      %1218 = vmatmul.mubr.bf16.gmra.mxu0 %v1083
      %v1219 = vpop.f32.mrf.mxu0
      %v1220 = vadd.f32 0.0, %v1219
      %v1221 = vpop.f32.mrf.mxu0
      %v1222 = vpop.f32.mrf.mxu0
      %v1223 = vadd.f32 0.0, %v1222
      %v1224 = vpop.f32.mrf.mxu0
      %1225 = vmatprep.mubr.bf16.mxu0 0
      %1226 = vmatmul.mubr.bf16.gmra.mxu0 %v1084
      %v1227 = vpop.f32.mrf.mxu0
      %v1228 = vadd.f32 0.0, %v1227
      %v1229 = vpop.f32.mrf.mxu0
      %v1230 = vpop.f32.mrf.mxu0
      %v1231 = vadd.f32 0.0, %v1230
      %v1232 = vpop.f32.mrf.mxu0
      %1233 = vmatprep.mubr.bf16.mxu0 0
      %1234 = vmatmul.mubr.bf16.gmra.mxu0 %v1085
      %v1235 = vpop.f32.mrf.mxu0
      %v1236 = vadd.f32 0.0, %v1235
      %v1237 = vpop.f32.mrf.mxu0
      %v1238 = vpop.f32.mrf.mxu0
      %v1239 = vadd.f32 0.0, %v1238
      %v1240 = vpop.f32.mrf.mxu0
      %1241 = vmatprep.mubr.bf16.mxu0 0
      %1242 = vmatmul.mubr.bf16.gmra.mxu0 %v1086
      %v1243 = vpop.f32.mrf.mxu0
      %v1244 = vadd.f32 0.0, %v1243
      %v1245 = vpop.f32.mrf.mxu0
      %v1246 = vpop.f32.mrf.mxu0
      %v1247 = vadd.f32 0.0, %v1246
      %v1248 = vpop.f32.mrf.mxu0
      %1249 = vmatprep.mubr.bf16.mxu0 0
      %1250 = vmatmul.mubr.bf16.gmra.mxu0 %v1087
      %v1251 = vpop.f32.mrf.mxu0
      %v1252 = vadd.f32 0.0, %v1251
      %v1253 = vpop.f32.mrf.mxu0
      %v1254 = vpop.f32.mrf.mxu0
      %v1255 = vadd.f32 0.0, %v1254
      %v1256 = vpop.f32.mrf.mxu0
      %1257 = vmatprep.mubr.bf16.mxu0 0
      %1258 = vmatmul.mubr.bf16.gmra.mxu0 %v1088
      %v1259 = vpop.f32.mrf.mxu0
      %v1260 = vadd.f32 0.0, %v1259
      %v1261 = vpop.f32.mrf.mxu0
      %v1262 = vpop.f32.mrf.mxu0
      %v1263 = vadd.f32 0.0, %v1262
      %v1264 = vpop.f32.mrf.mxu0
      %1265 = vmatprep.mubr.bf16.mxu0 0
      %1266 = vmatmul.mubr.bf16.gmra.mxu0 %v1089
      %v1267 = vpop.f32.mrf.mxu0
      %v1268 = vadd.f32 0.0, %v1267
      %v1269 = vpop.f32.mrf.mxu0
      %v1270 = vpop.f32.mrf.mxu0
      %v1271 = vadd.f32 0.0, %v1270
      %v1272 = vpop.f32.mrf.mxu0
      %1273 = vmatprep.mubr.bf16.mxu0 0
      %1274 = vmatmul.mubr.bf16.gmra.mxu0 %v1090
      %v1275 = vpop.f32.mrf.mxu0
      %v1276 = vadd.f32 0.0, %v1275
      %v1277 = vpop.f32.mrf.mxu0
      %v1278 = vpop.f32.mrf.mxu0
      %v1279 = vadd.f32 0.0, %v1278
      %v1280 = vpop.f32.mrf.mxu0
      %1281 = vmatprep.mubr.bf16.mxu0 0
      %1282 = vmatmul.mubr.bf16.gmra.mxu0 %v1091
      %v1283 = vpop.f32.mrf.mxu0
      %v1284 = vadd.f32 0.0, %v1283
      %v1285 = vpop.f32.mrf.mxu0
      %v1286 = vpop.f32.mrf.mxu0
      %v1287 = vadd.f32 0.0, %v1286
      %v1288 = vpop.f32.mrf.mxu0
      %1289 = vmatprep.mubr.bf16.mxu0 0
      %1290 = vmatmul.mubr.bf16.gmra.mxu0 %v1092
      %v1291 = vpop.f32.mrf.mxu0
      %v1292 = vadd.f32 0.0, %v1291
      %v1293 = vpop.f32.mrf.mxu0
      %v1294 = vpop.f32.mrf.mxu0
      %v1295 = vadd.f32 0.0, %v1294
      %v1296 = vpop.f32.mrf.mxu0
      %1297 = vmatprep.mubr.bf16.mxu0 0
      %1298 = vmatmul.mubr.bf16.gmra.mxu0 %v1093
      %v1299 = vpop.f32.mrf.mxu0
      %v1300 = vadd.f32 0.0, %v1299
      %v1301 = vpop.f32.mrf.mxu0
      %v1302 = vpop.f32.mrf.mxu0
      %v1303 = vadd.f32 0.0, %v1302
      %v1304 = vpop.f32.mrf.mxu0
      %1305 = vmatprep.mubr.bf16.mxu0 0
      %1306 = vmatmul.mubr.bf16.gmra.mxu0 %v1094
      %v1307 = vpop.f32.mrf.mxu0
      %v1308 = vadd.f32 0.0, %v1307
      %v1309 = vpop.f32.mrf.mxu0
      %v1310 = vpop.f32.mrf.mxu0
      %v1311 = vadd.f32 0.0, %v1310
      %v1312 = vpop.f32.mrf.mxu0
      %1313 = vmatprep.mubr.bf16.mxu0 0
      %1314 = vmatmul.mubr.bf16.gmra.mxu0 %v1095
      %v1315 = vpop.f32.mrf.mxu0
      %v1316 = vadd.f32 0.0, %v1315
      %v1317 = vpop.f32.mrf.mxu0
      %v1318 = vpop.f32.mrf.mxu0
      %v1319 = vadd.f32 0.0, %v1318
      %v1320 = vpop.f32.mrf.mxu0
      %1321 = vdwg.mxu0
      %v1322 = vadd.f32 %v922, %v1196
      %v1323 = vadd.f32 %v925, %v1199
      %v1324 = vadd.f32 %v930, %v1204
      %v1325 = vadd.f32 %v933, %v1207
      %v1326 = vadd.f32 %v938, %v1212
      %v1327 = vadd.f32 %v941, %v1215
      %v1328 = vadd.f32 %v946, %v1220
      %v1329 = vadd.f32 %v949, %v1223
      %v1330 = vadd.f32 %v954, %v1228
      %v1331 = vadd.f32 %v957, %v1231
      %v1332 = vadd.f32 %v962, %v1236
      %v1333 = vadd.f32 %v965, %v1239
      %v1334 = vadd.f32 %v970, %v1244
      %v1335 = vadd.f32 %v973, %v1247
      %v1336 = vadd.f32 %v978, %v1252
      %v1337 = vadd.f32 %v981, %v1255
      %v1338 = vadd.f32 %v986, %v1260
      %v1339 = vadd.f32 %v989, %v1263
      %v1340 = vadd.f32 %v994, %v1268
      %v1341 = vadd.f32 %v997, %v1271
      %v1342 = vadd.f32 %v1002, %v1276
      %v1343 = vadd.f32 %v1005, %v1279
      %v1344 = vadd.f32 %v1010, %v1284
      %v1345 = vadd.f32 %v1013, %v1287
      %v1346 = vadd.f32 %v1018, %v1292
      %v1347 = vadd.f32 %v1021, %v1295
      %v1348 = vadd.f32 %v1026, %v1300
      %v1349 = vadd.f32 %v1029, %v1303
      %v1350 = vadd.f32 %v1034, %v1308
      %v1351 = vadd.f32 %v1037, %v1311
      %v1352 = vadd.f32 %v1042, %v1316
      %v1353 = vadd.f32 %v1045, %v1319
      %v1354 = vld [vmem:[%s468 + $0x7] sm:$0xff]
      %v1355 = vld [vmem:[%s468 + $0xf] sm:$0xff]
      %v1356 = vld [vmem:[%s468 + $0x27] sm:$0xff]
      %v1357 = vld [vmem:[%s468 + $0x2f] sm:$0xff]
      %v1358 = vld [vmem:[%s468 + $0x47] sm:$0xff]
      %v1359 = vld [vmem:[%s468 + $0x4f] sm:$0xff]
      %v1360 = vld [vmem:[%s468 + $0x67] sm:$0xff]
      %v1361 = vld [vmem:[%s468 + $0x6f] sm:$0xff]
      %v1362 = vld [vmem:[%s468 + $0x87] sm:$0xff]
      %v1363 = vld [vmem:[%s468 + $0x8f] sm:$0xff]
      %v1364 = vld [vmem:[%s468 + $0xa7] sm:$0xff]
      %v1365 = vld [vmem:[%s468 + $0xaf] sm:$0xff]
      %v1366 = vld [vmem:[%s468 + $0xc7] sm:$0xff]
      %v1367 = vld [vmem:[%s468 + $0xcf] sm:$0xff]
      %v1368 = vld [vmem:[%s468 + $0xe7] sm:$0xff]
      %v1369 = vld [vmem:[%s468 + $0xef] sm:$0xff]
      %v1370 = vld [vmem:[%s468 + $0x107] sm:$0xff]
      %v1371 = vld [vmem:[%s468 + $0x10f] sm:$0xff]
      %v1372 = vld [vmem:[%s468 + $0x127] sm:$0xff]
      %v1373 = vld [vmem:[%s468 + $0x12f] sm:$0xff]
      %v1374 = vld [vmem:[%s468 + $0x147] sm:$0xff]
      %v1375 = vld [vmem:[%s468 + $0x14f] sm:$0xff]
      %v1376 = vld [vmem:[%s468 + $0x167] sm:$0xff]
      %v1377 = vld [vmem:[%s468 + $0x16f] sm:$0xff]
      %v1378 = vld [vmem:[%s468 + $0x187] sm:$0xff]
      %v1379 = vld [vmem:[%s468 + $0x18f] sm:$0xff]
      %v1380 = vld [vmem:[%s468 + $0x1a7] sm:$0xff]
      %v1381 = vld [vmem:[%s468 + $0x1af] sm:$0xff]
      %v1382 = vld [vmem:[%s468 + $0x1c7] sm:$0xff]
      %v1383 = vld [vmem:[%s468 + $0x1cf] sm:$0xff]
      %v1384 = vld [vmem:[%s468 + $0x1e7] sm:$0xff]
      %v1385 = vld [vmem:[%s468 + $0x1ef] sm:$0xff]
      %v1386 = vpack.c.bf16 %v1355, %v1354
      %v1387 = vpack.c.bf16 %v1357, %v1356
      %v1388 = vpack.c.bf16 %v1359, %v1358
      %v1389 = vpack.c.bf16 %v1361, %v1360
      %v1390 = vpack.c.bf16 %v1363, %v1362
      %v1391 = vpack.c.bf16 %v1365, %v1364
      %v1392 = vpack.c.bf16 %v1367, %v1366
      %v1393 = vpack.c.bf16 %v1369, %v1368
      %v1394 = vpack.c.bf16 %v1371, %v1370
      %v1395 = vpack.c.bf16 %v1373, %v1372
      %v1396 = vpack.c.bf16 %v1375, %v1374
      %v1397 = vpack.c.bf16 %v1377, %v1376
      %v1398 = vpack.c.bf16 %v1379, %v1378
      %v1399 = vpack.c.bf16 %v1381, %v1380
      %v1400 = vpack.c.bf16 %v1383, %v1382
      %v1401 = vpack.c.bf16 %v1385, %v1384
      %s1402 = scalar_lea.vmem %s1, 192
      %v1403 = vld [vmem:[%s1402] sm:$0xf]
      %v1404 = vld [vmem:[%s1402 + $0x4] sm:$0xf]
      %v1405 = vld [vmem:[%s1402 + $0x8] sm:$0xf]
      %v1406 = vld [vmem:[%s1402 + $0xc] sm:$0xf]
      %v1407 = vld [vmem:[%s1402 + $0x10] sm:$0xf]
      %v1408 = vld [vmem:[%s1402 + $0x14] sm:$0xf]
      %v1409 = vld [vmem:[%s1402 + $0x18] sm:$0xf]
      %v1410 = vld [vmem:[%s1402 + $0x1c] sm:$0xf]
      %v1411 = vld [vmem:[%s1402 + $0x20] sm:$0xf]
      %v1412 = vld [vmem:[%s1402 + $0x24] sm:$0xf]
      %v1413 = vld [vmem:[%s1402 + $0x28] sm:$0xf]
      %v1414 = vld [vmem:[%s1402 + $0x2c] sm:$0xf]
      %v1415 = vld [vmem:[%s1402 + $0x30] sm:$0xf]
      %v1416 = vld [vmem:[%s1402 + $0x34] sm:$0xf]
      %v1417 = vld [vmem:[%s1402 + $0x38] sm:$0xf]
      %v1418 = vld [vmem:[%s1402 + $0x3c] sm:$0xf]
      %v1435 = vunpack.c.l.b16 %v1403
      %v1436 = vunpack.c.l.b16 %v1404
      %v1437 = vunpack.c.l.b16 %v1405
      %v1438 = vunpack.c.l.b16 %v1406
      %v1439 = vunpack.c.l.b16 %v1407
      %v1440 = vunpack.c.l.b16 %v1408
      %v1441 = vunpack.c.l.b16 %v1409
      %v1442 = vunpack.c.l.b16 %v1410
      %v1443 = vunpack.c.l.b16 %v1411
      %v1444 = vunpack.c.l.b16 %v1412
      %v1445 = vunpack.c.l.b16 %v1413
      %v1446 = vunpack.c.l.b16 %v1414
      %v1447 = vunpack.c.l.b16 %v1415
      %v1448 = vunpack.c.l.b16 %v1416
      %v1449 = vunpack.c.l.b16 %v1417
      %v1450 = vunpack.c.l.b16 %v1418
      %v1451 = vpack.c.b16 %v1436, %v1435
      %v1452 = vpack.c.b16 %v1438, %v1437
      %v1453 = vpack.c.b16 %v1440, %v1439
      %v1454 = vpack.c.b16 %v1442, %v1441
      %v1455 = vpack.c.b16 %v1444, %v1443
      %v1456 = vpack.c.b16 %v1446, %v1445
      %v1457 = vpack.c.b16 %v1448, %v1447
      %v1458 = vpack.c.b16 %v1450, %v1449
      %1467 = vmatprep.subr.bf16.mxu0 0
      %1468 = vmatpush1.bf16.msra.mxu0 %v1458
      %1469 = vmatprep.subr.bf16.mxu0 0
      %1470 = vmatpush1.bf16.msra.mxu0 %v1457
      %1471 = vmatprep.subr.bf16.mxu0 0
      %1472 = vmatpush1.bf16.msra.mxu0 %v1456
      %1473 = vmatprep.subr.bf16.mxu0 0
      %1474 = vmatpush1.bf16.msra.mxu0 %v1455
      %1475 = vmatprep.subr.bf16.mxu0 0
      %1476 = vmatpush1.bf16.msra.mxu0 %v1454
      %1477 = vmatprep.subr.bf16.mxu0 0
      %1478 = vmatpush1.bf16.msra.mxu0 %v1453
      %1479 = vmatprep.subr.bf16.mxu0 0
      %1480 = vmatpush1.bf16.msra.mxu0 %v1452
      %1481 = vmatprep.subr.bf16.mxu0 0
      %1482 = vmatpush1.bf16.msra.mxu0 %v1451
      %1483 = vmatprep.subr.bf16.mxu0 0
      %1484 = vmatpush2.bf16.msra.mxu0 0
      %1485 = vmatprep.subr.bf16.mxu0 0
      %1486 = vmatpush2.bf16.msra.mxu0 0
      %1487 = vmatprep.subr.bf16.mxu0 0
      %1488 = vmatpush2.bf16.msra.mxu0 0
      %1489 = vmatprep.subr.bf16.mxu0 0
      %1490 = vmatpush2.bf16.msra.mxu0 0
      %1491 = vmatprep.subr.bf16.mxu0 0
      %1492 = vmatpush2.bf16.msra.mxu0 0
      %1493 = vmatprep.subr.bf16.mxu0 0
      %1494 = vmatpush2.bf16.msra.mxu0 0
      %1495 = vmatprep.subr.bf16.mxu0 0
      %1496 = vmatpush2.bf16.msra.mxu0 0
      %1497 = vmatprep.subr.bf16.mxu0 0
      %1498 = vmatpush2.bf16.msra.mxu0 0
      %1499 = vmatprep.mubr.bf16.mxu0 0
      %1500 = vmatmul.mubr.bf16.gmra.mxu0 %v1386
      %v1501 = vpop.f32.mrf.mxu0
      %v1502 = vadd.f32 0.0, %v1501
      %v1503 = vpop.f32.mrf.mxu0
      %v1504 = vpop.f32.mrf.mxu0
      %v1505 = vadd.f32 0.0, %v1504
      %v1506 = vpop.f32.mrf.mxu0
      %1507 = vmatprep.mubr.bf16.mxu0 0
      %1508 = vmatmul.mubr.bf16.gmra.mxu0 %v1387
      %v1509 = vpop.f32.mrf.mxu0
      %v1510 = vadd.f32 0.0, %v1509
      %v1511 = vpop.f32.mrf.mxu0
      %v1512 = vpop.f32.mrf.mxu0
      %v1513 = vadd.f32 0.0, %v1512
      %v1514 = vpop.f32.mrf.mxu0
      %1515 = vmatprep.mubr.bf16.mxu0 0
      %1516 = vmatmul.mubr.bf16.gmra.mxu0 %v1388
      %v1517 = vpop.f32.mrf.mxu0
      %v1518 = vadd.f32 0.0, %v1517
      %v1519 = vpop.f32.mrf.mxu0
      %v1520 = vpop.f32.mrf.mxu0
      %v1521 = vadd.f32 0.0, %v1520
      %v1522 = vpop.f32.mrf.mxu0
      %1523 = vmatprep.mubr.bf16.mxu0 0
      %1524 = vmatmul.mubr.bf16.gmra.mxu0 %v1389
      %v1525 = vpop.f32.mrf.mxu0
      %v1526 = vadd.f32 0.0, %v1525
      %v1527 = vpop.f32.mrf.mxu0
      %v1528 = vpop.f32.mrf.mxu0
      %v1529 = vadd.f32 0.0, %v1528
      %v1530 = vpop.f32.mrf.mxu0
      %1531 = vmatprep.mubr.bf16.mxu0 0
      %1532 = vmatmul.mubr.bf16.gmra.mxu0 %v1390
      %v1533 = vpop.f32.mrf.mxu0
      %v1534 = vadd.f32 0.0, %v1533
      %v1535 = vpop.f32.mrf.mxu0
      %v1536 = vpop.f32.mrf.mxu0
      %v1537 = vadd.f32 0.0, %v1536
      %v1538 = vpop.f32.mrf.mxu0
      %1539 = vmatprep.mubr.bf16.mxu0 0
      %1540 = vmatmul.mubr.bf16.gmra.mxu0 %v1391
      %v1541 = vpop.f32.mrf.mxu0
      %v1542 = vadd.f32 0.0, %v1541
      %v1543 = vpop.f32.mrf.mxu0
      %v1544 = vpop.f32.mrf.mxu0
      %v1545 = vadd.f32 0.0, %v1544
      %v1546 = vpop.f32.mrf.mxu0
      %1547 = vmatprep.mubr.bf16.mxu0 0
      %1548 = vmatmul.mubr.bf16.gmra.mxu0 %v1392
      %v1549 = vpop.f32.mrf.mxu0
      %v1550 = vadd.f32 0.0, %v1549
      %v1551 = vpop.f32.mrf.mxu0
      %v1552 = vpop.f32.mrf.mxu0
      %v1553 = vadd.f32 0.0, %v1552
      %v1554 = vpop.f32.mrf.mxu0
      %1555 = vmatprep.mubr.bf16.mxu0 0
      %1556 = vmatmul.mubr.bf16.gmra.mxu0 %v1393
      %v1557 = vpop.f32.mrf.mxu0
      %v1558 = vadd.f32 0.0, %v1557
      %v1559 = vpop.f32.mrf.mxu0
      %v1560 = vpop.f32.mrf.mxu0
      %v1561 = vadd.f32 0.0, %v1560
      %v1562 = vpop.f32.mrf.mxu0
      %1563 = vmatprep.mubr.bf16.mxu0 0
      %1564 = vmatmul.mubr.bf16.gmra.mxu0 %v1394
      %v1565 = vpop.f32.mrf.mxu0
      %v1566 = vadd.f32 0.0, %v1565
      %v1567 = vpop.f32.mrf.mxu0
      %v1568 = vpop.f32.mrf.mxu0
      %v1569 = vadd.f32 0.0, %v1568
      %v1570 = vpop.f32.mrf.mxu0
      %1571 = vmatprep.mubr.bf16.mxu0 0
      %1572 = vmatmul.mubr.bf16.gmra.mxu0 %v1395
      %v1573 = vpop.f32.mrf.mxu0
      %v1574 = vadd.f32 0.0, %v1573
      %v1575 = vpop.f32.mrf.mxu0
      %v1576 = vpop.f32.mrf.mxu0
      %v1577 = vadd.f32 0.0, %v1576
      %v1578 = vpop.f32.mrf.mxu0
      %1579 = vmatprep.mubr.bf16.mxu0 0
      %1580 = vmatmul.mubr.bf16.gmra.mxu0 %v1396
      %v1581 = vpop.f32.mrf.mxu0
      %v1582 = vadd.f32 0.0, %v1581
      %v1583 = vpop.f32.mrf.mxu0
      %v1584 = vpop.f32.mrf.mxu0
      %v1585 = vadd.f32 0.0, %v1584
      %v1586 = vpop.f32.mrf.mxu0
      %1587 = vmatprep.mubr.bf16.mxu0 0
      %1588 = vmatmul.mubr.bf16.gmra.mxu0 %v1397
      %v1589 = vpop.f32.mrf.mxu0
      %v1590 = vadd.f32 0.0, %v1589
      %v1591 = vpop.f32.mrf.mxu0
      %v1592 = vpop.f32.mrf.mxu0
      %v1593 = vadd.f32 0.0, %v1592
      %v1594 = vpop.f32.mrf.mxu0
      %1595 = vmatprep.mubr.bf16.mxu0 0
      %1596 = vmatmul.mubr.bf16.gmra.mxu0 %v1398
      %v1597 = vpop.f32.mrf.mxu0
      %v1598 = vadd.f32 0.0, %v1597
      %v1599 = vpop.f32.mrf.mxu0
      %v1600 = vpop.f32.mrf.mxu0
      %v1601 = vadd.f32 0.0, %v1600
      %v1602 = vpop.f32.mrf.mxu0
      %1603 = vmatprep.mubr.bf16.mxu0 0
      %1604 = vmatmul.mubr.bf16.gmra.mxu0 %v1399
      %v1605 = vpop.f32.mrf.mxu0
      %v1606 = vadd.f32 0.0, %v1605
      %v1607 = vpop.f32.mrf.mxu0
      %v1608 = vpop.f32.mrf.mxu0
      %v1609 = vadd.f32 0.0, %v1608
      %v1610 = vpop.f32.mrf.mxu0
      %1611 = vmatprep.mubr.bf16.mxu0 0
      %1612 = vmatmul.mubr.bf16.gmra.mxu0 %v1400
      %v1613 = vpop.f32.mrf.mxu0
      %v1614 = vadd.f32 0.0, %v1613
      %v1615 = vpop.f32.mrf.mxu0
      %v1616 = vpop.f32.mrf.mxu0
      %v1617 = vadd.f32 0.0, %v1616
      %v1618 = vpop.f32.mrf.mxu0
      %1619 = vmatprep.mubr.bf16.mxu0 0
      %1620 = vmatmul.mubr.bf16.gmra.mxu0 %v1401
      %v1621 = vpop.f32.mrf.mxu0
      %v1622 = vadd.f32 0.0, %v1621
      %v1623 = vpop.f32.mrf.mxu0
      %v1624 = vpop.f32.mrf.mxu0
      %v1625 = vadd.f32 0.0, %v1624
      %v1626 = vpop.f32.mrf.mxu0
      %1627 = vdwg.mxu0
      %v1628 = vadd.f32 %v1322, %v1502
      %v1629 = vadd.f32 %v1323, %v1505
      %v1630 = vadd.f32 %v1324, %v1510
      %v1631 = vadd.f32 %v1325, %v1513
      %v1632 = vadd.f32 %v1326, %v1518
      %v1633 = vadd.f32 %v1327, %v1521
      %v1634 = vadd.f32 %v1328, %v1526
      %v1635 = vadd.f32 %v1329, %v1529
      %v1636 = vadd.f32 %v1330, %v1534
      %v1637 = vadd.f32 %v1331, %v1537
      %v1638 = vadd.f32 %v1332, %v1542
      %v1639 = vadd.f32 %v1333, %v1545
      %v1640 = vadd.f32 %v1334, %v1550
      %v1641 = vadd.f32 %v1335, %v1553
      %v1642 = vadd.f32 %v1336, %v1558
      %v1643 = vadd.f32 %v1337, %v1561
      %v1644 = vadd.f32 %v1338, %v1566
      %v1645 = vadd.f32 %v1339, %v1569
      %v1646 = vadd.f32 %v1340, %v1574
      %v1647 = vadd.f32 %v1341, %v1577
      %v1648 = vadd.f32 %v1342, %v1582
      %v1649 = vadd.f32 %v1343, %v1585
      %v1650 = vadd.f32 %v1344, %v1590
      %v1651 = vadd.f32 %v1345, %v1593
      %v1652 = vadd.f32 %v1346, %v1598
      %v1653 = vadd.f32 %v1347, %v1601
      %v1654 = vadd.f32 %v1348, %v1606
      %v1655 = vadd.f32 %v1349, %v1609
      %v1656 = vadd.f32 %v1350, %v1614
      %v1657 = vadd.f32 %v1351, %v1617
      %v1658 = vadd.f32 %v1352, %v1622
      %v1659 = vadd.f32 %v1353, %v1625
      %v1660 = vld [vmem:[%s468 + $0x8] sm:$0xff]
      %v1661 = vld [vmem:[%s468 + $0x10] sm:$0xff]
      %v1662 = vld [vmem:[%s468 + $0x28] sm:$0xff]
      %v1663 = vld [vmem:[%s468 + $0x30] sm:$0xff]
      %v1664 = vld [vmem:[%s468 + $0x48] sm:$0xff]
      %v1665 = vld [vmem:[%s468 + $0x50] sm:$0xff]
      %v1666 = vld [vmem:[%s468 + $0x68] sm:$0xff]
      %v1667 = vld [vmem:[%s468 + $0x70] sm:$0xff]
      %v1668 = vld [vmem:[%s468 + $0x88] sm:$0xff]
      %v1669 = vld [vmem:[%s468 + $0x90] sm:$0xff]
      %v1670 = vld [vmem:[%s468 + $0xa8] sm:$0xff]
      %v1671 = vld [vmem:[%s468 + $0xb0] sm:$0xff]
      %v1672 = vld [vmem:[%s468 + $0xc8] sm:$0xff]
      %v1673 = vld [vmem:[%s468 + $0xd0] sm:$0xff]
      %v1674 = vld [vmem:[%s468 + $0xe8] sm:$0xff]
      %v1675 = vld [vmem:[%s468 + $0xf0] sm:$0xff]
      %v1676 = vld [vmem:[%s468 + $0x108] sm:$0xff]
      %v1677 = vld [vmem:[%s468 + $0x110] sm:$0xff]
      %v1678 = vld [vmem:[%s468 + $0x128] sm:$0xff]
      %v1679 = vld [vmem:[%s468 + $0x130] sm:$0xff]
      %v1680 = vld [vmem:[%s468 + $0x148] sm:$0xff]
      %v1681 = vld [vmem:[%s468 + $0x150] sm:$0xff]
      %v1682 = vld [vmem:[%s468 + $0x168] sm:$0xff]
      %v1683 = vld [vmem:[%s468 + $0x170] sm:$0xff]
      %v1684 = vld [vmem:[%s468 + $0x188] sm:$0xff]
      %v1685 = vld [vmem:[%s468 + $0x190] sm:$0xff]
      %v1686 = vld [vmem:[%s468 + $0x1a8] sm:$0xff]
      %v1687 = vld [vmem:[%s468 + $0x1b0] sm:$0xff]
      %v1688 = vld [vmem:[%s468 + $0x1c8] sm:$0xff]
      %v1689 = vld [vmem:[%s468 + $0x1d0] sm:$0xff]
      %v1690 = vld [vmem:[%s468 + $0x1e8] sm:$0xff]
      %v1691 = vld [vmem:[%s468 + $0x1f0] sm:$0xff]
      %v1692 = vpack.c.bf16 %v1661, %v1660
      %v1693 = vpack.c.bf16 %v1663, %v1662
      %v1694 = vpack.c.bf16 %v1665, %v1664
      %v1695 = vpack.c.bf16 %v1667, %v1666
      %v1696 = vpack.c.bf16 %v1669, %v1668
      %v1697 = vpack.c.bf16 %v1671, %v1670
      %v1698 = vpack.c.bf16 %v1673, %v1672
      %v1699 = vpack.c.bf16 %v1675, %v1674
      %v1700 = vpack.c.bf16 %v1677, %v1676
      %v1701 = vpack.c.bf16 %v1679, %v1678
      %v1702 = vpack.c.bf16 %v1681, %v1680
      %v1703 = vpack.c.bf16 %v1683, %v1682
      %v1704 = vpack.c.bf16 %v1685, %v1684
      %v1705 = vpack.c.bf16 %v1687, %v1686
      %v1706 = vpack.c.bf16 %v1689, %v1688
      %v1707 = vpack.c.bf16 %v1691, %v1690
      %s1708 = scalar_lea.vmem %s1, 256
      %v1709 = vld [vmem:[%s1708] sm:$0xf]
      %v1710 = vld [vmem:[%s1708 + $0x4] sm:$0xf]
      %v1711 = vld [vmem:[%s1708 + $0x8] sm:$0xf]
      %v1712 = vld [vmem:[%s1708 + $0xc] sm:$0xf]
      %v1713 = vld [vmem:[%s1708 + $0x10] sm:$0xf]
      %v1714 = vld [vmem:[%s1708 + $0x14] sm:$0xf]
      %v1715 = vld [vmem:[%s1708 + $0x18] sm:$0xf]
      %v1716 = vld [vmem:[%s1708 + $0x1c] sm:$0xf]
      %v1717 = vld [vmem:[%s1708 + $0x20] sm:$0xf]
      %v1718 = vld [vmem:[%s1708 + $0x24] sm:$0xf]
      %v1719 = vld [vmem:[%s1708 + $0x28] sm:$0xf]
      %v1720 = vld [vmem:[%s1708 + $0x2c] sm:$0xf]
      %v1721 = vld [vmem:[%s1708 + $0x30] sm:$0xf]
      %v1722 = vld [vmem:[%s1708 + $0x34] sm:$0xf]
      %v1723 = vld [vmem:[%s1708 + $0x38] sm:$0xf]
      %v1724 = vld [vmem:[%s1708 + $0x3c] sm:$0xf]
      %v1741 = vunpack.c.l.b16 %v1709
      %v1742 = vunpack.c.l.b16 %v1710
      %v1743 = vunpack.c.l.b16 %v1711
      %v1744 = vunpack.c.l.b16 %v1712
      %v1745 = vunpack.c.l.b16 %v1713
      %v1746 = vunpack.c.l.b16 %v1714
      %v1747 = vunpack.c.l.b16 %v1715
      %v1748 = vunpack.c.l.b16 %v1716
      %v1749 = vunpack.c.l.b16 %v1717
      %v1750 = vunpack.c.l.b16 %v1718
      %v1751 = vunpack.c.l.b16 %v1719
      %v1752 = vunpack.c.l.b16 %v1720
      %v1753 = vunpack.c.l.b16 %v1721
      %v1754 = vunpack.c.l.b16 %v1722
      %v1755 = vunpack.c.l.b16 %v1723
      %v1756 = vunpack.c.l.b16 %v1724
      %v1757 = vpack.c.b16 %v1742, %v1741
      %v1758 = vpack.c.b16 %v1744, %v1743
      %v1759 = vpack.c.b16 %v1746, %v1745
      %v1760 = vpack.c.b16 %v1748, %v1747
      %v1761 = vpack.c.b16 %v1750, %v1749
      %v1762 = vpack.c.b16 %v1752, %v1751
      %v1763 = vpack.c.b16 %v1754, %v1753
      %v1764 = vpack.c.b16 %v1756, %v1755
      %1773 = vmatprep.subr.bf16.mxu0 0
      %1774 = vmatpush1.bf16.msra.mxu0 %v1764
      %1775 = vmatprep.subr.bf16.mxu0 0
      %1776 = vmatpush1.bf16.msra.mxu0 %v1763
      %1777 = vmatprep.subr.bf16.mxu0 0
      %1778 = vmatpush1.bf16.msra.mxu0 %v1762
      %1779 = vmatprep.subr.bf16.mxu0 0
      %1780 = vmatpush1.bf16.msra.mxu0 %v1761
      %1781 = vmatprep.subr.bf16.mxu0 0
      %1782 = vmatpush1.bf16.msra.mxu0 %v1760
      %1783 = vmatprep.subr.bf16.mxu0 0
      %1784 = vmatpush1.bf16.msra.mxu0 %v1759
      %1785 = vmatprep.subr.bf16.mxu0 0
      %1786 = vmatpush1.bf16.msra.mxu0 %v1758
      %1787 = vmatprep.subr.bf16.mxu0 0
      %1788 = vmatpush1.bf16.msra.mxu0 %v1757
      %1789 = vmatprep.subr.bf16.mxu0 0
      %1790 = vmatpush2.bf16.msra.mxu0 0
      %1791 = vmatprep.subr.bf16.mxu0 0
      %1792 = vmatpush2.bf16.msra.mxu0 0
      %1793 = vmatprep.subr.bf16.mxu0 0
      %1794 = vmatpush2.bf16.msra.mxu0 0
      %1795 = vmatprep.subr.bf16.mxu0 0
      %1796 = vmatpush2.bf16.msra.mxu0 0
      %1797 = vmatprep.subr.bf16.mxu0 0
      %1798 = vmatpush2.bf16.msra.mxu0 0
      %1799 = vmatprep.subr.bf16.mxu0 0
      %1800 = vmatpush2.bf16.msra.mxu0 0
      %1801 = vmatprep.subr.bf16.mxu0 0
      %1802 = vmatpush2.bf16.msra.mxu0 0
      %1803 = vmatprep.subr.bf16.mxu0 0
      %1804 = vmatpush2.bf16.msra.mxu0 0
      %1805 = vmatprep.mubr.bf16.mxu0 0
      %1806 = vmatmul.mubr.bf16.gmra.mxu0 %v1692
      %v1807 = vpop.f32.mrf.mxu0
      %v1808 = vadd.f32 0.0, %v1807
      %v1809 = vpop.f32.mrf.mxu0
      %v1810 = vpop.f32.mrf.mxu0
      %v1811 = vadd.f32 0.0, %v1810
      %v1812 = vpop.f32.mrf.mxu0
      %1813 = vmatprep.mubr.bf16.mxu0 0
      %1814 = vmatmul.mubr.bf16.gmra.mxu0 %v1693
      %v1815 = vpop.f32.mrf.mxu0
      %v1816 = vadd.f32 0.0, %v1815
      %v1817 = vpop.f32.mrf.mxu0
      %v1818 = vpop.f32.mrf.mxu0
      %v1819 = vadd.f32 0.0, %v1818
      %v1820 = vpop.f32.mrf.mxu0
      %1821 = vmatprep.mubr.bf16.mxu0 0
      %1822 = vmatmul.mubr.bf16.gmra.mxu0 %v1694
      %v1823 = vpop.f32.mrf.mxu0
      %v1824 = vadd.f32 0.0, %v1823
      %v1825 = vpop.f32.mrf.mxu0
      %v1826 = vpop.f32.mrf.mxu0
      %v1827 = vadd.f32 0.0, %v1826
      %v1828 = vpop.f32.mrf.mxu0
      %1829 = vmatprep.mubr.bf16.mxu0 0
      %1830 = vmatmul.mubr.bf16.gmra.mxu0 %v1695
      %v1831 = vpop.f32.mrf.mxu0
      %v1832 = vadd.f32 0.0, %v1831
      %v1833 = vpop.f32.mrf.mxu0
      %v1834 = vpop.f32.mrf.mxu0
      %v1835 = vadd.f32 0.0, %v1834
      %v1836 = vpop.f32.mrf.mxu0
      %1837 = vmatprep.mubr.bf16.mxu0 0
      %1838 = vmatmul.mubr.bf16.gmra.mxu0 %v1696
      %v1839 = vpop.f32.mrf.mxu0
      %v1840 = vadd.f32 0.0, %v1839
      %v1841 = vpop.f32.mrf.mxu0
      %v1842 = vpop.f32.mrf.mxu0
      %v1843 = vadd.f32 0.0, %v1842
      %v1844 = vpop.f32.mrf.mxu0
      %1845 = vmatprep.mubr.bf16.mxu0 0
      %1846 = vmatmul.mubr.bf16.gmra.mxu0 %v1697
      %v1847 = vpop.f32.mrf.mxu0
      %v1848 = vadd.f32 0.0, %v1847
      %v1849 = vpop.f32.mrf.mxu0
      %v1850 = vpop.f32.mrf.mxu0
      %v1851 = vadd.f32 0.0, %v1850
      %v1852 = vpop.f32.mrf.mxu0
      %1853 = vmatprep.mubr.bf16.mxu0 0
      %1854 = vmatmul.mubr.bf16.gmra.mxu0 %v1698
      %v1855 = vpop.f32.mrf.mxu0
      %v1856 = vadd.f32 0.0, %v1855
      %v1857 = vpop.f32.mrf.mxu0
      %v1858 = vpop.f32.mrf.mxu0
      %v1859 = vadd.f32 0.0, %v1858
      %v1860 = vpop.f32.mrf.mxu0
      %1861 = vmatprep.mubr.bf16.mxu0 0
      %1862 = vmatmul.mubr.bf16.gmra.mxu0 %v1699
      %v1863 = vpop.f32.mrf.mxu0
      %v1864 = vadd.f32 0.0, %v1863
      %v1865 = vpop.f32.mrf.mxu0
      %v1866 = vpop.f32.mrf.mxu0
      %v1867 = vadd.f32 0.0, %v1866
      %v1868 = vpop.f32.mrf.mxu0
      %1869 = vmatprep.mubr.bf16.mxu0 0
      %1870 = vmatmul.mubr.bf16.gmra.mxu0 %v1700
      %v1871 = vpop.f32.mrf.mxu0
      %v1872 = vadd.f32 0.0, %v1871
      %v1873 = vpop.f32.mrf.mxu0
      %v1874 = vpop.f32.mrf.mxu0
      %v1875 = vadd.f32 0.0, %v1874
      %v1876 = vpop.f32.mrf.mxu0
      %1877 = vmatprep.mubr.bf16.mxu0 0
      %1878 = vmatmul.mubr.bf16.gmra.mxu0 %v1701
      %v1879 = vpop.f32.mrf.mxu0
      %v1880 = vadd.f32 0.0, %v1879
      %v1881 = vpop.f32.mrf.mxu0
      %v1882 = vpop.f32.mrf.mxu0
      %v1883 = vadd.f32 0.0, %v1882
      %v1884 = vpop.f32.mrf.mxu0
      %1885 = vmatprep.mubr.bf16.mxu0 0
      %1886 = vmatmul.mubr.bf16.gmra.mxu0 %v1702
      %v1887 = vpop.f32.mrf.mxu0
      %v1888 = vadd.f32 0.0, %v1887
      %v1889 = vpop.f32.mrf.mxu0
      %v1890 = vpop.f32.mrf.mxu0
      %v1891 = vadd.f32 0.0, %v1890
      %v1892 = vpop.f32.mrf.mxu0
      %1893 = vmatprep.mubr.bf16.mxu0 0
      %1894 = vmatmul.mubr.bf16.gmra.mxu0 %v1703
      %v1895 = vpop.f32.mrf.mxu0
      %v1896 = vadd.f32 0.0, %v1895
      %v1897 = vpop.f32.mrf.mxu0
      %v1898 = vpop.f32.mrf.mxu0
      %v1899 = vadd.f32 0.0, %v1898
      %v1900 = vpop.f32.mrf.mxu0
      %1901 = vmatprep.mubr.bf16.mxu0 0
      %1902 = vmatmul.mubr.bf16.gmra.mxu0 %v1704
      %v1903 = vpop.f32.mrf.mxu0
      %v1904 = vadd.f32 0.0, %v1903
      %v1905 = vpop.f32.mrf.mxu0
      %v1906 = vpop.f32.mrf.mxu0
      %v1907 = vadd.f32 0.0, %v1906
      %v1908 = vpop.f32.mrf.mxu0
      %1909 = vmatprep.mubr.bf16.mxu0 0
      %1910 = vmatmul.mubr.bf16.gmra.mxu0 %v1705
      %v1911 = vpop.f32.mrf.mxu0
      %v1912 = vadd.f32 0.0, %v1911
      %v1913 = vpop.f32.mrf.mxu0
      %v1914 = vpop.f32.mrf.mxu0
      %v1915 = vadd.f32 0.0, %v1914
      %v1916 = vpop.f32.mrf.mxu0
      %1917 = vmatprep.mubr.bf16.mxu0 0
      %1918 = vmatmul.mubr.bf16.gmra.mxu0 %v1706
      %v1919 = vpop.f32.mrf.mxu0
      %v1920 = vadd.f32 0.0, %v1919
      %v1921 = vpop.f32.mrf.mxu0
      %v1922 = vpop.f32.mrf.mxu0
      %v1923 = vadd.f32 0.0, %v1922
      %v1924 = vpop.f32.mrf.mxu0
      %1925 = vmatprep.mubr.bf16.mxu0 0
      %1926 = vmatmul.mubr.bf16.gmra.mxu0 %v1707
      %v1927 = vpop.f32.mrf.mxu0
      %v1928 = vadd.f32 0.0, %v1927
      %v1929 = vpop.f32.mrf.mxu0
      %v1930 = vpop.f32.mrf.mxu0
      %v1931 = vadd.f32 0.0, %v1930
      %v1932 = vpop.f32.mrf.mxu0
      %1933 = vdwg.mxu0
      %v1934 = vadd.f32 %v1628, %v1808
      %v1935 = vadd.f32 %v1629, %v1811
      %v1936 = vadd.f32 %v1630, %v1816
      %v1937 = vadd.f32 %v1631, %v1819
      %v1938 = vadd.f32 %v1632, %v1824
      %v1939 = vadd.f32 %v1633, %v1827
      %v1940 = vadd.f32 %v1634, %v1832
      %v1941 = vadd.f32 %v1635, %v1835
      %v1942 = vadd.f32 %v1636, %v1840
      %v1943 = vadd.f32 %v1637, %v1843
      %v1944 = vadd.f32 %v1638, %v1848
      %v1945 = vadd.f32 %v1639, %v1851
      %v1946 = vadd.f32 %v1640, %v1856
      %v1947 = vadd.f32 %v1641, %v1859
      %v1948 = vadd.f32 %v1642, %v1864
      %v1949 = vadd.f32 %v1643, %v1867
      %v1950 = vadd.f32 %v1644, %v1872
      %v1951 = vadd.f32 %v1645, %v1875
      %v1952 = vadd.f32 %v1646, %v1880
      %v1953 = vadd.f32 %v1647, %v1883
      %v1954 = vadd.f32 %v1648, %v1888
      %v1955 = vadd.f32 %v1649, %v1891
      %v1956 = vadd.f32 %v1650, %v1896
      %v1957 = vadd.f32 %v1651, %v1899
      %v1958 = vadd.f32 %v1652, %v1904
      %v1959 = vadd.f32 %v1653, %v1907
      %v1960 = vadd.f32 %v1654, %v1912
      %v1961 = vadd.f32 %v1655, %v1915
      %v1962 = vadd.f32 %v1656, %v1920
      %v1963 = vadd.f32 %v1657, %v1923
      %v1964 = vadd.f32 %v1658, %v1928
      %v1965 = vadd.f32 %v1659, %v1931
      %v1966 = vld [vmem:[%s468 + $0x9] sm:$0xff]
      %v1967 = vld [vmem:[%s468 + $0x11] sm:$0xff]
      %v1968 = vld [vmem:[%s468 + $0x29] sm:$0xff]
      %v1969 = vld [vmem:[%s468 + $0x31] sm:$0xff]
      %v1970 = vld [vmem:[%s468 + $0x49] sm:$0xff]
      %v1971 = vld [vmem:[%s468 + $0x51] sm:$0xff]
      %v1972 = vld [vmem:[%s468 + $0x69] sm:$0xff]
      %v1973 = vld [vmem:[%s468 + $0x71] sm:$0xff]
      %v1974 = vld [vmem:[%s468 + $0x89] sm:$0xff]
      %v1975 = vld [vmem:[%s468 + $0x91] sm:$0xff]
      %v1976 = vld [vmem:[%s468 + $0xa9] sm:$0xff]
      %v1977 = vld [vmem:[%s468 + $0xb1] sm:$0xff]
      %v1978 = vld [vmem:[%s468 + $0xc9] sm:$0xff]
      %v1979 = vld [vmem:[%s468 + $0xd1] sm:$0xff]
      %v1980 = vld [vmem:[%s468 + $0xe9] sm:$0xff]
      %v1981 = vld [vmem:[%s468 + $0xf1] sm:$0xff]
      %v1982 = vld [vmem:[%s468 + $0x109] sm:$0xff]
      %v1983 = vld [vmem:[%s468 + $0x111] sm:$0xff]
      %v1984 = vld [vmem:[%s468 + $0x129] sm:$0xff]
      %v1985 = vld [vmem:[%s468 + $0x131] sm:$0xff]
      %v1986 = vld [vmem:[%s468 + $0x149] sm:$0xff]
      %v1987 = vld [vmem:[%s468 + $0x151] sm:$0xff]
      %v1988 = vld [vmem:[%s468 + $0x169] sm:$0xff]
      %v1989 = vld [vmem:[%s468 + $0x171] sm:$0xff]
      %v1990 = vld [vmem:[%s468 + $0x189] sm:$0xff]
      %v1991 = vld [vmem:[%s468 + $0x191] sm:$0xff]
      %v1992 = vld [vmem:[%s468 + $0x1a9] sm:$0xff]
      %v1993 = vld [vmem:[%s468 + $0x1b1] sm:$0xff]
      %v1994 = vld [vmem:[%s468 + $0x1c9] sm:$0xff]
      %v1995 = vld [vmem:[%s468 + $0x1d1] sm:$0xff]
      %v1996 = vld [vmem:[%s468 + $0x1e9] sm:$0xff]
      %v1997 = vld [vmem:[%s468 + $0x1f1] sm:$0xff]
      %v1998 = vpack.c.bf16 %v1967, %v1966
      %v1999 = vpack.c.bf16 %v1969, %v1968
      %v2000 = vpack.c.bf16 %v1971, %v1970
      %v2001 = vpack.c.bf16 %v1973, %v1972
      %v2002 = vpack.c.bf16 %v1975, %v1974
      %v2003 = vpack.c.bf16 %v1977, %v1976
      %v2004 = vpack.c.bf16 %v1979, %v1978
      %v2005 = vpack.c.bf16 %v1981, %v1980
      %v2006 = vpack.c.bf16 %v1983, %v1982
      %v2007 = vpack.c.bf16 %v1985, %v1984
      %v2008 = vpack.c.bf16 %v1987, %v1986
      %v2009 = vpack.c.bf16 %v1989, %v1988
      %v2010 = vpack.c.bf16 %v1991, %v1990
      %v2011 = vpack.c.bf16 %v1993, %v1992
      %v2012 = vpack.c.bf16 %v1995, %v1994
      %v2013 = vpack.c.bf16 %v1997, %v1996
      %s2014 = scalar_lea.vmem %s1, 320
      %v2015 = vld [vmem:[%s2014] sm:$0xf]
      %v2016 = vld [vmem:[%s2014 + $0x4] sm:$0xf]
      %v2017 = vld [vmem:[%s2014 + $0x8] sm:$0xf]
      %v2018 = vld [vmem:[%s2014 + $0xc] sm:$0xf]
      %v2019 = vld [vmem:[%s2014 + $0x10] sm:$0xf]
      %v2020 = vld [vmem:[%s2014 + $0x14] sm:$0xf]
      %v2021 = vld [vmem:[%s2014 + $0x18] sm:$0xf]
      %v2022 = vld [vmem:[%s2014 + $0x1c] sm:$0xf]
      %v2023 = vld [vmem:[%s2014 + $0x20] sm:$0xf]
      %v2024 = vld [vmem:[%s2014 + $0x24] sm:$0xf]
      %v2025 = vld [vmem:[%s2014 + $0x28] sm:$0xf]
      %v2026 = vld [vmem:[%s2014 + $0x2c] sm:$0xf]
      %v2027 = vld [vmem:[%s2014 + $0x30] sm:$0xf]
      %v2028 = vld [vmem:[%s2014 + $0x34] sm:$0xf]
      %v2029 = vld [vmem:[%s2014 + $0x38] sm:$0xf]
      %v2030 = vld [vmem:[%s2014 + $0x3c] sm:$0xf]
      %v2047 = vunpack.c.l.b16 %v2015
      %v2048 = vunpack.c.l.b16 %v2016
      %v2049 = vunpack.c.l.b16 %v2017
      %v2050 = vunpack.c.l.b16 %v2018
      %v2051 = vunpack.c.l.b16 %v2019
      %v2052 = vunpack.c.l.b16 %v2020
      %v2053 = vunpack.c.l.b16 %v2021
      %v2054 = vunpack.c.l.b16 %v2022
      %v2055 = vunpack.c.l.b16 %v2023
      %v2056 = vunpack.c.l.b16 %v2024
      %v2057 = vunpack.c.l.b16 %v2025
      %v2058 = vunpack.c.l.b16 %v2026
      %v2059 = vunpack.c.l.b16 %v2027
      %v2060 = vunpack.c.l.b16 %v2028
      %v2061 = vunpack.c.l.b16 %v2029
      %v2062 = vunpack.c.l.b16 %v2030
      %v2063 = vpack.c.b16 %v2048, %v2047
      %v2064 = vpack.c.b16 %v2050, %v2049
      %v2065 = vpack.c.b16 %v2052, %v2051
      %v2066 = vpack.c.b16 %v2054, %v2053
      %v2067 = vpack.c.b16 %v2056, %v2055
      %v2068 = vpack.c.b16 %v2058, %v2057
      %v2069 = vpack.c.b16 %v2060, %v2059
      %v2070 = vpack.c.b16 %v2062, %v2061
      %2079 = vmatprep.subr.bf16.mxu0 0
      %2080 = vmatpush1.bf16.msra.mxu0 %v2070
      %2081 = vmatprep.subr.bf16.mxu0 0
      %2082 = vmatpush1.bf16.msra.mxu0 %v2069
      %2083 = vmatprep.subr.bf16.mxu0 0
      %2084 = vmatpush1.bf16.msra.mxu0 %v2068
      %2085 = vmatprep.subr.bf16.mxu0 0
      %2086 = vmatpush1.bf16.msra.mxu0 %v2067
      %2087 = vmatprep.subr.bf16.mxu0 0
      %2088 = vmatpush1.bf16.msra.mxu0 %v2066
      %2089 = vmatprep.subr.bf16.mxu0 0
      %2090 = vmatpush1.bf16.msra.mxu0 %v2065
      %2091 = vmatprep.subr.bf16.mxu0 0
      %2092 = vmatpush1.bf16.msra.mxu0 %v2064
      %2093 = vmatprep.subr.bf16.mxu0 0
      %2094 = vmatpush1.bf16.msra.mxu0 %v2063
      %2095 = vmatprep.subr.bf16.mxu0 0
      %2096 = vmatpush2.bf16.msra.mxu0 0
      %2097 = vmatprep.subr.bf16.mxu0 0
      %2098 = vmatpush2.bf16.msra.mxu0 0
      %2099 = vmatprep.subr.bf16.mxu0 0
      %2100 = vmatpush2.bf16.msra.mxu0 0
      %2101 = vmatprep.subr.bf16.mxu0 0
      %2102 = vmatpush2.bf16.msra.mxu0 0
      %2103 = vmatprep.subr.bf16.mxu0 0
      %2104 = vmatpush2.bf16.msra.mxu0 0
      %2105 = vmatprep.subr.bf16.mxu0 0
      %2106 = vmatpush2.bf16.msra.mxu0 0
      %2107 = vmatprep.subr.bf16.mxu0 0
      %2108 = vmatpush2.bf16.msra.mxu0 0
      %2109 = vmatprep.subr.bf16.mxu0 0
      %2110 = vmatpush2.bf16.msra.mxu0 0
      %2111 = vmatprep.mubr.bf16.mxu0 0
      %2112 = vmatmul.mubr.bf16.gmra.mxu0 %v1998
      %v2113 = vpop.f32.mrf.mxu0
      %v2114 = vadd.f32 0.0, %v2113
      %v2115 = vpop.f32.mrf.mxu0
      %v2116 = vpop.f32.mrf.mxu0
      %v2117 = vadd.f32 0.0, %v2116
      %v2118 = vpop.f32.mrf.mxu0
      %2119 = vmatprep.mubr.bf16.mxu0 0
      %2120 = vmatmul.mubr.bf16.gmra.mxu0 %v1999
      %v2121 = vpop.f32.mrf.mxu0
      %v2122 = vadd.f32 0.0, %v2121
      %v2123 = vpop.f32.mrf.mxu0
      %v2124 = vpop.f32.mrf.mxu0
      %v2125 = vadd.f32 0.0, %v2124
      %v2126 = vpop.f32.mrf.mxu0
      %2127 = vmatprep.mubr.bf16.mxu0 0
      %2128 = vmatmul.mubr.bf16.gmra.mxu0 %v2000
      %v2129 = vpop.f32.mrf.mxu0
      %v2130 = vadd.f32 0.0, %v2129
      %v2131 = vpop.f32.mrf.mxu0
      %v2132 = vpop.f32.mrf.mxu0
      %v2133 = vadd.f32 0.0, %v2132
      %v2134 = vpop.f32.mrf.mxu0
      %2135 = vmatprep.mubr.bf16.mxu0 0
      %2136 = vmatmul.mubr.bf16.gmra.mxu0 %v2001
      %v2137 = vpop.f32.mrf.mxu0
      %v2138 = vadd.f32 0.0, %v2137
      %v2139 = vpop.f32.mrf.mxu0
      %v2140 = vpop.f32.mrf.mxu0
      %v2141 = vadd.f32 0.0, %v2140
      %v2142 = vpop.f32.mrf.mxu0
      %2143 = vmatprep.mubr.bf16.mxu0 0
      %2144 = vmatmul.mubr.bf16.gmra.mxu0 %v2002
      %v2145 = vpop.f32.mrf.mxu0
      %v2146 = vadd.f32 0.0, %v2145
      %v2147 = vpop.f32.mrf.mxu0
      %v2148 = vpop.f32.mrf.mxu0
      %v2149 = vadd.f32 0.0, %v2148
      %v2150 = vpop.f32.mrf.mxu0
      %2151 = vmatprep.mubr.bf16.mxu0 0
      %2152 = vmatmul.mubr.bf16.gmra.mxu0 %v2003
      %v2153 = vpop.f32.mrf.mxu0
      %v2154 = vadd.f32 0.0, %v2153
      %v2155 = vpop.f32.mrf.mxu0
      %v2156 = vpop.f32.mrf.mxu0
      %v2157 = vadd.f32 0.0, %v2156
      %v2158 = vpop.f32.mrf.mxu0
      %2159 = vmatprep.mubr.bf16.mxu0 0
      %2160 = vmatmul.mubr.bf16.gmra.mxu0 %v2004
      %v2161 = vpop.f32.mrf.mxu0
      %v2162 = vadd.f32 0.0, %v2161
      %v2163 = vpop.f32.mrf.mxu0
      %v2164 = vpop.f32.mrf.mxu0
      %v2165 = vadd.f32 0.0, %v2164
      %v2166 = vpop.f32.mrf.mxu0
      %2167 = vmatprep.mubr.bf16.mxu0 0
      %2168 = vmatmul.mubr.bf16.gmra.mxu0 %v2005
      %v2169 = vpop.f32.mrf.mxu0
      %v2170 = vadd.f32 0.0, %v2169
      %v2171 = vpop.f32.mrf.mxu0
      %v2172 = vpop.f32.mrf.mxu0
      %v2173 = vadd.f32 0.0, %v2172
      %v2174 = vpop.f32.mrf.mxu0
      %2175 = vmatprep.mubr.bf16.mxu0 0
      %2176 = vmatmul.mubr.bf16.gmra.mxu0 %v2006
      %v2177 = vpop.f32.mrf.mxu0
      %v2178 = vadd.f32 0.0, %v2177
      %v2179 = vpop.f32.mrf.mxu0
      %v2180 = vpop.f32.mrf.mxu0
      %v2181 = vadd.f32 0.0, %v2180
      %v2182 = vpop.f32.mrf.mxu0
      %2183 = vmatprep.mubr.bf16.mxu0 0
      %2184 = vmatmul.mubr.bf16.gmra.mxu0 %v2007
      %v2185 = vpop.f32.mrf.mxu0
      %v2186 = vadd.f32 0.0, %v2185
      %v2187 = vpop.f32.mrf.mxu0
      %v2188 = vpop.f32.mrf.mxu0
      %v2189 = vadd.f32 0.0, %v2188
      %v2190 = vpop.f32.mrf.mxu0
      %2191 = vmatprep.mubr.bf16.mxu0 0
      %2192 = vmatmul.mubr.bf16.gmra.mxu0 %v2008
      %v2193 = vpop.f32.mrf.mxu0
      %v2194 = vadd.f32 0.0, %v2193
      %v2195 = vpop.f32.mrf.mxu0
      %v2196 = vpop.f32.mrf.mxu0
      %v2197 = vadd.f32 0.0, %v2196
      %v2198 = vpop.f32.mrf.mxu0
      %2199 = vmatprep.mubr.bf16.mxu0 0
      %2200 = vmatmul.mubr.bf16.gmra.mxu0 %v2009
      %v2201 = vpop.f32.mrf.mxu0
      %v2202 = vadd.f32 0.0, %v2201
      %v2203 = vpop.f32.mrf.mxu0
      %v2204 = vpop.f32.mrf.mxu0
      %v2205 = vadd.f32 0.0, %v2204
      %v2206 = vpop.f32.mrf.mxu0
      %2207 = vmatprep.mubr.bf16.mxu0 0
      %2208 = vmatmul.mubr.bf16.gmra.mxu0 %v2010
      %v2209 = vpop.f32.mrf.mxu0
      %v2210 = vadd.f32 0.0, %v2209
      %v2211 = vpop.f32.mrf.mxu0
      %v2212 = vpop.f32.mrf.mxu0
      %v2213 = vadd.f32 0.0, %v2212
      %v2214 = vpop.f32.mrf.mxu0
      %2215 = vmatprep.mubr.bf16.mxu0 0
      %2216 = vmatmul.mubr.bf16.gmra.mxu0 %v2011
      %v2217 = vpop.f32.mrf.mxu0
      %v2218 = vadd.f32 0.0, %v2217
      %v2219 = vpop.f32.mrf.mxu0
      %v2220 = vpop.f32.mrf.mxu0
      %v2221 = vadd.f32 0.0, %v2220
      %v2222 = vpop.f32.mrf.mxu0
      %2223 = vmatprep.mubr.bf16.mxu0 0
      %2224 = vmatmul.mubr.bf16.gmra.mxu0 %v2012
      %v2225 = vpop.f32.mrf.mxu0
      %v2226 = vadd.f32 0.0, %v2225
      %v2227 = vpop.f32.mrf.mxu0
      %v2228 = vpop.f32.mrf.mxu0
      %v2229 = vadd.f32 0.0, %v2228
      %v2230 = vpop.f32.mrf.mxu0
      %2231 = vmatprep.mubr.bf16.mxu0 0
      %2232 = vmatmul.mubr.bf16.gmra.mxu0 %v2013
      %v2233 = vpop.f32.mrf.mxu0
      %v2234 = vadd.f32 0.0, %v2233
      %v2235 = vpop.f32.mrf.mxu0
      %v2236 = vpop.f32.mrf.mxu0
      %v2237 = vadd.f32 0.0, %v2236
      %v2238 = vpop.f32.mrf.mxu0
      %2239 = vdwg.mxu0
      %v2240 = vadd.f32 %v1934, %v2114
      %v2241 = vadd.f32 %v1935, %v2117
      %v2242 = vadd.f32 %v1936, %v2122
      %v2243 = vadd.f32 %v1937, %v2125
      %v2244 = vadd.f32 %v1938, %v2130
      %v2245 = vadd.f32 %v1939, %v2133
      %v2246 = vadd.f32 %v1940, %v2138
      %v2247 = vadd.f32 %v1941, %v2141
      %v2248 = vadd.f32 %v1942, %v2146
      %v2249 = vadd.f32 %v1943, %v2149
      %v2250 = vadd.f32 %v1944, %v2154
      %v2251 = vadd.f32 %v1945, %v2157
      %v2252 = vadd.f32 %v1946, %v2162
      %v2253 = vadd.f32 %v1947, %v2165
      %v2254 = vadd.f32 %v1948, %v2170
      %v2255 = vadd.f32 %v1949, %v2173
      %v2256 = vadd.f32 %v1950, %v2178
      %v2257 = vadd.f32 %v1951, %v2181
      %v2258 = vadd.f32 %v1952, %v2186
      %v2259 = vadd.f32 %v1953, %v2189
      %v2260 = vadd.f32 %v1954, %v2194
      %v2261 = vadd.f32 %v1955, %v2197
      %v2262 = vadd.f32 %v1956, %v2202
      %v2263 = vadd.f32 %v1957, %v2205
      %v2264 = vadd.f32 %v1958, %v2210
      %v2265 = vadd.f32 %v1959, %v2213
      %v2266 = vadd.f32 %v1960, %v2218
      %v2267 = vadd.f32 %v1961, %v2221
      %v2268 = vadd.f32 %v1962, %v2226
      %v2269 = vadd.f32 %v1963, %v2229
      %v2270 = vadd.f32 %v1964, %v2234
      %v2271 = vadd.f32 %v1965, %v2237
      %s2272 = scalar_lea.vmem [#allocation2], 64
      %v2273 = vld [vmem:[%s2272 + $0x7] sm:$0xff]
      %v2274 = vld [vmem:[%s2272 + $0xf] sm:$0xff]
      %v2275 = vld [vmem:[%s2272 + $0x27] sm:$0xff]
      %v2276 = vld [vmem:[%s2272 + $0x2f] sm:$0xff]
      %v2277 = vld [vmem:[%s2272 + $0x47] sm:$0xff]
      %v2278 = vld [vmem:[%s2272 + $0x4f] sm:$0xff]
      %v2279 = vld [vmem:[%s2272 + $0x67] sm:$0xff]
      %v2280 = vld [vmem:[%s2272 + $0x6f] sm:$0xff]
      %v2281 = vld [vmem:[%s2272 + $0x87] sm:$0xff]
      %v2282 = vld [vmem:[%s2272 + $0x8f] sm:$0xff]
      %v2283 = vld [vmem:[%s2272 + $0xa7] sm:$0xff]
      %v2284 = vld [vmem:[%s2272 + $0xaf] sm:$0xff]
      %v2285 = vld [vmem:[%s2272 + $0xc7] sm:$0xff]
      %v2286 = vld [vmem:[%s2272 + $0xcf] sm:$0xff]
      %v2287 = vld [vmem:[%s2272 + $0xe7] sm:$0xff]
      %v2288 = vld [vmem:[%s2272 + $0xef] sm:$0xff]
      %v2289 = vld [vmem:[%s2272 + $0x107] sm:$0xff]
      %v2290 = vld [vmem:[%s2272 + $0x10f] sm:$0xff]
      %v2291 = vld [vmem:[%s2272 + $0x127] sm:$0xff]
      %v2292 = vld [vmem:[%s2272 + $0x12f] sm:$0xff]
      %v2293 = vld [vmem:[%s2272 + $0x147] sm:$0xff]
      %v2294 = vld [vmem:[%s2272 + $0x14f] sm:$0xff]
      %v2295 = vld [vmem:[%s2272 + $0x167] sm:$0xff]
      %v2296 = vld [vmem:[%s2272 + $0x16f] sm:$0xff]
      %v2297 = vld [vmem:[%s2272 + $0x187] sm:$0xff]
      %v2298 = vld [vmem:[%s2272 + $0x18f] sm:$0xff]
      %v2299 = vld [vmem:[%s2272 + $0x1a7] sm:$0xff]
      %v2300 = vld [vmem:[%s2272 + $0x1af] sm:$0xff]
      %v2301 = vld [vmem:[%s2272 + $0x1c7] sm:$0xff]
      %v2302 = vld [vmem:[%s2272 + $0x1cf] sm:$0xff]
      %v2303 = vld [vmem:[%s2272 + $0x1e7] sm:$0xff]
      %v2304 = vld [vmem:[%s2272 + $0x1ef] sm:$0xff]
      %v2305 = vpack.c.bf16 %v2274, %v2273
      %v2306 = vpack.c.bf16 %v2276, %v2275
      %v2307 = vpack.c.bf16 %v2278, %v2277
      %v2308 = vpack.c.bf16 %v2280, %v2279
      %v2309 = vpack.c.bf16 %v2282, %v2281
      %v2310 = vpack.c.bf16 %v2284, %v2283
      %v2311 = vpack.c.bf16 %v2286, %v2285
      %v2312 = vpack.c.bf16 %v2288, %v2287
      %v2313 = vpack.c.bf16 %v2290, %v2289
      %v2314 = vpack.c.bf16 %v2292, %v2291
      %v2315 = vpack.c.bf16 %v2294, %v2293
      %v2316 = vpack.c.bf16 %v2296, %v2295
      %v2317 = vpack.c.bf16 %v2298, %v2297
      %v2318 = vpack.c.bf16 %v2300, %v2299
      %v2319 = vpack.c.bf16 %v2302, %v2301
      %v2320 = vpack.c.bf16 %v2304, %v2303
      %s2321 = scalar_lea.vmem %s1, 384
      %v2322 = vld [vmem:[%s2321] sm:$0xf]
      %v2323 = vld [vmem:[%s2321 + $0x4] sm:$0xf]
      %v2324 = vld [vmem:[%s2321 + $0x8] sm:$0xf]
      %v2325 = vld [vmem:[%s2321 + $0xc] sm:$0xf]
      %v2326 = vld [vmem:[%s2321 + $0x10] sm:$0xf]
      %v2327 = vld [vmem:[%s2321 + $0x14] sm:$0xf]
      %v2328 = vld [vmem:[%s2321 + $0x18] sm:$0xf]
      %v2329 = vld [vmem:[%s2321 + $0x1c] sm:$0xf]
      %v2330 = vld [vmem:[%s2321 + $0x20] sm:$0xf]
      %v2331 = vld [vmem:[%s2321 + $0x24] sm:$0xf]
      %v2332 = vld [vmem:[%s2321 + $0x28] sm:$0xf]
      %v2333 = vld [vmem:[%s2321 + $0x2c] sm:$0xf]
      %v2334 = vld [vmem:[%s2321 + $0x30] sm:$0xf]
      %v2335 = vld [vmem:[%s2321 + $0x34] sm:$0xf]
      %v2336 = vld [vmem:[%s2321 + $0x38] sm:$0xf]
      %v2337 = vld [vmem:[%s2321 + $0x3c] sm:$0xf]
      %v2354 = vunpack.c.l.b16 %v2322
      %v2355 = vunpack.c.l.b16 %v2323
      %v2356 = vunpack.c.l.b16 %v2324
      %v2357 = vunpack.c.l.b16 %v2325
      %v2358 = vunpack.c.l.b16 %v2326
      %v2359 = vunpack.c.l.b16 %v2327
      %v2360 = vunpack.c.l.b16 %v2328
      %v2361 = vunpack.c.l.b16 %v2329
      %v2362 = vunpack.c.l.b16 %v2330
      %v2363 = vunpack.c.l.b16 %v2331
      %v2364 = vunpack.c.l.b16 %v2332
      %v2365 = vunpack.c.l.b16 %v2333
      %v2366 = vunpack.c.l.b16 %v2334
      %v2367 = vunpack.c.l.b16 %v2335
      %v2368 = vunpack.c.l.b16 %v2336
      %v2369 = vunpack.c.l.b16 %v2337
      %v2370 = vpack.c.b16 %v2355, %v2354
      %v2371 = vpack.c.b16 %v2357, %v2356
      %v2372 = vpack.c.b16 %v2359, %v2358
      %v2373 = vpack.c.b16 %v2361, %v2360
      %v2374 = vpack.c.b16 %v2363, %v2362
      %v2375 = vpack.c.b16 %v2365, %v2364
      %v2376 = vpack.c.b16 %v2367, %v2366
      %v2377 = vpack.c.b16 %v2369, %v2368
      %2386 = vmatprep.subr.bf16.mxu0 0
      %2387 = vmatpush1.bf16.msra.mxu0 %v2377
      %2388 = vmatprep.subr.bf16.mxu0 0
      %2389 = vmatpush1.bf16.msra.mxu0 %v2376
      %2390 = vmatprep.subr.bf16.mxu0 0
      %2391 = vmatpush1.bf16.msra.mxu0 %v2375
      %2392 = vmatprep.subr.bf16.mxu0 0
      %2393 = vmatpush1.bf16.msra.mxu0 %v2374
      %2394 = vmatprep.subr.bf16.mxu0 0
      %2395 = vmatpush1.bf16.msra.mxu0 %v2373
      %2396 = vmatprep.subr.bf16.mxu0 0
      %2397 = vmatpush1.bf16.msra.mxu0 %v2372
      %2398 = vmatprep.subr.bf16.mxu0 0
      %2399 = vmatpush1.bf16.msra.mxu0 %v2371
      %2400 = vmatprep.subr.bf16.mxu0 0
      %2401 = vmatpush1.bf16.msra.mxu0 %v2370
      %2402 = vmatprep.subr.bf16.mxu0 0
      %2403 = vmatpush2.bf16.msra.mxu0 0
      %2404 = vmatprep.subr.bf16.mxu0 0
      %2405 = vmatpush2.bf16.msra.mxu0 0
      %2406 = vmatprep.subr.bf16.mxu0 0
      %2407 = vmatpush2.bf16.msra.mxu0 0
      %2408 = vmatprep.subr.bf16.mxu0 0
      %2409 = vmatpush2.bf16.msra.mxu0 0
      %2410 = vmatprep.subr.bf16.mxu0 0
      %2411 = vmatpush2.bf16.msra.mxu0 0
      %2412 = vmatprep.subr.bf16.mxu0 0
      %2413 = vmatpush2.bf16.msra.mxu0 0
      %2414 = vmatprep.subr.bf16.mxu0 0
      %2415 = vmatpush2.bf16.msra.mxu0 0
      %2416 = vmatprep.subr.bf16.mxu0 0
      %2417 = vmatpush2.bf16.msra.mxu0 0
      %2418 = vmatprep.mubr.bf16.mxu0 0
      %2419 = vmatmul.mubr.bf16.gmra.mxu0 %v2305
      %v2420 = vpop.f32.mrf.mxu0
      %v2421 = vadd.f32 0.0, %v2420
      %v2422 = vpop.f32.mrf.mxu0
      %v2423 = vpop.f32.mrf.mxu0
      %v2424 = vadd.f32 0.0, %v2423
      %v2425 = vpop.f32.mrf.mxu0
      %2426 = vmatprep.mubr.bf16.mxu0 0
      %2427 = vmatmul.mubr.bf16.gmra.mxu0 %v2306
      %v2428 = vpop.f32.mrf.mxu0
      %v2429 = vadd.f32 0.0, %v2428
      %v2430 = vpop.f32.mrf.mxu0
      %v2431 = vpop.f32.mrf.mxu0
      %v2432 = vadd.f32 0.0, %v2431
      %v2433 = vpop.f32.mrf.mxu0
      %2434 = vmatprep.mubr.bf16.mxu0 0
      %2435 = vmatmul.mubr.bf16.gmra.mxu0 %v2307
      %v2436 = vpop.f32.mrf.mxu0
      %v2437 = vadd.f32 0.0, %v2436
      %v2438 = vpop.f32.mrf.mxu0
      %v2439 = vpop.f32.mrf.mxu0
      %v2440 = vadd.f32 0.0, %v2439
      %v2441 = vpop.f32.mrf.mxu0
      %2442 = vmatprep.mubr.bf16.mxu0 0
      %2443 = vmatmul.mubr.bf16.gmra.mxu0 %v2308
      %v2444 = vpop.f32.mrf.mxu0
      %v2445 = vadd.f32 0.0, %v2444
      %v2446 = vpop.f32.mrf.mxu0
      %v2447 = vpop.f32.mrf.mxu0
      %v2448 = vadd.f32 0.0, %v2447
      %v2449 = vpop.f32.mrf.mxu0
      %2450 = vmatprep.mubr.bf16.mxu0 0
      %2451 = vmatmul.mubr.bf16.gmra.mxu0 %v2309
      %v2452 = vpop.f32.mrf.mxu0
      %v2453 = vadd.f32 0.0, %v2452
      %v2454 = vpop.f32.mrf.mxu0
      %v2455 = vpop.f32.mrf.mxu0
      %v2456 = vadd.f32 0.0, %v2455
      %v2457 = vpop.f32.mrf.mxu0
      %2458 = vmatprep.mubr.bf16.mxu0 0
      %2459 = vmatmul.mubr.bf16.gmra.mxu0 %v2310
      %v2460 = vpop.f32.mrf.mxu0
      %v2461 = vadd.f32 0.0, %v2460
      %v2462 = vpop.f32.mrf.mxu0
      %v2463 = vpop.f32.mrf.mxu0
      %v2464 = vadd.f32 0.0, %v2463
      %v2465 = vpop.f32.mrf.mxu0
      %2466 = vmatprep.mubr.bf16.mxu0 0
      %2467 = vmatmul.mubr.bf16.gmra.mxu0 %v2311
      %v2468 = vpop.f32.mrf.mxu0
      %v2469 = vadd.f32 0.0, %v2468
      %v2470 = vpop.f32.mrf.mxu0
      %v2471 = vpop.f32.mrf.mxu0
      %v2472 = vadd.f32 0.0, %v2471
      %v2473 = vpop.f32.mrf.mxu0
      %2474 = vmatprep.mubr.bf16.mxu0 0
      %2475 = vmatmul.mubr.bf16.gmra.mxu0 %v2312
      %v2476 = vpop.f32.mrf.mxu0
      %v2477 = vadd.f32 0.0, %v2476
      %v2478 = vpop.f32.mrf.mxu0
      %v2479 = vpop.f32.mrf.mxu0
      %v2480 = vadd.f32 0.0, %v2479
      %v2481 = vpop.f32.mrf.mxu0
      %2482 = vmatprep.mubr.bf16.mxu0 0
      %2483 = vmatmul.mubr.bf16.gmra.mxu0 %v2313
      %v2484 = vpop.f32.mrf.mxu0
      %v2485 = vadd.f32 0.0, %v2484
      %v2486 = vpop.f32.mrf.mxu0
      %v2487 = vpop.f32.mrf.mxu0
      %v2488 = vadd.f32 0.0, %v2487
      %v2489 = vpop.f32.mrf.mxu0
      %2490 = vmatprep.mubr.bf16.mxu0 0
      %2491 = vmatmul.mubr.bf16.gmra.mxu0 %v2314
      %v2492 = vpop.f32.mrf.mxu0
      %v2493 = vadd.f32 0.0, %v2492
      %v2494 = vpop.f32.mrf.mxu0
      %v2495 = vpop.f32.mrf.mxu0
      %v2496 = vadd.f32 0.0, %v2495
      %v2497 = vpop.f32.mrf.mxu0
      %2498 = vmatprep.mubr.bf16.mxu0 0
      %2499 = vmatmul.mubr.bf16.gmra.mxu0 %v2315
      %v2500 = vpop.f32.mrf.mxu0
      %v2501 = vadd.f32 0.0, %v2500
      %v2502 = vpop.f32.mrf.mxu0
      %v2503 = vpop.f32.mrf.mxu0
      %v2504 = vadd.f32 0.0, %v2503
      %v2505 = vpop.f32.mrf.mxu0
      %2506 = vmatprep.mubr.bf16.mxu0 0
      %2507 = vmatmul.mubr.bf16.gmra.mxu0 %v2316
      %v2508 = vpop.f32.mrf.mxu0
      %v2509 = vadd.f32 0.0, %v2508
      %v2510 = vpop.f32.mrf.mxu0
      %v2511 = vpop.f32.mrf.mxu0
      %v2512 = vadd.f32 0.0, %v2511
      %v2513 = vpop.f32.mrf.mxu0
      %2514 = vmatprep.mubr.bf16.mxu0 0
      %2515 = vmatmul.mubr.bf16.gmra.mxu0 %v2317
      %v2516 = vpop.f32.mrf.mxu0
      %v2517 = vadd.f32 0.0, %v2516
      %v2518 = vpop.f32.mrf.mxu0
      %v2519 = vpop.f32.mrf.mxu0
      %v2520 = vadd.f32 0.0, %v2519
      %v2521 = vpop.f32.mrf.mxu0
      %2522 = vmatprep.mubr.bf16.mxu0 0
      %2523 = vmatmul.mubr.bf16.gmra.mxu0 %v2318
      %v2524 = vpop.f32.mrf.mxu0
      %v2525 = vadd.f32 0.0, %v2524
      %v2526 = vpop.f32.mrf.mxu0
      %v2527 = vpop.f32.mrf.mxu0
      %v2528 = vadd.f32 0.0, %v2527
      %v2529 = vpop.f32.mrf.mxu0
      %2530 = vmatprep.mubr.bf16.mxu0 0
      %2531 = vmatmul.mubr.bf16.gmra.mxu0 %v2319
      %v2532 = vpop.f32.mrf.mxu0
      %v2533 = vadd.f32 0.0, %v2532
      %v2534 = vpop.f32.mrf.mxu0
      %v2535 = vpop.f32.mrf.mxu0
      %v2536 = vadd.f32 0.0, %v2535
      %v2537 = vpop.f32.mrf.mxu0
      %2538 = vmatprep.mubr.bf16.mxu0 0
      %2539 = vmatmul.mubr.bf16.gmra.mxu0 %v2320
      %v2540 = vpop.f32.mrf.mxu0
      %v2541 = vadd.f32 0.0, %v2540
      %v2542 = vpop.f32.mrf.mxu0
      %v2543 = vpop.f32.mrf.mxu0
      %v2544 = vadd.f32 0.0, %v2543
      %v2545 = vpop.f32.mrf.mxu0
      %2546 = vdwg.mxu0
      %v2547 = vadd.f32 %v2240, %v2421
      %v2548 = vadd.f32 %v2241, %v2424
      %v2549 = vadd.f32 %v2242, %v2429
      %v2550 = vadd.f32 %v2243, %v2432
      %v2551 = vadd.f32 %v2244, %v2437
      %v2552 = vadd.f32 %v2245, %v2440
      %v2553 = vadd.f32 %v2246, %v2445
      %v2554 = vadd.f32 %v2247, %v2448
      %v2555 = vadd.f32 %v2248, %v2453
      %v2556 = vadd.f32 %v2249, %v2456
      %v2557 = vadd.f32 %v2250, %v2461
      %v2558 = vadd.f32 %v2251, %v2464
      %v2559 = vadd.f32 %v2252, %v2469
      %v2560 = vadd.f32 %v2253, %v2472
      %v2561 = vadd.f32 %v2254, %v2477
      %v2562 = vadd.f32 %v2255, %v2480
      %v2563 = vadd.f32 %v2256, %v2485
      %v2564 = vadd.f32 %v2257, %v2488
      %v2565 = vadd.f32 %v2258, %v2493
      %v2566 = vadd.f32 %v2259, %v2496
      %v2567 = vadd.f32 %v2260, %v2501
      %v2568 = vadd.f32 %v2261, %v2504
      %v2569 = vadd.f32 %v2262, %v2509
      %v2570 = vadd.f32 %v2263, %v2512
      %v2571 = vadd.f32 %v2264, %v2517
      %v2572 = vadd.f32 %v2265, %v2520
      %v2573 = vadd.f32 %v2266, %v2525
      %v2574 = vadd.f32 %v2267, %v2528
      %v2575 = vadd.f32 %v2268, %v2533
      %v2576 = vadd.f32 %v2269, %v2536
      %v2577 = vadd.f32 %v2270, %v2541
      %v2578 = vadd.f32 %v2271, %v2544
      %v2579 = vld [vmem:[%s2272 + $0x8] sm:$0xff]
      %v2580 = vld [vmem:[%s2272 + $0x10] sm:$0xff]
      %v2581 = vld [vmem:[%s2272 + $0x28] sm:$0xff]
      %v2582 = vld [vmem:[%s2272 + $0x30] sm:$0xff]
      %v2583 = vld [vmem:[%s2272 + $0x48] sm:$0xff]
      %v2584 = vld [vmem:[%s2272 + $0x50] sm:$0xff]
      %v2585 = vld [vmem:[%s2272 + $0x68] sm:$0xff]
      %v2586 = vld [vmem:[%s2272 + $0x70] sm:$0xff]
      %v2587 = vld [vmem:[%s2272 + $0x88] sm:$0xff]
      %v2588 = vld [vmem:[%s2272 + $0x90] sm:$0xff]
      %v2589 = vld [vmem:[%s2272 + $0xa8] sm:$0xff]
      %v2590 = vld [vmem:[%s2272 + $0xb0] sm:$0xff]
      %v2591 = vld [vmem:[%s2272 + $0xc8] sm:$0xff]
      %v2592 = vld [vmem:[%s2272 + $0xd0] sm:$0xff]
      %v2593 = vld [vmem:[%s2272 + $0xe8] sm:$0xff]
      %v2594 = vld [vmem:[%s2272 + $0xf0] sm:$0xff]
      %v2595 = vld [vmem:[%s2272 + $0x108] sm:$0xff]
      %v2596 = vld [vmem:[%s2272 + $0x110] sm:$0xff]
      %v2597 = vld [vmem:[%s2272 + $0x128] sm:$0xff]
      %v2598 = vld [vmem:[%s2272 + $0x130] sm:$0xff]
      %v2599 = vld [vmem:[%s2272 + $0x148] sm:$0xff]
      %v2600 = vld [vmem:[%s2272 + $0x150] sm:$0xff]
      %v2601 = vld [vmem:[%s2272 + $0x168] sm:$0xff]
      %v2602 = vld [vmem:[%s2272 + $0x170] sm:$0xff]
      %v2603 = vld [vmem:[%s2272 + $0x188] sm:$0xff]
      %v2604 = vld [vmem:[%s2272 + $0x190] sm:$0xff]
      %v2605 = vld [vmem:[%s2272 + $0x1a8] sm:$0xff]
      %v2606 = vld [vmem:[%s2272 + $0x1b0] sm:$0xff]
      %v2607 = vld [vmem:[%s2272 + $0x1c8] sm:$0xff]
      %v2608 = vld [vmem:[%s2272 + $0x1d0] sm:$0xff]
      %v2609 = vld [vmem:[%s2272 + $0x1e8] sm:$0xff]
      %v2610 = vld [vmem:[%s2272 + $0x1f0] sm:$0xff]
      %v2611 = vpack.c.bf16 %v2580, %v2579
      %v2612 = vpack.c.bf16 %v2582, %v2581
      %v2613 = vpack.c.bf16 %v2584, %v2583
      %v2614 = vpack.c.bf16 %v2586, %v2585
      %v2615 = vpack.c.bf16 %v2588, %v2587
      %v2616 = vpack.c.bf16 %v2590, %v2589
      %v2617 = vpack.c.bf16 %v2592, %v2591
      %v2618 = vpack.c.bf16 %v2594, %v2593
      %v2619 = vpack.c.bf16 %v2596, %v2595
      %v2620 = vpack.c.bf16 %v2598, %v2597
      %v2621 = vpack.c.bf16 %v2600, %v2599
      %v2622 = vpack.c.bf16 %v2602, %v2601
      %v2623 = vpack.c.bf16 %v2604, %v2603
      %v2624 = vpack.c.bf16 %v2606, %v2605
      %v2625 = vpack.c.bf16 %v2608, %v2607
      %v2626 = vpack.c.bf16 %v2610, %v2609
      %s2627 = scalar_lea.vmem %s1, 448
      %v2628 = vld [vmem:[%s2627] sm:$0xf]
      %v2629 = vld [vmem:[%s2627 + $0x4] sm:$0xf]
      %v2630 = vld [vmem:[%s2627 + $0x8] sm:$0xf]
      %v2631 = vld [vmem:[%s2627 + $0xc] sm:$0xf]
      %v2632 = vld [vmem:[%s2627 + $0x10] sm:$0xf]
      %v2633 = vld [vmem:[%s2627 + $0x14] sm:$0xf]
      %v2634 = vld [vmem:[%s2627 + $0x18] sm:$0xf]
      %v2635 = vld [vmem:[%s2627 + $0x1c] sm:$0xf]
      %v2636 = vld [vmem:[%s2627 + $0x20] sm:$0xf]
      %v2637 = vld [vmem:[%s2627 + $0x24] sm:$0xf]
      %v2638 = vld [vmem:[%s2627 + $0x28] sm:$0xf]
      %v2639 = vld [vmem:[%s2627 + $0x2c] sm:$0xf]
      %v2640 = vld [vmem:[%s2627 + $0x30] sm:$0xf]
      %v2641 = vld [vmem:[%s2627 + $0x34] sm:$0xf]
      %v2642 = vld [vmem:[%s2627 + $0x38] sm:$0xf]
      %v2643 = vld [vmem:[%s2627 + $0x3c] sm:$0xf]
      %v2660 = vunpack.c.l.b16 %v2628
      %v2661 = vunpack.c.l.b16 %v2629
      %v2662 = vunpack.c.l.b16 %v2630
      %v2663 = vunpack.c.l.b16 %v2631
      %v2664 = vunpack.c.l.b16 %v2632
      %v2665 = vunpack.c.l.b16 %v2633
      %v2666 = vunpack.c.l.b16 %v2634
      %v2667 = vunpack.c.l.b16 %v2635
      %v2668 = vunpack.c.l.b16 %v2636
      %v2669 = vunpack.c.l.b16 %v2637
      %v2670 = vunpack.c.l.b16 %v2638
      %v2671 = vunpack.c.l.b16 %v2639
      %v2672 = vunpack.c.l.b16 %v2640
      %v2673 = vunpack.c.l.b16 %v2641
      %v2674 = vunpack.c.l.b16 %v2642
      %v2675 = vunpack.c.l.b16 %v2643
      %v2676 = vpack.c.b16 %v2661, %v2660
      %v2677 = vpack.c.b16 %v2663, %v2662
      %v2678 = vpack.c.b16 %v2665, %v2664
      %v2679 = vpack.c.b16 %v2667, %v2666
      %v2680 = vpack.c.b16 %v2669, %v2668
      %v2681 = vpack.c.b16 %v2671, %v2670
      %v2682 = vpack.c.b16 %v2673, %v2672
      %v2683 = vpack.c.b16 %v2675, %v2674
      %2692 = vmatprep.subr.bf16.mxu0 0
      %2693 = vmatpush1.bf16.msra.mxu0 %v2683
      %2694 = vmatprep.subr.bf16.mxu0 0
      %2695 = vmatpush1.bf16.msra.mxu0 %v2682
      %2696 = vmatprep.subr.bf16.mxu0 0
      %2697 = vmatpush1.bf16.msra.mxu0 %v2681
      %2698 = vmatprep.subr.bf16.mxu0 0
      %2699 = vmatpush1.bf16.msra.mxu0 %v2680
      %2700 = vmatprep.subr.bf16.mxu0 0
      %2701 = vmatpush1.bf16.msra.mxu0 %v2679
      %2702 = vmatprep.subr.bf16.mxu0 0
      %2703 = vmatpush1.bf16.msra.mxu0 %v2678
      %2704 = vmatprep.subr.bf16.mxu0 0
      %2705 = vmatpush1.bf16.msra.mxu0 %v2677
      %2706 = vmatprep.subr.bf16.mxu0 0
      %2707 = vmatpush1.bf16.msra.mxu0 %v2676
      %2708 = vmatprep.subr.bf16.mxu0 0
      %2709 = vmatpush2.bf16.msra.mxu0 0
      %2710 = vmatprep.subr.bf16.mxu0 0
      %2711 = vmatpush2.bf16.msra.mxu0 0
      %2712 = vmatprep.subr.bf16.mxu0 0
      %2713 = vmatpush2.bf16.msra.mxu0 0
      %2714 = vmatprep.subr.bf16.mxu0 0
      %2715 = vmatpush2.bf16.msra.mxu0 0
      %2716 = vmatprep.subr.bf16.mxu0 0
      %2717 = vmatpush2.bf16.msra.mxu0 0
      %2718 = vmatprep.subr.bf16.mxu0 0
      %2719 = vmatpush2.bf16.msra.mxu0 0
      %2720 = vmatprep.subr.bf16.mxu0 0
      %2721 = vmatpush2.bf16.msra.mxu0 0
      %2722 = vmatprep.subr.bf16.mxu0 0
      %2723 = vmatpush2.bf16.msra.mxu0 0
      %2724 = vmatprep.mubr.bf16.mxu0 0
      %2725 = vmatmul.mubr.bf16.gmra.mxu0 %v2611
      %v2726 = vpop.f32.mrf.mxu0
      %v2727 = vadd.f32 0.0, %v2726
      %v2728 = vpop.f32.mrf.mxu0
      %v2729 = vpop.f32.mrf.mxu0
      %v2730 = vadd.f32 0.0, %v2729
      %v2731 = vpop.f32.mrf.mxu0
      %2732 = vmatprep.mubr.bf16.mxu0 0
      %2733 = vmatmul.mubr.bf16.gmra.mxu0 %v2612
      %v2734 = vpop.f32.mrf.mxu0
      %v2735 = vadd.f32 0.0, %v2734
      %v2736 = vpop.f32.mrf.mxu0
      %v2737 = vpop.f32.mrf.mxu0
      %v2738 = vadd.f32 0.0, %v2737
      %v2739 = vpop.f32.mrf.mxu0
      %2740 = vmatprep.mubr.bf16.mxu0 0
      %2741 = vmatmul.mubr.bf16.gmra.mxu0 %v2613
      %v2742 = vpop.f32.mrf.mxu0
      %v2743 = vadd.f32 0.0, %v2742
      %v2744 = vpop.f32.mrf.mxu0
      %v2745 = vpop.f32.mrf.mxu0
      %v2746 = vadd.f32 0.0, %v2745
      %v2747 = vpop.f32.mrf.mxu0
      %2748 = vmatprep.mubr.bf16.mxu0 0
      %2749 = vmatmul.mubr.bf16.gmra.mxu0 %v2614
      %v2750 = vpop.f32.mrf.mxu0
      %v2751 = vadd.f32 0.0, %v2750
      %v2752 = vpop.f32.mrf.mxu0
      %v2753 = vpop.f32.mrf.mxu0
      %v2754 = vadd.f32 0.0, %v2753
      %v2755 = vpop.f32.mrf.mxu0
      %2756 = vmatprep.mubr.bf16.mxu0 0
      %2757 = vmatmul.mubr.bf16.gmra.mxu0 %v2615
      %v2758 = vpop.f32.mrf.mxu0
      %v2759 = vadd.f32 0.0, %v2758
      %v2760 = vpop.f32.mrf.mxu0
      %v2761 = vpop.f32.mrf.mxu0
      %v2762 = vadd.f32 0.0, %v2761
      %v2763 = vpop.f32.mrf.mxu0
      %2764 = vmatprep.mubr.bf16.mxu0 0
      %2765 = vmatmul.mubr.bf16.gmra.mxu0 %v2616
      %v2766 = vpop.f32.mrf.mxu0
      %v2767 = vadd.f32 0.0, %v2766
      %v2768 = vpop.f32.mrf.mxu0
      %v2769 = vpop.f32.mrf.mxu0
      %v2770 = vadd.f32 0.0, %v2769
      %v2771 = vpop.f32.mrf.mxu0
      %2772 = vmatprep.mubr.bf16.mxu0 0
      %2773 = vmatmul.mubr.bf16.gmra.mxu0 %v2617
      %v2774 = vpop.f32.mrf.mxu0
      %v2775 = vadd.f32 0.0, %v2774
      %v2776 = vpop.f32.mrf.mxu0
      %v2777 = vpop.f32.mrf.mxu0
      %v2778 = vadd.f32 0.0, %v2777
      %v2779 = vpop.f32.mrf.mxu0
      %2780 = vmatprep.mubr.bf16.mxu0 0
      %2781 = vmatmul.mubr.bf16.gmra.mxu0 %v2618
      %v2782 = vpop.f32.mrf.mxu0
      %v2783 = vadd.f32 0.0, %v2782
      %v2784 = vpop.f32.mrf.mxu0
      %v2785 = vpop.f32.mrf.mxu0
      %v2786 = vadd.f32 0.0, %v2785
      %v2787 = vpop.f32.mrf.mxu0
      %2788 = vmatprep.mubr.bf16.mxu0 0
      %2789 = vmatmul.mubr.bf16.gmra.mxu0 %v2619
      %v2790 = vpop.f32.mrf.mxu0
      %v2791 = vadd.f32 0.0, %v2790
      %v2792 = vpop.f32.mrf.mxu0
      %v2793 = vpop.f32.mrf.mxu0
      %v2794 = vadd.f32 0.0, %v2793
      %v2795 = vpop.f32.mrf.mxu0
      %2796 = vmatprep.mubr.bf16.mxu0 0
      %2797 = vmatmul.mubr.bf16.gmra.mxu0 %v2620
      %v2798 = vpop.f32.mrf.mxu0
      %v2799 = vadd.f32 0.0, %v2798
      %v2800 = vpop.f32.mrf.mxu0
      %v2801 = vpop.f32.mrf.mxu0
      %v2802 = vadd.f32 0.0, %v2801
      %v2803 = vpop.f32.mrf.mxu0
      %2804 = vmatprep.mubr.bf16.mxu0 0
      %2805 = vmatmul.mubr.bf16.gmra.mxu0 %v2621
      %v2806 = vpop.f32.mrf.mxu0
      %v2807 = vadd.f32 0.0, %v2806
      %v2808 = vpop.f32.mrf.mxu0
      %v2809 = vpop.f32.mrf.mxu0
      %v2810 = vadd.f32 0.0, %v2809
      %v2811 = vpop.f32.mrf.mxu0
      %2812 = vmatprep.mubr.bf16.mxu0 0
      %2813 = vmatmul.mubr.bf16.gmra.mxu0 %v2622
      %v2814 = vpop.f32.mrf.mxu0
      %v2815 = vadd.f32 0.0, %v2814
      %v2816 = vpop.f32.mrf.mxu0
      %v2817 = vpop.f32.mrf.mxu0
      %v2818 = vadd.f32 0.0, %v2817
      %v2819 = vpop.f32.mrf.mxu0
      %2820 = vmatprep.mubr.bf16.mxu0 0
      %2821 = vmatmul.mubr.bf16.gmra.mxu0 %v2623
      %v2822 = vpop.f32.mrf.mxu0
      %v2823 = vadd.f32 0.0, %v2822
      %v2824 = vpop.f32.mrf.mxu0
      %v2825 = vpop.f32.mrf.mxu0
      %v2826 = vadd.f32 0.0, %v2825
      %v2827 = vpop.f32.mrf.mxu0
      %2828 = vmatprep.mubr.bf16.mxu0 0
      %2829 = vmatmul.mubr.bf16.gmra.mxu0 %v2624
      %v2830 = vpop.f32.mrf.mxu0
      %v2831 = vadd.f32 0.0, %v2830
      %v2832 = vpop.f32.mrf.mxu0
      %v2833 = vpop.f32.mrf.mxu0
      %v2834 = vadd.f32 0.0, %v2833
      %v2835 = vpop.f32.mrf.mxu0
      %2836 = vmatprep.mubr.bf16.mxu0 0
      %2837 = vmatmul.mubr.bf16.gmra.mxu0 %v2625
      %v2838 = vpop.f32.mrf.mxu0
      %v2839 = vadd.f32 0.0, %v2838
      %v2840 = vpop.f32.mrf.mxu0
      %v2841 = vpop.f32.mrf.mxu0
      %v2842 = vadd.f32 0.0, %v2841
      %v2843 = vpop.f32.mrf.mxu0
      %2844 = vmatprep.mubr.bf16.mxu0 0
      %2845 = vmatmul.mubr.bf16.gmra.mxu0 %v2626
      %v2846 = vpop.f32.mrf.mxu0
      %v2847 = vadd.f32 0.0, %v2846
      %v2848 = vpop.f32.mrf.mxu0
      %v2849 = vpop.f32.mrf.mxu0
      %v2850 = vadd.f32 0.0, %v2849
      %v2851 = vpop.f32.mrf.mxu0
      %2852 = vdwg.mxu0
      %v2853 = vadd.f32 %v2547, %v2727
      %v2854 = vadd.f32 %v2548, %v2730
      %v2855 = vadd.f32 %v2549, %v2735
      %v2856 = vadd.f32 %v2550, %v2738
      %v2857 = vadd.f32 %v2551, %v2743
      %v2858 = vadd.f32 %v2552, %v2746
      %v2859 = vadd.f32 %v2553, %v2751
      %v2860 = vadd.f32 %v2554, %v2754
      %v2861 = vadd.f32 %v2555, %v2759
      %v2862 = vadd.f32 %v2556, %v2762
      %v2863 = vadd.f32 %v2557, %v2767
      %v2864 = vadd.f32 %v2558, %v2770
      %v2865 = vadd.f32 %v2559, %v2775
      %v2866 = vadd.f32 %v2560, %v2778
      %v2867 = vadd.f32 %v2561, %v2783
      %v2868 = vadd.f32 %v2562, %v2786
      %v2869 = vadd.f32 %v2563, %v2791
      %v2870 = vadd.f32 %v2564, %v2794
      %v2871 = vadd.f32 %v2565, %v2799
      %v2872 = vadd.f32 %v2566, %v2802
      %v2873 = vadd.f32 %v2567, %v2807
      %v2874 = vadd.f32 %v2568, %v2810
      %v2875 = vadd.f32 %v2569, %v2815
      %v2876 = vadd.f32 %v2570, %v2818
      %v2877 = vadd.f32 %v2571, %v2823
      %v2878 = vadd.f32 %v2572, %v2826
      %v2879 = vadd.f32 %v2573, %v2831
      %v2880 = vadd.f32 %v2574, %v2834
      %v2881 = vadd.f32 %v2575, %v2839
      %v2882 = vadd.f32 %v2576, %v2842
      %v2883 = vadd.f32 %v2577, %v2847
      %v2884 = vadd.f32 %v2578, %v2850
      %v2885 = vld [vmem:[%s2272 + $0x9] sm:$0xff]
      %v2886 = vld [vmem:[%s2272 + $0x11] sm:$0xff]
      %v2887 = vld [vmem:[%s2272 + $0x29] sm:$0xff]
      %v2888 = vld [vmem:[%s2272 + $0x31] sm:$0xff]
      %v2889 = vld [vmem:[%s2272 + $0x49] sm:$0xff]
      %v2890 = vld [vmem:[%s2272 + $0x51] sm:$0xff]
      %v2891 = vld [vmem:[%s2272 + $0x69] sm:$0xff]
      %v2892 = vld [vmem:[%s2272 + $0x71] sm:$0xff]
      %v2893 = vld [vmem:[%s2272 + $0x89] sm:$0xff]
      %v2894 = vld [vmem:[%s2272 + $0x91] sm:$0xff]
      %v2895 = vld [vmem:[%s2272 + $0xa9] sm:$0xff]
      %v2896 = vld [vmem:[%s2272 + $0xb1] sm:$0xff]
      %v2897 = vld [vmem:[%s2272 + $0xc9] sm:$0xff]
      %v2898 = vld [vmem:[%s2272 + $0xd1] sm:$0xff]
      %v2899 = vld [vmem:[%s2272 + $0xe9] sm:$0xff]
      %v2900 = vld [vmem:[%s2272 + $0xf1] sm:$0xff]
      %v2901 = vld [vmem:[%s2272 + $0x109] sm:$0xff]
      %v2902 = vld [vmem:[%s2272 + $0x111] sm:$0xff]
      %v2903 = vld [vmem:[%s2272 + $0x129] sm:$0xff]
      %v2904 = vld [vmem:[%s2272 + $0x131] sm:$0xff]
      %v2905 = vld [vmem:[%s2272 + $0x149] sm:$0xff]
      %v2906 = vld [vmem:[%s2272 + $0x151] sm:$0xff]
      %v2907 = vld [vmem:[%s2272 + $0x169] sm:$0xff]
      %v2908 = vld [vmem:[%s2272 + $0x171] sm:$0xff]
      %v2909 = vld [vmem:[%s2272 + $0x189] sm:$0xff]
      %v2910 = vld [vmem:[%s2272 + $0x191] sm:$0xff]
      %v2911 = vld [vmem:[%s2272 + $0x1a9] sm:$0xff]
      %v2912 = vld [vmem:[%s2272 + $0x1b1] sm:$0xff]
      %v2913 = vld [vmem:[%s2272 + $0x1c9] sm:$0xff]
      %v2914 = vld [vmem:[%s2272 + $0x1d1] sm:$0xff]
      %v2915 = vld [vmem:[%s2272 + $0x1e9] sm:$0xff]
      %v2916 = vld [vmem:[%s2272 + $0x1f1] sm:$0xff]
      %v2917 = vpack.c.bf16 %v2886, %v2885
      %v2918 = vpack.c.bf16 %v2888, %v2887
      %v2919 = vpack.c.bf16 %v2890, %v2889
      %v2920 = vpack.c.bf16 %v2892, %v2891
      %v2921 = vpack.c.bf16 %v2894, %v2893
      %v2922 = vpack.c.bf16 %v2896, %v2895
      %v2923 = vpack.c.bf16 %v2898, %v2897
      %v2924 = vpack.c.bf16 %v2900, %v2899
      %v2925 = vpack.c.bf16 %v2902, %v2901
      %v2926 = vpack.c.bf16 %v2904, %v2903
      %v2927 = vpack.c.bf16 %v2906, %v2905
      %v2928 = vpack.c.bf16 %v2908, %v2907
      %v2929 = vpack.c.bf16 %v2910, %v2909
      %v2930 = vpack.c.bf16 %v2912, %v2911
      %v2931 = vpack.c.bf16 %v2914, %v2913
      %v2932 = vpack.c.bf16 %v2916, %v2915
      %s2933 = scalar_lea.vmem %s1, 512
      %v2934 = vld [vmem:[%s2933] sm:$0xf]
      %v2935 = vld [vmem:[%s2933 + $0x4] sm:$0xf]
      %v2936 = vld [vmem:[%s2933 + $0x8] sm:$0xf]
      %v2937 = vld [vmem:[%s2933 + $0xc] sm:$0xf]
      %v2938 = vld [vmem:[%s2933 + $0x10] sm:$0xf]
      %v2939 = vld [vmem:[%s2933 + $0x14] sm:$0xf]
      %v2940 = vld [vmem:[%s2933 + $0x18] sm:$0xf]
      %v2941 = vld [vmem:[%s2933 + $0x1c] sm:$0xf]
      %v2942 = vld [vmem:[%s2933 + $0x20] sm:$0xf]
      %v2943 = vld [vmem:[%s2933 + $0x24] sm:$0xf]
      %v2944 = vld [vmem:[%s2933 + $0x28] sm:$0xf]
      %v2945 = vld [vmem:[%s2933 + $0x2c] sm:$0xf]
      %v2946 = vld [vmem:[%s2933 + $0x30] sm:$0xf]
      %v2947 = vld [vmem:[%s2933 + $0x34] sm:$0xf]
      %v2948 = vld [vmem:[%s2933 + $0x38] sm:$0xf]
      %v2949 = vld [vmem:[%s2933 + $0x3c] sm:$0xf]
      %v2966 = vunpack.c.l.b16 %v2934
      %v2967 = vunpack.c.l.b16 %v2935
      %v2968 = vunpack.c.l.b16 %v2936
      %v2969 = vunpack.c.l.b16 %v2937
      %v2970 = vunpack.c.l.b16 %v2938
      %v2971 = vunpack.c.l.b16 %v2939
      %v2972 = vunpack.c.l.b16 %v2940
      %v2973 = vunpack.c.l.b16 %v2941
      %v2974 = vunpack.c.l.b16 %v2942
      %v2975 = vunpack.c.l.b16 %v2943
      %v2976 = vunpack.c.l.b16 %v2944
      %v2977 = vunpack.c.l.b16 %v2945
      %v2978 = vunpack.c.l.b16 %v2946
      %v2979 = vunpack.c.l.b16 %v2947
      %v2980 = vunpack.c.l.b16 %v2948
      %v2981 = vunpack.c.l.b16 %v2949
      %v2982 = vpack.c.b16 %v2967, %v2966
      %v2983 = vpack.c.b16 %v2969, %v2968
      %v2984 = vpack.c.b16 %v2971, %v2970
      %v2985 = vpack.c.b16 %v2973, %v2972
      %v2986 = vpack.c.b16 %v2975, %v2974
      %v2987 = vpack.c.b16 %v2977, %v2976
      %v2988 = vpack.c.b16 %v2979, %v2978
      %v2989 = vpack.c.b16 %v2981, %v2980
      %2998 = vmatprep.subr.bf16.mxu0 0
      %2999 = vmatpush1.bf16.msra.mxu0 %v2989
      %3000 = vmatprep.subr.bf16.mxu0 0
      %3001 = vmatpush1.bf16.msra.mxu0 %v2988
      %3002 = vmatprep.subr.bf16.mxu0 0
      %3003 = vmatpush1.bf16.msra.mxu0 %v2987
      %3004 = vmatprep.subr.bf16.mxu0 0
      %3005 = vmatpush1.bf16.msra.mxu0 %v2986
      %3006 = vmatprep.subr.bf16.mxu0 0
      %3007 = vmatpush1.bf16.msra.mxu0 %v2985
      %3008 = vmatprep.subr.bf16.mxu0 0
      %3009 = vmatpush1.bf16.msra.mxu0 %v2984
      %3010 = vmatprep.subr.bf16.mxu0 0
      %3011 = vmatpush1.bf16.msra.mxu0 %v2983
      %3012 = vmatprep.subr.bf16.mxu0 0
      %3013 = vmatpush1.bf16.msra.mxu0 %v2982
      %3014 = vmatprep.subr.bf16.mxu0 0
      %3015 = vmatpush2.bf16.msra.mxu0 0
      %3016 = vmatprep.subr.bf16.mxu0 0
      %3017 = vmatpush2.bf16.msra.mxu0 0
      %3018 = vmatprep.subr.bf16.mxu0 0
      %3019 = vmatpush2.bf16.msra.mxu0 0
      %3020 = vmatprep.subr.bf16.mxu0 0
      %3021 = vmatpush2.bf16.msra.mxu0 0
      %3022 = vmatprep.subr.bf16.mxu0 0
      %3023 = vmatpush2.bf16.msra.mxu0 0
      %3024 = vmatprep.subr.bf16.mxu0 0
      %3025 = vmatpush2.bf16.msra.mxu0 0
      %3026 = vmatprep.subr.bf16.mxu0 0
      %3027 = vmatpush2.bf16.msra.mxu0 0
      %3028 = vmatprep.subr.bf16.mxu0 0
      %3029 = vmatpush2.bf16.msra.mxu0 0
      %3030 = vmatprep.mubr.bf16.mxu0 0
      %3031 = vmatmul.mubr.bf16.gmra.mxu0 %v2917
      %v3032 = vpop.f32.mrf.mxu0
      %v3033 = vadd.f32 0.0, %v3032
      %v3034 = vpop.f32.mrf.mxu0
      %v3035 = vpop.f32.mrf.mxu0
      %v3036 = vadd.f32 0.0, %v3035
      %v3037 = vpop.f32.mrf.mxu0
      %3038 = vmatprep.mubr.bf16.mxu0 0
      %3039 = vmatmul.mubr.bf16.gmra.mxu0 %v2918
      %v3040 = vpop.f32.mrf.mxu0
      %v3041 = vadd.f32 0.0, %v3040
      %v3042 = vpop.f32.mrf.mxu0
      %v3043 = vpop.f32.mrf.mxu0
      %v3044 = vadd.f32 0.0, %v3043
      %v3045 = vpop.f32.mrf.mxu0
      %3046 = vmatprep.mubr.bf16.mxu0 0
      %3047 = vmatmul.mubr.bf16.gmra.mxu0 %v2919
      %v3048 = vpop.f32.mrf.mxu0
      %v3049 = vadd.f32 0.0, %v3048
      %v3050 = vpop.f32.mrf.mxu0
      %v3051 = vpop.f32.mrf.mxu0
      %v3052 = vadd.f32 0.0, %v3051
      %v3053 = vpop.f32.mrf.mxu0
      %3054 = vmatprep.mubr.bf16.mxu0 0
      %3055 = vmatmul.mubr.bf16.gmra.mxu0 %v2920
      %v3056 = vpop.f32.mrf.mxu0
      %v3057 = vadd.f32 0.0, %v3056
      %v3058 = vpop.f32.mrf.mxu0
      %v3059 = vpop.f32.mrf.mxu0
      %v3060 = vadd.f32 0.0, %v3059
      %v3061 = vpop.f32.mrf.mxu0
      %3062 = vmatprep.mubr.bf16.mxu0 0
      %3063 = vmatmul.mubr.bf16.gmra.mxu0 %v2921
      %v3064 = vpop.f32.mrf.mxu0
      %v3065 = vadd.f32 0.0, %v3064
      %v3066 = vpop.f32.mrf.mxu0
      %v3067 = vpop.f32.mrf.mxu0
      %v3068 = vadd.f32 0.0, %v3067
      %v3069 = vpop.f32.mrf.mxu0
      %3070 = vmatprep.mubr.bf16.mxu0 0
      %3071 = vmatmul.mubr.bf16.gmra.mxu0 %v2922
      %v3072 = vpop.f32.mrf.mxu0
      %v3073 = vadd.f32 0.0, %v3072
      %v3074 = vpop.f32.mrf.mxu0
      %v3075 = vpop.f32.mrf.mxu0
      %v3076 = vadd.f32 0.0, %v3075
      %v3077 = vpop.f32.mrf.mxu0
      %3078 = vmatprep.mubr.bf16.mxu0 0
      %3079 = vmatmul.mubr.bf16.gmra.mxu0 %v2923
      %v3080 = vpop.f32.mrf.mxu0
      %v3081 = vadd.f32 0.0, %v3080
      %v3082 = vpop.f32.mrf.mxu0
      %v3083 = vpop.f32.mrf.mxu0
      %v3084 = vadd.f32 0.0, %v3083
      %v3085 = vpop.f32.mrf.mxu0
      %3086 = vmatprep.mubr.bf16.mxu0 0
      %3087 = vmatmul.mubr.bf16.gmra.mxu0 %v2924
      %v3088 = vpop.f32.mrf.mxu0
      %v3089 = vadd.f32 0.0, %v3088
      %v3090 = vpop.f32.mrf.mxu0
      %v3091 = vpop.f32.mrf.mxu0
      %v3092 = vadd.f32 0.0, %v3091
      %v3093 = vpop.f32.mrf.mxu0
      %3094 = vmatprep.mubr.bf16.mxu0 0
      %3095 = vmatmul.mubr.bf16.gmra.mxu0 %v2925
      %v3096 = vpop.f32.mrf.mxu0
      %v3097 = vadd.f32 0.0, %v3096
      %v3098 = vpop.f32.mrf.mxu0
      %v3099 = vpop.f32.mrf.mxu0
      %v3100 = vadd.f32 0.0, %v3099
      %v3101 = vpop.f32.mrf.mxu0
      %3102 = vmatprep.mubr.bf16.mxu0 0
      %3103 = vmatmul.mubr.bf16.gmra.mxu0 %v2926
      %v3104 = vpop.f32.mrf.mxu0
      %v3105 = vadd.f32 0.0, %v3104
      %v3106 = vpop.f32.mrf.mxu0
      %v3107 = vpop.f32.mrf.mxu0
      %v3108 = vadd.f32 0.0, %v3107
      %v3109 = vpop.f32.mrf.mxu0
      %3110 = vmatprep.mubr.bf16.mxu0 0
      %3111 = vmatmul.mubr.bf16.gmra.mxu0 %v2927
      %v3112 = vpop.f32.mrf.mxu0
      %v3113 = vadd.f32 0.0, %v3112
      %v3114 = vpop.f32.mrf.mxu0
      %v3115 = vpop.f32.mrf.mxu0
      %v3116 = vadd.f32 0.0, %v3115
      %v3117 = vpop.f32.mrf.mxu0
      %3118 = vmatprep.mubr.bf16.mxu0 0
      %3119 = vmatmul.mubr.bf16.gmra.mxu0 %v2928
      %v3120 = vpop.f32.mrf.mxu0
      %v3121 = vadd.f32 0.0, %v3120
      %v3122 = vpop.f32.mrf.mxu0
      %v3123 = vpop.f32.mrf.mxu0
      %v3124 = vadd.f32 0.0, %v3123
      %v3125 = vpop.f32.mrf.mxu0
      %3126 = vmatprep.mubr.bf16.mxu0 0
      %3127 = vmatmul.mubr.bf16.gmra.mxu0 %v2929
      %v3128 = vpop.f32.mrf.mxu0
      %v3129 = vadd.f32 0.0, %v3128
      %v3130 = vpop.f32.mrf.mxu0
      %v3131 = vpop.f32.mrf.mxu0
      %v3132 = vadd.f32 0.0, %v3131
      %v3133 = vpop.f32.mrf.mxu0
      %3134 = vmatprep.mubr.bf16.mxu0 0
      %3135 = vmatmul.mubr.bf16.gmra.mxu0 %v2930
      %v3136 = vpop.f32.mrf.mxu0
      %v3137 = vadd.f32 0.0, %v3136
      %v3138 = vpop.f32.mrf.mxu0
      %v3139 = vpop.f32.mrf.mxu0
      %v3140 = vadd.f32 0.0, %v3139
      %v3141 = vpop.f32.mrf.mxu0
      %3142 = vmatprep.mubr.bf16.mxu0 0
      %3143 = vmatmul.mubr.bf16.gmra.mxu0 %v2931
      %v3144 = vpop.f32.mrf.mxu0
      %v3145 = vadd.f32 0.0, %v3144
      %v3146 = vpop.f32.mrf.mxu0
      %v3147 = vpop.f32.mrf.mxu0
      %v3148 = vadd.f32 0.0, %v3147
      %v3149 = vpop.f32.mrf.mxu0
      %3150 = vmatprep.mubr.bf16.mxu0 0
      %3151 = vmatmul.mubr.bf16.gmra.mxu0 %v2932
      %v3152 = vpop.f32.mrf.mxu0
      %v3153 = vadd.f32 0.0, %v3152
      %v3154 = vpop.f32.mrf.mxu0
      %v3155 = vpop.f32.mrf.mxu0
      %v3156 = vadd.f32 0.0, %v3155
      %v3157 = vpop.f32.mrf.mxu0
      %3158 = vdwg.mxu0
      %v3159 = vadd.f32 %v2853, %v3033
      %v3160 = vadd.f32 %v2854, %v3036
      %v3161 = vadd.f32 %v2855, %v3041
      %v3162 = vadd.f32 %v2856, %v3044
      %v3163 = vadd.f32 %v2857, %v3049
      %v3164 = vadd.f32 %v2858, %v3052
      %v3165 = vadd.f32 %v2859, %v3057
      %v3166 = vadd.f32 %v2860, %v3060
      %v3167 = vadd.f32 %v2861, %v3065
      %v3168 = vadd.f32 %v2862, %v3068
      %v3169 = vadd.f32 %v2863, %v3073
      %v3170 = vadd.f32 %v2864, %v3076
      %v3171 = vadd.f32 %v2865, %v3081
      %v3172 = vadd.f32 %v2866, %v3084
      %v3173 = vadd.f32 %v2867, %v3089
      %v3174 = vadd.f32 %v2868, %v3092
      %v3175 = vadd.f32 %v2869, %v3097
      %v3176 = vadd.f32 %v2870, %v3100
      %v3177 = vadd.f32 %v2871, %v3105
      %v3178 = vadd.f32 %v2872, %v3108
      %v3179 = vadd.f32 %v2873, %v3113
      %v3180 = vadd.f32 %v2874, %v3116
      %v3181 = vadd.f32 %v2875, %v3121
      %v3182 = vadd.f32 %v2876, %v3124
      %v3183 = vadd.f32 %v2877, %v3129
      %v3184 = vadd.f32 %v2878, %v3132
      %v3185 = vadd.f32 %v2879, %v3137
      %v3186 = vadd.f32 %v2880, %v3140
      %v3187 = vadd.f32 %v2881, %v3145
      %v3188 = vadd.f32 %v2882, %v3148
      %v3189 = vadd.f32 %v2883, %v3153
      %v3190 = vadd.f32 %v2884, %v3156
      %v3191 = vld [vmem:[%s2] sm:$0x1]
      %v3193 = vlaneseq
      %v3194 = vshrl.u32 %v3193, 7
      %v3195 = vsub.s32 0, %v3194
      %v3196 = vrot.slane %v3191, %v3195
      %v3198 = vadd.f32 %v3159, %v3196
      %v3199 = vadd.f32 %v3160, %v3196
      %v3200 = vadd.f32 %v3161, %v3196
      %v3201 = vadd.f32 %v3162, %v3196
      %v3202 = vadd.f32 %v3163, %v3196
      %v3203 = vadd.f32 %v3164, %v3196
      %v3204 = vadd.f32 %v3165, %v3196
      %v3205 = vadd.f32 %v3166, %v3196
      %v3206 = vadd.f32 %v3167, %v3196
      %v3207 = vadd.f32 %v3168, %v3196
      %v3208 = vadd.f32 %v3169, %v3196
      %v3209 = vadd.f32 %v3170, %v3196
      %v3210 = vadd.f32 %v3171, %v3196
      %v3211 = vadd.f32 %v3172, %v3196
      %v3212 = vadd.f32 %v3173, %v3196
      %v3213 = vadd.f32 %v3174, %v3196
      %v3214 = vadd.f32 %v3175, %v3196
      %v3215 = vadd.f32 %v3176, %v3196
      %v3216 = vadd.f32 %v3177, %v3196
      %v3217 = vadd.f32 %v3178, %v3196
      %v3218 = vadd.f32 %v3179, %v3196
      %v3219 = vadd.f32 %v3180, %v3196
      %v3220 = vadd.f32 %v3181, %v3196
      %v3221 = vadd.f32 %v3182, %v3196
      %v3222 = vadd.f32 %v3183, %v3196
      %v3223 = vadd.f32 %v3184, %v3196
      %v3224 = vadd.f32 %v3185, %v3196
      %v3225 = vadd.f32 %v3186, %v3196
      %v3226 = vadd.f32 %v3187, %v3196
      %v3227 = vadd.f32 %v3188, %v3196
      %v3228 = vadd.f32 %v3189, %v3196
      %v3229 = vadd.f32 %v3190, %v3196
      %v3230 = vmax.f32 %v3198, 0.0
      %v3231 = vmax.f32 %v3199, 0.0
      %v3232 = vmax.f32 %v3200, 0.0
      %v3233 = vmax.f32 %v3201, 0.0
      %v3234 = vmax.f32 %v3202, 0.0
      %v3235 = vmax.f32 %v3203, 0.0
      %v3236 = vmax.f32 %v3204, 0.0
      %v3237 = vmax.f32 %v3205, 0.0
      %v3238 = vmax.f32 %v3206, 0.0
      %v3239 = vmax.f32 %v3207, 0.0
      %v3240 = vmax.f32 %v3208, 0.0
      %v3241 = vmax.f32 %v3209, 0.0
      %v3242 = vmax.f32 %v3210, 0.0
      %v3243 = vmax.f32 %v3211, 0.0
      %v3244 = vmax.f32 %v3212, 0.0
      %v3245 = vmax.f32 %v3213, 0.0
      %v3246 = vmax.f32 %v3214, 0.0
      %v3247 = vmax.f32 %v3215, 0.0
      %v3248 = vmax.f32 %v3216, 0.0
      %v3249 = vmax.f32 %v3217, 0.0
      %v3250 = vmax.f32 %v3218, 0.0
      %v3251 = vmax.f32 %v3219, 0.0
      %v3252 = vmax.f32 %v3220, 0.0
      %v3253 = vmax.f32 %v3221, 0.0
      %v3254 = vmax.f32 %v3222, 0.0
      %v3255 = vmax.f32 %v3223, 0.0
      %v3256 = vmax.f32 %v3224, 0.0
      %v3257 = vmax.f32 %v3225, 0.0
      %v3258 = vmax.f32 %v3226, 0.0
      %v3259 = vmax.f32 %v3227, 0.0
      %v3260 = vmax.f32 %v3228, 0.0
      %v3261 = vmax.f32 %v3229, 0.0
      %3262 = vst [vmem:[%s468 + $0x8] sm:$0xff] %v3230
      %3263 = vst [vmem:[%s468 + $0x10] sm:$0xff] %v3231
      %3264 = vst [vmem:[%s468 + $0x28] sm:$0xff] %v3232
      %3265 = vst [vmem:[%s468 + $0x30] sm:$0xff] %v3233
      %3266 = vst [vmem:[%s468 + $0x48] sm:$0xff] %v3234
      %3267 = vst [vmem:[%s468 + $0x50] sm:$0xff] %v3235
      %3268 = vst [vmem:[%s468 + $0x68] sm:$0xff] %v3236
      %3269 = vst [vmem:[%s468 + $0x70] sm:$0xff] %v3237
      %3270 = vst [vmem:[%s468 + $0x88] sm:$0xff] %v3238
      %3271 = vst [vmem:[%s468 + $0x90] sm:$0xff] %v3239
      %3272 = vst [vmem:[%s468 + $0xa8] sm:$0xff] %v3240
      %3273 = vst [vmem:[%s468 + $0xb0] sm:$0xff] %v3241
      %3274 = vst [vmem:[%s468 + $0xc8] sm:$0xff] %v3242
      %3275 = vst [vmem:[%s468 + $0xd0] sm:$0xff] %v3243
      %3276 = vst [vmem:[%s468 + $0xe8] sm:$0xff] %v3244
      %3277 = vst [vmem:[%s468 + $0xf0] sm:$0xff] %v3245
      %3278 = vst [vmem:[%s468 + $0x108] sm:$0xff] %v3246
      %3279 = vst [vmem:[%s468 + $0x110] sm:$0xff] %v3247
      %3280 = vst [vmem:[%s468 + $0x128] sm:$0xff] %v3248
      %3281 = vst [vmem:[%s468 + $0x130] sm:$0xff] %v3249
      %3282 = vst [vmem:[%s468 + $0x148] sm:$0xff] %v3250
      %3283 = vst [vmem:[%s468 + $0x150] sm:$0xff] %v3251
      %3284 = vst [vmem:[%s468 + $0x168] sm:$0xff] %v3252
      %3285 = vst [vmem:[%s468 + $0x170] sm:$0xff] %v3253
      %3286 = vst [vmem:[%s468 + $0x188] sm:$0xff] %v3254
      %3287 = vst [vmem:[%s468 + $0x190] sm:$0xff] %v3255
      %3288 = vst [vmem:[%s468 + $0x1a8] sm:$0xff] %v3256
      %3289 = vst [vmem:[%s468 + $0x1b0] sm:$0xff] %v3257
      %3290 = vst [vmem:[%s468 + $0x1c8] sm:$0xff] %v3258
      %3291 = vst [vmem:[%s468 + $0x1d0] sm:$0xff] %v3259
      %3292 = vst [vmem:[%s468 + $0x1e8] sm:$0xff] %v3260
      %3293 = vst [vmem:[%s468 + $0x1f0] sm:$0xff] %v3261
      %v3294 = vld [vmem:[#allocation2 + $0x7] sm:$0xff]
      %v3295 = vld [vmem:[#allocation2 + $0xf] sm:$0xff]
      %v3296 = vld [vmem:[#allocation2 + $0x27] sm:$0xff]
      %v3297 = vld [vmem:[#allocation2 + $0x2f] sm:$0xff]
      %v3298 = vld [vmem:[#allocation2 + $0x47] sm:$0xff]
      %v3299 = vld [vmem:[#allocation2 + $0x4f] sm:$0xff]
      %v3300 = vld [vmem:[#allocation2 + $0x67] sm:$0xff]
      %v3301 = vld [vmem:[#allocation2 + $0x6f] sm:$0xff]
      %v3302 = vld [vmem:[#allocation2 + $0x87] sm:$0xff]
      %v3303 = vld [vmem:[#allocation2 + $0x8f] sm:$0xff]
      %v3304 = vld [vmem:[#allocation2 + $0xa7] sm:$0xff]
      %v3305 = vld [vmem:[#allocation2 + $0xaf] sm:$0xff]
      %v3306 = vld [vmem:[#allocation2 + $0xc7] sm:$0xff]
      %v3307 = vld [vmem:[#allocation2 + $0xcf] sm:$0xff]
      %v3308 = vld [vmem:[#allocation2 + $0xe7] sm:$0xff]
      %v3309 = vld [vmem:[#allocation2 + $0xef] sm:$0xff]
      %v3310 = vld [vmem:[#allocation2 + $0x107] sm:$0xff]
      %v3311 = vld [vmem:[#allocation2 + $0x10f] sm:$0xff]
      %v3312 = vld [vmem:[#allocation2 + $0x127] sm:$0xff]
      %v3313 = vld [vmem:[#allocation2 + $0x12f] sm:$0xff]
      %v3314 = vld [vmem:[#allocation2 + $0x147] sm:$0xff]
      %v3315 = vld [vmem:[#allocation2 + $0x14f] sm:$0xff]
      %v3316 = vld [vmem:[#allocation2 + $0x167] sm:$0xff]
      %v3317 = vld [vmem:[#allocation2 + $0x16f] sm:$0xff]
      %v3318 = vld [vmem:[#allocation2 + $0x187] sm:$0xff]
      %v3319 = vld [vmem:[#allocation2 + $0x18f] sm:$0xff]
      %v3320 = vld [vmem:[#allocation2 + $0x1a7] sm:$0xff]
      %v3321 = vld [vmem:[#allocation2 + $0x1af] sm:$0xff]
      %v3322 = vld [vmem:[#allocation2 + $0x1c7] sm:$0xff]
      %v3323 = vld [vmem:[#allocation2 + $0x1cf] sm:$0xff]
      %v3324 = vld [vmem:[#allocation2 + $0x1e7] sm:$0xff]
      %v3325 = vld [vmem:[#allocation2 + $0x1ef] sm:$0xff]
      %v3326 = vpack.c.bf16 %v3295, %v3294
      %v3327 = vpack.c.bf16 %v3297, %v3296
      %v3328 = vpack.c.bf16 %v3299, %v3298
      %v3329 = vpack.c.bf16 %v3301, %v3300
      %v3330 = vpack.c.bf16 %v3303, %v3302
      %v3331 = vpack.c.bf16 %v3305, %v3304
      %v3332 = vpack.c.bf16 %v3307, %v3306
      %v3333 = vpack.c.bf16 %v3309, %v3308
      %v3334 = vpack.c.bf16 %v3311, %v3310
      %v3335 = vpack.c.bf16 %v3313, %v3312
      %v3336 = vpack.c.bf16 %v3315, %v3314
      %v3337 = vpack.c.bf16 %v3317, %v3316
      %v3338 = vpack.c.bf16 %v3319, %v3318
      %v3339 = vpack.c.bf16 %v3321, %v3320
      %v3340 = vpack.c.bf16 %v3323, %v3322
      %v3341 = vpack.c.bf16 %v3325, %v3324
      %v3342 = vld [vmem:[%s3] sm:$0xf]
      %v3343 = vld [vmem:[%s3 + $0x4] sm:$0xf]
      %v3344 = vld [vmem:[%s3 + $0x8] sm:$0xf]
      %v3345 = vld [vmem:[%s3 + $0xc] sm:$0xf]
      %v3346 = vld [vmem:[%s3 + $0x10] sm:$0xf]
      %v3347 = vld [vmem:[%s3 + $0x14] sm:$0xf]
      %v3348 = vld [vmem:[%s3 + $0x18] sm:$0xf]
      %v3349 = vld [vmem:[%s3 + $0x1c] sm:$0xf]
      %v3350 = vld [vmem:[%s3 + $0x20] sm:$0xf]
      %v3351 = vld [vmem:[%s3 + $0x24] sm:$0xf]
      %v3352 = vld [vmem:[%s3 + $0x28] sm:$0xf]
      %v3353 = vld [vmem:[%s3 + $0x2c] sm:$0xf]
      %v3354 = vld [vmem:[%s3 + $0x30] sm:$0xf]
      %v3355 = vld [vmem:[%s3 + $0x34] sm:$0xf]
      %v3356 = vld [vmem:[%s3 + $0x38] sm:$0xf]
      %v3357 = vld [vmem:[%s3 + $0x3c] sm:$0xf]
      %v3358 = vld [vmem:[#allocation2 + $0x8] sm:$0xff]
      %v3359 = vld [vmem:[#allocation2 + $0x10] sm:$0xff]
      %v3360 = vld [vmem:[#allocation2 + $0x28] sm:$0xff]
      %v3361 = vld [vmem:[#allocation2 + $0x30] sm:$0xff]
      %v3362 = vld [vmem:[#allocation2 + $0x48] sm:$0xff]
      %v3363 = vld [vmem:[#allocation2 + $0x50] sm:$0xff]
      %v3364 = vld [vmem:[#allocation2 + $0x68] sm:$0xff]
      %v3365 = vld [vmem:[#allocation2 + $0x70] sm:$0xff]
      %v3366 = vld [vmem:[#allocation2 + $0x88] sm:$0xff]
      %v3367 = vld [vmem:[#allocation2 + $0x90] sm:$0xff]
      %v3368 = vld [vmem:[#allocation2 + $0xa8] sm:$0xff]
      %v3369 = vld [vmem:[#allocation2 + $0xb0] sm:$0xff]
      %v3370 = vld [vmem:[#allocation2 + $0xc8] sm:$0xff]
      %v3371 = vld [vmem:[#allocation2 + $0xd0] sm:$0xff]
      %v3372 = vld [vmem:[#allocation2 + $0xe8] sm:$0xff]
      %v3373 = vld [vmem:[#allocation2 + $0xf0] sm:$0xff]
      %v3374 = vld [vmem:[#allocation2 + $0x108] sm:$0xff]
      %v3375 = vld [vmem:[#allocation2 + $0x110] sm:$0xff]
      %v3376 = vld [vmem:[#allocation2 + $0x128] sm:$0xff]
      %v3377 = vld [vmem:[#allocation2 + $0x130] sm:$0xff]
      %v3378 = vld [vmem:[#allocation2 + $0x148] sm:$0xff]
      %v3379 = vld [vmem:[#allocation2 + $0x150] sm:$0xff]
      %v3380 = vld [vmem:[#allocation2 + $0x168] sm:$0xff]
      %v3381 = vld [vmem:[#allocation2 + $0x170] sm:$0xff]
      %v3382 = vld [vmem:[#allocation2 + $0x188] sm:$0xff]
      %v3383 = vld [vmem:[#allocation2 + $0x190] sm:$0xff]
      %v3384 = vld [vmem:[#allocation2 + $0x1a8] sm:$0xff]
      %v3385 = vld [vmem:[#allocation2 + $0x1b0] sm:$0xff]
      %v3386 = vld [vmem:[#allocation2 + $0x1c8] sm:$0xff]
      %v3387 = vld [vmem:[#allocation2 + $0x1d0] sm:$0xff]
      %v3388 = vld [vmem:[#allocation2 + $0x1e8] sm:$0xff]
      %v3389 = vld [vmem:[#allocation2 + $0x1f0] sm:$0xff]
      %v3390 = vpack.c.bf16 %v3359, %v3358
      %v3391 = vpack.c.bf16 %v3361, %v3360
      %v3392 = vpack.c.bf16 %v3363, %v3362
      %v3393 = vpack.c.bf16 %v3365, %v3364
      %v3394 = vpack.c.bf16 %v3367, %v3366
      %v3395 = vpack.c.bf16 %v3369, %v3368
      %v3396 = vpack.c.bf16 %v3371, %v3370
      %v3397 = vpack.c.bf16 %v3373, %v3372
      %v3398 = vpack.c.bf16 %v3375, %v3374
      %v3399 = vpack.c.bf16 %v3377, %v3376
      %v3400 = vpack.c.bf16 %v3379, %v3378
      %v3401 = vpack.c.bf16 %v3381, %v3380
      %v3402 = vpack.c.bf16 %v3383, %v3382
      %v3403 = vpack.c.bf16 %v3385, %v3384
      %v3404 = vpack.c.bf16 %v3387, %v3386
      %v3405 = vpack.c.bf16 %v3389, %v3388
      %s3406 = scalar_lea.vmem %s3, 64
      %v3407 = vld [vmem:[%s3406] sm:$0xf]
      %v3408 = vld [vmem:[%s3406 + $0x4] sm:$0xf]
      %v3409 = vld [vmem:[%s3406 + $0x8] sm:$0xf]
      %v3410 = vld [vmem:[%s3406 + $0xc] sm:$0xf]
      %v3411 = vld [vmem:[%s3406 + $0x10] sm:$0xf]
      %v3412 = vld [vmem:[%s3406 + $0x14] sm:$0xf]
      %v3413 = vld [vmem:[%s3406 + $0x18] sm:$0xf]
      %v3414 = vld [vmem:[%s3406 + $0x1c] sm:$0xf]
      %v3415 = vld [vmem:[%s3406 + $0x20] sm:$0xf]
      %v3416 = vld [vmem:[%s3406 + $0x24] sm:$0xf]
      %v3417 = vld [vmem:[%s3406 + $0x28] sm:$0xf]
      %v3418 = vld [vmem:[%s3406 + $0x2c] sm:$0xf]
      %v3419 = vld [vmem:[%s3406 + $0x30] sm:$0xf]
      %v3420 = vld [vmem:[%s3406 + $0x34] sm:$0xf]
      %v3421 = vld [vmem:[%s3406 + $0x38] sm:$0xf]
      %v3422 = vld [vmem:[%s3406 + $0x3c] sm:$0xf]
      %v3439 = vunpack.c.l.b16 %v3407
      %v3440 = vunpack.c.l.b16 %v3408
      %v3441 = vunpack.c.l.b16 %v3409
      %v3442 = vunpack.c.l.b16 %v3410
      %v3443 = vunpack.c.l.b16 %v3411
      %v3444 = vunpack.c.l.b16 %v3412
      %v3445 = vunpack.c.l.b16 %v3413
      %v3446 = vunpack.c.l.b16 %v3414
      %v3447 = vunpack.c.l.b16 %v3415
      %v3448 = vunpack.c.l.b16 %v3416
      %v3449 = vunpack.c.l.b16 %v3417
      %v3450 = vunpack.c.l.b16 %v3418
      %v3451 = vunpack.c.l.b16 %v3419
      %v3452 = vunpack.c.l.b16 %v3420
      %v3453 = vunpack.c.l.b16 %v3421
      %v3454 = vunpack.c.l.b16 %v3422
      %v3455 = vpack.c.b16 %v3440, %v3439
      %v3456 = vpack.c.b16 %v3442, %v3441
      %v3457 = vpack.c.b16 %v3444, %v3443
      %v3458 = vpack.c.b16 %v3446, %v3445
      %v3459 = vpack.c.b16 %v3448, %v3447
      %v3460 = vpack.c.b16 %v3450, %v3449
      %v3461 = vpack.c.b16 %v3452, %v3451
      %v3462 = vpack.c.b16 %v3454, %v3453
      %3471 = vmatprep.subr.bf16.mxu0 0
      %3472 = vmatpush1.bf16.msra.mxu0 %v3462
      %3473 = vmatprep.subr.bf16.mxu0 0
      %3474 = vmatpush1.bf16.msra.mxu0 %v3461
      %3475 = vmatprep.subr.bf16.mxu0 0
      %3476 = vmatpush1.bf16.msra.mxu0 %v3460
      %3477 = vmatprep.subr.bf16.mxu0 0
      %3478 = vmatpush1.bf16.msra.mxu0 %v3459
      %3479 = vmatprep.subr.bf16.mxu0 0
      %3480 = vmatpush1.bf16.msra.mxu0 %v3458
      %3481 = vmatprep.subr.bf16.mxu0 0
      %3482 = vmatpush1.bf16.msra.mxu0 %v3457
      %3483 = vmatprep.subr.bf16.mxu0 0
      %3484 = vmatpush1.bf16.msra.mxu0 %v3456
      %3485 = vmatprep.subr.bf16.mxu0 0
      %3486 = vmatpush1.bf16.msra.mxu0 %v3455
      %3487 = vmatprep.subr.bf16.mxu0 0
      %3488 = vmatpush2.bf16.msra.mxu0 0
      %3489 = vmatprep.subr.bf16.mxu0 0
      %3490 = vmatpush2.bf16.msra.mxu0 0
      %3491 = vmatprep.subr.bf16.mxu0 0
      %3492 = vmatpush2.bf16.msra.mxu0 0
      %3493 = vmatprep.subr.bf16.mxu0 0
      %3494 = vmatpush2.bf16.msra.mxu0 0
      %3495 = vmatprep.subr.bf16.mxu0 0
      %3496 = vmatpush2.bf16.msra.mxu0 0
      %3497 = vmatprep.subr.bf16.mxu0 0
      %3498 = vmatpush2.bf16.msra.mxu0 0
      %3499 = vmatprep.subr.bf16.mxu0 0
      %3500 = vmatpush2.bf16.msra.mxu0 0
      %3501 = vmatprep.subr.bf16.mxu0 0
      %3502 = vmatpush2.bf16.msra.mxu0 0
      %3503 = vmatprep.mubr.bf16.mxu0 0
      %3504 = vmatmul.mubr.bf16.gmra.mxu0 %v3390
      %v3505 = vpop.f32.mrf.mxu0
      %v3506 = vadd.f32 0.0, %v3505
      %v3507 = vpop.f32.mrf.mxu0
      %v3508 = vpop.f32.mrf.mxu0
      %v3509 = vadd.f32 0.0, %v3508
      %v3510 = vpop.f32.mrf.mxu0
      %3511 = vmatprep.mubr.bf16.mxu0 0
      %3512 = vmatmul.mubr.bf16.gmra.mxu0 %v3391
      %v3513 = vpop.f32.mrf.mxu0
      %v3514 = vadd.f32 0.0, %v3513
      %v3515 = vpop.f32.mrf.mxu0
      %v3516 = vpop.f32.mrf.mxu0
      %v3517 = vadd.f32 0.0, %v3516
      %v3518 = vpop.f32.mrf.mxu0
      %3519 = vmatprep.mubr.bf16.mxu0 0
      %3520 = vmatmul.mubr.bf16.gmra.mxu0 %v3392
      %v3521 = vpop.f32.mrf.mxu0
      %v3522 = vadd.f32 0.0, %v3521
      %v3523 = vpop.f32.mrf.mxu0
      %v3524 = vpop.f32.mrf.mxu0
      %v3525 = vadd.f32 0.0, %v3524
      %v3526 = vpop.f32.mrf.mxu0
      %3527 = vmatprep.mubr.bf16.mxu0 0
      %3528 = vmatmul.mubr.bf16.gmra.mxu0 %v3393
      %v3529 = vpop.f32.mrf.mxu0
      %v3530 = vadd.f32 0.0, %v3529
      %v3531 = vpop.f32.mrf.mxu0
      %v3532 = vpop.f32.mrf.mxu0
      %v3533 = vadd.f32 0.0, %v3532
      %v3534 = vpop.f32.mrf.mxu0
      %3535 = vmatprep.mubr.bf16.mxu0 0
      %3536 = vmatmul.mubr.bf16.gmra.mxu0 %v3394
      %v3537 = vpop.f32.mrf.mxu0
      %v3538 = vadd.f32 0.0, %v3537
      %v3539 = vpop.f32.mrf.mxu0
      %v3540 = vpop.f32.mrf.mxu0
      %v3541 = vadd.f32 0.0, %v3540
      %v3542 = vpop.f32.mrf.mxu0
      %3543 = vmatprep.mubr.bf16.mxu0 0
      %3544 = vmatmul.mubr.bf16.gmra.mxu0 %v3395
      %v3545 = vpop.f32.mrf.mxu0
      %v3546 = vadd.f32 0.0, %v3545
      %v3547 = vpop.f32.mrf.mxu0
      %v3548 = vpop.f32.mrf.mxu0
      %v3549 = vadd.f32 0.0, %v3548
      %v3550 = vpop.f32.mrf.mxu0
      %3551 = vmatprep.mubr.bf16.mxu0 0
      %3552 = vmatmul.mubr.bf16.gmra.mxu0 %v3396
      %v3553 = vpop.f32.mrf.mxu0
      %v3554 = vadd.f32 0.0, %v3553
      %v3555 = vpop.f32.mrf.mxu0
      %v3556 = vpop.f32.mrf.mxu0
      %v3557 = vadd.f32 0.0, %v3556
      %v3558 = vpop.f32.mrf.mxu0
      %3559 = vmatprep.mubr.bf16.mxu0 0
      %3560 = vmatmul.mubr.bf16.gmra.mxu0 %v3397
      %v3561 = vpop.f32.mrf.mxu0
      %v3562 = vadd.f32 0.0, %v3561
      %v3563 = vpop.f32.mrf.mxu0
      %v3564 = vpop.f32.mrf.mxu0
      %v3565 = vadd.f32 0.0, %v3564
      %v3566 = vpop.f32.mrf.mxu0
      %3567 = vmatprep.mubr.bf16.mxu0 0
      %3568 = vmatmul.mubr.bf16.gmra.mxu0 %v3398
      %v3569 = vpop.f32.mrf.mxu0
      %v3570 = vadd.f32 0.0, %v3569
      %v3571 = vpop.f32.mrf.mxu0
      %v3572 = vpop.f32.mrf.mxu0
      %v3573 = vadd.f32 0.0, %v3572
      %v3574 = vpop.f32.mrf.mxu0
      %3575 = vmatprep.mubr.bf16.mxu0 0
      %3576 = vmatmul.mubr.bf16.gmra.mxu0 %v3399
      %v3577 = vpop.f32.mrf.mxu0
      %v3578 = vadd.f32 0.0, %v3577
      %v3579 = vpop.f32.mrf.mxu0
      %v3580 = vpop.f32.mrf.mxu0
      %v3581 = vadd.f32 0.0, %v3580
      %v3582 = vpop.f32.mrf.mxu0
      %3583 = vmatprep.mubr.bf16.mxu0 0
      %3584 = vmatmul.mubr.bf16.gmra.mxu0 %v3400
      %v3585 = vpop.f32.mrf.mxu0
      %v3586 = vadd.f32 0.0, %v3585
      %v3587 = vpop.f32.mrf.mxu0
      %v3588 = vpop.f32.mrf.mxu0
      %v3589 = vadd.f32 0.0, %v3588
      %v3590 = vpop.f32.mrf.mxu0
      %3591 = vmatprep.mubr.bf16.mxu0 0
      %3592 = vmatmul.mubr.bf16.gmra.mxu0 %v3401
      %v3593 = vpop.f32.mrf.mxu0
      %v3594 = vadd.f32 0.0, %v3593
      %v3595 = vpop.f32.mrf.mxu0
      %v3596 = vpop.f32.mrf.mxu0
      %v3597 = vadd.f32 0.0, %v3596
      %v3598 = vpop.f32.mrf.mxu0
      %3599 = vmatprep.mubr.bf16.mxu0 0
      %3600 = vmatmul.mubr.bf16.gmra.mxu0 %v3402
      %v3601 = vpop.f32.mrf.mxu0
      %v3602 = vadd.f32 0.0, %v3601
      %v3603 = vpop.f32.mrf.mxu0
      %v3604 = vpop.f32.mrf.mxu0
      %v3605 = vadd.f32 0.0, %v3604
      %v3606 = vpop.f32.mrf.mxu0
      %3607 = vmatprep.mubr.bf16.mxu0 0
      %3608 = vmatmul.mubr.bf16.gmra.mxu0 %v3403
      %v3609 = vpop.f32.mrf.mxu0
      %v3610 = vadd.f32 0.0, %v3609
      %v3611 = vpop.f32.mrf.mxu0
      %v3612 = vpop.f32.mrf.mxu0
      %v3613 = vadd.f32 0.0, %v3612
      %v3614 = vpop.f32.mrf.mxu0
      %3615 = vmatprep.mubr.bf16.mxu0 0
      %3616 = vmatmul.mubr.bf16.gmra.mxu0 %v3404
      %v3617 = vpop.f32.mrf.mxu0
      %v3618 = vadd.f32 0.0, %v3617
      %v3619 = vpop.f32.mrf.mxu0
      %v3620 = vpop.f32.mrf.mxu0
      %v3621 = vadd.f32 0.0, %v3620
      %v3622 = vpop.f32.mrf.mxu0
      %3623 = vmatprep.mubr.bf16.mxu0 0
      %3624 = vmatmul.mubr.bf16.gmra.mxu0 %v3405
      %v3625 = vpop.f32.mrf.mxu0
      %v3626 = vadd.f32 0.0, %v3625
      %v3627 = vpop.f32.mrf.mxu0
      %v3628 = vpop.f32.mrf.mxu0
      %v3629 = vadd.f32 0.0, %v3628
      %v3630 = vpop.f32.mrf.mxu0
      %3631 = vdwg.mxu0
      %v3648 = vunpack.c.l.b16 %v3342
      %v3649 = vunpack.c.l.b16 %v3343
      %v3650 = vunpack.c.l.b16 %v3344
      %v3651 = vunpack.c.l.b16 %v3345
      %v3652 = vunpack.c.l.b16 %v3346
      %v3653 = vunpack.c.l.b16 %v3347
      %v3654 = vunpack.c.l.b16 %v3348
      %v3655 = vunpack.c.l.b16 %v3349
      %v3656 = vunpack.c.l.b16 %v3350
      %v3657 = vunpack.c.l.b16 %v3351
      %v3658 = vunpack.c.l.b16 %v3352
      %v3659 = vunpack.c.l.b16 %v3353
      %v3660 = vunpack.c.l.b16 %v3354
      %v3661 = vunpack.c.l.b16 %v3355
      %v3662 = vunpack.c.l.b16 %v3356
      %v3663 = vunpack.c.l.b16 %v3357
      %v3664 = vpack.c.b16 %v3649, %v3648
      %v3665 = vpack.c.b16 %v3651, %v3650
      %v3666 = vpack.c.b16 %v3653, %v3652
      %v3667 = vpack.c.b16 %v3655, %v3654
      %v3668 = vpack.c.b16 %v3657, %v3656
      %v3669 = vpack.c.b16 %v3659, %v3658
      %v3670 = vpack.c.b16 %v3661, %v3660
      %v3671 = vpack.c.b16 %v3663, %v3662
      %3680 = vmatprep.subr.bf16.mxu0 0
      %3681 = vmatpush1.bf16.msra.mxu0 %v3671
      %3682 = vmatprep.subr.bf16.mxu0 0
      %3683 = vmatpush1.bf16.msra.mxu0 %v3670
      %3684 = vmatprep.subr.bf16.mxu0 0
      %3685 = vmatpush1.bf16.msra.mxu0 %v3669
      %3686 = vmatprep.subr.bf16.mxu0 0
      %3687 = vmatpush1.bf16.msra.mxu0 %v3668
      %3688 = vmatprep.subr.bf16.mxu0 0
      %3689 = vmatpush1.bf16.msra.mxu0 %v3667
      %3690 = vmatprep.subr.bf16.mxu0 0
      %3691 = vmatpush1.bf16.msra.mxu0 %v3666
      %3692 = vmatprep.subr.bf16.mxu0 0
      %3693 = vmatpush1.bf16.msra.mxu0 %v3665
      %3694 = vmatprep.subr.bf16.mxu0 0
      %3695 = vmatpush1.bf16.msra.mxu0 %v3664
      %3696 = vmatprep.subr.bf16.mxu0 0
      %3697 = vmatpush2.bf16.msra.mxu0 0
      %3698 = vmatprep.subr.bf16.mxu0 0
      %3699 = vmatpush2.bf16.msra.mxu0 0
      %3700 = vmatprep.subr.bf16.mxu0 0
      %3701 = vmatpush2.bf16.msra.mxu0 0
      %3702 = vmatprep.subr.bf16.mxu0 0
      %3703 = vmatpush2.bf16.msra.mxu0 0
      %3704 = vmatprep.subr.bf16.mxu0 0
      %3705 = vmatpush2.bf16.msra.mxu0 0
      %3706 = vmatprep.subr.bf16.mxu0 0
      %3707 = vmatpush2.bf16.msra.mxu0 0
      %3708 = vmatprep.subr.bf16.mxu0 0
      %3709 = vmatpush2.bf16.msra.mxu0 0
      %3710 = vmatprep.subr.bf16.mxu0 0
      %3711 = vmatpush2.bf16.msra.mxu0 0
      %3712 = vmatprep.mubr.bf16.mxu0 0
      %3713 = vmatmul.mubr.bf16.gmra.mxu0 %v3326
      %v3714 = vpop.f32.mrf.mxu0
      %v3715 = vadd.f32 %v3506, %v3714
      %v3716 = vpop.f32.mrf.mxu0
      %v3717 = vpop.f32.mrf.mxu0
      %v3718 = vadd.f32 %v3509, %v3717
      %v3719 = vpop.f32.mrf.mxu0
      %3720 = vmatprep.mubr.bf16.mxu0 0
      %3721 = vmatmul.mubr.bf16.gmra.mxu0 %v3327
      %v3722 = vpop.f32.mrf.mxu0
      %v3723 = vadd.f32 %v3514, %v3722
      %v3724 = vpop.f32.mrf.mxu0
      %v3725 = vpop.f32.mrf.mxu0
      %v3726 = vadd.f32 %v3517, %v3725
      %v3727 = vpop.f32.mrf.mxu0
      %3728 = vmatprep.mubr.bf16.mxu0 0
      %3729 = vmatmul.mubr.bf16.gmra.mxu0 %v3328
      %v3730 = vpop.f32.mrf.mxu0
      %v3731 = vadd.f32 %v3522, %v3730
      %v3732 = vpop.f32.mrf.mxu0
      %v3733 = vpop.f32.mrf.mxu0
      %v3734 = vadd.f32 %v3525, %v3733
      %v3735 = vpop.f32.mrf.mxu0
      %3736 = vmatprep.mubr.bf16.mxu0 0
      %3737 = vmatmul.mubr.bf16.gmra.mxu0 %v3329
      %v3738 = vpop.f32.mrf.mxu0
      %v3739 = vadd.f32 %v3530, %v3738
      %v3740 = vpop.f32.mrf.mxu0
      %v3741 = vpop.f32.mrf.mxu0
      %v3742 = vadd.f32 %v3533, %v3741
      %v3743 = vpop.f32.mrf.mxu0
      %3744 = vmatprep.mubr.bf16.mxu0 0
      %3745 = vmatmul.mubr.bf16.gmra.mxu0 %v3330
      %v3746 = vpop.f32.mrf.mxu0
      %v3747 = vadd.f32 %v3538, %v3746
      %v3748 = vpop.f32.mrf.mxu0
      %v3749 = vpop.f32.mrf.mxu0
      %v3750 = vadd.f32 %v3541, %v3749
      %v3751 = vpop.f32.mrf.mxu0
      %3752 = vmatprep.mubr.bf16.mxu0 0
      %3753 = vmatmul.mubr.bf16.gmra.mxu0 %v3331
      %v3754 = vpop.f32.mrf.mxu0
      %v3755 = vadd.f32 %v3546, %v3754
      %v3756 = vpop.f32.mrf.mxu0
      %v3757 = vpop.f32.mrf.mxu0
      %v3758 = vadd.f32 %v3549, %v3757
      %v3759 = vpop.f32.mrf.mxu0
      %3760 = vmatprep.mubr.bf16.mxu0 0
      %3761 = vmatmul.mubr.bf16.gmra.mxu0 %v3332
      %v3762 = vpop.f32.mrf.mxu0
      %v3763 = vadd.f32 %v3554, %v3762
      %v3764 = vpop.f32.mrf.mxu0
      %v3765 = vpop.f32.mrf.mxu0
      %v3766 = vadd.f32 %v3557, %v3765
      %v3767 = vpop.f32.mrf.mxu0
      %3768 = vmatprep.mubr.bf16.mxu0 0
      %3769 = vmatmul.mubr.bf16.gmra.mxu0 %v3333
      %v3770 = vpop.f32.mrf.mxu0
      %v3771 = vadd.f32 %v3562, %v3770
      %v3772 = vpop.f32.mrf.mxu0
      %v3773 = vpop.f32.mrf.mxu0
      %v3774 = vadd.f32 %v3565, %v3773
      %v3775 = vpop.f32.mrf.mxu0
      %3776 = vmatprep.mubr.bf16.mxu0 0
      %3777 = vmatmul.mubr.bf16.gmra.mxu0 %v3334
      %v3778 = vpop.f32.mrf.mxu0
      %v3779 = vadd.f32 %v3570, %v3778
      %v3780 = vpop.f32.mrf.mxu0
      %v3781 = vpop.f32.mrf.mxu0
      %v3782 = vadd.f32 %v3573, %v3781
      %v3783 = vpop.f32.mrf.mxu0
      %3784 = vmatprep.mubr.bf16.mxu0 0
      %3785 = vmatmul.mubr.bf16.gmra.mxu0 %v3335
      %v3786 = vpop.f32.mrf.mxu0
      %v3787 = vadd.f32 %v3578, %v3786
      %v3788 = vpop.f32.mrf.mxu0
      %v3789 = vpop.f32.mrf.mxu0
      %v3790 = vadd.f32 %v3581, %v3789
      %v3791 = vpop.f32.mrf.mxu0
      %3792 = vmatprep.mubr.bf16.mxu0 0
      %3793 = vmatmul.mubr.bf16.gmra.mxu0 %v3336
      %v3794 = vpop.f32.mrf.mxu0
      %v3795 = vadd.f32 %v3586, %v3794
      %v3796 = vpop.f32.mrf.mxu0
      %v3797 = vpop.f32.mrf.mxu0
      %v3798 = vadd.f32 %v3589, %v3797
      %v3799 = vpop.f32.mrf.mxu0
      %3800 = vmatprep.mubr.bf16.mxu0 0
      %3801 = vmatmul.mubr.bf16.gmra.mxu0 %v3337
      %v3802 = vpop.f32.mrf.mxu0
      %v3803 = vadd.f32 %v3594, %v3802
      %v3804 = vpop.f32.mrf.mxu0
      %v3805 = vpop.f32.mrf.mxu0
      %v3806 = vadd.f32 %v3597, %v3805
      %v3807 = vpop.f32.mrf.mxu0
      %3808 = vmatprep.mubr.bf16.mxu0 0
      %3809 = vmatmul.mubr.bf16.gmra.mxu0 %v3338
      %v3810 = vpop.f32.mrf.mxu0
      %v3811 = vadd.f32 %v3602, %v3810
      %v3812 = vpop.f32.mrf.mxu0
      %v3813 = vpop.f32.mrf.mxu0
      %v3814 = vadd.f32 %v3605, %v3813
      %v3815 = vpop.f32.mrf.mxu0
      %3816 = vmatprep.mubr.bf16.mxu0 0
      %3817 = vmatmul.mubr.bf16.gmra.mxu0 %v3339
      %v3818 = vpop.f32.mrf.mxu0
      %v3819 = vadd.f32 %v3610, %v3818
      %v3820 = vpop.f32.mrf.mxu0
      %v3821 = vpop.f32.mrf.mxu0
      %v3822 = vadd.f32 %v3613, %v3821
      %v3823 = vpop.f32.mrf.mxu0
      %3824 = vmatprep.mubr.bf16.mxu0 0
      %3825 = vmatmul.mubr.bf16.gmra.mxu0 %v3340
      %v3826 = vpop.f32.mrf.mxu0
      %v3827 = vadd.f32 %v3618, %v3826
      %v3828 = vpop.f32.mrf.mxu0
      %v3829 = vpop.f32.mrf.mxu0
      %v3830 = vadd.f32 %v3621, %v3829
      %v3831 = vpop.f32.mrf.mxu0
      %3832 = vmatprep.mubr.bf16.mxu0 0
      %3833 = vmatmul.mubr.bf16.gmra.mxu0 %v3341
      %v3834 = vpop.f32.mrf.mxu0
      %v3835 = vadd.f32 %v3626, %v3834
      %v3836 = vpop.f32.mrf.mxu0
      %v3837 = vpop.f32.mrf.mxu0
      %v3838 = vadd.f32 %v3629, %v3837
      %v3839 = vpop.f32.mrf.mxu0
      %3840 = vdwg.mxu0
      %v3841 = vld [vmem:[#allocation2 + $0x9] sm:$0xff]
      %v3842 = vld [vmem:[#allocation2 + $0x11] sm:$0xff]
      %v3843 = vld [vmem:[#allocation2 + $0x29] sm:$0xff]
      %v3844 = vld [vmem:[#allocation2 + $0x31] sm:$0xff]
      %v3845 = vld [vmem:[#allocation2 + $0x49] sm:$0xff]
      %v3846 = vld [vmem:[#allocation2 + $0x51] sm:$0xff]
      %v3847 = vld [vmem:[#allocation2 + $0x69] sm:$0xff]
      %v3848 = vld [vmem:[#allocation2 + $0x71] sm:$0xff]
      %v3849 = vld [vmem:[#allocation2 + $0x89] sm:$0xff]
      %v3850 = vld [vmem:[#allocation2 + $0x91] sm:$0xff]
      %v3851 = vld [vmem:[#allocation2 + $0xa9] sm:$0xff]
      %v3852 = vld [vmem:[#allocation2 + $0xb1] sm:$0xff]
      %v3853 = vld [vmem:[#allocation2 + $0xc9] sm:$0xff]
      %v3854 = vld [vmem:[#allocation2 + $0xd1] sm:$0xff]
      %v3855 = vld [vmem:[#allocation2 + $0xe9] sm:$0xff]
      %v3856 = vld [vmem:[#allocation2 + $0xf1] sm:$0xff]
      %v3857 = vld [vmem:[#allocation2 + $0x109] sm:$0xff]
      %v3858 = vld [vmem:[#allocation2 + $0x111] sm:$0xff]
      %v3859 = vld [vmem:[#allocation2 + $0x129] sm:$0xff]
      %v3860 = vld [vmem:[#allocation2 + $0x131] sm:$0xff]
      %v3861 = vld [vmem:[#allocation2 + $0x149] sm:$0xff]
      %v3862 = vld [vmem:[#allocation2 + $0x151] sm:$0xff]
      %v3863 = vld [vmem:[#allocation2 + $0x169] sm:$0xff]
      %v3864 = vld [vmem:[#allocation2 + $0x171] sm:$0xff]
      %v3865 = vld [vmem:[#allocation2 + $0x189] sm:$0xff]
      %v3866 = vld [vmem:[#allocation2 + $0x191] sm:$0xff]
      %v3867 = vld [vmem:[#allocation2 + $0x1a9] sm:$0xff]
      %v3868 = vld [vmem:[#allocation2 + $0x1b1] sm:$0xff]
      %v3869 = vld [vmem:[#allocation2 + $0x1c9] sm:$0xff]
      %v3870 = vld [vmem:[#allocation2 + $0x1d1] sm:$0xff]
      %v3871 = vld [vmem:[#allocation2 + $0x1e9] sm:$0xff]
      %v3872 = vld [vmem:[#allocation2 + $0x1f1] sm:$0xff]
      %v3873 = vpack.c.bf16 %v3842, %v3841
      %v3874 = vpack.c.bf16 %v3844, %v3843
      %v3875 = vpack.c.bf16 %v3846, %v3845
      %v3876 = vpack.c.bf16 %v3848, %v3847
      %v3877 = vpack.c.bf16 %v3850, %v3849
      %v3878 = vpack.c.bf16 %v3852, %v3851
      %v3879 = vpack.c.bf16 %v3854, %v3853
      %v3880 = vpack.c.bf16 %v3856, %v3855
      %v3881 = vpack.c.bf16 %v3858, %v3857
      %v3882 = vpack.c.bf16 %v3860, %v3859
      %v3883 = vpack.c.bf16 %v3862, %v3861
      %v3884 = vpack.c.bf16 %v3864, %v3863
      %v3885 = vpack.c.bf16 %v3866, %v3865
      %v3886 = vpack.c.bf16 %v3868, %v3867
      %v3887 = vpack.c.bf16 %v3870, %v3869
      %v3888 = vpack.c.bf16 %v3872, %v3871
      %s3889 = scalar_lea.vmem %s3, 128
      %v3890 = vld [vmem:[%s3889] sm:$0xf]
      %v3891 = vld [vmem:[%s3889 + $0x4] sm:$0xf]
      %v3892 = vld [vmem:[%s3889 + $0x8] sm:$0xf]
      %v3893 = vld [vmem:[%s3889 + $0xc] sm:$0xf]
      %v3894 = vld [vmem:[%s3889 + $0x10] sm:$0xf]
      %v3895 = vld [vmem:[%s3889 + $0x14] sm:$0xf]
      %v3896 = vld [vmem:[%s3889 + $0x18] sm:$0xf]
      %v3897 = vld [vmem:[%s3889 + $0x1c] sm:$0xf]
      %v3898 = vld [vmem:[%s3889 + $0x20] sm:$0xf]
      %v3899 = vld [vmem:[%s3889 + $0x24] sm:$0xf]
      %v3900 = vld [vmem:[%s3889 + $0x28] sm:$0xf]
      %v3901 = vld [vmem:[%s3889 + $0x2c] sm:$0xf]
      %v3902 = vld [vmem:[%s3889 + $0x30] sm:$0xf]
      %v3903 = vld [vmem:[%s3889 + $0x34] sm:$0xf]
      %v3904 = vld [vmem:[%s3889 + $0x38] sm:$0xf]
      %v3905 = vld [vmem:[%s3889 + $0x3c] sm:$0xf]
      %v3922 = vunpack.c.l.b16 %v3890
      %v3923 = vunpack.c.l.b16 %v3891
      %v3924 = vunpack.c.l.b16 %v3892
      %v3925 = vunpack.c.l.b16 %v3893
      %v3926 = vunpack.c.l.b16 %v3894
      %v3927 = vunpack.c.l.b16 %v3895
      %v3928 = vunpack.c.l.b16 %v3896
      %v3929 = vunpack.c.l.b16 %v3897
      %v3930 = vunpack.c.l.b16 %v3898
      %v3931 = vunpack.c.l.b16 %v3899
      %v3932 = vunpack.c.l.b16 %v3900
      %v3933 = vunpack.c.l.b16 %v3901
      %v3934 = vunpack.c.l.b16 %v3902
      %v3935 = vunpack.c.l.b16 %v3903
      %v3936 = vunpack.c.l.b16 %v3904
      %v3937 = vunpack.c.l.b16 %v3905
      %v3938 = vpack.c.b16 %v3923, %v3922
      %v3939 = vpack.c.b16 %v3925, %v3924
      %v3940 = vpack.c.b16 %v3927, %v3926
      %v3941 = vpack.c.b16 %v3929, %v3928
      %v3942 = vpack.c.b16 %v3931, %v3930
      %v3943 = vpack.c.b16 %v3933, %v3932
      %v3944 = vpack.c.b16 %v3935, %v3934
      %v3945 = vpack.c.b16 %v3937, %v3936
      %3954 = vmatprep.subr.bf16.mxu0 0
      %3955 = vmatpush1.bf16.msra.mxu0 %v3945
      %3956 = vmatprep.subr.bf16.mxu0 0
      %3957 = vmatpush1.bf16.msra.mxu0 %v3944
      %3958 = vmatprep.subr.bf16.mxu0 0
      %3959 = vmatpush1.bf16.msra.mxu0 %v3943
      %3960 = vmatprep.subr.bf16.mxu0 0
      %3961 = vmatpush1.bf16.msra.mxu0 %v3942
      %3962 = vmatprep.subr.bf16.mxu0 0
      %3963 = vmatpush1.bf16.msra.mxu0 %v3941
      %3964 = vmatprep.subr.bf16.mxu0 0
      %3965 = vmatpush1.bf16.msra.mxu0 %v3940
      %3966 = vmatprep.subr.bf16.mxu0 0
      %3967 = vmatpush1.bf16.msra.mxu0 %v3939
      %3968 = vmatprep.subr.bf16.mxu0 0
      %3969 = vmatpush1.bf16.msra.mxu0 %v3938
      %3970 = vmatprep.subr.bf16.mxu0 0
      %3971 = vmatpush2.bf16.msra.mxu0 0
      %3972 = vmatprep.subr.bf16.mxu0 0
      %3973 = vmatpush2.bf16.msra.mxu0 0
      %3974 = vmatprep.subr.bf16.mxu0 0
      %3975 = vmatpush2.bf16.msra.mxu0 0
      %3976 = vmatprep.subr.bf16.mxu0 0
      %3977 = vmatpush2.bf16.msra.mxu0 0
      %3978 = vmatprep.subr.bf16.mxu0 0
      %3979 = vmatpush2.bf16.msra.mxu0 0
      %3980 = vmatprep.subr.bf16.mxu0 0
      %3981 = vmatpush2.bf16.msra.mxu0 0
      %3982 = vmatprep.subr.bf16.mxu0 0
      %3983 = vmatpush2.bf16.msra.mxu0 0
      %3984 = vmatprep.subr.bf16.mxu0 0
      %3985 = vmatpush2.bf16.msra.mxu0 0
      %3986 = vmatprep.mubr.bf16.mxu0 0
      %3987 = vmatmul.mubr.bf16.gmra.mxu0 %v3873
      %v3988 = vpop.f32.mrf.mxu0
      %v3989 = vadd.f32 0.0, %v3988
      %v3990 = vpop.f32.mrf.mxu0
      %v3991 = vpop.f32.mrf.mxu0
      %v3992 = vadd.f32 0.0, %v3991
      %v3993 = vpop.f32.mrf.mxu0
      %3994 = vmatprep.mubr.bf16.mxu0 0
      %3995 = vmatmul.mubr.bf16.gmra.mxu0 %v3874
      %v3996 = vpop.f32.mrf.mxu0
      %v3997 = vadd.f32 0.0, %v3996
      %v3998 = vpop.f32.mrf.mxu0
      %v3999 = vpop.f32.mrf.mxu0
      %v4000 = vadd.f32 0.0, %v3999
      %v4001 = vpop.f32.mrf.mxu0
      %4002 = vmatprep.mubr.bf16.mxu0 0
      %4003 = vmatmul.mubr.bf16.gmra.mxu0 %v3875
      %v4004 = vpop.f32.mrf.mxu0
      %v4005 = vadd.f32 0.0, %v4004
      %v4006 = vpop.f32.mrf.mxu0
      %v4007 = vpop.f32.mrf.mxu0
      %v4008 = vadd.f32 0.0, %v4007
      %v4009 = vpop.f32.mrf.mxu0
      %4010 = vmatprep.mubr.bf16.mxu0 0
      %4011 = vmatmul.mubr.bf16.gmra.mxu0 %v3876
      %v4012 = vpop.f32.mrf.mxu0
      %v4013 = vadd.f32 0.0, %v4012
      %v4014 = vpop.f32.mrf.mxu0
      %v4015 = vpop.f32.mrf.mxu0
      %v4016 = vadd.f32 0.0, %v4015
      %v4017 = vpop.f32.mrf.mxu0
      %4018 = vmatprep.mubr.bf16.mxu0 0
      %4019 = vmatmul.mubr.bf16.gmra.mxu0 %v3877
      %v4020 = vpop.f32.mrf.mxu0
      %v4021 = vadd.f32 0.0, %v4020
      %v4022 = vpop.f32.mrf.mxu0
      %v4023 = vpop.f32.mrf.mxu0
      %v4024 = vadd.f32 0.0, %v4023
      %v4025 = vpop.f32.mrf.mxu0
      %4026 = vmatprep.mubr.bf16.mxu0 0
      %4027 = vmatmul.mubr.bf16.gmra.mxu0 %v3878
      %v4028 = vpop.f32.mrf.mxu0
      %v4029 = vadd.f32 0.0, %v4028
      %v4030 = vpop.f32.mrf.mxu0
      %v4031 = vpop.f32.mrf.mxu0
      %v4032 = vadd.f32 0.0, %v4031
      %v4033 = vpop.f32.mrf.mxu0
      %4034 = vmatprep.mubr.bf16.mxu0 0
      %4035 = vmatmul.mubr.bf16.gmra.mxu0 %v3879
      %v4036 = vpop.f32.mrf.mxu0
      %v4037 = vadd.f32 0.0, %v4036
      %v4038 = vpop.f32.mrf.mxu0
      %v4039 = vpop.f32.mrf.mxu0
      %v4040 = vadd.f32 0.0, %v4039
      %v4041 = vpop.f32.mrf.mxu0
      %4042 = vmatprep.mubr.bf16.mxu0 0
      %4043 = vmatmul.mubr.bf16.gmra.mxu0 %v3880
      %v4044 = vpop.f32.mrf.mxu0
      %v4045 = vadd.f32 0.0, %v4044
      %v4046 = vpop.f32.mrf.mxu0
      %v4047 = vpop.f32.mrf.mxu0
      %v4048 = vadd.f32 0.0, %v4047
      %v4049 = vpop.f32.mrf.mxu0
      %4050 = vmatprep.mubr.bf16.mxu0 0
      %4051 = vmatmul.mubr.bf16.gmra.mxu0 %v3881
      %v4052 = vpop.f32.mrf.mxu0
      %v4053 = vadd.f32 0.0, %v4052
      %v4054 = vpop.f32.mrf.mxu0
      %v4055 = vpop.f32.mrf.mxu0
      %v4056 = vadd.f32 0.0, %v4055
      %v4057 = vpop.f32.mrf.mxu0
      %4058 = vmatprep.mubr.bf16.mxu0 0
      %4059 = vmatmul.mubr.bf16.gmra.mxu0 %v3882
      %v4060 = vpop.f32.mrf.mxu0
      %v4061 = vadd.f32 0.0, %v4060
      %v4062 = vpop.f32.mrf.mxu0
      %v4063 = vpop.f32.mrf.mxu0
      %v4064 = vadd.f32 0.0, %v4063
      %v4065 = vpop.f32.mrf.mxu0
      %4066 = vmatprep.mubr.bf16.mxu0 0
      %4067 = vmatmul.mubr.bf16.gmra.mxu0 %v3883
      %v4068 = vpop.f32.mrf.mxu0
      %v4069 = vadd.f32 0.0, %v4068
      %v4070 = vpop.f32.mrf.mxu0
      %v4071 = vpop.f32.mrf.mxu0
      %v4072 = vadd.f32 0.0, %v4071
      %v4073 = vpop.f32.mrf.mxu0
      %4074 = vmatprep.mubr.bf16.mxu0 0
      %4075 = vmatmul.mubr.bf16.gmra.mxu0 %v3884
      %v4076 = vpop.f32.mrf.mxu0
      %v4077 = vadd.f32 0.0, %v4076
      %v4078 = vpop.f32.mrf.mxu0
      %v4079 = vpop.f32.mrf.mxu0
      %v4080 = vadd.f32 0.0, %v4079
      %v4081 = vpop.f32.mrf.mxu0
      %4082 = vmatprep.mubr.bf16.mxu0 0
      %4083 = vmatmul.mubr.bf16.gmra.mxu0 %v3885
      %v4084 = vpop.f32.mrf.mxu0
      %v4085 = vadd.f32 0.0, %v4084
      %v4086 = vpop.f32.mrf.mxu0
      %v4087 = vpop.f32.mrf.mxu0
      %v4088 = vadd.f32 0.0, %v4087
      %v4089 = vpop.f32.mrf.mxu0
      %4090 = vmatprep.mubr.bf16.mxu0 0
      %4091 = vmatmul.mubr.bf16.gmra.mxu0 %v3886
      %v4092 = vpop.f32.mrf.mxu0
      %v4093 = vadd.f32 0.0, %v4092
      %v4094 = vpop.f32.mrf.mxu0
      %v4095 = vpop.f32.mrf.mxu0
      %v4096 = vadd.f32 0.0, %v4095
      %v4097 = vpop.f32.mrf.mxu0
      %4098 = vmatprep.mubr.bf16.mxu0 0
      %4099 = vmatmul.mubr.bf16.gmra.mxu0 %v3887
      %v4100 = vpop.f32.mrf.mxu0
      %v4101 = vadd.f32 0.0, %v4100
      %v4102 = vpop.f32.mrf.mxu0
      %v4103 = vpop.f32.mrf.mxu0
      %v4104 = vadd.f32 0.0, %v4103
      %v4105 = vpop.f32.mrf.mxu0
      %4106 = vmatprep.mubr.bf16.mxu0 0
      %4107 = vmatmul.mubr.bf16.gmra.mxu0 %v3888
      %v4108 = vpop.f32.mrf.mxu0
      %v4109 = vadd.f32 0.0, %v4108
      %v4110 = vpop.f32.mrf.mxu0
      %v4111 = vpop.f32.mrf.mxu0
      %v4112 = vadd.f32 0.0, %v4111
      %v4113 = vpop.f32.mrf.mxu0
      %4114 = vdwg.mxu0
      %v4115 = vadd.f32 %v3715, %v3989
      %v4116 = vadd.f32 %v3718, %v3992
      %v4117 = vadd.f32 %v3723, %v3997
      %v4118 = vadd.f32 %v3726, %v4000
      %v4119 = vadd.f32 %v3731, %v4005
      %v4120 = vadd.f32 %v3734, %v4008
      %v4121 = vadd.f32 %v3739, %v4013
      %v4122 = vadd.f32 %v3742, %v4016
      %v4123 = vadd.f32 %v3747, %v4021
      %v4124 = vadd.f32 %v3750, %v4024
      %v4125 = vadd.f32 %v3755, %v4029
      %v4126 = vadd.f32 %v3758, %v4032
      %v4127 = vadd.f32 %v3763, %v4037
      %v4128 = vadd.f32 %v3766, %v4040
      %v4129 = vadd.f32 %v3771, %v4045
      %v4130 = vadd.f32 %v3774, %v4048
      %v4131 = vadd.f32 %v3779, %v4053
      %v4132 = vadd.f32 %v3782, %v4056
      %v4133 = vadd.f32 %v3787, %v4061
      %v4134 = vadd.f32 %v3790, %v4064
      %v4135 = vadd.f32 %v3795, %v4069
      %v4136 = vadd.f32 %v3798, %v4072
      %v4137 = vadd.f32 %v3803, %v4077
      %v4138 = vadd.f32 %v3806, %v4080
      %v4139 = vadd.f32 %v3811, %v4085
      %v4140 = vadd.f32 %v3814, %v4088
      %v4141 = vadd.f32 %v3819, %v4093
      %v4142 = vadd.f32 %v3822, %v4096
      %v4143 = vadd.f32 %v3827, %v4101
      %v4144 = vadd.f32 %v3830, %v4104
      %v4145 = vadd.f32 %v3835, %v4109
      %v4146 = vadd.f32 %v3838, %v4112
      %v4147 = vld [vmem:[%s468 + $0x7] sm:$0xff]
      %v4148 = vld [vmem:[%s468 + $0xf] sm:$0xff]
      %v4149 = vld [vmem:[%s468 + $0x27] sm:$0xff]
      %v4150 = vld [vmem:[%s468 + $0x2f] sm:$0xff]
      %v4151 = vld [vmem:[%s468 + $0x47] sm:$0xff]
      %v4152 = vld [vmem:[%s468 + $0x4f] sm:$0xff]
      %v4153 = vld [vmem:[%s468 + $0x67] sm:$0xff]
      %v4154 = vld [vmem:[%s468 + $0x6f] sm:$0xff]
      %v4155 = vld [vmem:[%s468 + $0x87] sm:$0xff]
      %v4156 = vld [vmem:[%s468 + $0x8f] sm:$0xff]
      %v4157 = vld [vmem:[%s468 + $0xa7] sm:$0xff]
      %v4158 = vld [vmem:[%s468 + $0xaf] sm:$0xff]
      %v4159 = vld [vmem:[%s468 + $0xc7] sm:$0xff]
      %v4160 = vld [vmem:[%s468 + $0xcf] sm:$0xff]
      %v4161 = vld [vmem:[%s468 + $0xe7] sm:$0xff]
      %v4162 = vld [vmem:[%s468 + $0xef] sm:$0xff]
      %v4163 = vld [vmem:[%s468 + $0x107] sm:$0xff]
      %v4164 = vld [vmem:[%s468 + $0x10f] sm:$0xff]
      %v4165 = vld [vmem:[%s468 + $0x127] sm:$0xff]
      %v4166 = vld [vmem:[%s468 + $0x12f] sm:$0xff]
      %v4167 = vld [vmem:[%s468 + $0x147] sm:$0xff]
      %v4168 = vld [vmem:[%s468 + $0x14f] sm:$0xff]
      %v4169 = vld [vmem:[%s468 + $0x167] sm:$0xff]
      %v4170 = vld [vmem:[%s468 + $0x16f] sm:$0xff]
      %v4171 = vld [vmem:[%s468 + $0x187] sm:$0xff]
      %v4172 = vld [vmem:[%s468 + $0x18f] sm:$0xff]
      %v4173 = vld [vmem:[%s468 + $0x1a7] sm:$0xff]
      %v4174 = vld [vmem:[%s468 + $0x1af] sm:$0xff]
      %v4175 = vld [vmem:[%s468 + $0x1c7] sm:$0xff]
      %v4176 = vld [vmem:[%s468 + $0x1cf] sm:$0xff]
      %v4177 = vld [vmem:[%s468 + $0x1e7] sm:$0xff]
      %v4178 = vld [vmem:[%s468 + $0x1ef] sm:$0xff]
      %v4179 = vpack.c.bf16 %v4148, %v4147
      %v4180 = vpack.c.bf16 %v4150, %v4149
      %v4181 = vpack.c.bf16 %v4152, %v4151
      %v4182 = vpack.c.bf16 %v4154, %v4153
      %v4183 = vpack.c.bf16 %v4156, %v4155
      %v4184 = vpack.c.bf16 %v4158, %v4157
      %v4185 = vpack.c.bf16 %v4160, %v4159
      %v4186 = vpack.c.bf16 %v4162, %v4161
      %v4187 = vpack.c.bf16 %v4164, %v4163
      %v4188 = vpack.c.bf16 %v4166, %v4165
      %v4189 = vpack.c.bf16 %v4168, %v4167
      %v4190 = vpack.c.bf16 %v4170, %v4169
      %v4191 = vpack.c.bf16 %v4172, %v4171
      %v4192 = vpack.c.bf16 %v4174, %v4173
      %v4193 = vpack.c.bf16 %v4176, %v4175
      %v4194 = vpack.c.bf16 %v4178, %v4177
      %s4195 = scalar_lea.vmem %s3, 192
      %v4196 = vld [vmem:[%s4195] sm:$0xf]
      %v4197 = vld [vmem:[%s4195 + $0x4] sm:$0xf]
      %v4198 = vld [vmem:[%s4195 + $0x8] sm:$0xf]
      %v4199 = vld [vmem:[%s4195 + $0xc] sm:$0xf]
      %v4200 = vld [vmem:[%s4195 + $0x10] sm:$0xf]
      %v4201 = vld [vmem:[%s4195 + $0x14] sm:$0xf]
      %v4202 = vld [vmem:[%s4195 + $0x18] sm:$0xf]
      %v4203 = vld [vmem:[%s4195 + $0x1c] sm:$0xf]
      %v4204 = vld [vmem:[%s4195 + $0x20] sm:$0xf]
      %v4205 = vld [vmem:[%s4195 + $0x24] sm:$0xf]
      %v4206 = vld [vmem:[%s4195 + $0x28] sm:$0xf]
      %v4207 = vld [vmem:[%s4195 + $0x2c] sm:$0xf]
      %v4208 = vld [vmem:[%s4195 + $0x30] sm:$0xf]
      %v4209 = vld [vmem:[%s4195 + $0x34] sm:$0xf]
      %v4210 = vld [vmem:[%s4195 + $0x38] sm:$0xf]
      %v4211 = vld [vmem:[%s4195 + $0x3c] sm:$0xf]
      %v4228 = vunpack.c.l.b16 %v4196
      %v4229 = vunpack.c.l.b16 %v4197
      %v4230 = vunpack.c.l.b16 %v4198
      %v4231 = vunpack.c.l.b16 %v4199
      %v4232 = vunpack.c.l.b16 %v4200
      %v4233 = vunpack.c.l.b16 %v4201
      %v4234 = vunpack.c.l.b16 %v4202
      %v4235 = vunpack.c.l.b16 %v4203
      %v4236 = vunpack.c.l.b16 %v4204
      %v4237 = vunpack.c.l.b16 %v4205
      %v4238 = vunpack.c.l.b16 %v4206
      %v4239 = vunpack.c.l.b16 %v4207
      %v4240 = vunpack.c.l.b16 %v4208
      %v4241 = vunpack.c.l.b16 %v4209
      %v4242 = vunpack.c.l.b16 %v4210
      %v4243 = vunpack.c.l.b16 %v4211
      %v4244 = vpack.c.b16 %v4229, %v4228
      %v4245 = vpack.c.b16 %v4231, %v4230
      %v4246 = vpack.c.b16 %v4233, %v4232
      %v4247 = vpack.c.b16 %v4235, %v4234
      %v4248 = vpack.c.b16 %v4237, %v4236
      %v4249 = vpack.c.b16 %v4239, %v4238
      %v4250 = vpack.c.b16 %v4241, %v4240
      %v4251 = vpack.c.b16 %v4243, %v4242
      %4260 = vmatprep.subr.bf16.mxu0 0
      %4261 = vmatpush1.bf16.msra.mxu0 %v4251
      %4262 = vmatprep.subr.bf16.mxu0 0
      %4263 = vmatpush1.bf16.msra.mxu0 %v4250
      %4264 = vmatprep.subr.bf16.mxu0 0
      %4265 = vmatpush1.bf16.msra.mxu0 %v4249
      %4266 = vmatprep.subr.bf16.mxu0 0
      %4267 = vmatpush1.bf16.msra.mxu0 %v4248
      %4268 = vmatprep.subr.bf16.mxu0 0
      %4269 = vmatpush1.bf16.msra.mxu0 %v4247
      %4270 = vmatprep.subr.bf16.mxu0 0
      %4271 = vmatpush1.bf16.msra.mxu0 %v4246
      %4272 = vmatprep.subr.bf16.mxu0 0
      %4273 = vmatpush1.bf16.msra.mxu0 %v4245
      %4274 = vmatprep.subr.bf16.mxu0 0
      %4275 = vmatpush1.bf16.msra.mxu0 %v4244
      %4276 = vmatprep.subr.bf16.mxu0 0
      %4277 = vmatpush2.bf16.msra.mxu0 0
      %4278 = vmatprep.subr.bf16.mxu0 0
      %4279 = vmatpush2.bf16.msra.mxu0 0
      %4280 = vmatprep.subr.bf16.mxu0 0
      %4281 = vmatpush2.bf16.msra.mxu0 0
      %4282 = vmatprep.subr.bf16.mxu0 0
      %4283 = vmatpush2.bf16.msra.mxu0 0
      %4284 = vmatprep.subr.bf16.mxu0 0
      %4285 = vmatpush2.bf16.msra.mxu0 0
      %4286 = vmatprep.subr.bf16.mxu0 0
      %4287 = vmatpush2.bf16.msra.mxu0 0
      %4288 = vmatprep.subr.bf16.mxu0 0
      %4289 = vmatpush2.bf16.msra.mxu0 0
      %4290 = vmatprep.subr.bf16.mxu0 0
      %4291 = vmatpush2.bf16.msra.mxu0 0
      %4292 = vmatprep.mubr.bf16.mxu0 0
      %4293 = vmatmul.mubr.bf16.gmra.mxu0 %v4179
      %v4294 = vpop.f32.mrf.mxu0
      %v4295 = vadd.f32 0.0, %v4294
      %v4296 = vpop.f32.mrf.mxu0
      %v4297 = vpop.f32.mrf.mxu0
      %v4298 = vadd.f32 0.0, %v4297
      %v4299 = vpop.f32.mrf.mxu0
      %4300 = vmatprep.mubr.bf16.mxu0 0
      %4301 = vmatmul.mubr.bf16.gmra.mxu0 %v4180
      %v4302 = vpop.f32.mrf.mxu0
      %v4303 = vadd.f32 0.0, %v4302
      %v4304 = vpop.f32.mrf.mxu0
      %v4305 = vpop.f32.mrf.mxu0
      %v4306 = vadd.f32 0.0, %v4305
      %v4307 = vpop.f32.mrf.mxu0
      %4308 = vmatprep.mubr.bf16.mxu0 0
      %4309 = vmatmul.mubr.bf16.gmra.mxu0 %v4181
      %v4310 = vpop.f32.mrf.mxu0
      %v4311 = vadd.f32 0.0, %v4310
      %v4312 = vpop.f32.mrf.mxu0
      %v4313 = vpop.f32.mrf.mxu0
      %v4314 = vadd.f32 0.0, %v4313
      %v4315 = vpop.f32.mrf.mxu0
      %4316 = vmatprep.mubr.bf16.mxu0 0
      %4317 = vmatmul.mubr.bf16.gmra.mxu0 %v4182
      %v4318 = vpop.f32.mrf.mxu0
      %v4319 = vadd.f32 0.0, %v4318
      %v4320 = vpop.f32.mrf.mxu0
      %v4321 = vpop.f32.mrf.mxu0
      %v4322 = vadd.f32 0.0, %v4321
      %v4323 = vpop.f32.mrf.mxu0
      %4324 = vmatprep.mubr.bf16.mxu0 0
      %4325 = vmatmul.mubr.bf16.gmra.mxu0 %v4183
      %v4326 = vpop.f32.mrf.mxu0
      %v4327 = vadd.f32 0.0, %v4326
      %v4328 = vpop.f32.mrf.mxu0
      %v4329 = vpop.f32.mrf.mxu0
      %v4330 = vadd.f32 0.0, %v4329
      %v4331 = vpop.f32.mrf.mxu0
      %4332 = vmatprep.mubr.bf16.mxu0 0
      %4333 = vmatmul.mubr.bf16.gmra.mxu0 %v4184
      %v4334 = vpop.f32.mrf.mxu0
      %v4335 = vadd.f32 0.0, %v4334
      %v4336 = vpop.f32.mrf.mxu0
      %v4337 = vpop.f32.mrf.mxu0
      %v4338 = vadd.f32 0.0, %v4337
      %v4339 = vpop.f32.mrf.mxu0
      %4340 = vmatprep.mubr.bf16.mxu0 0
      %4341 = vmatmul.mubr.bf16.gmra.mxu0 %v4185
      %v4342 = vpop.f32.mrf.mxu0
      %v4343 = vadd.f32 0.0, %v4342
      %v4344 = vpop.f32.mrf.mxu0
      %v4345 = vpop.f32.mrf.mxu0
      %v4346 = vadd.f32 0.0, %v4345
      %v4347 = vpop.f32.mrf.mxu0
      %4348 = vmatprep.mubr.bf16.mxu0 0
      %4349 = vmatmul.mubr.bf16.gmra.mxu0 %v4186
      %v4350 = vpop.f32.mrf.mxu0
      %v4351 = vadd.f32 0.0, %v4350
      %v4352 = vpop.f32.mrf.mxu0
      %v4353 = vpop.f32.mrf.mxu0
      %v4354 = vadd.f32 0.0, %v4353
      %v4355 = vpop.f32.mrf.mxu0
      %4356 = vmatprep.mubr.bf16.mxu0 0
      %4357 = vmatmul.mubr.bf16.gmra.mxu0 %v4187
      %v4358 = vpop.f32.mrf.mxu0
      %v4359 = vadd.f32 0.0, %v4358
      %v4360 = vpop.f32.mrf.mxu0
      %v4361 = vpop.f32.mrf.mxu0
      %v4362 = vadd.f32 0.0, %v4361
      %v4363 = vpop.f32.mrf.mxu0
      %4364 = vmatprep.mubr.bf16.mxu0 0
      %4365 = vmatmul.mubr.bf16.gmra.mxu0 %v4188
      %v4366 = vpop.f32.mrf.mxu0
      %v4367 = vadd.f32 0.0, %v4366
      %v4368 = vpop.f32.mrf.mxu0
      %v4369 = vpop.f32.mrf.mxu0
      %v4370 = vadd.f32 0.0, %v4369
      %v4371 = vpop.f32.mrf.mxu0
      %4372 = vmatprep.mubr.bf16.mxu0 0
      %4373 = vmatmul.mubr.bf16.gmra.mxu0 %v4189
      %v4374 = vpop.f32.mrf.mxu0
      %v4375 = vadd.f32 0.0, %v4374
      %v4376 = vpop.f32.mrf.mxu0
      %v4377 = vpop.f32.mrf.mxu0
      %v4378 = vadd.f32 0.0, %v4377
      %v4379 = vpop.f32.mrf.mxu0
      %4380 = vmatprep.mubr.bf16.mxu0 0
      %4381 = vmatmul.mubr.bf16.gmra.mxu0 %v4190
      %v4382 = vpop.f32.mrf.mxu0
      %v4383 = vadd.f32 0.0, %v4382
      %v4384 = vpop.f32.mrf.mxu0
      %v4385 = vpop.f32.mrf.mxu0
      %v4386 = vadd.f32 0.0, %v4385
      %v4387 = vpop.f32.mrf.mxu0
      %4388 = vmatprep.mubr.bf16.mxu0 0
      %4389 = vmatmul.mubr.bf16.gmra.mxu0 %v4191
      %v4390 = vpop.f32.mrf.mxu0
      %v4391 = vadd.f32 0.0, %v4390
      %v4392 = vpop.f32.mrf.mxu0
      %v4393 = vpop.f32.mrf.mxu0
      %v4394 = vadd.f32 0.0, %v4393
      %v4395 = vpop.f32.mrf.mxu0
      %4396 = vmatprep.mubr.bf16.mxu0 0
      %4397 = vmatmul.mubr.bf16.gmra.mxu0 %v4192
      %v4398 = vpop.f32.mrf.mxu0
      %v4399 = vadd.f32 0.0, %v4398
      %v4400 = vpop.f32.mrf.mxu0
      %v4401 = vpop.f32.mrf.mxu0
      %v4402 = vadd.f32 0.0, %v4401
      %v4403 = vpop.f32.mrf.mxu0
      %4404 = vmatprep.mubr.bf16.mxu0 0
      %4405 = vmatmul.mubr.bf16.gmra.mxu0 %v4193
      %v4406 = vpop.f32.mrf.mxu0
      %v4407 = vadd.f32 0.0, %v4406
      %v4408 = vpop.f32.mrf.mxu0
      %v4409 = vpop.f32.mrf.mxu0
      %v4410 = vadd.f32 0.0, %v4409
      %v4411 = vpop.f32.mrf.mxu0
      %4412 = vmatprep.mubr.bf16.mxu0 0
      %4413 = vmatmul.mubr.bf16.gmra.mxu0 %v4194
      %v4414 = vpop.f32.mrf.mxu0
      %v4415 = vadd.f32 0.0, %v4414
      %v4416 = vpop.f32.mrf.mxu0
      %v4417 = vpop.f32.mrf.mxu0
      %v4418 = vadd.f32 0.0, %v4417
      %v4419 = vpop.f32.mrf.mxu0
      %4420 = vdwg.mxu0
      %v4421 = vadd.f32 %v4115, %v4295
      %v4422 = vadd.f32 %v4116, %v4298
      %v4423 = vadd.f32 %v4117, %v4303
      %v4424 = vadd.f32 %v4118, %v4306
      %v4425 = vadd.f32 %v4119, %v4311
      %v4426 = vadd.f32 %v4120, %v4314
      %v4427 = vadd.f32 %v4121, %v4319
      %v4428 = vadd.f32 %v4122, %v4322
      %v4429 = vadd.f32 %v4123, %v4327
      %v4430 = vadd.f32 %v4124, %v4330
      %v4431 = vadd.f32 %v4125, %v4335
      %v4432 = vadd.f32 %v4126, %v4338
      %v4433 = vadd.f32 %v4127, %v4343
      %v4434 = vadd.f32 %v4128, %v4346
      %v4435 = vadd.f32 %v4129, %v4351
      %v4436 = vadd.f32 %v4130, %v4354
      %v4437 = vadd.f32 %v4131, %v4359
      %v4438 = vadd.f32 %v4132, %v4362
      %v4439 = vadd.f32 %v4133, %v4367
      %v4440 = vadd.f32 %v4134, %v4370
      %v4441 = vadd.f32 %v4135, %v4375
      %v4442 = vadd.f32 %v4136, %v4378
      %v4443 = vadd.f32 %v4137, %v4383
      %v4444 = vadd.f32 %v4138, %v4386
      %v4445 = vadd.f32 %v4139, %v4391
      %v4446 = vadd.f32 %v4140, %v4394
      %v4447 = vadd.f32 %v4141, %v4399
      %v4448 = vadd.f32 %v4142, %v4402
      %v4449 = vadd.f32 %v4143, %v4407
      %v4450 = vadd.f32 %v4144, %v4410
      %v4451 = vadd.f32 %v4145, %v4415
      %v4452 = vadd.f32 %v4146, %v4418
      %v4453 = vld [vmem:[%s468 + $0x8] sm:$0xff]
      %v4454 = vld [vmem:[%s468 + $0x10] sm:$0xff]
      %v4455 = vld [vmem:[%s468 + $0x28] sm:$0xff]
      %v4456 = vld [vmem:[%s468 + $0x30] sm:$0xff]
      %v4457 = vld [vmem:[%s468 + $0x48] sm:$0xff]
      %v4458 = vld [vmem:[%s468 + $0x50] sm:$0xff]
      %v4459 = vld [vmem:[%s468 + $0x68] sm:$0xff]
      %v4460 = vld [vmem:[%s468 + $0x70] sm:$0xff]
      %v4461 = vld [vmem:[%s468 + $0x88] sm:$0xff]
      %v4462 = vld [vmem:[%s468 + $0x90] sm:$0xff]
      %v4463 = vld [vmem:[%s468 + $0xa8] sm:$0xff]
      %v4464 = vld [vmem:[%s468 + $0xb0] sm:$0xff]
      %v4465 = vld [vmem:[%s468 + $0xc8] sm:$0xff]
      %v4466 = vld [vmem:[%s468 + $0xd0] sm:$0xff]
      %v4467 = vld [vmem:[%s468 + $0xe8] sm:$0xff]
      %v4468 = vld [vmem:[%s468 + $0xf0] sm:$0xff]
      %v4469 = vld [vmem:[%s468 + $0x108] sm:$0xff]
      %v4470 = vld [vmem:[%s468 + $0x110] sm:$0xff]
      %v4471 = vld [vmem:[%s468 + $0x128] sm:$0xff]
      %v4472 = vld [vmem:[%s468 + $0x130] sm:$0xff]
      %v4473 = vld [vmem:[%s468 + $0x148] sm:$0xff]
      %v4474 = vld [vmem:[%s468 + $0x150] sm:$0xff]
      %v4475 = vld [vmem:[%s468 + $0x168] sm:$0xff]
      %v4476 = vld [vmem:[%s468 + $0x170] sm:$0xff]
      %v4477 = vld [vmem:[%s468 + $0x188] sm:$0xff]
      %v4478 = vld [vmem:[%s468 + $0x190] sm:$0xff]
      %v4479 = vld [vmem:[%s468 + $0x1a8] sm:$0xff]
      %v4480 = vld [vmem:[%s468 + $0x1b0] sm:$0xff]
      %v4481 = vld [vmem:[%s468 + $0x1c8] sm:$0xff]
      %v4482 = vld [vmem:[%s468 + $0x1d0] sm:$0xff]
      %v4483 = vld [vmem:[%s468 + $0x1e8] sm:$0xff]
      %v4484 = vld [vmem:[%s468 + $0x1f0] sm:$0xff]
      %v4485 = vpack.c.bf16 %v4454, %v4453
      %v4486 = vpack.c.bf16 %v4456, %v4455
      %v4487 = vpack.c.bf16 %v4458, %v4457
      %v4488 = vpack.c.bf16 %v4460, %v4459
      %v4489 = vpack.c.bf16 %v4462, %v4461
      %v4490 = vpack.c.bf16 %v4464, %v4463
      %v4491 = vpack.c.bf16 %v4466, %v4465
      %v4492 = vpack.c.bf16 %v4468, %v4467
      %v4493 = vpack.c.bf16 %v4470, %v4469
      %v4494 = vpack.c.bf16 %v4472, %v4471
      %v4495 = vpack.c.bf16 %v4474, %v4473
      %v4496 = vpack.c.bf16 %v4476, %v4475
      %v4497 = vpack.c.bf16 %v4478, %v4477
      %v4498 = vpack.c.bf16 %v4480, %v4479
      %v4499 = vpack.c.bf16 %v4482, %v4481
      %v4500 = vpack.c.bf16 %v4484, %v4483
      %s4501 = scalar_lea.vmem %s3, 256
      %v4502 = vld [vmem:[%s4501] sm:$0xf]
      %v4503 = vld [vmem:[%s4501 + $0x4] sm:$0xf]
      %v4504 = vld [vmem:[%s4501 + $0x8] sm:$0xf]
      %v4505 = vld [vmem:[%s4501 + $0xc] sm:$0xf]
      %v4506 = vld [vmem:[%s4501 + $0x10] sm:$0xf]
      %v4507 = vld [vmem:[%s4501 + $0x14] sm:$0xf]
      %v4508 = vld [vmem:[%s4501 + $0x18] sm:$0xf]
      %v4509 = vld [vmem:[%s4501 + $0x1c] sm:$0xf]
      %v4510 = vld [vmem:[%s4501 + $0x20] sm:$0xf]
      %v4511 = vld [vmem:[%s4501 + $0x24] sm:$0xf]
      %v4512 = vld [vmem:[%s4501 + $0x28] sm:$0xf]
      %v4513 = vld [vmem:[%s4501 + $0x2c] sm:$0xf]
      %v4514 = vld [vmem:[%s4501 + $0x30] sm:$0xf]
      %v4515 = vld [vmem:[%s4501 + $0x34] sm:$0xf]
      %v4516 = vld [vmem:[%s4501 + $0x38] sm:$0xf]
      %v4517 = vld [vmem:[%s4501 + $0x3c] sm:$0xf]
      %v4534 = vunpack.c.l.b16 %v4502
      %v4535 = vunpack.c.l.b16 %v4503
      %v4536 = vunpack.c.l.b16 %v4504
      %v4537 = vunpack.c.l.b16 %v4505
      %v4538 = vunpack.c.l.b16 %v4506
      %v4539 = vunpack.c.l.b16 %v4507
      %v4540 = vunpack.c.l.b16 %v4508
      %v4541 = vunpack.c.l.b16 %v4509
      %v4542 = vunpack.c.l.b16 %v4510
      %v4543 = vunpack.c.l.b16 %v4511
      %v4544 = vunpack.c.l.b16 %v4512
      %v4545 = vunpack.c.l.b16 %v4513
      %v4546 = vunpack.c.l.b16 %v4514
      %v4547 = vunpack.c.l.b16 %v4515
      %v4548 = vunpack.c.l.b16 %v4516
      %v4549 = vunpack.c.l.b16 %v4517
      %v4550 = vpack.c.b16 %v4535, %v4534
      %v4551 = vpack.c.b16 %v4537, %v4536
      %v4552 = vpack.c.b16 %v4539, %v4538
      %v4553 = vpack.c.b16 %v4541, %v4540
      %v4554 = vpack.c.b16 %v4543, %v4542
      %v4555 = vpack.c.b16 %v4545, %v4544
      %v4556 = vpack.c.b16 %v4547, %v4546
      %v4557 = vpack.c.b16 %v4549, %v4548
      %4566 = vmatprep.subr.bf16.mxu0 0
      %4567 = vmatpush1.bf16.msra.mxu0 %v4557
      %4568 = vmatprep.subr.bf16.mxu0 0
      %4569 = vmatpush1.bf16.msra.mxu0 %v4556
      %4570 = vmatprep.subr.bf16.mxu0 0
      %4571 = vmatpush1.bf16.msra.mxu0 %v4555
      %4572 = vmatprep.subr.bf16.mxu0 0
      %4573 = vmatpush1.bf16.msra.mxu0 %v4554
      %4574 = vmatprep.subr.bf16.mxu0 0
      %4575 = vmatpush1.bf16.msra.mxu0 %v4553
      %4576 = vmatprep.subr.bf16.mxu0 0
      %4577 = vmatpush1.bf16.msra.mxu0 %v4552
      %4578 = vmatprep.subr.bf16.mxu0 0
      %4579 = vmatpush1.bf16.msra.mxu0 %v4551
      %4580 = vmatprep.subr.bf16.mxu0 0
      %4581 = vmatpush1.bf16.msra.mxu0 %v4550
      %4582 = vmatprep.subr.bf16.mxu0 0
      %4583 = vmatpush2.bf16.msra.mxu0 0
      %4584 = vmatprep.subr.bf16.mxu0 0
      %4585 = vmatpush2.bf16.msra.mxu0 0
      %4586 = vmatprep.subr.bf16.mxu0 0
      %4587 = vmatpush2.bf16.msra.mxu0 0
      %4588 = vmatprep.subr.bf16.mxu0 0
      %4589 = vmatpush2.bf16.msra.mxu0 0
      %4590 = vmatprep.subr.bf16.mxu0 0
      %4591 = vmatpush2.bf16.msra.mxu0 0
      %4592 = vmatprep.subr.bf16.mxu0 0
      %4593 = vmatpush2.bf16.msra.mxu0 0
      %4594 = vmatprep.subr.bf16.mxu0 0
      %4595 = vmatpush2.bf16.msra.mxu0 0
      %4596 = vmatprep.subr.bf16.mxu0 0
      %4597 = vmatpush2.bf16.msra.mxu0 0
      %4598 = vmatprep.mubr.bf16.mxu0 0
      %4599 = vmatmul.mubr.bf16.gmra.mxu0 %v4485
      %v4600 = vpop.f32.mrf.mxu0
      %v4601 = vadd.f32 0.0, %v4600
      %v4602 = vpop.f32.mrf.mxu0
      %v4603 = vpop.f32.mrf.mxu0
      %v4604 = vadd.f32 0.0, %v4603
      %v4605 = vpop.f32.mrf.mxu0
      %4606 = vmatprep.mubr.bf16.mxu0 0
      %4607 = vmatmul.mubr.bf16.gmra.mxu0 %v4486
      %v4608 = vpop.f32.mrf.mxu0
      %v4609 = vadd.f32 0.0, %v4608
      %v4610 = vpop.f32.mrf.mxu0
      %v4611 = vpop.f32.mrf.mxu0
      %v4612 = vadd.f32 0.0, %v4611
      %v4613 = vpop.f32.mrf.mxu0
      %4614 = vmatprep.mubr.bf16.mxu0 0
      %4615 = vmatmul.mubr.bf16.gmra.mxu0 %v4487
      %v4616 = vpop.f32.mrf.mxu0
      %v4617 = vadd.f32 0.0, %v4616
      %v4618 = vpop.f32.mrf.mxu0
      %v4619 = vpop.f32.mrf.mxu0
      %v4620 = vadd.f32 0.0, %v4619
      %v4621 = vpop.f32.mrf.mxu0
      %4622 = vmatprep.mubr.bf16.mxu0 0
      %4623 = vmatmul.mubr.bf16.gmra.mxu0 %v4488
      %v4624 = vpop.f32.mrf.mxu0
      %v4625 = vadd.f32 0.0, %v4624
      %v4626 = vpop.f32.mrf.mxu0
      %v4627 = vpop.f32.mrf.mxu0
      %v4628 = vadd.f32 0.0, %v4627
      %v4629 = vpop.f32.mrf.mxu0
      %4630 = vmatprep.mubr.bf16.mxu0 0
      %4631 = vmatmul.mubr.bf16.gmra.mxu0 %v4489
      %v4632 = vpop.f32.mrf.mxu0
      %v4633 = vadd.f32 0.0, %v4632
      %v4634 = vpop.f32.mrf.mxu0
      %v4635 = vpop.f32.mrf.mxu0
      %v4636 = vadd.f32 0.0, %v4635
      %v4637 = vpop.f32.mrf.mxu0
      %4638 = vmatprep.mubr.bf16.mxu0 0
      %4639 = vmatmul.mubr.bf16.gmra.mxu0 %v4490
      %v4640 = vpop.f32.mrf.mxu0
      %v4641 = vadd.f32 0.0, %v4640
      %v4642 = vpop.f32.mrf.mxu0
      %v4643 = vpop.f32.mrf.mxu0
      %v4644 = vadd.f32 0.0, %v4643
      %v4645 = vpop.f32.mrf.mxu0
      %4646 = vmatprep.mubr.bf16.mxu0 0
      %4647 = vmatmul.mubr.bf16.gmra.mxu0 %v4491
      %v4648 = vpop.f32.mrf.mxu0
      %v4649 = vadd.f32 0.0, %v4648
      %v4650 = vpop.f32.mrf.mxu0
      %v4651 = vpop.f32.mrf.mxu0
      %v4652 = vadd.f32 0.0, %v4651
      %v4653 = vpop.f32.mrf.mxu0
      %4654 = vmatprep.mubr.bf16.mxu0 0
      %4655 = vmatmul.mubr.bf16.gmra.mxu0 %v4492
      %v4656 = vpop.f32.mrf.mxu0
      %v4657 = vadd.f32 0.0, %v4656
      %v4658 = vpop.f32.mrf.mxu0
      %v4659 = vpop.f32.mrf.mxu0
      %v4660 = vadd.f32 0.0, %v4659
      %v4661 = vpop.f32.mrf.mxu0
      %4662 = vmatprep.mubr.bf16.mxu0 0
      %4663 = vmatmul.mubr.bf16.gmra.mxu0 %v4493
      %v4664 = vpop.f32.mrf.mxu0
      %v4665 = vadd.f32 0.0, %v4664
      %v4666 = vpop.f32.mrf.mxu0
      %v4667 = vpop.f32.mrf.mxu0
      %v4668 = vadd.f32 0.0, %v4667
      %v4669 = vpop.f32.mrf.mxu0
      %4670 = vmatprep.mubr.bf16.mxu0 0
      %4671 = vmatmul.mubr.bf16.gmra.mxu0 %v4494
      %v4672 = vpop.f32.mrf.mxu0
      %v4673 = vadd.f32 0.0, %v4672
      %v4674 = vpop.f32.mrf.mxu0
      %v4675 = vpop.f32.mrf.mxu0
      %v4676 = vadd.f32 0.0, %v4675
      %v4677 = vpop.f32.mrf.mxu0
      %4678 = vmatprep.mubr.bf16.mxu0 0
      %4679 = vmatmul.mubr.bf16.gmra.mxu0 %v4495
      %v4680 = vpop.f32.mrf.mxu0
      %v4681 = vadd.f32 0.0, %v4680
      %v4682 = vpop.f32.mrf.mxu0
      %v4683 = vpop.f32.mrf.mxu0
      %v4684 = vadd.f32 0.0, %v4683
      %v4685 = vpop.f32.mrf.mxu0
      %4686 = vmatprep.mubr.bf16.mxu0 0
      %4687 = vmatmul.mubr.bf16.gmra.mxu0 %v4496
      %v4688 = vpop.f32.mrf.mxu0
      %v4689 = vadd.f32 0.0, %v4688
      %v4690 = vpop.f32.mrf.mxu0
      %v4691 = vpop.f32.mrf.mxu0
      %v4692 = vadd.f32 0.0, %v4691
      %v4693 = vpop.f32.mrf.mxu0
      %4694 = vmatprep.mubr.bf16.mxu0 0
      %4695 = vmatmul.mubr.bf16.gmra.mxu0 %v4497
      %v4696 = vpop.f32.mrf.mxu0
      %v4697 = vadd.f32 0.0, %v4696
      %v4698 = vpop.f32.mrf.mxu0
      %v4699 = vpop.f32.mrf.mxu0
      %v4700 = vadd.f32 0.0, %v4699
      %v4701 = vpop.f32.mrf.mxu0
      %4702 = vmatprep.mubr.bf16.mxu0 0
      %4703 = vmatmul.mubr.bf16.gmra.mxu0 %v4498
      %v4704 = vpop.f32.mrf.mxu0
      %v4705 = vadd.f32 0.0, %v4704
      %v4706 = vpop.f32.mrf.mxu0
      %v4707 = vpop.f32.mrf.mxu0
      %v4708 = vadd.f32 0.0, %v4707
      %v4709 = vpop.f32.mrf.mxu0
      %4710 = vmatprep.mubr.bf16.mxu0 0
      %4711 = vmatmul.mubr.bf16.gmra.mxu0 %v4499
      %v4712 = vpop.f32.mrf.mxu0
      %v4713 = vadd.f32 0.0, %v4712
      %v4714 = vpop.f32.mrf.mxu0
      %v4715 = vpop.f32.mrf.mxu0
      %v4716 = vadd.f32 0.0, %v4715
      %v4717 = vpop.f32.mrf.mxu0
      %4718 = vmatprep.mubr.bf16.mxu0 0
      %4719 = vmatmul.mubr.bf16.gmra.mxu0 %v4500
      %v4720 = vpop.f32.mrf.mxu0
      %v4721 = vadd.f32 0.0, %v4720
      %v4722 = vpop.f32.mrf.mxu0
      %v4723 = vpop.f32.mrf.mxu0
      %v4724 = vadd.f32 0.0, %v4723
      %v4725 = vpop.f32.mrf.mxu0
      %4726 = vdwg.mxu0
      %v4727 = vadd.f32 %v4421, %v4601
      %v4728 = vadd.f32 %v4422, %v4604
      %v4729 = vadd.f32 %v4423, %v4609
      %v4730 = vadd.f32 %v4424, %v4612
      %v4731 = vadd.f32 %v4425, %v4617
      %v4732 = vadd.f32 %v4426, %v4620
      %v4733 = vadd.f32 %v4427, %v4625
      %v4734 = vadd.f32 %v4428, %v4628
      %v4735 = vadd.f32 %v4429, %v4633
      %v4736 = vadd.f32 %v4430, %v4636
      %v4737 = vadd.f32 %v4431, %v4641
      %v4738 = vadd.f32 %v4432, %v4644
      %v4739 = vadd.f32 %v4433, %v4649
      %v4740 = vadd.f32 %v4434, %v4652
      %v4741 = vadd.f32 %v4435, %v4657
      %v4742 = vadd.f32 %v4436, %v4660
      %v4743 = vadd.f32 %v4437, %v4665
      %v4744 = vadd.f32 %v4438, %v4668
      %v4745 = vadd.f32 %v4439, %v4673
      %v4746 = vadd.f32 %v4440, %v4676
      %v4747 = vadd.f32 %v4441, %v4681
      %v4748 = vadd.f32 %v4442, %v4684
      %v4749 = vadd.f32 %v4443, %v4689
      %v4750 = vadd.f32 %v4444, %v4692
      %v4751 = vadd.f32 %v4445, %v4697
      %v4752 = vadd.f32 %v4446, %v4700
      %v4753 = vadd.f32 %v4447, %v4705
      %v4754 = vadd.f32 %v4448, %v4708
      %v4755 = vadd.f32 %v4449, %v4713
      %v4756 = vadd.f32 %v4450, %v4716
      %v4757 = vadd.f32 %v4451, %v4721
      %v4758 = vadd.f32 %v4452, %v4724
      %v4759 = vld [vmem:[%s468 + $0x9] sm:$0xff]
      %v4760 = vld [vmem:[%s468 + $0x11] sm:$0xff]
      %v4761 = vld [vmem:[%s468 + $0x29] sm:$0xff]
      %v4762 = vld [vmem:[%s468 + $0x31] sm:$0xff]
      %v4763 = vld [vmem:[%s468 + $0x49] sm:$0xff]
      %v4764 = vld [vmem:[%s468 + $0x51] sm:$0xff]
      %v4765 = vld [vmem:[%s468 + $0x69] sm:$0xff]
      %v4766 = vld [vmem:[%s468 + $0x71] sm:$0xff]
      %v4767 = vld [vmem:[%s468 + $0x89] sm:$0xff]
      %v4768 = vld [vmem:[%s468 + $0x91] sm:$0xff]
      %v4769 = vld [vmem:[%s468 + $0xa9] sm:$0xff]
      %v4770 = vld [vmem:[%s468 + $0xb1] sm:$0xff]
      %v4771 = vld [vmem:[%s468 + $0xc9] sm:$0xff]
      %v4772 = vld [vmem:[%s468 + $0xd1] sm:$0xff]
      %v4773 = vld [vmem:[%s468 + $0xe9] sm:$0xff]
      %v4774 = vld [vmem:[%s468 + $0xf1] sm:$0xff]
      %v4775 = vld [vmem:[%s468 + $0x109] sm:$0xff]
      %v4776 = vld [vmem:[%s468 + $0x111] sm:$0xff]
      %v4777 = vld [vmem:[%s468 + $0x129] sm:$0xff]
      %v4778 = vld [vmem:[%s468 + $0x131] sm:$0xff]
      %v4779 = vld [vmem:[%s468 + $0x149] sm:$0xff]
      %v4780 = vld [vmem:[%s468 + $0x151] sm:$0xff]
      %v4781 = vld [vmem:[%s468 + $0x169] sm:$0xff]
      %v4782 = vld [vmem:[%s468 + $0x171] sm:$0xff]
      %v4783 = vld [vmem:[%s468 + $0x189] sm:$0xff]
      %v4784 = vld [vmem:[%s468 + $0x191] sm:$0xff]
      %v4785 = vld [vmem:[%s468 + $0x1a9] sm:$0xff]
      %v4786 = vld [vmem:[%s468 + $0x1b1] sm:$0xff]
      %v4787 = vld [vmem:[%s468 + $0x1c9] sm:$0xff]
      %v4788 = vld [vmem:[%s468 + $0x1d1] sm:$0xff]
      %v4789 = vld [vmem:[%s468 + $0x1e9] sm:$0xff]
      %v4790 = vld [vmem:[%s468 + $0x1f1] sm:$0xff]
      %v4791 = vpack.c.bf16 %v4760, %v4759
      %v4792 = vpack.c.bf16 %v4762, %v4761
      %v4793 = vpack.c.bf16 %v4764, %v4763
      %v4794 = vpack.c.bf16 %v4766, %v4765
      %v4795 = vpack.c.bf16 %v4768, %v4767
      %v4796 = vpack.c.bf16 %v4770, %v4769
      %v4797 = vpack.c.bf16 %v4772, %v4771
      %v4798 = vpack.c.bf16 %v4774, %v4773
      %v4799 = vpack.c.bf16 %v4776, %v4775
      %v4800 = vpack.c.bf16 %v4778, %v4777
      %v4801 = vpack.c.bf16 %v4780, %v4779
      %v4802 = vpack.c.bf16 %v4782, %v4781
      %v4803 = vpack.c.bf16 %v4784, %v4783
      %v4804 = vpack.c.bf16 %v4786, %v4785
      %v4805 = vpack.c.bf16 %v4788, %v4787
      %v4806 = vpack.c.bf16 %v4790, %v4789
      %s4807 = scalar_lea.vmem %s3, 320
      %v4808 = vld [vmem:[%s4807] sm:$0xf]
      %v4809 = vld [vmem:[%s4807 + $0x4] sm:$0xf]
      %v4810 = vld [vmem:[%s4807 + $0x8] sm:$0xf]
      %v4811 = vld [vmem:[%s4807 + $0xc] sm:$0xf]
      %v4812 = vld [vmem:[%s4807 + $0x10] sm:$0xf]
      %v4813 = vld [vmem:[%s4807 + $0x14] sm:$0xf]
      %v4814 = vld [vmem:[%s4807 + $0x18] sm:$0xf]
      %v4815 = vld [vmem:[%s4807 + $0x1c] sm:$0xf]
      %v4816 = vld [vmem:[%s4807 + $0x20] sm:$0xf]
      %v4817 = vld [vmem:[%s4807 + $0x24] sm:$0xf]
      %v4818 = vld [vmem:[%s4807 + $0x28] sm:$0xf]
      %v4819 = vld [vmem:[%s4807 + $0x2c] sm:$0xf]
      %v4820 = vld [vmem:[%s4807 + $0x30] sm:$0xf]
      %v4821 = vld [vmem:[%s4807 + $0x34] sm:$0xf]
      %v4822 = vld [vmem:[%s4807 + $0x38] sm:$0xf]
      %v4823 = vld [vmem:[%s4807 + $0x3c] sm:$0xf]
      %v4840 = vunpack.c.l.b16 %v4808
      %v4841 = vunpack.c.l.b16 %v4809
      %v4842 = vunpack.c.l.b16 %v4810
      %v4843 = vunpack.c.l.b16 %v4811
      %v4844 = vunpack.c.l.b16 %v4812
      %v4845 = vunpack.c.l.b16 %v4813
      %v4846 = vunpack.c.l.b16 %v4814
      %v4847 = vunpack.c.l.b16 %v4815
      %v4848 = vunpack.c.l.b16 %v4816
      %v4849 = vunpack.c.l.b16 %v4817
      %v4850 = vunpack.c.l.b16 %v4818
      %v4851 = vunpack.c.l.b16 %v4819
      %v4852 = vunpack.c.l.b16 %v4820
      %v4853 = vunpack.c.l.b16 %v4821
      %v4854 = vunpack.c.l.b16 %v4822
      %v4855 = vunpack.c.l.b16 %v4823
      %v4856 = vpack.c.b16 %v4841, %v4840
      %v4857 = vpack.c.b16 %v4843, %v4842
      %v4858 = vpack.c.b16 %v4845, %v4844
      %v4859 = vpack.c.b16 %v4847, %v4846
      %v4860 = vpack.c.b16 %v4849, %v4848
      %v4861 = vpack.c.b16 %v4851, %v4850
      %v4862 = vpack.c.b16 %v4853, %v4852
      %v4863 = vpack.c.b16 %v4855, %v4854
      %4872 = vmatprep.subr.bf16.mxu0 0
      %4873 = vmatpush1.bf16.msra.mxu0 %v4863
      %4874 = vmatprep.subr.bf16.mxu0 0
      %4875 = vmatpush1.bf16.msra.mxu0 %v4862
      %4876 = vmatprep.subr.bf16.mxu0 0
      %4877 = vmatpush1.bf16.msra.mxu0 %v4861
      %4878 = vmatprep.subr.bf16.mxu0 0
      %4879 = vmatpush1.bf16.msra.mxu0 %v4860
      %4880 = vmatprep.subr.bf16.mxu0 0
      %4881 = vmatpush1.bf16.msra.mxu0 %v4859
      %4882 = vmatprep.subr.bf16.mxu0 0
      %4883 = vmatpush1.bf16.msra.mxu0 %v4858
      %4884 = vmatprep.subr.bf16.mxu0 0
      %4885 = vmatpush1.bf16.msra.mxu0 %v4857
      %4886 = vmatprep.subr.bf16.mxu0 0
      %4887 = vmatpush1.bf16.msra.mxu0 %v4856
      %4888 = vmatprep.subr.bf16.mxu0 0
      %4889 = vmatpush2.bf16.msra.mxu0 0
      %4890 = vmatprep.subr.bf16.mxu0 0
      %4891 = vmatpush2.bf16.msra.mxu0 0
      %4892 = vmatprep.subr.bf16.mxu0 0
      %4893 = vmatpush2.bf16.msra.mxu0 0
      %4894 = vmatprep.subr.bf16.mxu0 0
      %4895 = vmatpush2.bf16.msra.mxu0 0
      %4896 = vmatprep.subr.bf16.mxu0 0
      %4897 = vmatpush2.bf16.msra.mxu0 0
      %4898 = vmatprep.subr.bf16.mxu0 0
      %4899 = vmatpush2.bf16.msra.mxu0 0
      %4900 = vmatprep.subr.bf16.mxu0 0
      %4901 = vmatpush2.bf16.msra.mxu0 0
      %4902 = vmatprep.subr.bf16.mxu0 0
      %4903 = vmatpush2.bf16.msra.mxu0 0
      %4904 = vmatprep.mubr.bf16.mxu0 0
      %4905 = vmatmul.mubr.bf16.gmra.mxu0 %v4791
      %v4906 = vpop.f32.mrf.mxu0
      %v4907 = vadd.f32 0.0, %v4906
      %v4908 = vpop.f32.mrf.mxu0
      %v4909 = vpop.f32.mrf.mxu0
      %v4910 = vadd.f32 0.0, %v4909
      %v4911 = vpop.f32.mrf.mxu0
      %4912 = vmatprep.mubr.bf16.mxu0 0
      %4913 = vmatmul.mubr.bf16.gmra.mxu0 %v4792
      %v4914 = vpop.f32.mrf.mxu0
      %v4915 = vadd.f32 0.0, %v4914
      %v4916 = vpop.f32.mrf.mxu0
      %v4917 = vpop.f32.mrf.mxu0
      %v4918 = vadd.f32 0.0, %v4917
      %v4919 = vpop.f32.mrf.mxu0
      %4920 = vmatprep.mubr.bf16.mxu0 0
      %4921 = vmatmul.mubr.bf16.gmra.mxu0 %v4793
      %v4922 = vpop.f32.mrf.mxu0
      %v4923 = vadd.f32 0.0, %v4922
      %v4924 = vpop.f32.mrf.mxu0
      %v4925 = vpop.f32.mrf.mxu0
      %v4926 = vadd.f32 0.0, %v4925
      %v4927 = vpop.f32.mrf.mxu0
      %4928 = vmatprep.mubr.bf16.mxu0 0
      %4929 = vmatmul.mubr.bf16.gmra.mxu0 %v4794
      %v4930 = vpop.f32.mrf.mxu0
      %v4931 = vadd.f32 0.0, %v4930
      %v4932 = vpop.f32.mrf.mxu0
      %v4933 = vpop.f32.mrf.mxu0
      %v4934 = vadd.f32 0.0, %v4933
      %v4935 = vpop.f32.mrf.mxu0
      %4936 = vmatprep.mubr.bf16.mxu0 0
      %4937 = vmatmul.mubr.bf16.gmra.mxu0 %v4795
      %v4938 = vpop.f32.mrf.mxu0
      %v4939 = vadd.f32 0.0, %v4938
      %v4940 = vpop.f32.mrf.mxu0
      %v4941 = vpop.f32.mrf.mxu0
      %v4942 = vadd.f32 0.0, %v4941
      %v4943 = vpop.f32.mrf.mxu0
      %4944 = vmatprep.mubr.bf16.mxu0 0
      %4945 = vmatmul.mubr.bf16.gmra.mxu0 %v4796
      %v4946 = vpop.f32.mrf.mxu0
      %v4947 = vadd.f32 0.0, %v4946
      %v4948 = vpop.f32.mrf.mxu0
      %v4949 = vpop.f32.mrf.mxu0
      %v4950 = vadd.f32 0.0, %v4949
      %v4951 = vpop.f32.mrf.mxu0
      %4952 = vmatprep.mubr.bf16.mxu0 0
      %4953 = vmatmul.mubr.bf16.gmra.mxu0 %v4797
      %v4954 = vpop.f32.mrf.mxu0
      %v4955 = vadd.f32 0.0, %v4954
      %v4956 = vpop.f32.mrf.mxu0
      %v4957 = vpop.f32.mrf.mxu0
      %v4958 = vadd.f32 0.0, %v4957
      %v4959 = vpop.f32.mrf.mxu0
      %4960 = vmatprep.mubr.bf16.mxu0 0
      %4961 = vmatmul.mubr.bf16.gmra.mxu0 %v4798
      %v4962 = vpop.f32.mrf.mxu0
      %v4963 = vadd.f32 0.0, %v4962
      %v4964 = vpop.f32.mrf.mxu0
      %v4965 = vpop.f32.mrf.mxu0
      %v4966 = vadd.f32 0.0, %v4965
      %v4967 = vpop.f32.mrf.mxu0
      %4968 = vmatprep.mubr.bf16.mxu0 0
      %4969 = vmatmul.mubr.bf16.gmra.mxu0 %v4799
      %v4970 = vpop.f32.mrf.mxu0
      %v4971 = vadd.f32 0.0, %v4970
      %v4972 = vpop.f32.mrf.mxu0
      %v4973 = vpop.f32.mrf.mxu0
      %v4974 = vadd.f32 0.0, %v4973
      %v4975 = vpop.f32.mrf.mxu0
      %4976 = vmatprep.mubr.bf16.mxu0 0
      %4977 = vmatmul.mubr.bf16.gmra.mxu0 %v4800
      %v4978 = vpop.f32.mrf.mxu0
      %v4979 = vadd.f32 0.0, %v4978
      %v4980 = vpop.f32.mrf.mxu0
      %v4981 = vpop.f32.mrf.mxu0
      %v4982 = vadd.f32 0.0, %v4981
      %v4983 = vpop.f32.mrf.mxu0
      %4984 = vmatprep.mubr.bf16.mxu0 0
      %4985 = vmatmul.mubr.bf16.gmra.mxu0 %v4801
      %v4986 = vpop.f32.mrf.mxu0
      %v4987 = vadd.f32 0.0, %v4986
      %v4988 = vpop.f32.mrf.mxu0
      %v4989 = vpop.f32.mrf.mxu0
      %v4990 = vadd.f32 0.0, %v4989
      %v4991 = vpop.f32.mrf.mxu0
      %4992 = vmatprep.mubr.bf16.mxu0 0
      %4993 = vmatmul.mubr.bf16.gmra.mxu0 %v4802
      %v4994 = vpop.f32.mrf.mxu0
      %v4995 = vadd.f32 0.0, %v4994
      %v4996 = vpop.f32.mrf.mxu0
      %v4997 = vpop.f32.mrf.mxu0
      %v4998 = vadd.f32 0.0, %v4997
      %v4999 = vpop.f32.mrf.mxu0
      %5000 = vmatprep.mubr.bf16.mxu0 0
      %5001 = vmatmul.mubr.bf16.gmra.mxu0 %v4803
      %v5002 = vpop.f32.mrf.mxu0
      %v5003 = vadd.f32 0.0, %v5002
      %v5004 = vpop.f32.mrf.mxu0
      %v5005 = vpop.f32.mrf.mxu0
      %v5006 = vadd.f32 0.0, %v5005
      %v5007 = vpop.f32.mrf.mxu0
      %5008 = vmatprep.mubr.bf16.mxu0 0
      %5009 = vmatmul.mubr.bf16.gmra.mxu0 %v4804
      %v5010 = vpop.f32.mrf.mxu0
      %v5011 = vadd.f32 0.0, %v5010
      %v5012 = vpop.f32.mrf.mxu0
      %v5013 = vpop.f32.mrf.mxu0
      %v5014 = vadd.f32 0.0, %v5013
      %v5015 = vpop.f32.mrf.mxu0
      %5016 = vmatprep.mubr.bf16.mxu0 0
      %5017 = vmatmul.mubr.bf16.gmra.mxu0 %v4805
      %v5018 = vpop.f32.mrf.mxu0
      %v5019 = vadd.f32 0.0, %v5018
      %v5020 = vpop.f32.mrf.mxu0
      %v5021 = vpop.f32.mrf.mxu0
      %v5022 = vadd.f32 0.0, %v5021
      %v5023 = vpop.f32.mrf.mxu0
      %5024 = vmatprep.mubr.bf16.mxu0 0
      %5025 = vmatmul.mubr.bf16.gmra.mxu0 %v4806
      %v5026 = vpop.f32.mrf.mxu0
      %v5027 = vadd.f32 0.0, %v5026
      %v5028 = vpop.f32.mrf.mxu0
      %v5029 = vpop.f32.mrf.mxu0
      %v5030 = vadd.f32 0.0, %v5029
      %v5031 = vpop.f32.mrf.mxu0
      %5032 = vdwg.mxu0
      %v5033 = vadd.f32 %v4727, %v4907
      %v5034 = vadd.f32 %v4728, %v4910
      %v5035 = vadd.f32 %v4729, %v4915
      %v5036 = vadd.f32 %v4730, %v4918
      %v5037 = vadd.f32 %v4731, %v4923
      %v5038 = vadd.f32 %v4732, %v4926
      %v5039 = vadd.f32 %v4733, %v4931
      %v5040 = vadd.f32 %v4734, %v4934
      %v5041 = vadd.f32 %v4735, %v4939
      %v5042 = vadd.f32 %v4736, %v4942
      %v5043 = vadd.f32 %v4737, %v4947
      %v5044 = vadd.f32 %v4738, %v4950
      %v5045 = vadd.f32 %v4739, %v4955
      %v5046 = vadd.f32 %v4740, %v4958
      %v5047 = vadd.f32 %v4741, %v4963
      %v5048 = vadd.f32 %v4742, %v4966
      %v5049 = vadd.f32 %v4743, %v4971
      %v5050 = vadd.f32 %v4744, %v4974
      %v5051 = vadd.f32 %v4745, %v4979
      %v5052 = vadd.f32 %v4746, %v4982
      %v5053 = vadd.f32 %v4747, %v4987
      %v5054 = vadd.f32 %v4748, %v4990
      %v5055 = vadd.f32 %v4749, %v4995
      %v5056 = vadd.f32 %v4750, %v4998
      %v5057 = vadd.f32 %v4751, %v5003
      %v5058 = vadd.f32 %v4752, %v5006
      %v5059 = vadd.f32 %v4753, %v5011
      %v5060 = vadd.f32 %v4754, %v5014
      %v5061 = vadd.f32 %v4755, %v5019
      %v5062 = vadd.f32 %v4756, %v5022
      %v5063 = vadd.f32 %v4757, %v5027
      %v5064 = vadd.f32 %v4758, %v5030
      %v5065 = vld [vmem:[%s2272 + $0x7] sm:$0xff]
      %v5066 = vld [vmem:[%s2272 + $0xf] sm:$0xff]
      %v5067 = vld [vmem:[%s2272 + $0x27] sm:$0xff]
      %v5068 = vld [vmem:[%s2272 + $0x2f] sm:$0xff]
      %v5069 = vld [vmem:[%s2272 + $0x47] sm:$0xff]
      %v5070 = vld [vmem:[%s2272 + $0x4f] sm:$0xff]
      %v5071 = vld [vmem:[%s2272 + $0x67] sm:$0xff]
      %v5072 = vld [vmem:[%s2272 + $0x6f] sm:$0xff]
      %v5073 = vld [vmem:[%s2272 + $0x87] sm:$0xff]
      %v5074 = vld [vmem:[%s2272 + $0x8f] sm:$0xff]
      %v5075 = vld [vmem:[%s2272 + $0xa7] sm:$0xff]
      %v5076 = vld [vmem:[%s2272 + $0xaf] sm:$0xff]
      %v5077 = vld [vmem:[%s2272 + $0xc7] sm:$0xff]
      %v5078 = vld [vmem:[%s2272 + $0xcf] sm:$0xff]
      %v5079 = vld [vmem:[%s2272 + $0xe7] sm:$0xff]
      %v5080 = vld [vmem:[%s2272 + $0xef] sm:$0xff]
      %v5081 = vld [vmem:[%s2272 + $0x107] sm:$0xff]
      %v5082 = vld [vmem:[%s2272 + $0x10f] sm:$0xff]
      %v5083 = vld [vmem:[%s2272 + $0x127] sm:$0xff]
      %v5084 = vld [vmem:[%s2272 + $0x12f] sm:$0xff]
      %v5085 = vld [vmem:[%s2272 + $0x147] sm:$0xff]
      %v5086 = vld [vmem:[%s2272 + $0x14f] sm:$0xff]
      %v5087 = vld [vmem:[%s2272 + $0x167] sm:$0xff]
      %v5088 = vld [vmem:[%s2272 + $0x16f] sm:$0xff]
      %v5089 = vld [vmem:[%s2272 + $0x187] sm:$0xff]
      %v5090 = vld [vmem:[%s2272 + $0x18f] sm:$0xff]
      %v5091 = vld [vmem:[%s2272 + $0x1a7] sm:$0xff]
      %v5092 = vld [vmem:[%s2272 + $0x1af] sm:$0xff]
      %v5093 = vld [vmem:[%s2272 + $0x1c7] sm:$0xff]
      %v5094 = vld [vmem:[%s2272 + $0x1cf] sm:$0xff]
      %v5095 = vld [vmem:[%s2272 + $0x1e7] sm:$0xff]
      %v5096 = vld [vmem:[%s2272 + $0x1ef] sm:$0xff]
      %v5097 = vpack.c.bf16 %v5066, %v5065
      %v5098 = vpack.c.bf16 %v5068, %v5067
      %v5099 = vpack.c.bf16 %v5070, %v5069
      %v5100 = vpack.c.bf16 %v5072, %v5071
      %v5101 = vpack.c.bf16 %v5074, %v5073
      %v5102 = vpack.c.bf16 %v5076, %v5075
      %v5103 = vpack.c.bf16 %v5078, %v5077
      %v5104 = vpack.c.bf16 %v5080, %v5079
      %v5105 = vpack.c.bf16 %v5082, %v5081
      %v5106 = vpack.c.bf16 %v5084, %v5083
      %v5107 = vpack.c.bf16 %v5086, %v5085
      %v5108 = vpack.c.bf16 %v5088, %v5087
      %v5109 = vpack.c.bf16 %v5090, %v5089
      %v5110 = vpack.c.bf16 %v5092, %v5091
      %v5111 = vpack.c.bf16 %v5094, %v5093
      %v5112 = vpack.c.bf16 %v5096, %v5095
      %s5113 = scalar_lea.vmem %s3, 384
      %v5114 = vld [vmem:[%s5113] sm:$0xf]
      %v5115 = vld [vmem:[%s5113 + $0x4] sm:$0xf]
      %v5116 = vld [vmem:[%s5113 + $0x8] sm:$0xf]
      %v5117 = vld [vmem:[%s5113 + $0xc] sm:$0xf]
      %v5118 = vld [vmem:[%s5113 + $0x10] sm:$0xf]
      %v5119 = vld [vmem:[%s5113 + $0x14] sm:$0xf]
      %v5120 = vld [vmem:[%s5113 + $0x18] sm:$0xf]
      %v5121 = vld [vmem:[%s5113 + $0x1c] sm:$0xf]
      %v5122 = vld [vmem:[%s5113 + $0x20] sm:$0xf]
      %v5123 = vld [vmem:[%s5113 + $0x24] sm:$0xf]
      %v5124 = vld [vmem:[%s5113 + $0x28] sm:$0xf]
      %v5125 = vld [vmem:[%s5113 + $0x2c] sm:$0xf]
      %v5126 = vld [vmem:[%s5113 + $0x30] sm:$0xf]
      %v5127 = vld [vmem:[%s5113 + $0x34] sm:$0xf]
      %v5128 = vld [vmem:[%s5113 + $0x38] sm:$0xf]
      %v5129 = vld [vmem:[%s5113 + $0x3c] sm:$0xf]
      %v5146 = vunpack.c.l.b16 %v5114
      %v5147 = vunpack.c.l.b16 %v5115
      %v5148 = vunpack.c.l.b16 %v5116
      %v5149 = vunpack.c.l.b16 %v5117
      %v5150 = vunpack.c.l.b16 %v5118
      %v5151 = vunpack.c.l.b16 %v5119
      %v5152 = vunpack.c.l.b16 %v5120
      %v5153 = vunpack.c.l.b16 %v5121
      %v5154 = vunpack.c.l.b16 %v5122
      %v5155 = vunpack.c.l.b16 %v5123
      %v5156 = vunpack.c.l.b16 %v5124
      %v5157 = vunpack.c.l.b16 %v5125
      %v5158 = vunpack.c.l.b16 %v5126
      %v5159 = vunpack.c.l.b16 %v5127
      %v5160 = vunpack.c.l.b16 %v5128
      %v5161 = vunpack.c.l.b16 %v5129
      %v5162 = vpack.c.b16 %v5147, %v5146
      %v5163 = vpack.c.b16 %v5149, %v5148
      %v5164 = vpack.c.b16 %v5151, %v5150
      %v5165 = vpack.c.b16 %v5153, %v5152
      %v5166 = vpack.c.b16 %v5155, %v5154
      %v5167 = vpack.c.b16 %v5157, %v5156
      %v5168 = vpack.c.b16 %v5159, %v5158
      %v5169 = vpack.c.b16 %v5161, %v5160
      %5178 = vmatprep.subr.bf16.mxu0 0
      %5179 = vmatpush1.bf16.msra.mxu0 %v5169
      %5180 = vmatprep.subr.bf16.mxu0 0
      %5181 = vmatpush1.bf16.msra.mxu0 %v5168
      %5182 = vmatprep.subr.bf16.mxu0 0
      %5183 = vmatpush1.bf16.msra.mxu0 %v5167
      %5184 = vmatprep.subr.bf16.mxu0 0
      %5185 = vmatpush1.bf16.msra.mxu0 %v5166
      %5186 = vmatprep.subr.bf16.mxu0 0
      %5187 = vmatpush1.bf16.msra.mxu0 %v5165
      %5188 = vmatprep.subr.bf16.mxu0 0
      %5189 = vmatpush1.bf16.msra.mxu0 %v5164
      %5190 = vmatprep.subr.bf16.mxu0 0
      %5191 = vmatpush1.bf16.msra.mxu0 %v5163
      %5192 = vmatprep.subr.bf16.mxu0 0
      %5193 = vmatpush1.bf16.msra.mxu0 %v5162
      %5194 = vmatprep.subr.bf16.mxu0 0
      %5195 = vmatpush2.bf16.msra.mxu0 0
      %5196 = vmatprep.subr.bf16.mxu0 0
      %5197 = vmatpush2.bf16.msra.mxu0 0
      %5198 = vmatprep.subr.bf16.mxu0 0
      %5199 = vmatpush2.bf16.msra.mxu0 0
      %5200 = vmatprep.subr.bf16.mxu0 0
      %5201 = vmatpush2.bf16.msra.mxu0 0
      %5202 = vmatprep.subr.bf16.mxu0 0
      %5203 = vmatpush2.bf16.msra.mxu0 0
      %5204 = vmatprep.subr.bf16.mxu0 0
      %5205 = vmatpush2.bf16.msra.mxu0 0
      %5206 = vmatprep.subr.bf16.mxu0 0
      %5207 = vmatpush2.bf16.msra.mxu0 0
      %5208 = vmatprep.subr.bf16.mxu0 0
      %5209 = vmatpush2.bf16.msra.mxu0 0
      %5210 = vmatprep.mubr.bf16.mxu0 0
      %5211 = vmatmul.mubr.bf16.gmra.mxu0 %v5097
      %v5212 = vpop.f32.mrf.mxu0
      %v5213 = vadd.f32 0.0, %v5212
      %v5214 = vpop.f32.mrf.mxu0
      %v5215 = vpop.f32.mrf.mxu0
      %v5216 = vadd.f32 0.0, %v5215
      %v5217 = vpop.f32.mrf.mxu0
      %5218 = vmatprep.mubr.bf16.mxu0 0
      %5219 = vmatmul.mubr.bf16.gmra.mxu0 %v5098
      %v5220 = vpop.f32.mrf.mxu0
      %v5221 = vadd.f32 0.0, %v5220
      %v5222 = vpop.f32.mrf.mxu0
      %v5223 = vpop.f32.mrf.mxu0
      %v5224 = vadd.f32 0.0, %v5223
      %v5225 = vpop.f32.mrf.mxu0
      %5226 = vmatprep.mubr.bf16.mxu0 0
      %5227 = vmatmul.mubr.bf16.gmra.mxu0 %v5099
      %v5228 = vpop.f32.mrf.mxu0
      %v5229 = vadd.f32 0.0, %v5228
      %v5230 = vpop.f32.mrf.mxu0
      %v5231 = vpop.f32.mrf.mxu0
      %v5232 = vadd.f32 0.0, %v5231
      %v5233 = vpop.f32.mrf.mxu0
      %5234 = vmatprep.mubr.bf16.mxu0 0
      %5235 = vmatmul.mubr.bf16.gmra.mxu0 %v5100
      %v5236 = vpop.f32.mrf.mxu0
      %v5237 = vadd.f32 0.0, %v5236
      %v5238 = vpop.f32.mrf.mxu0
      %v5239 = vpop.f32.mrf.mxu0
      %v5240 = vadd.f32 0.0, %v5239
      %v5241 = vpop.f32.mrf.mxu0
      %5242 = vmatprep.mubr.bf16.mxu0 0
      %5243 = vmatmul.mubr.bf16.gmra.mxu0 %v5101
      %v5244 = vpop.f32.mrf.mxu0
      %v5245 = vadd.f32 0.0, %v5244
      %v5246 = vpop.f32.mrf.mxu0
      %v5247 = vpop.f32.mrf.mxu0
      %v5248 = vadd.f32 0.0, %v5247
      %v5249 = vpop.f32.mrf.mxu0
      %5250 = vmatprep.mubr.bf16.mxu0 0
      %5251 = vmatmul.mubr.bf16.gmra.mxu0 %v5102
      %v5252 = vpop.f32.mrf.mxu0
      %v5253 = vadd.f32 0.0, %v5252
      %v5254 = vpop.f32.mrf.mxu0
      %v5255 = vpop.f32.mrf.mxu0
      %v5256 = vadd.f32 0.0, %v5255
      %v5257 = vpop.f32.mrf.mxu0
      %5258 = vmatprep.mubr.bf16.mxu0 0
      %5259 = vmatmul.mubr.bf16.gmra.mxu0 %v5103
      %v5260 = vpop.f32.mrf.mxu0
      %v5261 = vadd.f32 0.0, %v5260
      %v5262 = vpop.f32.mrf.mxu0
      %v5263 = vpop.f32.mrf.mxu0
      %v5264 = vadd.f32 0.0, %v5263
      %v5265 = vpop.f32.mrf.mxu0
      %5266 = vmatprep.mubr.bf16.mxu0 0
      %5267 = vmatmul.mubr.bf16.gmra.mxu0 %v5104
      %v5268 = vpop.f32.mrf.mxu0
      %v5269 = vadd.f32 0.0, %v5268
      %v5270 = vpop.f32.mrf.mxu0
      %v5271 = vpop.f32.mrf.mxu0
      %v5272 = vadd.f32 0.0, %v5271
      %v5273 = vpop.f32.mrf.mxu0
      %5274 = vmatprep.mubr.bf16.mxu0 0
      %5275 = vmatmul.mubr.bf16.gmra.mxu0 %v5105
      %v5276 = vpop.f32.mrf.mxu0
      %v5277 = vadd.f32 0.0, %v5276
      %v5278 = vpop.f32.mrf.mxu0
      %v5279 = vpop.f32.mrf.mxu0
      %v5280 = vadd.f32 0.0, %v5279
      %v5281 = vpop.f32.mrf.mxu0
      %5282 = vmatprep.mubr.bf16.mxu0 0
      %5283 = vmatmul.mubr.bf16.gmra.mxu0 %v5106
      %v5284 = vpop.f32.mrf.mxu0
      %v5285 = vadd.f32 0.0, %v5284
      %v5286 = vpop.f32.mrf.mxu0
      %v5287 = vpop.f32.mrf.mxu0
      %v5288 = vadd.f32 0.0, %v5287
      %v5289 = vpop.f32.mrf.mxu0
      %5290 = vmatprep.mubr.bf16.mxu0 0
      %5291 = vmatmul.mubr.bf16.gmra.mxu0 %v5107
      %v5292 = vpop.f32.mrf.mxu0
      %v5293 = vadd.f32 0.0, %v5292
      %v5294 = vpop.f32.mrf.mxu0
      %v5295 = vpop.f32.mrf.mxu0
      %v5296 = vadd.f32 0.0, %v5295
      %v5297 = vpop.f32.mrf.mxu0
      %5298 = vmatprep.mubr.bf16.mxu0 0
      %5299 = vmatmul.mubr.bf16.gmra.mxu0 %v5108
      %v5300 = vpop.f32.mrf.mxu0
      %v5301 = vadd.f32 0.0, %v5300
      %v5302 = vpop.f32.mrf.mxu0
      %v5303 = vpop.f32.mrf.mxu0
      %v5304 = vadd.f32 0.0, %v5303
      %v5305 = vpop.f32.mrf.mxu0
      %5306 = vmatprep.mubr.bf16.mxu0 0
      %5307 = vmatmul.mubr.bf16.gmra.mxu0 %v5109
      %v5308 = vpop.f32.mrf.mxu0
      %v5309 = vadd.f32 0.0, %v5308
      %v5310 = vpop.f32.mrf.mxu0
      %v5311 = vpop.f32.mrf.mxu0
      %v5312 = vadd.f32 0.0, %v5311
      %v5313 = vpop.f32.mrf.mxu0
      %5314 = vmatprep.mubr.bf16.mxu0 0
      %5315 = vmatmul.mubr.bf16.gmra.mxu0 %v5110
      %v5316 = vpop.f32.mrf.mxu0
      %v5317 = vadd.f32 0.0, %v5316
      %v5318 = vpop.f32.mrf.mxu0
      %v5319 = vpop.f32.mrf.mxu0
      %v5320 = vadd.f32 0.0, %v5319
      %v5321 = vpop.f32.mrf.mxu0
      %5322 = vmatprep.mubr.bf16.mxu0 0
      %5323 = vmatmul.mubr.bf16.gmra.mxu0 %v5111
      %v5324 = vpop.f32.mrf.mxu0
      %v5325 = vadd.f32 0.0, %v5324
      %v5326 = vpop.f32.mrf.mxu0
      %v5327 = vpop.f32.mrf.mxu0
      %v5328 = vadd.f32 0.0, %v5327
      %v5329 = vpop.f32.mrf.mxu0
      %5330 = vmatprep.mubr.bf16.mxu0 0
      %5331 = vmatmul.mubr.bf16.gmra.mxu0 %v5112
      %v5332 = vpop.f32.mrf.mxu0
      %v5333 = vadd.f32 0.0, %v5332
      %v5334 = vpop.f32.mrf.mxu0
      %v5335 = vpop.f32.mrf.mxu0
      %v5336 = vadd.f32 0.0, %v5335
      %v5337 = vpop.f32.mrf.mxu0
      %5338 = vdwg.mxu0
      %v5339 = vadd.f32 %v5033, %v5213
      %v5340 = vadd.f32 %v5034, %v5216
      %v5341 = vadd.f32 %v5035, %v5221
      %v5342 = vadd.f32 %v5036, %v5224
      %v5343 = vadd.f32 %v5037, %v5229
      %v5344 = vadd.f32 %v5038, %v5232
      %v5345 = vadd.f32 %v5039, %v5237
      %v5346 = vadd.f32 %v5040, %v5240
      %v5347 = vadd.f32 %v5041, %v5245
      %v5348 = vadd.f32 %v5042, %v5248
      %v5349 = vadd.f32 %v5043, %v5253
      %v5350 = vadd.f32 %v5044, %v5256
      %v5351 = vadd.f32 %v5045, %v5261
      %v5352 = vadd.f32 %v5046, %v5264
      %v5353 = vadd.f32 %v5047, %v5269
      %v5354 = vadd.f32 %v5048, %v5272
      %v5355 = vadd.f32 %v5049, %v5277
      %v5356 = vadd.f32 %v5050, %v5280
      %v5357 = vadd.f32 %v5051, %v5285
      %v5358 = vadd.f32 %v5052, %v5288
      %v5359 = vadd.f32 %v5053, %v5293
      %v5360 = vadd.f32 %v5054, %v5296
      %v5361 = vadd.f32 %v5055, %v5301
      %v5362 = vadd.f32 %v5056, %v5304
      %v5363 = vadd.f32 %v5057, %v5309
      %v5364 = vadd.f32 %v5058, %v5312
      %v5365 = vadd.f32 %v5059, %v5317
      %v5366 = vadd.f32 %v5060, %v5320
      %v5367 = vadd.f32 %v5061, %v5325
      %v5368 = vadd.f32 %v5062, %v5328
      %v5369 = vadd.f32 %v5063, %v5333
      %v5370 = vadd.f32 %v5064, %v5336
      %v5371 = vld [vmem:[%s2272 + $0x8] sm:$0xff]
      %v5372 = vld [vmem:[%s2272 + $0x10] sm:$0xff]
      %v5373 = vld [vmem:[%s2272 + $0x28] sm:$0xff]
      %v5374 = vld [vmem:[%s2272 + $0x30] sm:$0xff]
      %v5375 = vld [vmem:[%s2272 + $0x48] sm:$0xff]
      %v5376 = vld [vmem:[%s2272 + $0x50] sm:$0xff]
      %v5377 = vld [vmem:[%s2272 + $0x68] sm:$0xff]
      %v5378 = vld [vmem:[%s2272 + $0x70] sm:$0xff]
      %v5379 = vld [vmem:[%s2272 + $0x88] sm:$0xff]
      %v5380 = vld [vmem:[%s2272 + $0x90] sm:$0xff]
      %v5381 = vld [vmem:[%s2272 + $0xa8] sm:$0xff]
      %v5382 = vld [vmem:[%s2272 + $0xb0] sm:$0xff]
      %v5383 = vld [vmem:[%s2272 + $0xc8] sm:$0xff]
      %v5384 = vld [vmem:[%s2272 + $0xd0] sm:$0xff]
      %v5385 = vld [vmem:[%s2272 + $0xe8] sm:$0xff]
      %v5386 = vld [vmem:[%s2272 + $0xf0] sm:$0xff]
      %v5387 = vld [vmem:[%s2272 + $0x108] sm:$0xff]
      %v5388 = vld [vmem:[%s2272 + $0x110] sm:$0xff]
      %v5389 = vld [vmem:[%s2272 + $0x128] sm:$0xff]
      %v5390 = vld [vmem:[%s2272 + $0x130] sm:$0xff]
      %v5391 = vld [vmem:[%s2272 + $0x148] sm:$0xff]
      %v5392 = vld [vmem:[%s2272 + $0x150] sm:$0xff]
      %v5393 = vld [vmem:[%s2272 + $0x168] sm:$0xff]
      %v5394 = vld [vmem:[%s2272 + $0x170] sm:$0xff]
      %v5395 = vld [vmem:[%s2272 + $0x188] sm:$0xff]
      %v5396 = vld [vmem:[%s2272 + $0x190] sm:$0xff]
      %v5397 = vld [vmem:[%s2272 + $0x1a8] sm:$0xff]
      %v5398 = vld [vmem:[%s2272 + $0x1b0] sm:$0xff]
      %v5399 = vld [vmem:[%s2272 + $0x1c8] sm:$0xff]
      %v5400 = vld [vmem:[%s2272 + $0x1d0] sm:$0xff]
      %v5401 = vld [vmem:[%s2272 + $0x1e8] sm:$0xff]
      %v5402 = vld [vmem:[%s2272 + $0x1f0] sm:$0xff]
      %v5403 = vpack.c.bf16 %v5372, %v5371
      %v5404 = vpack.c.bf16 %v5374, %v5373
      %v5405 = vpack.c.bf16 %v5376, %v5375
      %v5406 = vpack.c.bf16 %v5378, %v5377
      %v5407 = vpack.c.bf16 %v5380, %v5379
      %v5408 = vpack.c.bf16 %v5382, %v5381
      %v5409 = vpack.c.bf16 %v5384, %v5383
      %v5410 = vpack.c.bf16 %v5386, %v5385
      %v5411 = vpack.c.bf16 %v5388, %v5387
      %v5412 = vpack.c.bf16 %v5390, %v5389
      %v5413 = vpack.c.bf16 %v5392, %v5391
      %v5414 = vpack.c.bf16 %v5394, %v5393
      %v5415 = vpack.c.bf16 %v5396, %v5395
      %v5416 = vpack.c.bf16 %v5398, %v5397
      %v5417 = vpack.c.bf16 %v5400, %v5399
      %v5418 = vpack.c.bf16 %v5402, %v5401
      %s5419 = scalar_lea.vmem %s3, 448
      %v5420 = vld [vmem:[%s5419] sm:$0xf]
      %v5421 = vld [vmem:[%s5419 + $0x4] sm:$0xf]
      %v5422 = vld [vmem:[%s5419 + $0x8] sm:$0xf]
      %v5423 = vld [vmem:[%s5419 + $0xc] sm:$0xf]
      %v5424 = vld [vmem:[%s5419 + $0x10] sm:$0xf]
      %v5425 = vld [vmem:[%s5419 + $0x14] sm:$0xf]
      %v5426 = vld [vmem:[%s5419 + $0x18] sm:$0xf]
      %v5427 = vld [vmem:[%s5419 + $0x1c] sm:$0xf]
      %v5428 = vld [vmem:[%s5419 + $0x20] sm:$0xf]
      %v5429 = vld [vmem:[%s5419 + $0x24] sm:$0xf]
      %v5430 = vld [vmem:[%s5419 + $0x28] sm:$0xf]
      %v5431 = vld [vmem:[%s5419 + $0x2c] sm:$0xf]
      %v5432 = vld [vmem:[%s5419 + $0x30] sm:$0xf]
      %v5433 = vld [vmem:[%s5419 + $0x34] sm:$0xf]
      %v5434 = vld [vmem:[%s5419 + $0x38] sm:$0xf]
      %v5435 = vld [vmem:[%s5419 + $0x3c] sm:$0xf]
      %v5452 = vunpack.c.l.b16 %v5420
      %v5453 = vunpack.c.l.b16 %v5421
      %v5454 = vunpack.c.l.b16 %v5422
      %v5455 = vunpack.c.l.b16 %v5423
      %v5456 = vunpack.c.l.b16 %v5424
      %v5457 = vunpack.c.l.b16 %v5425
      %v5458 = vunpack.c.l.b16 %v5426
      %v5459 = vunpack.c.l.b16 %v5427
      %v5460 = vunpack.c.l.b16 %v5428
      %v5461 = vunpack.c.l.b16 %v5429
      %v5462 = vunpack.c.l.b16 %v5430
      %v5463 = vunpack.c.l.b16 %v5431
      %v5464 = vunpack.c.l.b16 %v5432
      %v5465 = vunpack.c.l.b16 %v5433
      %v5466 = vunpack.c.l.b16 %v5434
      %v5467 = vunpack.c.l.b16 %v5435
      %v5468 = vpack.c.b16 %v5453, %v5452
      %v5469 = vpack.c.b16 %v5455, %v5454
      %v5470 = vpack.c.b16 %v5457, %v5456
      %v5471 = vpack.c.b16 %v5459, %v5458
      %v5472 = vpack.c.b16 %v5461, %v5460
      %v5473 = vpack.c.b16 %v5463, %v5462
      %v5474 = vpack.c.b16 %v5465, %v5464
      %v5475 = vpack.c.b16 %v5467, %v5466
      %5484 = vmatprep.subr.bf16.mxu0 0
      %5485 = vmatpush1.bf16.msra.mxu0 %v5475
      %5486 = vmatprep.subr.bf16.mxu0 0
      %5487 = vmatpush1.bf16.msra.mxu0 %v5474
      %5488 = vmatprep.subr.bf16.mxu0 0
      %5489 = vmatpush1.bf16.msra.mxu0 %v5473
      %5490 = vmatprep.subr.bf16.mxu0 0
      %5491 = vmatpush1.bf16.msra.mxu0 %v5472
      %5492 = vmatprep.subr.bf16.mxu0 0
      %5493 = vmatpush1.bf16.msra.mxu0 %v5471
      %5494 = vmatprep.subr.bf16.mxu0 0
      %5495 = vmatpush1.bf16.msra.mxu0 %v5470
      %5496 = vmatprep.subr.bf16.mxu0 0
      %5497 = vmatpush1.bf16.msra.mxu0 %v5469
      %5498 = vmatprep.subr.bf16.mxu0 0
      %5499 = vmatpush1.bf16.msra.mxu0 %v5468
      %5500 = vmatprep.subr.bf16.mxu0 0
      %5501 = vmatpush2.bf16.msra.mxu0 0
      %5502 = vmatprep.subr.bf16.mxu0 0
      %5503 = vmatpush2.bf16.msra.mxu0 0
      %5504 = vmatprep.subr.bf16.mxu0 0
      %5505 = vmatpush2.bf16.msra.mxu0 0
      %5506 = vmatprep.subr.bf16.mxu0 0
      %5507 = vmatpush2.bf16.msra.mxu0 0
      %5508 = vmatprep.subr.bf16.mxu0 0
      %5509 = vmatpush2.bf16.msra.mxu0 0
      %5510 = vmatprep.subr.bf16.mxu0 0
      %5511 = vmatpush2.bf16.msra.mxu0 0
      %5512 = vmatprep.subr.bf16.mxu0 0
      %5513 = vmatpush2.bf16.msra.mxu0 0
      %5514 = vmatprep.subr.bf16.mxu0 0
      %5515 = vmatpush2.bf16.msra.mxu0 0
      %5516 = vmatprep.mubr.bf16.mxu0 0
      %5517 = vmatmul.mubr.bf16.gmra.mxu0 %v5403
      %v5518 = vpop.f32.mrf.mxu0
      %v5519 = vadd.f32 0.0, %v5518
      %v5520 = vpop.f32.mrf.mxu0
      %v5521 = vpop.f32.mrf.mxu0
      %v5522 = vadd.f32 0.0, %v5521
      %v5523 = vpop.f32.mrf.mxu0
      %5524 = vmatprep.mubr.bf16.mxu0 0
      %5525 = vmatmul.mubr.bf16.gmra.mxu0 %v5404
      %v5526 = vpop.f32.mrf.mxu0
      %v5527 = vadd.f32 0.0, %v5526
      %v5528 = vpop.f32.mrf.mxu0
      %v5529 = vpop.f32.mrf.mxu0
      %v5530 = vadd.f32 0.0, %v5529
      %v5531 = vpop.f32.mrf.mxu0
      %5532 = vmatprep.mubr.bf16.mxu0 0
      %5533 = vmatmul.mubr.bf16.gmra.mxu0 %v5405
      %v5534 = vpop.f32.mrf.mxu0
      %v5535 = vadd.f32 0.0, %v5534
      %v5536 = vpop.f32.mrf.mxu0
      %v5537 = vpop.f32.mrf.mxu0
      %v5538 = vadd.f32 0.0, %v5537
      %v5539 = vpop.f32.mrf.mxu0
      %5540 = vmatprep.mubr.bf16.mxu0 0
      %5541 = vmatmul.mubr.bf16.gmra.mxu0 %v5406
      %v5542 = vpop.f32.mrf.mxu0
      %v5543 = vadd.f32 0.0, %v5542
      %v5544 = vpop.f32.mrf.mxu0
      %v5545 = vpop.f32.mrf.mxu0
      %v5546 = vadd.f32 0.0, %v5545
      %v5547 = vpop.f32.mrf.mxu0
      %5548 = vmatprep.mubr.bf16.mxu0 0
      %5549 = vmatmul.mubr.bf16.gmra.mxu0 %v5407
      %v5550 = vpop.f32.mrf.mxu0
      %v5551 = vadd.f32 0.0, %v5550
      %v5552 = vpop.f32.mrf.mxu0
      %v5553 = vpop.f32.mrf.mxu0
      %v5554 = vadd.f32 0.0, %v5553
      %v5555 = vpop.f32.mrf.mxu0
      %5556 = vmatprep.mubr.bf16.mxu0 0
      %5557 = vmatmul.mubr.bf16.gmra.mxu0 %v5408
      %v5558 = vpop.f32.mrf.mxu0
      %v5559 = vadd.f32 0.0, %v5558
      %v5560 = vpop.f32.mrf.mxu0
      %v5561 = vpop.f32.mrf.mxu0
      %v5562 = vadd.f32 0.0, %v5561
      %v5563 = vpop.f32.mrf.mxu0
      %5564 = vmatprep.mubr.bf16.mxu0 0
      %5565 = vmatmul.mubr.bf16.gmra.mxu0 %v5409
      %v5566 = vpop.f32.mrf.mxu0
      %v5567 = vadd.f32 0.0, %v5566
      %v5568 = vpop.f32.mrf.mxu0
      %v5569 = vpop.f32.mrf.mxu0
      %v5570 = vadd.f32 0.0, %v5569
      %v5571 = vpop.f32.mrf.mxu0
      %5572 = vmatprep.mubr.bf16.mxu0 0
      %5573 = vmatmul.mubr.bf16.gmra.mxu0 %v5410
      %v5574 = vpop.f32.mrf.mxu0
      %v5575 = vadd.f32 0.0, %v5574
      %v5576 = vpop.f32.mrf.mxu0
      %v5577 = vpop.f32.mrf.mxu0
      %v5578 = vadd.f32 0.0, %v5577
      %v5579 = vpop.f32.mrf.mxu0
      %5580 = vmatprep.mubr.bf16.mxu0 0
      %5581 = vmatmul.mubr.bf16.gmra.mxu0 %v5411
      %v5582 = vpop.f32.mrf.mxu0
      %v5583 = vadd.f32 0.0, %v5582
      %v5584 = vpop.f32.mrf.mxu0
      %v5585 = vpop.f32.mrf.mxu0
      %v5586 = vadd.f32 0.0, %v5585
      %v5587 = vpop.f32.mrf.mxu0
      %5588 = vmatprep.mubr.bf16.mxu0 0
      %5589 = vmatmul.mubr.bf16.gmra.mxu0 %v5412
      %v5590 = vpop.f32.mrf.mxu0
      %v5591 = vadd.f32 0.0, %v5590
      %v5592 = vpop.f32.mrf.mxu0
      %v5593 = vpop.f32.mrf.mxu0
      %v5594 = vadd.f32 0.0, %v5593
      %v5595 = vpop.f32.mrf.mxu0
      %5596 = vmatprep.mubr.bf16.mxu0 0
      %5597 = vmatmul.mubr.bf16.gmra.mxu0 %v5413
      %v5598 = vpop.f32.mrf.mxu0
      %v5599 = vadd.f32 0.0, %v5598
      %v5600 = vpop.f32.mrf.mxu0
      %v5601 = vpop.f32.mrf.mxu0
      %v5602 = vadd.f32 0.0, %v5601
      %v5603 = vpop.f32.mrf.mxu0
      %5604 = vmatprep.mubr.bf16.mxu0 0
      %5605 = vmatmul.mubr.bf16.gmra.mxu0 %v5414
      %v5606 = vpop.f32.mrf.mxu0
      %v5607 = vadd.f32 0.0, %v5606
      %v5608 = vpop.f32.mrf.mxu0
      %v5609 = vpop.f32.mrf.mxu0
      %v5610 = vadd.f32 0.0, %v5609
      %v5611 = vpop.f32.mrf.mxu0
      %5612 = vmatprep.mubr.bf16.mxu0 0
      %5613 = vmatmul.mubr.bf16.gmra.mxu0 %v5415
      %v5614 = vpop.f32.mrf.mxu0
      %v5615 = vadd.f32 0.0, %v5614
      %v5616 = vpop.f32.mrf.mxu0
      %v5617 = vpop.f32.mrf.mxu0
      %v5618 = vadd.f32 0.0, %v5617
      %v5619 = vpop.f32.mrf.mxu0
      %5620 = vmatprep.mubr.bf16.mxu0 0
      %5621 = vmatmul.mubr.bf16.gmra.mxu0 %v5416
      %v5622 = vpop.f32.mrf.mxu0
      %v5623 = vadd.f32 0.0, %v5622
      %v5624 = vpop.f32.mrf.mxu0
      %v5625 = vpop.f32.mrf.mxu0
      %v5626 = vadd.f32 0.0, %v5625
      %v5627 = vpop.f32.mrf.mxu0
      %5628 = vmatprep.mubr.bf16.mxu0 0
      %5629 = vmatmul.mubr.bf16.gmra.mxu0 %v5417
      %v5630 = vpop.f32.mrf.mxu0
      %v5631 = vadd.f32 0.0, %v5630
      %v5632 = vpop.f32.mrf.mxu0
      %v5633 = vpop.f32.mrf.mxu0
      %v5634 = vadd.f32 0.0, %v5633
      %v5635 = vpop.f32.mrf.mxu0
      %5636 = vmatprep.mubr.bf16.mxu0 0
      %5637 = vmatmul.mubr.bf16.gmra.mxu0 %v5418
      %v5638 = vpop.f32.mrf.mxu0
      %v5639 = vadd.f32 0.0, %v5638
      %v5640 = vpop.f32.mrf.mxu0
      %v5641 = vpop.f32.mrf.mxu0
      %v5642 = vadd.f32 0.0, %v5641
      %v5643 = vpop.f32.mrf.mxu0
      %5644 = vdwg.mxu0
      %v5645 = vadd.f32 %v5339, %v5519
      %v5646 = vadd.f32 %v5340, %v5522
      %v5647 = vadd.f32 %v5341, %v5527
      %v5648 = vadd.f32 %v5342, %v5530
      %v5649 = vadd.f32 %v5343, %v5535
      %v5650 = vadd.f32 %v5344, %v5538
      %v5651 = vadd.f32 %v5345, %v5543
      %v5652 = vadd.f32 %v5346, %v5546
      %v5653 = vadd.f32 %v5347, %v5551
      %v5654 = vadd.f32 %v5348, %v5554
      %v5655 = vadd.f32 %v5349, %v5559
      %v5656 = vadd.f32 %v5350, %v5562
      %v5657 = vadd.f32 %v5351, %v5567
      %v5658 = vadd.f32 %v5352, %v5570
      %v5659 = vadd.f32 %v5353, %v5575
      %v5660 = vadd.f32 %v5354, %v5578
      %v5661 = vadd.f32 %v5355, %v5583
      %v5662 = vadd.f32 %v5356, %v5586
      %v5663 = vadd.f32 %v5357, %v5591
      %v5664 = vadd.f32 %v5358, %v5594
      %v5665 = vadd.f32 %v5359, %v5599
      %v5666 = vadd.f32 %v5360, %v5602
      %v5667 = vadd.f32 %v5361, %v5607
      %v5668 = vadd.f32 %v5362, %v5610
      %v5669 = vadd.f32 %v5363, %v5615
      %v5670 = vadd.f32 %v5364, %v5618
      %v5671 = vadd.f32 %v5365, %v5623
      %v5672 = vadd.f32 %v5366, %v5626
      %v5673 = vadd.f32 %v5367, %v5631
      %v5674 = vadd.f32 %v5368, %v5634
      %v5675 = vadd.f32 %v5369, %v5639
      %v5676 = vadd.f32 %v5370, %v5642
      %v5677 = vld [vmem:[%s2272 + $0x9] sm:$0xff]
      %v5678 = vld [vmem:[%s2272 + $0x11] sm:$0xff]
      %v5679 = vld [vmem:[%s2272 + $0x29] sm:$0xff]
      %v5680 = vld [vmem:[%s2272 + $0x31] sm:$0xff]
      %v5681 = vld [vmem:[%s2272 + $0x49] sm:$0xff]
      %v5682 = vld [vmem:[%s2272 + $0x51] sm:$0xff]
      %v5683 = vld [vmem:[%s2272 + $0x69] sm:$0xff]
      %v5684 = vld [vmem:[%s2272 + $0x71] sm:$0xff]
      %v5685 = vld [vmem:[%s2272 + $0x89] sm:$0xff]
      %v5686 = vld [vmem:[%s2272 + $0x91] sm:$0xff]
      %v5687 = vld [vmem:[%s2272 + $0xa9] sm:$0xff]
      %v5688 = vld [vmem:[%s2272 + $0xb1] sm:$0xff]
      %v5689 = vld [vmem:[%s2272 + $0xc9] sm:$0xff]
      %v5690 = vld [vmem:[%s2272 + $0xd1] sm:$0xff]
      %v5691 = vld [vmem:[%s2272 + $0xe9] sm:$0xff]
      %v5692 = vld [vmem:[%s2272 + $0xf1] sm:$0xff]
      %v5693 = vld [vmem:[%s2272 + $0x109] sm:$0xff]
      %v5694 = vld [vmem:[%s2272 + $0x111] sm:$0xff]
      %v5695 = vld [vmem:[%s2272 + $0x129] sm:$0xff]
      %v5696 = vld [vmem:[%s2272 + $0x131] sm:$0xff]
      %v5697 = vld [vmem:[%s2272 + $0x149] sm:$0xff]
      %v5698 = vld [vmem:[%s2272 + $0x151] sm:$0xff]
      %v5699 = vld [vmem:[%s2272 + $0x169] sm:$0xff]
      %v5700 = vld [vmem:[%s2272 + $0x171] sm:$0xff]
      %v5701 = vld [vmem:[%s2272 + $0x189] sm:$0xff]
      %v5702 = vld [vmem:[%s2272 + $0x191] sm:$0xff]
      %v5703 = vld [vmem:[%s2272 + $0x1a9] sm:$0xff]
      %v5704 = vld [vmem:[%s2272 + $0x1b1] sm:$0xff]
      %v5705 = vld [vmem:[%s2272 + $0x1c9] sm:$0xff]
      %v5706 = vld [vmem:[%s2272 + $0x1d1] sm:$0xff]
      %v5707 = vld [vmem:[%s2272 + $0x1e9] sm:$0xff]
      %v5708 = vld [vmem:[%s2272 + $0x1f1] sm:$0xff]
      %v5709 = vpack.c.bf16 %v5678, %v5677
      %v5710 = vpack.c.bf16 %v5680, %v5679
      %v5711 = vpack.c.bf16 %v5682, %v5681
      %v5712 = vpack.c.bf16 %v5684, %v5683
      %v5713 = vpack.c.bf16 %v5686, %v5685
      %v5714 = vpack.c.bf16 %v5688, %v5687
      %v5715 = vpack.c.bf16 %v5690, %v5689
      %v5716 = vpack.c.bf16 %v5692, %v5691
      %v5717 = vpack.c.bf16 %v5694, %v5693
      %v5718 = vpack.c.bf16 %v5696, %v5695
      %v5719 = vpack.c.bf16 %v5698, %v5697
      %v5720 = vpack.c.bf16 %v5700, %v5699
      %v5721 = vpack.c.bf16 %v5702, %v5701
      %v5722 = vpack.c.bf16 %v5704, %v5703
      %v5723 = vpack.c.bf16 %v5706, %v5705
      %v5724 = vpack.c.bf16 %v5708, %v5707
      %s5725 = scalar_lea.vmem %s3, 512
      %v5726 = vld [vmem:[%s5725] sm:$0xf]
      %v5727 = vld [vmem:[%s5725 + $0x4] sm:$0xf]
      %v5728 = vld [vmem:[%s5725 + $0x8] sm:$0xf]
      %v5729 = vld [vmem:[%s5725 + $0xc] sm:$0xf]
      %v5730 = vld [vmem:[%s5725 + $0x10] sm:$0xf]
      %v5731 = vld [vmem:[%s5725 + $0x14] sm:$0xf]
      %v5732 = vld [vmem:[%s5725 + $0x18] sm:$0xf]
      %v5733 = vld [vmem:[%s5725 + $0x1c] sm:$0xf]
      %v5734 = vld [vmem:[%s5725 + $0x20] sm:$0xf]
      %v5735 = vld [vmem:[%s5725 + $0x24] sm:$0xf]
      %v5736 = vld [vmem:[%s5725 + $0x28] sm:$0xf]
      %v5737 = vld [vmem:[%s5725 + $0x2c] sm:$0xf]
      %v5738 = vld [vmem:[%s5725 + $0x30] sm:$0xf]
      %v5739 = vld [vmem:[%s5725 + $0x34] sm:$0xf]
      %v5740 = vld [vmem:[%s5725 + $0x38] sm:$0xf]
      %v5741 = vld [vmem:[%s5725 + $0x3c] sm:$0xf]
      %v5758 = vunpack.c.l.b16 %v5726
      %v5759 = vunpack.c.l.b16 %v5727
      %v5760 = vunpack.c.l.b16 %v5728
      %v5761 = vunpack.c.l.b16 %v5729
      %v5762 = vunpack.c.l.b16 %v5730
      %v5763 = vunpack.c.l.b16 %v5731
      %v5764 = vunpack.c.l.b16 %v5732
      %v5765 = vunpack.c.l.b16 %v5733
      %v5766 = vunpack.c.l.b16 %v5734
      %v5767 = vunpack.c.l.b16 %v5735
      %v5768 = vunpack.c.l.b16 %v5736
      %v5769 = vunpack.c.l.b16 %v5737
      %v5770 = vunpack.c.l.b16 %v5738
      %v5771 = vunpack.c.l.b16 %v5739
      %v5772 = vunpack.c.l.b16 %v5740
      %v5773 = vunpack.c.l.b16 %v5741
      %v5774 = vpack.c.b16 %v5759, %v5758
      %v5775 = vpack.c.b16 %v5761, %v5760
      %v5776 = vpack.c.b16 %v5763, %v5762
      %v5777 = vpack.c.b16 %v5765, %v5764
      %v5778 = vpack.c.b16 %v5767, %v5766
      %v5779 = vpack.c.b16 %v5769, %v5768
      %v5780 = vpack.c.b16 %v5771, %v5770
      %v5781 = vpack.c.b16 %v5773, %v5772
      %5790 = vmatprep.subr.bf16.mxu0 0
      %5791 = vmatpush1.bf16.msra.mxu0 %v5781
      %5792 = vmatprep.subr.bf16.mxu0 0
      %5793 = vmatpush1.bf16.msra.mxu0 %v5780
      %5794 = vmatprep.subr.bf16.mxu0 0
      %5795 = vmatpush1.bf16.msra.mxu0 %v5779
      %5796 = vmatprep.subr.bf16.mxu0 0
      %5797 = vmatpush1.bf16.msra.mxu0 %v5778
      %5798 = vmatprep.subr.bf16.mxu0 0
      %5799 = vmatpush1.bf16.msra.mxu0 %v5777
      %5800 = vmatprep.subr.bf16.mxu0 0
      %5801 = vmatpush1.bf16.msra.mxu0 %v5776
      %5802 = vmatprep.subr.bf16.mxu0 0
      %5803 = vmatpush1.bf16.msra.mxu0 %v5775
      %5804 = vmatprep.subr.bf16.mxu0 0
      %5805 = vmatpush1.bf16.msra.mxu0 %v5774
      %5806 = vmatprep.subr.bf16.mxu0 0
      %5807 = vmatpush2.bf16.msra.mxu0 0
      %5808 = vmatprep.subr.bf16.mxu0 0
      %5809 = vmatpush2.bf16.msra.mxu0 0
      %5810 = vmatprep.subr.bf16.mxu0 0
      %5811 = vmatpush2.bf16.msra.mxu0 0
      %5812 = vmatprep.subr.bf16.mxu0 0
      %5813 = vmatpush2.bf16.msra.mxu0 0
      %5814 = vmatprep.subr.bf16.mxu0 0
      %5815 = vmatpush2.bf16.msra.mxu0 0
      %5816 = vmatprep.subr.bf16.mxu0 0
      %5817 = vmatpush2.bf16.msra.mxu0 0
      %5818 = vmatprep.subr.bf16.mxu0 0
      %5819 = vmatpush2.bf16.msra.mxu0 0
      %5820 = vmatprep.subr.bf16.mxu0 0
      %5821 = vmatpush2.bf16.msra.mxu0 0
      %5822 = vmatprep.mubr.bf16.mxu0 0
      %5823 = vmatmul.mubr.bf16.gmra.mxu0 %v5709
      %v5824 = vpop.f32.mrf.mxu0
      %v5825 = vadd.f32 0.0, %v5824
      %v5826 = vpop.f32.mrf.mxu0
      %v5827 = vpop.f32.mrf.mxu0
      %v5828 = vadd.f32 0.0, %v5827
      %v5829 = vpop.f32.mrf.mxu0
      %5830 = vmatprep.mubr.bf16.mxu0 0
      %5831 = vmatmul.mubr.bf16.gmra.mxu0 %v5710
      %v5832 = vpop.f32.mrf.mxu0
      %v5833 = vadd.f32 0.0, %v5832
      %v5834 = vpop.f32.mrf.mxu0
      %v5835 = vpop.f32.mrf.mxu0
      %v5836 = vadd.f32 0.0, %v5835
      %v5837 = vpop.f32.mrf.mxu0
      %5838 = vmatprep.mubr.bf16.mxu0 0
      %5839 = vmatmul.mubr.bf16.gmra.mxu0 %v5711
      %v5840 = vpop.f32.mrf.mxu0
      %v5841 = vadd.f32 0.0, %v5840
      %v5842 = vpop.f32.mrf.mxu0
      %v5843 = vpop.f32.mrf.mxu0
      %v5844 = vadd.f32 0.0, %v5843
      %v5845 = vpop.f32.mrf.mxu0
      %5846 = vmatprep.mubr.bf16.mxu0 0
      %5847 = vmatmul.mubr.bf16.gmra.mxu0 %v5712
      %v5848 = vpop.f32.mrf.mxu0
      %v5849 = vadd.f32 0.0, %v5848
      %v5850 = vpop.f32.mrf.mxu0
      %v5851 = vpop.f32.mrf.mxu0
      %v5852 = vadd.f32 0.0, %v5851
      %v5853 = vpop.f32.mrf.mxu0
      %5854 = vmatprep.mubr.bf16.mxu0 0
      %5855 = vmatmul.mubr.bf16.gmra.mxu0 %v5713
      %v5856 = vpop.f32.mrf.mxu0
      %v5857 = vadd.f32 0.0, %v5856
      %v5858 = vpop.f32.mrf.mxu0
      %v5859 = vpop.f32.mrf.mxu0
      %v5860 = vadd.f32 0.0, %v5859
      %v5861 = vpop.f32.mrf.mxu0
      %5862 = vmatprep.mubr.bf16.mxu0 0
      %5863 = vmatmul.mubr.bf16.gmra.mxu0 %v5714
      %v5864 = vpop.f32.mrf.mxu0
      %v5865 = vadd.f32 0.0, %v5864
      %v5866 = vpop.f32.mrf.mxu0
      %v5867 = vpop.f32.mrf.mxu0
      %v5868 = vadd.f32 0.0, %v5867
      %v5869 = vpop.f32.mrf.mxu0
      %5870 = vmatprep.mubr.bf16.mxu0 0
      %5871 = vmatmul.mubr.bf16.gmra.mxu0 %v5715
      %v5872 = vpop.f32.mrf.mxu0
      %v5873 = vadd.f32 0.0, %v5872
      %v5874 = vpop.f32.mrf.mxu0
      %v5875 = vpop.f32.mrf.mxu0
      %v5876 = vadd.f32 0.0, %v5875
      %v5877 = vpop.f32.mrf.mxu0
      %5878 = vmatprep.mubr.bf16.mxu0 0
      %5879 = vmatmul.mubr.bf16.gmra.mxu0 %v5716
      %v5880 = vpop.f32.mrf.mxu0
      %v5881 = vadd.f32 0.0, %v5880
      %v5882 = vpop.f32.mrf.mxu0
      %v5883 = vpop.f32.mrf.mxu0
      %v5884 = vadd.f32 0.0, %v5883
      %v5885 = vpop.f32.mrf.mxu0
      %5886 = vmatprep.mubr.bf16.mxu0 0
      %5887 = vmatmul.mubr.bf16.gmra.mxu0 %v5717
      %v5888 = vpop.f32.mrf.mxu0
      %v5889 = vadd.f32 0.0, %v5888
      %v5890 = vpop.f32.mrf.mxu0
      %v5891 = vpop.f32.mrf.mxu0
      %v5892 = vadd.f32 0.0, %v5891
      %v5893 = vpop.f32.mrf.mxu0
      %5894 = vmatprep.mubr.bf16.mxu0 0
      %5895 = vmatmul.mubr.bf16.gmra.mxu0 %v5718
      %v5896 = vpop.f32.mrf.mxu0
      %v5897 = vadd.f32 0.0, %v5896
      %v5898 = vpop.f32.mrf.mxu0
      %v5899 = vpop.f32.mrf.mxu0
      %v5900 = vadd.f32 0.0, %v5899
      %v5901 = vpop.f32.mrf.mxu0
      %5902 = vmatprep.mubr.bf16.mxu0 0
      %5903 = vmatmul.mubr.bf16.gmra.mxu0 %v5719
      %v5904 = vpop.f32.mrf.mxu0
      %v5905 = vadd.f32 0.0, %v5904
      %v5906 = vpop.f32.mrf.mxu0
      %v5907 = vpop.f32.mrf.mxu0
      %v5908 = vadd.f32 0.0, %v5907
      %v5909 = vpop.f32.mrf.mxu0
      %5910 = vmatprep.mubr.bf16.mxu0 0
      %5911 = vmatmul.mubr.bf16.gmra.mxu0 %v5720
      %v5912 = vpop.f32.mrf.mxu0
      %v5913 = vadd.f32 0.0, %v5912
      %v5914 = vpop.f32.mrf.mxu0
      %v5915 = vpop.f32.mrf.mxu0
      %v5916 = vadd.f32 0.0, %v5915
      %v5917 = vpop.f32.mrf.mxu0
      %5918 = vmatprep.mubr.bf16.mxu0 0
      %5919 = vmatmul.mubr.bf16.gmra.mxu0 %v5721
      %v5920 = vpop.f32.mrf.mxu0
      %v5921 = vadd.f32 0.0, %v5920
      %v5922 = vpop.f32.mrf.mxu0
      %v5923 = vpop.f32.mrf.mxu0
      %v5924 = vadd.f32 0.0, %v5923
      %v5925 = vpop.f32.mrf.mxu0
      %5926 = vmatprep.mubr.bf16.mxu0 0
      %5927 = vmatmul.mubr.bf16.gmra.mxu0 %v5722
      %v5928 = vpop.f32.mrf.mxu0
      %v5929 = vadd.f32 0.0, %v5928
      %v5930 = vpop.f32.mrf.mxu0
      %v5931 = vpop.f32.mrf.mxu0
      %v5932 = vadd.f32 0.0, %v5931
      %v5933 = vpop.f32.mrf.mxu0
      %5934 = vmatprep.mubr.bf16.mxu0 0
      %5935 = vmatmul.mubr.bf16.gmra.mxu0 %v5723
      %v5936 = vpop.f32.mrf.mxu0
      %v5937 = vadd.f32 0.0, %v5936
      %v5938 = vpop.f32.mrf.mxu0
      %v5939 = vpop.f32.mrf.mxu0
      %v5940 = vadd.f32 0.0, %v5939
      %v5941 = vpop.f32.mrf.mxu0
      %5942 = vmatprep.mubr.bf16.mxu0 0
      %5943 = vmatmul.mubr.bf16.gmra.mxu0 %v5724
      %v5944 = vpop.f32.mrf.mxu0
      %v5945 = vadd.f32 0.0, %v5944
      %v5946 = vpop.f32.mrf.mxu0
      %v5947 = vpop.f32.mrf.mxu0
      %v5948 = vadd.f32 0.0, %v5947
      %v5949 = vpop.f32.mrf.mxu0
      %5950 = vdwg.mxu0
      %v5951 = vadd.f32 %v5645, %v5825
      %v5952 = vadd.f32 %v5646, %v5828
      %v5953 = vadd.f32 %v5647, %v5833
      %v5954 = vadd.f32 %v5648, %v5836
      %v5955 = vadd.f32 %v5649, %v5841
      %v5956 = vadd.f32 %v5650, %v5844
      %v5957 = vadd.f32 %v5651, %v5849
      %v5958 = vadd.f32 %v5652, %v5852
      %v5959 = vadd.f32 %v5653, %v5857
      %v5960 = vadd.f32 %v5654, %v5860
      %v5961 = vadd.f32 %v5655, %v5865
      %v5962 = vadd.f32 %v5656, %v5868
      %v5963 = vadd.f32 %v5657, %v5873
      %v5964 = vadd.f32 %v5658, %v5876
      %v5965 = vadd.f32 %v5659, %v5881
      %v5966 = vadd.f32 %v5660, %v5884
      %v5967 = vadd.f32 %v5661, %v5889
      %v5968 = vadd.f32 %v5662, %v5892
      %v5969 = vadd.f32 %v5663, %v5897
      %v5970 = vadd.f32 %v5664, %v5900
      %v5971 = vadd.f32 %v5665, %v5905
      %v5972 = vadd.f32 %v5666, %v5908
      %v5973 = vadd.f32 %v5667, %v5913
      %v5974 = vadd.f32 %v5668, %v5916
      %v5975 = vadd.f32 %v5669, %v5921
      %v5976 = vadd.f32 %v5670, %v5924
      %v5977 = vadd.f32 %v5671, %v5929
      %v5978 = vadd.f32 %v5672, %v5932
      %v5979 = vadd.f32 %v5673, %v5937
      %v5980 = vadd.f32 %v5674, %v5940
      %v5981 = vadd.f32 %v5675, %v5945
      %v5982 = vadd.f32 %v5676, %v5948
      %v5983 = vld [vmem:[%s4] sm:$0x1]
      %v5985 = vlaneseq
      %v5986 = vshrl.u32 %v5985, 7
      %v5987 = vsub.s32 0, %v5986
      %v5988 = vrot.slane %v5983, %v5987
      %v5990 = vadd.f32 %v5951, %v5988
      %v5991 = vadd.f32 %v5952, %v5988
      %v5992 = vadd.f32 %v5953, %v5988
      %v5993 = vadd.f32 %v5954, %v5988
      %v5994 = vadd.f32 %v5955, %v5988
      %v5995 = vadd.f32 %v5956, %v5988
      %v5996 = vadd.f32 %v5957, %v5988
      %v5997 = vadd.f32 %v5958, %v5988
      %v5998 = vadd.f32 %v5959, %v5988
      %v5999 = vadd.f32 %v5960, %v5988
      %v6000 = vadd.f32 %v5961, %v5988
      %v6001 = vadd.f32 %v5962, %v5988
      %v6002 = vadd.f32 %v5963, %v5988
      %v6003 = vadd.f32 %v5964, %v5988
      %v6004 = vadd.f32 %v5965, %v5988
      %v6005 = vadd.f32 %v5966, %v5988
      %v6006 = vadd.f32 %v5967, %v5988
      %v6007 = vadd.f32 %v5968, %v5988
      %v6008 = vadd.f32 %v5969, %v5988
      %v6009 = vadd.f32 %v5970, %v5988
      %v6010 = vadd.f32 %v5971, %v5988
      %v6011 = vadd.f32 %v5972, %v5988
      %v6012 = vadd.f32 %v5973, %v5988
      %v6013 = vadd.f32 %v5974, %v5988
      %v6014 = vadd.f32 %v5975, %v5988
      %v6015 = vadd.f32 %v5976, %v5988
      %v6016 = vadd.f32 %v5977, %v5988
      %v6017 = vadd.f32 %v5978, %v5988
      %v6018 = vadd.f32 %v5979, %v5988
      %v6019 = vadd.f32 %v5980, %v5988
      %v6020 = vadd.f32 %v5981, %v5988
      %v6021 = vadd.f32 %v5982, %v5988
      %v6022 = vmax.f32 %v5990, 0.0
      %v6023 = vmax.f32 %v5991, 0.0
      %v6024 = vmax.f32 %v5992, 0.0
      %v6025 = vmax.f32 %v5993, 0.0
      %v6026 = vmax.f32 %v5994, 0.0
      %v6027 = vmax.f32 %v5995, 0.0
      %v6028 = vmax.f32 %v5996, 0.0
      %v6029 = vmax.f32 %v5997, 0.0
      %v6030 = vmax.f32 %v5998, 0.0
      %v6031 = vmax.f32 %v5999, 0.0
      %v6032 = vmax.f32 %v6000, 0.0
      %v6033 = vmax.f32 %v6001, 0.0
      %v6034 = vmax.f32 %v6002, 0.0
      %v6035 = vmax.f32 %v6003, 0.0
      %v6036 = vmax.f32 %v6004, 0.0
      %v6037 = vmax.f32 %v6005, 0.0
      %v6038 = vmax.f32 %v6006, 0.0
      %v6039 = vmax.f32 %v6007, 0.0
      %v6040 = vmax.f32 %v6008, 0.0
      %v6041 = vmax.f32 %v6009, 0.0
      %v6042 = vmax.f32 %v6010, 0.0
      %v6043 = vmax.f32 %v6011, 0.0
      %v6044 = vmax.f32 %v6012, 0.0
      %v6045 = vmax.f32 %v6013, 0.0
      %v6046 = vmax.f32 %v6014, 0.0
      %v6047 = vmax.f32 %v6015, 0.0
      %v6048 = vmax.f32 %v6016, 0.0
      %v6049 = vmax.f32 %v6017, 0.0
      %v6050 = vmax.f32 %v6018, 0.0
      %v6051 = vmax.f32 %v6019, 0.0
      %v6052 = vmax.f32 %v6020, 0.0
      %v6053 = vmax.f32 %v6021, 0.0
      %v6054 = vmax.f32 %v6022, %v6024
      %v6055 = vmax.f32 %v6023, %v6025
      %v6056 = vmax.f32 %v6026, %v6028
      %v6057 = vmax.f32 %v6027, %v6029
      %v6058 = vmax.f32 %v6030, %v6032
      %v6059 = vmax.f32 %v6031, %v6033
      %v6060 = vmax.f32 %v6034, %v6036
      %v6061 = vmax.f32 %v6035, %v6037
      %v6062 = vmax.f32 %v6038, %v6040
      %v6063 = vmax.f32 %v6039, %v6041
      %v6064 = vmax.f32 %v6042, %v6044
      %v6065 = vmax.f32 %v6043, %v6045
      %v6066 = vmax.f32 %v6046, %v6048
      %v6067 = vmax.f32 %v6047, %v6049
      %v6068 = vmax.f32 %v6050, %v6052
      %v6069 = vmax.f32 %v6051, %v6053
      %6070 = vst [vmem:[#allocation3] sm:$0xff] %v6054
      %6071 = vst [vmem:[#allocation3 + $0x8] sm:$0xff] %v6055
      %6072 = vst [vmem:[#allocation3 + $0x10] sm:$0xff] %v6056
      %6073 = vst [vmem:[#allocation3 + $0x18] sm:$0xff] %v6057
      %6074 = vst [vmem:[#allocation3 + $0x20] sm:$0xff] %v6058
      %6075 = vst [vmem:[#allocation3 + $0x28] sm:$0xff] %v6059
      %6076 = vst [vmem:[#allocation3 + $0x30] sm:$0xff] %v6060
      %6077 = vst [vmem:[#allocation3 + $0x38] sm:$0xff] %v6061
      %6078 = vst [vmem:[#allocation3 + $0x40] sm:$0xff] %v6062
      %6079 = vst [vmem:[#allocation3 + $0x48] sm:$0xff] %v6063
      %6080 = vst [vmem:[#allocation3 + $0x50] sm:$0xff] %v6064
      %6081 = vst [vmem:[#allocation3 + $0x58] sm:$0xff] %v6065
      %6082 = vst [vmem:[#allocation3 + $0x60] sm:$0xff] %v6066
      %6083 = vst [vmem:[#allocation3 + $0x68] sm:$0xff] %v6067
      %6084 = vst [vmem:[#allocation3 + $0x70] sm:$0xff] %v6068
      %6085 = vst [vmem:[#allocation3 + $0x78] sm:$0xff] %v6069
      %v6086 = vld [vmem:[#allocation3] ss:$2 sm:$0xff]
      %s6087 = scalar_lea.vmem [#allocation3], 16
      %v6088 = vld [vmem:[%s6087] ss:$2 sm:$0xff]
      %s6089 = scalar_lea.vmem [#allocation3], 32
      %v6090 = vld [vmem:[%s6089] ss:$2 sm:$0xff]
      %s6091 = scalar_lea.vmem [#allocation3], 48
      %v6092 = vld [vmem:[%s6091] ss:$2 sm:$0xff]
      %s6093 = scalar_lea.vmem [#allocation3], 64
      %v6094 = vld [vmem:[%s6093] ss:$2 sm:$0xff]
      %s6095 = scalar_lea.vmem [#allocation3], 80
      %v6096 = vld [vmem:[%s6095] ss:$2 sm:$0xff]
      %s6097 = scalar_lea.vmem [#allocation3], 96
      %v6098 = vld [vmem:[%s6097] ss:$2 sm:$0xff]
      %s6099 = scalar_lea.vmem [#allocation3], 112
      %v6100 = vld [vmem:[%s6099] ss:$2 sm:$0xff]
      %s6101 = scalar_lea.vmem [#allocation3], 1
      %v6102 = vld [vmem:[%s6101] ss:$2 sm:$0xff]
      %s6103 = scalar_lea.vmem [#allocation3], 17
      %v6104 = vld [vmem:[%s6103] ss:$2 sm:$0xff]
      %s6105 = scalar_lea.vmem [#allocation3], 33
      %v6106 = vld [vmem:[%s6105] ss:$2 sm:$0xff]
      %s6107 = scalar_lea.vmem [#allocation3], 49
      %v6108 = vld [vmem:[%s6107] ss:$2 sm:$0xff]
      %s6109 = scalar_lea.vmem [#allocation3], 65
      %v6110 = vld [vmem:[%s6109] ss:$2 sm:$0xff]
      %s6111 = scalar_lea.vmem [#allocation3], 81
      %v6112 = vld [vmem:[%s6111] ss:$2 sm:$0xff]
      %s6113 = scalar_lea.vmem [#allocation3], 97
      %v6114 = vld [vmem:[%s6113] ss:$2 sm:$0xff]
      %s6115 = scalar_lea.vmem [#allocation3], 113
      %v6116 = vld [vmem:[%s6115] ss:$2 sm:$0xff]
      %v6117 = vmax.f32 %v6086, %v6102
      %v6118 = vmax.f32 %v6088, %v6104
      %v6119 = vmax.f32 %v6090, %v6106
      %v6120 = vmax.f32 %v6092, %v6108
      %v6121 = vmax.f32 %v6094, %v6110
      %v6122 = vmax.f32 %v6096, %v6112
      %v6123 = vmax.f32 %v6098, %v6114
      %v6124 = vmax.f32 %v6100, %v6116
      %s6125 = scalar_lea.vmem [#allocation4], 24
      %6126 = vst [vmem:[%s6125 + $0x8] sm:$0xff] %v6117
      %6127 = vst [vmem:[%s6125 + $0x20] sm:$0xff] %v6118
      %6128 = vst [vmem:[%s6125 + $0x38] sm:$0xff] %v6119
      %6129 = vst [vmem:[%s6125 + $0x50] sm:$0xff] %v6120
      %6130 = vst [vmem:[%s6125 + $0x68] sm:$0xff] %v6121
      %6131 = vst [vmem:[%s6125 + $0x80] sm:$0xff] %v6122
      %6132 = vst [vmem:[%s6125 + $0x98] sm:$0xff] %v6123
      %6133 = vst [vmem:[%s6125 + $0xb0] sm:$0xff] %v6124
      %v6134 = vld [vmem:[#allocation4 + $0x7] sm:$0xff]
      %v6135 = vld [vmem:[#allocation4 + $0x1f] sm:$0xff]
      %v6136 = vld [vmem:[#allocation4 + $0x37] sm:$0xff]
      %v6137 = vld [vmem:[#allocation4 + $0x4f] sm:$0xff]
      %v6138 = vld [vmem:[#allocation4 + $0x67] sm:$0xff]
      %v6139 = vld [vmem:[#allocation4 + $0x7f] sm:$0xff]
      %v6140 = vld [vmem:[#allocation4 + $0x97] sm:$0xff]
      %v6141 = vld [vmem:[#allocation4 + $0xaf] sm:$0xff]
      %v6142 = vpack.c.bf16 %v6135, %v6134
      %v6143 = vpack.c.bf16 %v6137, %v6136
      %v6144 = vpack.c.bf16 %v6139, %v6138
      %v6145 = vpack.c.bf16 %v6141, %v6140
      %v6146 = vld [vmem:[%s5] sm:$0xf]
      %v6147 = vld [vmem:[%s5 + $0x4] sm:$0xf]
      %v6148 = vld [vmem:[%s5 + $0x8] sm:$0xf]
      %v6149 = vld [vmem:[%s5 + $0xc] sm:$0xf]
      %v6150 = vld [vmem:[%s5 + $0x10] sm:$0xf]
      %v6151 = vld [vmem:[%s5 + $0x14] sm:$0xf]
      %v6152 = vld [vmem:[%s5 + $0x18] sm:$0xf]
      %v6153 = vld [vmem:[%s5 + $0x1c] sm:$0xf]
      %v6154 = vld [vmem:[%s5 + $0x20] sm:$0xf]
      %v6155 = vld [vmem:[%s5 + $0x24] sm:$0xf]
      %v6156 = vld [vmem:[%s5 + $0x28] sm:$0xf]
      %v6157 = vld [vmem:[%s5 + $0x2c] sm:$0xf]
      %v6158 = vld [vmem:[%s5 + $0x30] sm:$0xf]
      %v6159 = vld [vmem:[%s5 + $0x34] sm:$0xf]
      %v6160 = vld [vmem:[%s5 + $0x38] sm:$0xf]
      %v6161 = vld [vmem:[%s5 + $0x3c] sm:$0xf]
      %v6162 = vld [vmem:[#allocation4 + $0x8] sm:$0xff]
      %v6163 = vld [vmem:[#allocation4 + $0x20] sm:$0xff]
      %v6164 = vld [vmem:[#allocation4 + $0x38] sm:$0xff]
      %v6165 = vld [vmem:[#allocation4 + $0x50] sm:$0xff]
      %v6166 = vld [vmem:[#allocation4 + $0x68] sm:$0xff]
      %v6167 = vld [vmem:[#allocation4 + $0x80] sm:$0xff]
      %v6168 = vld [vmem:[#allocation4 + $0x98] sm:$0xff]
      %v6169 = vld [vmem:[#allocation4 + $0xb0] sm:$0xff]
      %v6170 = vpack.c.bf16 %v6163, %v6162
      %v6171 = vpack.c.bf16 %v6165, %v6164
      %v6172 = vpack.c.bf16 %v6167, %v6166
      %v6173 = vpack.c.bf16 %v6169, %v6168
      %s6174 = scalar_lea.vmem %s5, 64
      %v6175 = vld [vmem:[%s6174] sm:$0xf]
      %v6176 = vld [vmem:[%s6174 + $0x4] sm:$0xf]
      %v6177 = vld [vmem:[%s6174 + $0x8] sm:$0xf]
      %v6178 = vld [vmem:[%s6174 + $0xc] sm:$0xf]
      %v6179 = vld [vmem:[%s6174 + $0x10] sm:$0xf]
      %v6180 = vld [vmem:[%s6174 + $0x14] sm:$0xf]
      %v6181 = vld [vmem:[%s6174 + $0x18] sm:$0xf]
      %v6182 = vld [vmem:[%s6174 + $0x1c] sm:$0xf]
      %v6183 = vld [vmem:[%s6174 + $0x20] sm:$0xf]
      %v6184 = vld [vmem:[%s6174 + $0x24] sm:$0xf]
      %v6185 = vld [vmem:[%s6174 + $0x28] sm:$0xf]
      %v6186 = vld [vmem:[%s6174 + $0x2c] sm:$0xf]
      %v6187 = vld [vmem:[%s6174 + $0x30] sm:$0xf]
      %v6188 = vld [vmem:[%s6174 + $0x34] sm:$0xf]
      %v6189 = vld [vmem:[%s6174 + $0x38] sm:$0xf]
      %v6190 = vld [vmem:[%s6174 + $0x3c] sm:$0xf]
      %v6207 = vunpack.c.l.b16 %v6175
      %v6208 = vunpack.c.l.b16 %v6176
      %v6209 = vunpack.c.l.b16 %v6177
      %v6210 = vunpack.c.l.b16 %v6178
      %v6211 = vunpack.c.l.b16 %v6179
      %v6212 = vunpack.c.l.b16 %v6180
      %v6213 = vunpack.c.l.b16 %v6181
      %v6214 = vunpack.c.l.b16 %v6182
      %v6215 = vunpack.c.l.b16 %v6183
      %v6216 = vunpack.c.l.b16 %v6184
      %v6217 = vunpack.c.l.b16 %v6185
      %v6218 = vunpack.c.l.b16 %v6186
      %v6219 = vunpack.c.l.b16 %v6187
      %v6220 = vunpack.c.l.b16 %v6188
      %v6221 = vunpack.c.l.b16 %v6189
      %v6222 = vunpack.c.l.b16 %v6190
      %v6223 = vpack.c.b16 %v6208, %v6207
      %v6224 = vpack.c.b16 %v6210, %v6209
      %v6225 = vpack.c.b16 %v6212, %v6211
      %v6226 = vpack.c.b16 %v6214, %v6213
      %v6227 = vpack.c.b16 %v6216, %v6215
      %v6228 = vpack.c.b16 %v6218, %v6217
      %v6229 = vpack.c.b16 %v6220, %v6219
      %v6230 = vpack.c.b16 %v6222, %v6221
      %6239 = vmatprep.subr.bf16.mxu0 0
      %6240 = vmatpush1.bf16.msra.mxu0 %v6230
      %6241 = vmatprep.subr.bf16.mxu0 0
      %6242 = vmatpush1.bf16.msra.mxu0 %v6229
      %6243 = vmatprep.subr.bf16.mxu0 0
      %6244 = vmatpush1.bf16.msra.mxu0 %v6228
      %6245 = vmatprep.subr.bf16.mxu0 0
      %6246 = vmatpush1.bf16.msra.mxu0 %v6227
      %6247 = vmatprep.subr.bf16.mxu0 0
      %6248 = vmatpush1.bf16.msra.mxu0 %v6226
      %6249 = vmatprep.subr.bf16.mxu0 0
      %6250 = vmatpush1.bf16.msra.mxu0 %v6225
      %6251 = vmatprep.subr.bf16.mxu0 0
      %6252 = vmatpush1.bf16.msra.mxu0 %v6224
      %6253 = vmatprep.subr.bf16.mxu0 0
      %6254 = vmatpush1.bf16.msra.mxu0 %v6223
      %6255 = vmatprep.subr.bf16.mxu0 0
      %6256 = vmatpush2.bf16.msra.mxu0 0
      %6257 = vmatprep.subr.bf16.mxu0 0
      %6258 = vmatpush2.bf16.msra.mxu0 0
      %6259 = vmatprep.subr.bf16.mxu0 0
      %6260 = vmatpush2.bf16.msra.mxu0 0
      %6261 = vmatprep.subr.bf16.mxu0 0
      %6262 = vmatpush2.bf16.msra.mxu0 0
      %6263 = vmatprep.subr.bf16.mxu0 0
      %6264 = vmatpush2.bf16.msra.mxu0 0
      %6265 = vmatprep.subr.bf16.mxu0 0
      %6266 = vmatpush2.bf16.msra.mxu0 0
      %6267 = vmatprep.subr.bf16.mxu0 0
      %6268 = vmatpush2.bf16.msra.mxu0 0
      %6269 = vmatprep.subr.bf16.mxu0 0
      %6270 = vmatpush2.bf16.msra.mxu0 0
      %6271 = vmatprep.mubr.bf16.mxu0 0
      %6272 = vmatmul.mubr.bf16.gmra.mxu0 %v6170
      %v6273 = vpop.f32.mrf.mxu0
      %v6274 = vadd.f32 0.0, %v6273
      %v6275 = vpop.f32.mrf.mxu0
      %v6276 = vpop.f32.mrf.mxu0
      %v6277 = vadd.f32 0.0, %v6276
      %v6278 = vpop.f32.mrf.mxu0
      %6279 = vmatprep.mubr.bf16.mxu0 0
      %6280 = vmatmul.mubr.bf16.gmra.mxu0 %v6171
      %v6281 = vpop.f32.mrf.mxu0
      %v6282 = vadd.f32 0.0, %v6281
      %v6283 = vpop.f32.mrf.mxu0
      %v6284 = vpop.f32.mrf.mxu0
      %v6285 = vadd.f32 0.0, %v6284
      %v6286 = vpop.f32.mrf.mxu0
      %6287 = vmatprep.mubr.bf16.mxu0 0
      %6288 = vmatmul.mubr.bf16.gmra.mxu0 %v6172
      %v6289 = vpop.f32.mrf.mxu0
      %v6290 = vadd.f32 0.0, %v6289
      %v6291 = vpop.f32.mrf.mxu0
      %v6292 = vpop.f32.mrf.mxu0
      %v6293 = vadd.f32 0.0, %v6292
      %v6294 = vpop.f32.mrf.mxu0
      %6295 = vmatprep.mubr.bf16.mxu0 0
      %6296 = vmatmul.mubr.bf16.gmra.mxu0 %v6173
      %v6297 = vpop.f32.mrf.mxu0
      %v6298 = vadd.f32 0.0, %v6297
      %v6299 = vpop.f32.mrf.mxu0
      %v6300 = vpop.f32.mrf.mxu0
      %v6301 = vadd.f32 0.0, %v6300
      %v6302 = vpop.f32.mrf.mxu0
      %6303 = vdwg.mxu0
      %v6320 = vunpack.c.l.b16 %v6146
      %v6321 = vunpack.c.l.b16 %v6147
      %v6322 = vunpack.c.l.b16 %v6148
      %v6323 = vunpack.c.l.b16 %v6149
      %v6324 = vunpack.c.l.b16 %v6150
      %v6325 = vunpack.c.l.b16 %v6151
      %v6326 = vunpack.c.l.b16 %v6152
      %v6327 = vunpack.c.l.b16 %v6153
      %v6328 = vunpack.c.l.b16 %v6154
      %v6329 = vunpack.c.l.b16 %v6155
      %v6330 = vunpack.c.l.b16 %v6156
      %v6331 = vunpack.c.l.b16 %v6157
      %v6332 = vunpack.c.l.b16 %v6158
      %v6333 = vunpack.c.l.b16 %v6159
      %v6334 = vunpack.c.l.b16 %v6160
      %v6335 = vunpack.c.l.b16 %v6161
      %v6336 = vpack.c.b16 %v6321, %v6320
      %v6337 = vpack.c.b16 %v6323, %v6322
      %v6338 = vpack.c.b16 %v6325, %v6324
      %v6339 = vpack.c.b16 %v6327, %v6326
      %v6340 = vpack.c.b16 %v6329, %v6328
      %v6341 = vpack.c.b16 %v6331, %v6330
      %v6342 = vpack.c.b16 %v6333, %v6332
      %v6343 = vpack.c.b16 %v6335, %v6334
      %6352 = vmatprep.subr.bf16.mxu0 0
      %6353 = vmatpush1.bf16.msra.mxu0 %v6343
      %6354 = vmatprep.subr.bf16.mxu0 0
      %6355 = vmatpush1.bf16.msra.mxu0 %v6342
      %6356 = vmatprep.subr.bf16.mxu0 0
      %6357 = vmatpush1.bf16.msra.mxu0 %v6341
      %6358 = vmatprep.subr.bf16.mxu0 0
      %6359 = vmatpush1.bf16.msra.mxu0 %v6340
      %6360 = vmatprep.subr.bf16.mxu0 0
      %6361 = vmatpush1.bf16.msra.mxu0 %v6339
      %6362 = vmatprep.subr.bf16.mxu0 0
      %6363 = vmatpush1.bf16.msra.mxu0 %v6338
      %6364 = vmatprep.subr.bf16.mxu0 0
      %6365 = vmatpush1.bf16.msra.mxu0 %v6337
      %6366 = vmatprep.subr.bf16.mxu0 0
      %6367 = vmatpush1.bf16.msra.mxu0 %v6336
      %6368 = vmatprep.subr.bf16.mxu0 0
      %6369 = vmatpush2.bf16.msra.mxu0 0
      %6370 = vmatprep.subr.bf16.mxu0 0
      %6371 = vmatpush2.bf16.msra.mxu0 0
      %6372 = vmatprep.subr.bf16.mxu0 0
      %6373 = vmatpush2.bf16.msra.mxu0 0
      %6374 = vmatprep.subr.bf16.mxu0 0
      %6375 = vmatpush2.bf16.msra.mxu0 0
      %6376 = vmatprep.subr.bf16.mxu0 0
      %6377 = vmatpush2.bf16.msra.mxu0 0
      %6378 = vmatprep.subr.bf16.mxu0 0
      %6379 = vmatpush2.bf16.msra.mxu0 0
      %6380 = vmatprep.subr.bf16.mxu0 0
      %6381 = vmatpush2.bf16.msra.mxu0 0
      %6382 = vmatprep.subr.bf16.mxu0 0
      %6383 = vmatpush2.bf16.msra.mxu0 0
      %6384 = vmatprep.mubr.bf16.mxu0 0
      %6385 = vmatmul.mubr.bf16.gmra.mxu0 %v6142
      %v6386 = vpop.f32.mrf.mxu0
      %v6387 = vadd.f32 %v6274, %v6386
      %v6388 = vpop.f32.mrf.mxu0
      %v6389 = vpop.f32.mrf.mxu0
      %v6390 = vadd.f32 %v6277, %v6389
      %v6391 = vpop.f32.mrf.mxu0
      %6392 = vmatprep.mubr.bf16.mxu0 0
      %6393 = vmatmul.mubr.bf16.gmra.mxu0 %v6143
      %v6394 = vpop.f32.mrf.mxu0
      %v6395 = vadd.f32 %v6282, %v6394
      %v6396 = vpop.f32.mrf.mxu0
      %v6397 = vpop.f32.mrf.mxu0
      %v6398 = vadd.f32 %v6285, %v6397
      %v6399 = vpop.f32.mrf.mxu0
      %6400 = vmatprep.mubr.bf16.mxu0 0
      %6401 = vmatmul.mubr.bf16.gmra.mxu0 %v6144
      %v6402 = vpop.f32.mrf.mxu0
      %v6403 = vadd.f32 %v6290, %v6402
      %v6404 = vpop.f32.mrf.mxu0
      %v6405 = vpop.f32.mrf.mxu0
      %v6406 = vadd.f32 %v6293, %v6405
      %v6407 = vpop.f32.mrf.mxu0
      %6408 = vmatprep.mubr.bf16.mxu0 0
      %6409 = vmatmul.mubr.bf16.gmra.mxu0 %v6145
      %v6410 = vpop.f32.mrf.mxu0
      %v6411 = vadd.f32 %v6298, %v6410
      %v6412 = vpop.f32.mrf.mxu0
      %v6413 = vpop.f32.mrf.mxu0
      %v6414 = vadd.f32 %v6301, %v6413
      %v6415 = vpop.f32.mrf.mxu0
      %6416 = vdwg.mxu0
      %v6417 = vld [vmem:[#allocation4 + $0x9] sm:$0xff]
      %v6418 = vld [vmem:[#allocation4 + $0x21] sm:$0xff]
      %v6419 = vld [vmem:[#allocation4 + $0x39] sm:$0xff]
      %v6420 = vld [vmem:[#allocation4 + $0x51] sm:$0xff]
      %v6421 = vld [vmem:[#allocation4 + $0x69] sm:$0xff]
      %v6422 = vld [vmem:[#allocation4 + $0x81] sm:$0xff]
      %v6423 = vld [vmem:[#allocation4 + $0x99] sm:$0xff]
      %v6424 = vld [vmem:[#allocation4 + $0xb1] sm:$0xff]
      %v6425 = vpack.c.bf16 %v6418, %v6417
      %v6426 = vpack.c.bf16 %v6420, %v6419
      %v6427 = vpack.c.bf16 %v6422, %v6421
      %v6428 = vpack.c.bf16 %v6424, %v6423
      %s6429 = scalar_lea.vmem %s5, 128
      %v6430 = vld [vmem:[%s6429] sm:$0xf]
      %v6431 = vld [vmem:[%s6429 + $0x4] sm:$0xf]
      %v6432 = vld [vmem:[%s6429 + $0x8] sm:$0xf]
      %v6433 = vld [vmem:[%s6429 + $0xc] sm:$0xf]
      %v6434 = vld [vmem:[%s6429 + $0x10] sm:$0xf]
      %v6435 = vld [vmem:[%s6429 + $0x14] sm:$0xf]
      %v6436 = vld [vmem:[%s6429 + $0x18] sm:$0xf]
      %v6437 = vld [vmem:[%s6429 + $0x1c] sm:$0xf]
      %v6438 = vld [vmem:[%s6429 + $0x20] sm:$0xf]
      %v6439 = vld [vmem:[%s6429 + $0x24] sm:$0xf]
      %v6440 = vld [vmem:[%s6429 + $0x28] sm:$0xf]
      %v6441 = vld [vmem:[%s6429 + $0x2c] sm:$0xf]
      %v6442 = vld [vmem:[%s6429 + $0x30] sm:$0xf]
      %v6443 = vld [vmem:[%s6429 + $0x34] sm:$0xf]
      %v6444 = vld [vmem:[%s6429 + $0x38] sm:$0xf]
      %v6445 = vld [vmem:[%s6429 + $0x3c] sm:$0xf]
      %v6462 = vunpack.c.l.b16 %v6430
      %v6463 = vunpack.c.l.b16 %v6431
      %v6464 = vunpack.c.l.b16 %v6432
      %v6465 = vunpack.c.l.b16 %v6433
      %v6466 = vunpack.c.l.b16 %v6434
      %v6467 = vunpack.c.l.b16 %v6435
      %v6468 = vunpack.c.l.b16 %v6436
      %v6469 = vunpack.c.l.b16 %v6437
      %v6470 = vunpack.c.l.b16 %v6438
      %v6471 = vunpack.c.l.b16 %v6439
      %v6472 = vunpack.c.l.b16 %v6440
      %v6473 = vunpack.c.l.b16 %v6441
      %v6474 = vunpack.c.l.b16 %v6442
      %v6475 = vunpack.c.l.b16 %v6443
      %v6476 = vunpack.c.l.b16 %v6444
      %v6477 = vunpack.c.l.b16 %v6445
      %v6478 = vpack.c.b16 %v6463, %v6462
      %v6479 = vpack.c.b16 %v6465, %v6464
      %v6480 = vpack.c.b16 %v6467, %v6466
      %v6481 = vpack.c.b16 %v6469, %v6468
      %v6482 = vpack.c.b16 %v6471, %v6470
      %v6483 = vpack.c.b16 %v6473, %v6472
      %v6484 = vpack.c.b16 %v6475, %v6474
      %v6485 = vpack.c.b16 %v6477, %v6476
      %6494 = vmatprep.subr.bf16.mxu0 0
      %6495 = vmatpush1.bf16.msra.mxu0 %v6485
      %6496 = vmatprep.subr.bf16.mxu0 0
      %6497 = vmatpush1.bf16.msra.mxu0 %v6484
      %6498 = vmatprep.subr.bf16.mxu0 0
      %6499 = vmatpush1.bf16.msra.mxu0 %v6483
      %6500 = vmatprep.subr.bf16.mxu0 0
      %6501 = vmatpush1.bf16.msra.mxu0 %v6482
      %6502 = vmatprep.subr.bf16.mxu0 0
      %6503 = vmatpush1.bf16.msra.mxu0 %v6481
      %6504 = vmatprep.subr.bf16.mxu0 0
      %6505 = vmatpush1.bf16.msra.mxu0 %v6480
      %6506 = vmatprep.subr.bf16.mxu0 0
      %6507 = vmatpush1.bf16.msra.mxu0 %v6479
      %6508 = vmatprep.subr.bf16.mxu0 0
      %6509 = vmatpush1.bf16.msra.mxu0 %v6478
      %6510 = vmatprep.subr.bf16.mxu0 0
      %6511 = vmatpush2.bf16.msra.mxu0 0
      %6512 = vmatprep.subr.bf16.mxu0 0
      %6513 = vmatpush2.bf16.msra.mxu0 0
      %6514 = vmatprep.subr.bf16.mxu0 0
      %6515 = vmatpush2.bf16.msra.mxu0 0
      %6516 = vmatprep.subr.bf16.mxu0 0
      %6517 = vmatpush2.bf16.msra.mxu0 0
      %6518 = vmatprep.subr.bf16.mxu0 0
      %6519 = vmatpush2.bf16.msra.mxu0 0
      %6520 = vmatprep.subr.bf16.mxu0 0
      %6521 = vmatpush2.bf16.msra.mxu0 0
      %6522 = vmatprep.subr.bf16.mxu0 0
      %6523 = vmatpush2.bf16.msra.mxu0 0
      %6524 = vmatprep.subr.bf16.mxu0 0
      %6525 = vmatpush2.bf16.msra.mxu0 0
      %6526 = vmatprep.mubr.bf16.mxu0 0
      %6527 = vmatmul.mubr.bf16.gmra.mxu0 %v6425
      %v6528 = vpop.f32.mrf.mxu0
      %v6529 = vadd.f32 0.0, %v6528
      %v6530 = vpop.f32.mrf.mxu0
      %v6531 = vpop.f32.mrf.mxu0
      %v6532 = vadd.f32 0.0, %v6531
      %v6533 = vpop.f32.mrf.mxu0
      %6534 = vmatprep.mubr.bf16.mxu0 0
      %6535 = vmatmul.mubr.bf16.gmra.mxu0 %v6426
      %v6536 = vpop.f32.mrf.mxu0
      %v6537 = vadd.f32 0.0, %v6536
      %v6538 = vpop.f32.mrf.mxu0
      %v6539 = vpop.f32.mrf.mxu0
      %v6540 = vadd.f32 0.0, %v6539
      %v6541 = vpop.f32.mrf.mxu0
      %6542 = vmatprep.mubr.bf16.mxu0 0
      %6543 = vmatmul.mubr.bf16.gmra.mxu0 %v6427
      %v6544 = vpop.f32.mrf.mxu0
      %v6545 = vadd.f32 0.0, %v6544
      %v6546 = vpop.f32.mrf.mxu0
      %v6547 = vpop.f32.mrf.mxu0
      %v6548 = vadd.f32 0.0, %v6547
      %v6549 = vpop.f32.mrf.mxu0
      %6550 = vmatprep.mubr.bf16.mxu0 0
      %6551 = vmatmul.mubr.bf16.gmra.mxu0 %v6428
      %v6552 = vpop.f32.mrf.mxu0
      %v6553 = vadd.f32 0.0, %v6552
      %v6554 = vpop.f32.mrf.mxu0
      %v6555 = vpop.f32.mrf.mxu0
      %v6556 = vadd.f32 0.0, %v6555
      %v6557 = vpop.f32.mrf.mxu0
      %6558 = vdwg.mxu0
      %v6559 = vadd.f32 %v6387, %v6529
      %v6560 = vadd.f32 %v6390, %v6532
      %v6561 = vadd.f32 %v6395, %v6537
      %v6562 = vadd.f32 %v6398, %v6540
      %v6563 = vadd.f32 %v6403, %v6545
      %v6564 = vadd.f32 %v6406, %v6548
      %v6565 = vadd.f32 %v6411, %v6553
      %v6566 = vadd.f32 %v6414, %v6556
      %v6567 = vld [vmem:[%s6125 + $0x7] sm:$0xff]
      %v6568 = vld [vmem:[%s6125 + $0x1f] sm:$0xff]
      %v6569 = vld [vmem:[%s6125 + $0x37] sm:$0xff]
      %v6570 = vld [vmem:[%s6125 + $0x4f] sm:$0xff]
      %v6571 = vld [vmem:[%s6125 + $0x67] sm:$0xff]
      %v6572 = vld [vmem:[%s6125 + $0x7f] sm:$0xff]
      %v6573 = vld [vmem:[%s6125 + $0x97] sm:$0xff]
      %v6574 = vld [vmem:[%s6125 + $0xaf] sm:$0xff]
      %v6575 = vpack.c.bf16 %v6568, %v6567
      %v6576 = vpack.c.bf16 %v6570, %v6569
      %v6577 = vpack.c.bf16 %v6572, %v6571
      %v6578 = vpack.c.bf16 %v6574, %v6573
      %s6579 = scalar_lea.vmem %s5, 192
      %v6580 = vld [vmem:[%s6579] sm:$0xf]
      %v6581 = vld [vmem:[%s6579 + $0x4] sm:$0xf]
      %v6582 = vld [vmem:[%s6579 + $0x8] sm:$0xf]
      %v6583 = vld [vmem:[%s6579 + $0xc] sm:$0xf]
      %v6584 = vld [vmem:[%s6579 + $0x10] sm:$0xf]
      %v6585 = vld [vmem:[%s6579 + $0x14] sm:$0xf]
      %v6586 = vld [vmem:[%s6579 + $0x18] sm:$0xf]
      %v6587 = vld [vmem:[%s6579 + $0x1c] sm:$0xf]
      %v6588 = vld [vmem:[%s6579 + $0x20] sm:$0xf]
      %v6589 = vld [vmem:[%s6579 + $0x24] sm:$0xf]
      %v6590 = vld [vmem:[%s6579 + $0x28] sm:$0xf]
      %v6591 = vld [vmem:[%s6579 + $0x2c] sm:$0xf]
      %v6592 = vld [vmem:[%s6579 + $0x30] sm:$0xf]
      %v6593 = vld [vmem:[%s6579 + $0x34] sm:$0xf]
      %v6594 = vld [vmem:[%s6579 + $0x38] sm:$0xf]
      %v6595 = vld [vmem:[%s6579 + $0x3c] sm:$0xf]
      %v6612 = vunpack.c.l.b16 %v6580
      %v6613 = vunpack.c.l.b16 %v6581
      %v6614 = vunpack.c.l.b16 %v6582
      %v6615 = vunpack.c.l.b16 %v6583
      %v6616 = vunpack.c.l.b16 %v6584
      %v6617 = vunpack.c.l.b16 %v6585
      %v6618 = vunpack.c.l.b16 %v6586
      %v6619 = vunpack.c.l.b16 %v6587
      %v6620 = vunpack.c.l.b16 %v6588
      %v6621 = vunpack.c.l.b16 %v6589
      %v6622 = vunpack.c.l.b16 %v6590
      %v6623 = vunpack.c.l.b16 %v6591
      %v6624 = vunpack.c.l.b16 %v6592
      %v6625 = vunpack.c.l.b16 %v6593
      %v6626 = vunpack.c.l.b16 %v6594
      %v6627 = vunpack.c.l.b16 %v6595
      %v6628 = vpack.c.b16 %v6613, %v6612
      %v6629 = vpack.c.b16 %v6615, %v6614
      %v6630 = vpack.c.b16 %v6617, %v6616
      %v6631 = vpack.c.b16 %v6619, %v6618
      %v6632 = vpack.c.b16 %v6621, %v6620
      %v6633 = vpack.c.b16 %v6623, %v6622
      %v6634 = vpack.c.b16 %v6625, %v6624
      %v6635 = vpack.c.b16 %v6627, %v6626
      %6644 = vmatprep.subr.bf16.mxu0 0
      %6645 = vmatpush1.bf16.msra.mxu0 %v6635
      %6646 = vmatprep.subr.bf16.mxu0 0
      %6647 = vmatpush1.bf16.msra.mxu0 %v6634
      %6648 = vmatprep.subr.bf16.mxu0 0
      %6649 = vmatpush1.bf16.msra.mxu0 %v6633
      %6650 = vmatprep.subr.bf16.mxu0 0
      %6651 = vmatpush1.bf16.msra.mxu0 %v6632
      %6652 = vmatprep.subr.bf16.mxu0 0
      %6653 = vmatpush1.bf16.msra.mxu0 %v6631
      %6654 = vmatprep.subr.bf16.mxu0 0
      %6655 = vmatpush1.bf16.msra.mxu0 %v6630
      %6656 = vmatprep.subr.bf16.mxu0 0
      %6657 = vmatpush1.bf16.msra.mxu0 %v6629
      %6658 = vmatprep.subr.bf16.mxu0 0
      %6659 = vmatpush1.bf16.msra.mxu0 %v6628
      %6660 = vmatprep.subr.bf16.mxu0 0
      %6661 = vmatpush2.bf16.msra.mxu0 0
      %6662 = vmatprep.subr.bf16.mxu0 0
      %6663 = vmatpush2.bf16.msra.mxu0 0
      %6664 = vmatprep.subr.bf16.mxu0 0
      %6665 = vmatpush2.bf16.msra.mxu0 0
      %6666 = vmatprep.subr.bf16.mxu0 0
      %6667 = vmatpush2.bf16.msra.mxu0 0
      %6668 = vmatprep.subr.bf16.mxu0 0
      %6669 = vmatpush2.bf16.msra.mxu0 0
      %6670 = vmatprep.subr.bf16.mxu0 0
      %6671 = vmatpush2.bf16.msra.mxu0 0
      %6672 = vmatprep.subr.bf16.mxu0 0
      %6673 = vmatpush2.bf16.msra.mxu0 0
      %6674 = vmatprep.subr.bf16.mxu0 0
      %6675 = vmatpush2.bf16.msra.mxu0 0
      %6676 = vmatprep.mubr.bf16.mxu0 0
      %6677 = vmatmul.mubr.bf16.gmra.mxu0 %v6575
      %v6678 = vpop.f32.mrf.mxu0
      %v6679 = vadd.f32 0.0, %v6678
      %v6680 = vpop.f32.mrf.mxu0
      %v6681 = vpop.f32.mrf.mxu0
      %v6682 = vadd.f32 0.0, %v6681
      %v6683 = vpop.f32.mrf.mxu0
      %6684 = vmatprep.mubr.bf16.mxu0 0
      %6685 = vmatmul.mubr.bf16.gmra.mxu0 %v6576
      %v6686 = vpop.f32.mrf.mxu0
      %v6687 = vadd.f32 0.0, %v6686
      %v6688 = vpop.f32.mrf.mxu0
      %v6689 = vpop.f32.mrf.mxu0
      %v6690 = vadd.f32 0.0, %v6689
      %v6691 = vpop.f32.mrf.mxu0
      %6692 = vmatprep.mubr.bf16.mxu0 0
      %6693 = vmatmul.mubr.bf16.gmra.mxu0 %v6577
      %v6694 = vpop.f32.mrf.mxu0
      %v6695 = vadd.f32 0.0, %v6694
      %v6696 = vpop.f32.mrf.mxu0
      %v6697 = vpop.f32.mrf.mxu0
      %v6698 = vadd.f32 0.0, %v6697
      %v6699 = vpop.f32.mrf.mxu0
      %6700 = vmatprep.mubr.bf16.mxu0 0
      %6701 = vmatmul.mubr.bf16.gmra.mxu0 %v6578
      %v6702 = vpop.f32.mrf.mxu0
      %v6703 = vadd.f32 0.0, %v6702
      %v6704 = vpop.f32.mrf.mxu0
      %v6705 = vpop.f32.mrf.mxu0
      %v6706 = vadd.f32 0.0, %v6705
      %v6707 = vpop.f32.mrf.mxu0
      %6708 = vdwg.mxu0
      %v6709 = vadd.f32 %v6559, %v6679
      %v6710 = vadd.f32 %v6560, %v6682
      %v6711 = vadd.f32 %v6561, %v6687
      %v6712 = vadd.f32 %v6562, %v6690
      %v6713 = vadd.f32 %v6563, %v6695
      %v6714 = vadd.f32 %v6564, %v6698
      %v6715 = vadd.f32 %v6565, %v6703
      %v6716 = vadd.f32 %v6566, %v6706
      %v6717 = vld [vmem:[%s6125 + $0x8] sm:$0xff]
      %v6718 = vld [vmem:[%s6125 + $0x20] sm:$0xff]
      %v6719 = vld [vmem:[%s6125 + $0x38] sm:$0xff]
      %v6720 = vld [vmem:[%s6125 + $0x50] sm:$0xff]
      %v6721 = vld [vmem:[%s6125 + $0x68] sm:$0xff]
      %v6722 = vld [vmem:[%s6125 + $0x80] sm:$0xff]
      %v6723 = vld [vmem:[%s6125 + $0x98] sm:$0xff]
      %v6724 = vld [vmem:[%s6125 + $0xb0] sm:$0xff]
      %v6725 = vpack.c.bf16 %v6718, %v6717
      %v6726 = vpack.c.bf16 %v6720, %v6719
      %v6727 = vpack.c.bf16 %v6722, %v6721
      %v6728 = vpack.c.bf16 %v6724, %v6723
      %s6729 = scalar_lea.vmem %s5, 256
      %v6730 = vld [vmem:[%s6729] sm:$0xf]
      %v6731 = vld [vmem:[%s6729 + $0x4] sm:$0xf]
      %v6732 = vld [vmem:[%s6729 + $0x8] sm:$0xf]
      %v6733 = vld [vmem:[%s6729 + $0xc] sm:$0xf]
      %v6734 = vld [vmem:[%s6729 + $0x10] sm:$0xf]
      %v6735 = vld [vmem:[%s6729 + $0x14] sm:$0xf]
      %v6736 = vld [vmem:[%s6729 + $0x18] sm:$0xf]
      %v6737 = vld [vmem:[%s6729 + $0x1c] sm:$0xf]
      %v6738 = vld [vmem:[%s6729 + $0x20] sm:$0xf]
      %v6739 = vld [vmem:[%s6729 + $0x24] sm:$0xf]
      %v6740 = vld [vmem:[%s6729 + $0x28] sm:$0xf]
      %v6741 = vld [vmem:[%s6729 + $0x2c] sm:$0xf]
      %v6742 = vld [vmem:[%s6729 + $0x30] sm:$0xf]
      %v6743 = vld [vmem:[%s6729 + $0x34] sm:$0xf]
      %v6744 = vld [vmem:[%s6729 + $0x38] sm:$0xf]
      %v6745 = vld [vmem:[%s6729 + $0x3c] sm:$0xf]
      %v6762 = vunpack.c.l.b16 %v6730
      %v6763 = vunpack.c.l.b16 %v6731
      %v6764 = vunpack.c.l.b16 %v6732
      %v6765 = vunpack.c.l.b16 %v6733
      %v6766 = vunpack.c.l.b16 %v6734
      %v6767 = vunpack.c.l.b16 %v6735
      %v6768 = vunpack.c.l.b16 %v6736
      %v6769 = vunpack.c.l.b16 %v6737
      %v6770 = vunpack.c.l.b16 %v6738
      %v6771 = vunpack.c.l.b16 %v6739
      %v6772 = vunpack.c.l.b16 %v6740
      %v6773 = vunpack.c.l.b16 %v6741
      %v6774 = vunpack.c.l.b16 %v6742
      %v6775 = vunpack.c.l.b16 %v6743
      %v6776 = vunpack.c.l.b16 %v6744
      %v6777 = vunpack.c.l.b16 %v6745
      %v6778 = vpack.c.b16 %v6763, %v6762
      %v6779 = vpack.c.b16 %v6765, %v6764
      %v6780 = vpack.c.b16 %v6767, %v6766
      %v6781 = vpack.c.b16 %v6769, %v6768
      %v6782 = vpack.c.b16 %v6771, %v6770
      %v6783 = vpack.c.b16 %v6773, %v6772
      %v6784 = vpack.c.b16 %v6775, %v6774
      %v6785 = vpack.c.b16 %v6777, %v6776
      %6794 = vmatprep.subr.bf16.mxu0 0
      %6795 = vmatpush1.bf16.msra.mxu0 %v6785
      %6796 = vmatprep.subr.bf16.mxu0 0
      %6797 = vmatpush1.bf16.msra.mxu0 %v6784
      %6798 = vmatprep.subr.bf16.mxu0 0
      %6799 = vmatpush1.bf16.msra.mxu0 %v6783
      %6800 = vmatprep.subr.bf16.mxu0 0
      %6801 = vmatpush1.bf16.msra.mxu0 %v6782
      %6802 = vmatprep.subr.bf16.mxu0 0
      %6803 = vmatpush1.bf16.msra.mxu0 %v6781
      %6804 = vmatprep.subr.bf16.mxu0 0
      %6805 = vmatpush1.bf16.msra.mxu0 %v6780
      %6806 = vmatprep.subr.bf16.mxu0 0
      %6807 = vmatpush1.bf16.msra.mxu0 %v6779
      %6808 = vmatprep.subr.bf16.mxu0 0
      %6809 = vmatpush1.bf16.msra.mxu0 %v6778
      %6810 = vmatprep.subr.bf16.mxu0 0
      %6811 = vmatpush2.bf16.msra.mxu0 0
      %6812 = vmatprep.subr.bf16.mxu0 0
      %6813 = vmatpush2.bf16.msra.mxu0 0
      %6814 = vmatprep.subr.bf16.mxu0 0
      %6815 = vmatpush2.bf16.msra.mxu0 0
      %6816 = vmatprep.subr.bf16.mxu0 0
      %6817 = vmatpush2.bf16.msra.mxu0 0
      %6818 = vmatprep.subr.bf16.mxu0 0
      %6819 = vmatpush2.bf16.msra.mxu0 0
      %6820 = vmatprep.subr.bf16.mxu0 0
      %6821 = vmatpush2.bf16.msra.mxu0 0
      %6822 = vmatprep.subr.bf16.mxu0 0
      %6823 = vmatpush2.bf16.msra.mxu0 0
      %6824 = vmatprep.subr.bf16.mxu0 0
      %6825 = vmatpush2.bf16.msra.mxu0 0
      %6826 = vmatprep.mubr.bf16.mxu0 0
      %6827 = vmatmul.mubr.bf16.gmra.mxu0 %v6725
      %v6828 = vpop.f32.mrf.mxu0
      %v6829 = vadd.f32 0.0, %v6828
      %v6830 = vpop.f32.mrf.mxu0
      %v6831 = vpop.f32.mrf.mxu0
      %v6832 = vadd.f32 0.0, %v6831
      %v6833 = vpop.f32.mrf.mxu0
      %6834 = vmatprep.mubr.bf16.mxu0 0
      %6835 = vmatmul.mubr.bf16.gmra.mxu0 %v6726
      %v6836 = vpop.f32.mrf.mxu0
      %v6837 = vadd.f32 0.0, %v6836
      %v6838 = vpop.f32.mrf.mxu0
      %v6839 = vpop.f32.mrf.mxu0
      %v6840 = vadd.f32 0.0, %v6839
      %v6841 = vpop.f32.mrf.mxu0
      %6842 = vmatprep.mubr.bf16.mxu0 0
      %6843 = vmatmul.mubr.bf16.gmra.mxu0 %v6727
      %v6844 = vpop.f32.mrf.mxu0
      %v6845 = vadd.f32 0.0, %v6844
      %v6846 = vpop.f32.mrf.mxu0
      %v6847 = vpop.f32.mrf.mxu0
      %v6848 = vadd.f32 0.0, %v6847
      %v6849 = vpop.f32.mrf.mxu0
      %6850 = vmatprep.mubr.bf16.mxu0 0
      %6851 = vmatmul.mubr.bf16.gmra.mxu0 %v6728
      %v6852 = vpop.f32.mrf.mxu0
      %v6853 = vadd.f32 0.0, %v6852
      %v6854 = vpop.f32.mrf.mxu0
      %v6855 = vpop.f32.mrf.mxu0
      %v6856 = vadd.f32 0.0, %v6855
      %v6857 = vpop.f32.mrf.mxu0
      %6858 = vdwg.mxu0
      %v6859 = vadd.f32 %v6709, %v6829
      %v6860 = vadd.f32 %v6710, %v6832
      %v6861 = vadd.f32 %v6711, %v6837
      %v6862 = vadd.f32 %v6712, %v6840
      %v6863 = vadd.f32 %v6713, %v6845
      %v6864 = vadd.f32 %v6714, %v6848
      %v6865 = vadd.f32 %v6715, %v6853
      %v6866 = vadd.f32 %v6716, %v6856
      %v6867 = vld [vmem:[%s6125 + $0x9] sm:$0xff]
      %v6868 = vld [vmem:[%s6125 + $0x21] sm:$0xff]
      %v6869 = vld [vmem:[%s6125 + $0x39] sm:$0xff]
      %v6870 = vld [vmem:[%s6125 + $0x51] sm:$0xff]
      %v6871 = vld [vmem:[%s6125 + $0x69] sm:$0xff]
      %v6872 = vld [vmem:[%s6125 + $0x81] sm:$0xff]
      %v6873 = vld [vmem:[%s6125 + $0x99] sm:$0xff]
      %v6874 = vld [vmem:[%s6125 + $0xb1] sm:$0xff]
      %v6875 = vpack.c.bf16 %v6868, %v6867
      %v6876 = vpack.c.bf16 %v6870, %v6869
      %v6877 = vpack.c.bf16 %v6872, %v6871
      %v6878 = vpack.c.bf16 %v6874, %v6873
      %s6879 = scalar_lea.vmem %s5, 320
      %v6880 = vld [vmem:[%s6879] sm:$0xf]
      %v6881 = vld [vmem:[%s6879 + $0x4] sm:$0xf]
      %v6882 = vld [vmem:[%s6879 + $0x8] sm:$0xf]
      %v6883 = vld [vmem:[%s6879 + $0xc] sm:$0xf]
      %v6884 = vld [vmem:[%s6879 + $0x10] sm:$0xf]
      %v6885 = vld [vmem:[%s6879 + $0x14] sm:$0xf]
      %v6886 = vld [vmem:[%s6879 + $0x18] sm:$0xf]
      %v6887 = vld [vmem:[%s6879 + $0x1c] sm:$0xf]
      %v6888 = vld [vmem:[%s6879 + $0x20] sm:$0xf]
      %v6889 = vld [vmem:[%s6879 + $0x24] sm:$0xf]
      %v6890 = vld [vmem:[%s6879 + $0x28] sm:$0xf]
      %v6891 = vld [vmem:[%s6879 + $0x2c] sm:$0xf]
      %v6892 = vld [vmem:[%s6879 + $0x30] sm:$0xf]
      %v6893 = vld [vmem:[%s6879 + $0x34] sm:$0xf]
      %v6894 = vld [vmem:[%s6879 + $0x38] sm:$0xf]
      %v6895 = vld [vmem:[%s6879 + $0x3c] sm:$0xf]
      %v6912 = vunpack.c.l.b16 %v6880
      %v6913 = vunpack.c.l.b16 %v6881
      %v6914 = vunpack.c.l.b16 %v6882
      %v6915 = vunpack.c.l.b16 %v6883
      %v6916 = vunpack.c.l.b16 %v6884
      %v6917 = vunpack.c.l.b16 %v6885
      %v6918 = vunpack.c.l.b16 %v6886
      %v6919 = vunpack.c.l.b16 %v6887
      %v6920 = vunpack.c.l.b16 %v6888
      %v6921 = vunpack.c.l.b16 %v6889
      %v6922 = vunpack.c.l.b16 %v6890
      %v6923 = vunpack.c.l.b16 %v6891
      %v6924 = vunpack.c.l.b16 %v6892
      %v6925 = vunpack.c.l.b16 %v6893
      %v6926 = vunpack.c.l.b16 %v6894
      %v6927 = vunpack.c.l.b16 %v6895
      %v6928 = vpack.c.b16 %v6913, %v6912
      %v6929 = vpack.c.b16 %v6915, %v6914
      %v6930 = vpack.c.b16 %v6917, %v6916
      %v6931 = vpack.c.b16 %v6919, %v6918
      %v6932 = vpack.c.b16 %v6921, %v6920
      %v6933 = vpack.c.b16 %v6923, %v6922
      %v6934 = vpack.c.b16 %v6925, %v6924
      %v6935 = vpack.c.b16 %v6927, %v6926
      %6944 = vmatprep.subr.bf16.mxu0 0
      %6945 = vmatpush1.bf16.msra.mxu0 %v6935
      %6946 = vmatprep.subr.bf16.mxu0 0
      %6947 = vmatpush1.bf16.msra.mxu0 %v6934
      %6948 = vmatprep.subr.bf16.mxu0 0
      %6949 = vmatpush1.bf16.msra.mxu0 %v6933
      %6950 = vmatprep.subr.bf16.mxu0 0
      %6951 = vmatpush1.bf16.msra.mxu0 %v6932
      %6952 = vmatprep.subr.bf16.mxu0 0
      %6953 = vmatpush1.bf16.msra.mxu0 %v6931
      %6954 = vmatprep.subr.bf16.mxu0 0
      %6955 = vmatpush1.bf16.msra.mxu0 %v6930
      %6956 = vmatprep.subr.bf16.mxu0 0
      %6957 = vmatpush1.bf16.msra.mxu0 %v6929
      %6958 = vmatprep.subr.bf16.mxu0 0
      %6959 = vmatpush1.bf16.msra.mxu0 %v6928
      %6960 = vmatprep.subr.bf16.mxu0 0
      %6961 = vmatpush2.bf16.msra.mxu0 0
      %6962 = vmatprep.subr.bf16.mxu0 0
      %6963 = vmatpush2.bf16.msra.mxu0 0
      %6964 = vmatprep.subr.bf16.mxu0 0
      %6965 = vmatpush2.bf16.msra.mxu0 0
      %6966 = vmatprep.subr.bf16.mxu0 0
      %6967 = vmatpush2.bf16.msra.mxu0 0
      %6968 = vmatprep.subr.bf16.mxu0 0
      %6969 = vmatpush2.bf16.msra.mxu0 0
      %6970 = vmatprep.subr.bf16.mxu0 0
      %6971 = vmatpush2.bf16.msra.mxu0 0
      %6972 = vmatprep.subr.bf16.mxu0 0
      %6973 = vmatpush2.bf16.msra.mxu0 0
      %6974 = vmatprep.subr.bf16.mxu0 0
      %6975 = vmatpush2.bf16.msra.mxu0 0
      %6976 = vmatprep.mubr.bf16.mxu0 0
      %6977 = vmatmul.mubr.bf16.gmra.mxu0 %v6875
      %v6978 = vpop.f32.mrf.mxu0
      %v6979 = vadd.f32 0.0, %v6978
      %v6980 = vpop.f32.mrf.mxu0
      %v6981 = vpop.f32.mrf.mxu0
      %v6982 = vadd.f32 0.0, %v6981
      %v6983 = vpop.f32.mrf.mxu0
      %6984 = vmatprep.mubr.bf16.mxu0 0
      %6985 = vmatmul.mubr.bf16.gmra.mxu0 %v6876
      %v6986 = vpop.f32.mrf.mxu0
      %v6987 = vadd.f32 0.0, %v6986
      %v6988 = vpop.f32.mrf.mxu0
      %v6989 = vpop.f32.mrf.mxu0
      %v6990 = vadd.f32 0.0, %v6989
      %v6991 = vpop.f32.mrf.mxu0
      %6992 = vmatprep.mubr.bf16.mxu0 0
      %6993 = vmatmul.mubr.bf16.gmra.mxu0 %v6877
      %v6994 = vpop.f32.mrf.mxu0
      %v6995 = vadd.f32 0.0, %v6994
      %v6996 = vpop.f32.mrf.mxu0
      %v6997 = vpop.f32.mrf.mxu0
      %v6998 = vadd.f32 0.0, %v6997
      %v6999 = vpop.f32.mrf.mxu0
      %7000 = vmatprep.mubr.bf16.mxu0 0
      %7001 = vmatmul.mubr.bf16.gmra.mxu0 %v6878
      %v7002 = vpop.f32.mrf.mxu0
      %v7003 = vadd.f32 0.0, %v7002
      %v7004 = vpop.f32.mrf.mxu0
      %v7005 = vpop.f32.mrf.mxu0
      %v7006 = vadd.f32 0.0, %v7005
      %v7007 = vpop.f32.mrf.mxu0
      %7008 = vdwg.mxu0
      %v7009 = vadd.f32 %v6859, %v6979
      %v7010 = vadd.f32 %v6860, %v6982
      %v7011 = vadd.f32 %v6861, %v6987
      %v7012 = vadd.f32 %v6862, %v6990
      %v7013 = vadd.f32 %v6863, %v6995
      %v7014 = vadd.f32 %v6864, %v6998
      %v7015 = vadd.f32 %v6865, %v7003
      %v7016 = vadd.f32 %v6866, %v7006
      %s7017 = scalar_lea.vmem [#allocation4], 48
      %v7018 = vld [vmem:[%s7017 + $0x7] sm:$0xff]
      %v7019 = vld [vmem:[%s7017 + $0x1f] sm:$0xff]
      %v7020 = vld [vmem:[%s7017 + $0x37] sm:$0xff]
      %v7021 = vld [vmem:[%s7017 + $0x4f] sm:$0xff]
      %v7022 = vld [vmem:[%s7017 + $0x67] sm:$0xff]
      %v7023 = vld [vmem:[%s7017 + $0x7f] sm:$0xff]
      %v7024 = vld [vmem:[%s7017 + $0x97] sm:$0xff]
      %v7025 = vld [vmem:[%s7017 + $0xaf] sm:$0xff]
      %v7026 = vpack.c.bf16 %v7019, %v7018
      %v7027 = vpack.c.bf16 %v7021, %v7020
      %v7028 = vpack.c.bf16 %v7023, %v7022
      %v7029 = vpack.c.bf16 %v7025, %v7024
      %s7030 = scalar_lea.vmem %s5, 384
      %v7031 = vld [vmem:[%s7030] sm:$0xf]
      %v7032 = vld [vmem:[%s7030 + $0x4] sm:$0xf]
      %v7033 = vld [vmem:[%s7030 + $0x8] sm:$0xf]
      %v7034 = vld [vmem:[%s7030 + $0xc] sm:$0xf]
      %v7035 = vld [vmem:[%s7030 + $0x10] sm:$0xf]
      %v7036 = vld [vmem:[%s7030 + $0x14] sm:$0xf]
      %v7037 = vld [vmem:[%s7030 + $0x18] sm:$0xf]
      %v7038 = vld [vmem:[%s7030 + $0x1c] sm:$0xf]
      %v7039 = vld [vmem:[%s7030 + $0x20] sm:$0xf]
      %v7040 = vld [vmem:[%s7030 + $0x24] sm:$0xf]
      %v7041 = vld [vmem:[%s7030 + $0x28] sm:$0xf]
      %v7042 = vld [vmem:[%s7030 + $0x2c] sm:$0xf]
      %v7043 = vld [vmem:[%s7030 + $0x30] sm:$0xf]
      %v7044 = vld [vmem:[%s7030 + $0x34] sm:$0xf]
      %v7045 = vld [vmem:[%s7030 + $0x38] sm:$0xf]
      %v7046 = vld [vmem:[%s7030 + $0x3c] sm:$0xf]
      %v7063 = vunpack.c.l.b16 %v7031
      %v7064 = vunpack.c.l.b16 %v7032
      %v7065 = vunpack.c.l.b16 %v7033
      %v7066 = vunpack.c.l.b16 %v7034
      %v7067 = vunpack.c.l.b16 %v7035
      %v7068 = vunpack.c.l.b16 %v7036
      %v7069 = vunpack.c.l.b16 %v7037
      %v7070 = vunpack.c.l.b16 %v7038
      %v7071 = vunpack.c.l.b16 %v7039
      %v7072 = vunpack.c.l.b16 %v7040
      %v7073 = vunpack.c.l.b16 %v7041
      %v7074 = vunpack.c.l.b16 %v7042
      %v7075 = vunpack.c.l.b16 %v7043
      %v7076 = vunpack.c.l.b16 %v7044
      %v7077 = vunpack.c.l.b16 %v7045
      %v7078 = vunpack.c.l.b16 %v7046
      %v7079 = vpack.c.b16 %v7064, %v7063
      %v7080 = vpack.c.b16 %v7066, %v7065
      %v7081 = vpack.c.b16 %v7068, %v7067
      %v7082 = vpack.c.b16 %v7070, %v7069
      %v7083 = vpack.c.b16 %v7072, %v7071
      %v7084 = vpack.c.b16 %v7074, %v7073
      %v7085 = vpack.c.b16 %v7076, %v7075
      %v7086 = vpack.c.b16 %v7078, %v7077
      %7095 = vmatprep.subr.bf16.mxu0 0
      %7096 = vmatpush1.bf16.msra.mxu0 %v7086
      %7097 = vmatprep.subr.bf16.mxu0 0
      %7098 = vmatpush1.bf16.msra.mxu0 %v7085
      %7099 = vmatprep.subr.bf16.mxu0 0
      %7100 = vmatpush1.bf16.msra.mxu0 %v7084
      %7101 = vmatprep.subr.bf16.mxu0 0
      %7102 = vmatpush1.bf16.msra.mxu0 %v7083
      %7103 = vmatprep.subr.bf16.mxu0 0
      %7104 = vmatpush1.bf16.msra.mxu0 %v7082
      %7105 = vmatprep.subr.bf16.mxu0 0
      %7106 = vmatpush1.bf16.msra.mxu0 %v7081
      %7107 = vmatprep.subr.bf16.mxu0 0
      %7108 = vmatpush1.bf16.msra.mxu0 %v7080
      %7109 = vmatprep.subr.bf16.mxu0 0
      %7110 = vmatpush1.bf16.msra.mxu0 %v7079
      %7111 = vmatprep.subr.bf16.mxu0 0
      %7112 = vmatpush2.bf16.msra.mxu0 0
      %7113 = vmatprep.subr.bf16.mxu0 0
      %7114 = vmatpush2.bf16.msra.mxu0 0
      %7115 = vmatprep.subr.bf16.mxu0 0
      %7116 = vmatpush2.bf16.msra.mxu0 0
      %7117 = vmatprep.subr.bf16.mxu0 0
      %7118 = vmatpush2.bf16.msra.mxu0 0
      %7119 = vmatprep.subr.bf16.mxu0 0
      %7120 = vmatpush2.bf16.msra.mxu0 0
      %7121 = vmatprep.subr.bf16.mxu0 0
      %7122 = vmatpush2.bf16.msra.mxu0 0
      %7123 = vmatprep.subr.bf16.mxu0 0
      %7124 = vmatpush2.bf16.msra.mxu0 0
      %7125 = vmatprep.subr.bf16.mxu0 0
      %7126 = vmatpush2.bf16.msra.mxu0 0
      %7127 = vmatprep.mubr.bf16.mxu0 0
      %7128 = vmatmul.mubr.bf16.gmra.mxu0 %v7026
      %v7129 = vpop.f32.mrf.mxu0
      %v7130 = vadd.f32 0.0, %v7129
      %v7131 = vpop.f32.mrf.mxu0
      %v7132 = vpop.f32.mrf.mxu0
      %v7133 = vadd.f32 0.0, %v7132
      %v7134 = vpop.f32.mrf.mxu0
      %7135 = vmatprep.mubr.bf16.mxu0 0
      %7136 = vmatmul.mubr.bf16.gmra.mxu0 %v7027
      %v7137 = vpop.f32.mrf.mxu0
      %v7138 = vadd.f32 0.0, %v7137
      %v7139 = vpop.f32.mrf.mxu0
      %v7140 = vpop.f32.mrf.mxu0
      %v7141 = vadd.f32 0.0, %v7140
      %v7142 = vpop.f32.mrf.mxu0
      %7143 = vmatprep.mubr.bf16.mxu0 0
      %7144 = vmatmul.mubr.bf16.gmra.mxu0 %v7028
      %v7145 = vpop.f32.mrf.mxu0
      %v7146 = vadd.f32 0.0, %v7145
      %v7147 = vpop.f32.mrf.mxu0
      %v7148 = vpop.f32.mrf.mxu0
      %v7149 = vadd.f32 0.0, %v7148
      %v7150 = vpop.f32.mrf.mxu0
      %7151 = vmatprep.mubr.bf16.mxu0 0
      %7152 = vmatmul.mubr.bf16.gmra.mxu0 %v7029
      %v7153 = vpop.f32.mrf.mxu0
      %v7154 = vadd.f32 0.0, %v7153
      %v7155 = vpop.f32.mrf.mxu0
      %v7156 = vpop.f32.mrf.mxu0
      %v7157 = vadd.f32 0.0, %v7156
      %v7158 = vpop.f32.mrf.mxu0
      %7159 = vdwg.mxu0
      %v7160 = vadd.f32 %v7009, %v7130
      %v7161 = vadd.f32 %v7010, %v7133
      %v7162 = vadd.f32 %v7011, %v7138
      %v7163 = vadd.f32 %v7012, %v7141
      %v7164 = vadd.f32 %v7013, %v7146
      %v7165 = vadd.f32 %v7014, %v7149
      %v7166 = vadd.f32 %v7015, %v7154
      %v7167 = vadd.f32 %v7016, %v7157
      %v7168 = vld [vmem:[%s7017 + $0x8] sm:$0xff]
      %v7169 = vld [vmem:[%s7017 + $0x20] sm:$0xff]
      %v7170 = vld [vmem:[%s7017 + $0x38] sm:$0xff]
      %v7171 = vld [vmem:[%s7017 + $0x50] sm:$0xff]
      %v7172 = vld [vmem:[%s7017 + $0x68] sm:$0xff]
      %v7173 = vld [vmem:[%s7017 + $0x80] sm:$0xff]
      %v7174 = vld [vmem:[%s7017 + $0x98] sm:$0xff]
      %v7175 = vld [vmem:[%s7017 + $0xb0] sm:$0xff]
      %v7176 = vpack.c.bf16 %v7169, %v7168
      %v7177 = vpack.c.bf16 %v7171, %v7170
      %v7178 = vpack.c.bf16 %v7173, %v7172
      %v7179 = vpack.c.bf16 %v7175, %v7174
      %s7180 = scalar_lea.vmem %s5, 448
      %v7181 = vld [vmem:[%s7180] sm:$0xf]
      %v7182 = vld [vmem:[%s7180 + $0x4] sm:$0xf]
      %v7183 = vld [vmem:[%s7180 + $0x8] sm:$0xf]
      %v7184 = vld [vmem:[%s7180 + $0xc] sm:$0xf]
      %v7185 = vld [vmem:[%s7180 + $0x10] sm:$0xf]
      %v7186 = vld [vmem:[%s7180 + $0x14] sm:$0xf]
      %v7187 = vld [vmem:[%s7180 + $0x18] sm:$0xf]
      %v7188 = vld [vmem:[%s7180 + $0x1c] sm:$0xf]
      %v7189 = vld [vmem:[%s7180 + $0x20] sm:$0xf]
      %v7190 = vld [vmem:[%s7180 + $0x24] sm:$0xf]
      %v7191 = vld [vmem:[%s7180 + $0x28] sm:$0xf]
      %v7192 = vld [vmem:[%s7180 + $0x2c] sm:$0xf]
      %v7193 = vld [vmem:[%s7180 + $0x30] sm:$0xf]
      %v7194 = vld [vmem:[%s7180 + $0x34] sm:$0xf]
      %v7195 = vld [vmem:[%s7180 + $0x38] sm:$0xf]
      %v7196 = vld [vmem:[%s7180 + $0x3c] sm:$0xf]
      %v7213 = vunpack.c.l.b16 %v7181
      %v7214 = vunpack.c.l.b16 %v7182
      %v7215 = vunpack.c.l.b16 %v7183
      %v7216 = vunpack.c.l.b16 %v7184
      %v7217 = vunpack.c.l.b16 %v7185
      %v7218 = vunpack.c.l.b16 %v7186
      %v7219 = vunpack.c.l.b16 %v7187
      %v7220 = vunpack.c.l.b16 %v7188
      %v7221 = vunpack.c.l.b16 %v7189
      %v7222 = vunpack.c.l.b16 %v7190
      %v7223 = vunpack.c.l.b16 %v7191
      %v7224 = vunpack.c.l.b16 %v7192
      %v7225 = vunpack.c.l.b16 %v7193
      %v7226 = vunpack.c.l.b16 %v7194
      %v7227 = vunpack.c.l.b16 %v7195
      %v7228 = vunpack.c.l.b16 %v7196
      %v7229 = vpack.c.b16 %v7214, %v7213
      %v7230 = vpack.c.b16 %v7216, %v7215
      %v7231 = vpack.c.b16 %v7218, %v7217
      %v7232 = vpack.c.b16 %v7220, %v7219
      %v7233 = vpack.c.b16 %v7222, %v7221
      %v7234 = vpack.c.b16 %v7224, %v7223
      %v7235 = vpack.c.b16 %v7226, %v7225
      %v7236 = vpack.c.b16 %v7228, %v7227
      %7245 = vmatprep.subr.bf16.mxu0 0
      %7246 = vmatpush1.bf16.msra.mxu0 %v7236
      %7247 = vmatprep.subr.bf16.mxu0 0
      %7248 = vmatpush1.bf16.msra.mxu0 %v7235
      %7249 = vmatprep.subr.bf16.mxu0 0
      %7250 = vmatpush1.bf16.msra.mxu0 %v7234
      %7251 = vmatprep.subr.bf16.mxu0 0
      %7252 = vmatpush1.bf16.msra.mxu0 %v7233
      %7253 = vmatprep.subr.bf16.mxu0 0
      %7254 = vmatpush1.bf16.msra.mxu0 %v7232
      %7255 = vmatprep.subr.bf16.mxu0 0
      %7256 = vmatpush1.bf16.msra.mxu0 %v7231
      %7257 = vmatprep.subr.bf16.mxu0 0
      %7258 = vmatpush1.bf16.msra.mxu0 %v7230
      %7259 = vmatprep.subr.bf16.mxu0 0
      %7260 = vmatpush1.bf16.msra.mxu0 %v7229
      %7261 = vmatprep.subr.bf16.mxu0 0
      %7262 = vmatpush2.bf16.msra.mxu0 0
      %7263 = vmatprep.subr.bf16.mxu0 0
      %7264 = vmatpush2.bf16.msra.mxu0 0
      %7265 = vmatprep.subr.bf16.mxu0 0
      %7266 = vmatpush2.bf16.msra.mxu0 0
      %7267 = vmatprep.subr.bf16.mxu0 0
      %7268 = vmatpush2.bf16.msra.mxu0 0
      %7269 = vmatprep.subr.bf16.mxu0 0
      %7270 = vmatpush2.bf16.msra.mxu0 0
      %7271 = vmatprep.subr.bf16.mxu0 0
      %7272 = vmatpush2.bf16.msra.mxu0 0
      %7273 = vmatprep.subr.bf16.mxu0 0
      %7274 = vmatpush2.bf16.msra.mxu0 0
      %7275 = vmatprep.subr.bf16.mxu0 0
      %7276 = vmatpush2.bf16.msra.mxu0 0
      %7277 = vmatprep.mubr.bf16.mxu0 0
      %7278 = vmatmul.mubr.bf16.gmra.mxu0 %v7176
      %v7279 = vpop.f32.mrf.mxu0
      %v7280 = vadd.f32 0.0, %v7279
      %v7281 = vpop.f32.mrf.mxu0
      %v7282 = vpop.f32.mrf.mxu0
      %v7283 = vadd.f32 0.0, %v7282
      %v7284 = vpop.f32.mrf.mxu0
      %7285 = vmatprep.mubr.bf16.mxu0 0
      %7286 = vmatmul.mubr.bf16.gmra.mxu0 %v7177
      %v7287 = vpop.f32.mrf.mxu0
      %v7288 = vadd.f32 0.0, %v7287
      %v7289 = vpop.f32.mrf.mxu0
      %v7290 = vpop.f32.mrf.mxu0
      %v7291 = vadd.f32 0.0, %v7290
      %v7292 = vpop.f32.mrf.mxu0
      %7293 = vmatprep.mubr.bf16.mxu0 0
      %7294 = vmatmul.mubr.bf16.gmra.mxu0 %v7178
      %v7295 = vpop.f32.mrf.mxu0
      %v7296 = vadd.f32 0.0, %v7295
      %v7297 = vpop.f32.mrf.mxu0
      %v7298 = vpop.f32.mrf.mxu0
      %v7299 = vadd.f32 0.0, %v7298
      %v7300 = vpop.f32.mrf.mxu0
      %7301 = vmatprep.mubr.bf16.mxu0 0
      %7302 = vmatmul.mubr.bf16.gmra.mxu0 %v7179
      %v7303 = vpop.f32.mrf.mxu0
      %v7304 = vadd.f32 0.0, %v7303
      %v7305 = vpop.f32.mrf.mxu0
      %v7306 = vpop.f32.mrf.mxu0
      %v7307 = vadd.f32 0.0, %v7306
      %v7308 = vpop.f32.mrf.mxu0
      %7309 = vdwg.mxu0
      %v7310 = vadd.f32 %v7160, %v7280
      %v7311 = vadd.f32 %v7161, %v7283
      %v7312 = vadd.f32 %v7162, %v7288
      %v7313 = vadd.f32 %v7163, %v7291
      %v7314 = vadd.f32 %v7164, %v7296
      %v7315 = vadd.f32 %v7165, %v7299
      %v7316 = vadd.f32 %v7166, %v7304
      %v7317 = vadd.f32 %v7167, %v7307
      %v7318 = vld [vmem:[%s7017 + $0x9] sm:$0xff]
      %v7319 = vld [vmem:[%s7017 + $0x21] sm:$0xff]
      %v7320 = vld [vmem:[%s7017 + $0x39] sm:$0xff]
      %v7321 = vld [vmem:[%s7017 + $0x51] sm:$0xff]
      %v7322 = vld [vmem:[%s7017 + $0x69] sm:$0xff]
      %v7323 = vld [vmem:[%s7017 + $0x81] sm:$0xff]
      %v7324 = vld [vmem:[%s7017 + $0x99] sm:$0xff]
      %v7325 = vld [vmem:[%s7017 + $0xb1] sm:$0xff]
      %v7326 = vpack.c.bf16 %v7319, %v7318
      %v7327 = vpack.c.bf16 %v7321, %v7320
      %v7328 = vpack.c.bf16 %v7323, %v7322
      %v7329 = vpack.c.bf16 %v7325, %v7324
      %s7330 = scalar_lea.vmem %s5, 512
      %v7331 = vld [vmem:[%s7330] sm:$0xf]
      %v7332 = vld [vmem:[%s7330 + $0x4] sm:$0xf]
      %v7333 = vld [vmem:[%s7330 + $0x8] sm:$0xf]
      %v7334 = vld [vmem:[%s7330 + $0xc] sm:$0xf]
      %v7335 = vld [vmem:[%s7330 + $0x10] sm:$0xf]
      %v7336 = vld [vmem:[%s7330 + $0x14] sm:$0xf]
      %v7337 = vld [vmem:[%s7330 + $0x18] sm:$0xf]
      %v7338 = vld [vmem:[%s7330 + $0x1c] sm:$0xf]
      %v7339 = vld [vmem:[%s7330 + $0x20] sm:$0xf]
      %v7340 = vld [vmem:[%s7330 + $0x24] sm:$0xf]
      %v7341 = vld [vmem:[%s7330 + $0x28] sm:$0xf]
      %v7342 = vld [vmem:[%s7330 + $0x2c] sm:$0xf]
      %v7343 = vld [vmem:[%s7330 + $0x30] sm:$0xf]
      %v7344 = vld [vmem:[%s7330 + $0x34] sm:$0xf]
      %v7345 = vld [vmem:[%s7330 + $0x38] sm:$0xf]
      %v7346 = vld [vmem:[%s7330 + $0x3c] sm:$0xf]
      %v7363 = vunpack.c.l.b16 %v7331
      %v7364 = vunpack.c.l.b16 %v7332
      %v7365 = vunpack.c.l.b16 %v7333
      %v7366 = vunpack.c.l.b16 %v7334
      %v7367 = vunpack.c.l.b16 %v7335
      %v7368 = vunpack.c.l.b16 %v7336
      %v7369 = vunpack.c.l.b16 %v7337
      %v7370 = vunpack.c.l.b16 %v7338
      %v7371 = vunpack.c.l.b16 %v7339
      %v7372 = vunpack.c.l.b16 %v7340
      %v7373 = vunpack.c.l.b16 %v7341
      %v7374 = vunpack.c.l.b16 %v7342
      %v7375 = vunpack.c.l.b16 %v7343
      %v7376 = vunpack.c.l.b16 %v7344
      %v7377 = vunpack.c.l.b16 %v7345
      %v7378 = vunpack.c.l.b16 %v7346
      %v7379 = vpack.c.b16 %v7364, %v7363
      %v7380 = vpack.c.b16 %v7366, %v7365
      %v7381 = vpack.c.b16 %v7368, %v7367
      %v7382 = vpack.c.b16 %v7370, %v7369
      %v7383 = vpack.c.b16 %v7372, %v7371
      %v7384 = vpack.c.b16 %v7374, %v7373
      %v7385 = vpack.c.b16 %v7376, %v7375
      %v7386 = vpack.c.b16 %v7378, %v7377
      %7395 = vmatprep.subr.bf16.mxu0 0
      %7396 = vmatpush1.bf16.msra.mxu0 %v7386
      %7397 = vmatprep.subr.bf16.mxu0 0
      %7398 = vmatpush1.bf16.msra.mxu0 %v7385
      %7399 = vmatprep.subr.bf16.mxu0 0
      %7400 = vmatpush1.bf16.msra.mxu0 %v7384
      %7401 = vmatprep.subr.bf16.mxu0 0
      %7402 = vmatpush1.bf16.msra.mxu0 %v7383
      %7403 = vmatprep.subr.bf16.mxu0 0
      %7404 = vmatpush1.bf16.msra.mxu0 %v7382
      %7405 = vmatprep.subr.bf16.mxu0 0
      %7406 = vmatpush1.bf16.msra.mxu0 %v7381
      %7407 = vmatprep.subr.bf16.mxu0 0
      %7408 = vmatpush1.bf16.msra.mxu0 %v7380
      %7409 = vmatprep.subr.bf16.mxu0 0
      %7410 = vmatpush1.bf16.msra.mxu0 %v7379
      %7411 = vmatprep.subr.bf16.mxu0 0
      %7412 = vmatpush2.bf16.msra.mxu0 0
      %7413 = vmatprep.subr.bf16.mxu0 0
      %7414 = vmatpush2.bf16.msra.mxu0 0
      %7415 = vmatprep.subr.bf16.mxu0 0
      %7416 = vmatpush2.bf16.msra.mxu0 0
      %7417 = vmatprep.subr.bf16.mxu0 0
      %7418 = vmatpush2.bf16.msra.mxu0 0
      %7419 = vmatprep.subr.bf16.mxu0 0
      %7420 = vmatpush2.bf16.msra.mxu0 0
      %7421 = vmatprep.subr.bf16.mxu0 0
      %7422 = vmatpush2.bf16.msra.mxu0 0
      %7423 = vmatprep.subr.bf16.mxu0 0
      %7424 = vmatpush2.bf16.msra.mxu0 0
      %7425 = vmatprep.subr.bf16.mxu0 0
      %7426 = vmatpush2.bf16.msra.mxu0 0
      %7427 = vmatprep.mubr.bf16.mxu0 0
      %7428 = vmatmul.mubr.bf16.gmra.mxu0 %v7326
      %v7429 = vpop.f32.mrf.mxu0
      %v7430 = vadd.f32 0.0, %v7429
      %v7431 = vpop.f32.mrf.mxu0
      %v7432 = vpop.f32.mrf.mxu0
      %v7433 = vadd.f32 0.0, %v7432
      %v7434 = vpop.f32.mrf.mxu0
      %7435 = vmatprep.mubr.bf16.mxu0 0
      %7436 = vmatmul.mubr.bf16.gmra.mxu0 %v7327
      %v7437 = vpop.f32.mrf.mxu0
      %v7438 = vadd.f32 0.0, %v7437
      %v7439 = vpop.f32.mrf.mxu0
      %v7440 = vpop.f32.mrf.mxu0
      %v7441 = vadd.f32 0.0, %v7440
      %v7442 = vpop.f32.mrf.mxu0
      %7443 = vmatprep.mubr.bf16.mxu0 0
      %7444 = vmatmul.mubr.bf16.gmra.mxu0 %v7328
      %v7445 = vpop.f32.mrf.mxu0
      %v7446 = vadd.f32 0.0, %v7445
      %v7447 = vpop.f32.mrf.mxu0
      %v7448 = vpop.f32.mrf.mxu0
      %v7449 = vadd.f32 0.0, %v7448
      %v7450 = vpop.f32.mrf.mxu0
      %7451 = vmatprep.mubr.bf16.mxu0 0
      %7452 = vmatmul.mubr.bf16.gmra.mxu0 %v7329
      %v7453 = vpop.f32.mrf.mxu0
      %v7454 = vadd.f32 0.0, %v7453
      %v7455 = vpop.f32.mrf.mxu0
      %v7456 = vpop.f32.mrf.mxu0
      %v7457 = vadd.f32 0.0, %v7456
      %v7458 = vpop.f32.mrf.mxu0
      %7459 = vdwg.mxu0
      %v7460 = vadd.f32 %v7310, %v7430
      %v7461 = vadd.f32 %v7311, %v7433
      %v7462 = vadd.f32 %v7312, %v7438
      %v7463 = vadd.f32 %v7313, %v7441
      %v7464 = vadd.f32 %v7314, %v7446
      %v7465 = vadd.f32 %v7315, %v7449
      %v7466 = vadd.f32 %v7316, %v7454
      %v7467 = vadd.f32 %v7317, %v7457
      %v7468 = vld [vmem:[%s6] sm:$0x1]
      %v7470 = vlaneseq
      %v7471 = vshrl.u32 %v7470, 7
      %v7472 = vsub.s32 0, %v7471
      %v7473 = vrot.slane %v7468, %v7472
      %v7475 = vadd.f32 %v7460, %v7473
      %v7476 = vadd.f32 %v7461, %v7473
      %v7477 = vadd.f32 %v7462, %v7473
      %v7478 = vadd.f32 %v7463, %v7473
      %v7479 = vadd.f32 %v7464, %v7473
      %v7480 = vadd.f32 %v7465, %v7473
      %v7481 = vadd.f32 %v7466, %v7473
      %v7482 = vadd.f32 %v7467, %v7473
      %v7483 = vadd.f32 %v6717, %v7475
      %v7484 = vadd.f32 %v6718, %v7476
      %v7485 = vadd.f32 %v6719, %v7477
      %v7486 = vadd.f32 %v6720, %v7478
      %v7487 = vadd.f32 %v6721, %v7479
      %v7488 = vadd.f32 %v6722, %v7480
      %v7489 = vadd.f32 %v6723, %v7481
      %v7490 = vadd.f32 %v6724, %v7482
      %7491 = vst [vmem:[%s6125 + $0x8] sm:$0xff] %v7483
      %7492 = vst [vmem:[%s6125 + $0x20] sm:$0xff] %v7484
      %7493 = vst [vmem:[%s6125 + $0x38] sm:$0xff] %v7485
      %7494 = vst [vmem:[%s6125 + $0x50] sm:$0xff] %v7486
      %7495 = vst [vmem:[%s6125 + $0x68] sm:$0xff] %v7487
      %7496 = vst [vmem:[%s6125 + $0x80] sm:$0xff] %v7488
      %7497 = vst [vmem:[%s6125 + $0x98] sm:$0xff] %v7489
      %7498 = vst [vmem:[%s6125 + $0xb0] sm:$0xff] %v7490
      %v7499 = vld [vmem:[#allocation4 + $0x7] sm:$0xff]
      %v7500 = vld [vmem:[#allocation4 + $0x1f] sm:$0xff]
      %v7501 = vld [vmem:[#allocation4 + $0x37] sm:$0xff]
      %v7502 = vld [vmem:[#allocation4 + $0x4f] sm:$0xff]
      %v7503 = vld [vmem:[#allocation4 + $0x67] sm:$0xff]
      %v7504 = vld [vmem:[#allocation4 + $0x7f] sm:$0xff]
      %v7505 = vld [vmem:[#allocation4 + $0x97] sm:$0xff]
      %v7506 = vld [vmem:[#allocation4 + $0xaf] sm:$0xff]
      %v7507 = vpack.c.bf16 %v7500, %v7499
      %v7508 = vpack.c.bf16 %v7502, %v7501
      %v7509 = vpack.c.bf16 %v7504, %v7503
      %v7510 = vpack.c.bf16 %v7506, %v7505
      %v7511 = vld [vmem:[%s7] sm:$0xf]
      %v7512 = vld [vmem:[%s7 + $0x4] sm:$0xf]
      %v7513 = vld [vmem:[%s7 + $0x8] sm:$0xf]
      %v7514 = vld [vmem:[%s7 + $0xc] sm:$0xf]
      %v7515 = vld [vmem:[%s7 + $0x10] sm:$0xf]
      %v7516 = vld [vmem:[%s7 + $0x14] sm:$0xf]
      %v7517 = vld [vmem:[%s7 + $0x18] sm:$0xf]
      %v7518 = vld [vmem:[%s7 + $0x1c] sm:$0xf]
      %v7519 = vld [vmem:[%s7 + $0x20] sm:$0xf]
      %v7520 = vld [vmem:[%s7 + $0x24] sm:$0xf]
      %v7521 = vld [vmem:[%s7 + $0x28] sm:$0xf]
      %v7522 = vld [vmem:[%s7 + $0x2c] sm:$0xf]
      %v7523 = vld [vmem:[%s7 + $0x30] sm:$0xf]
      %v7524 = vld [vmem:[%s7 + $0x34] sm:$0xf]
      %v7525 = vld [vmem:[%s7 + $0x38] sm:$0xf]
      %v7526 = vld [vmem:[%s7 + $0x3c] sm:$0xf]
      %v7527 = vld [vmem:[#allocation4 + $0x8] sm:$0xff]
      %v7528 = vld [vmem:[#allocation4 + $0x20] sm:$0xff]
      %v7529 = vld [vmem:[#allocation4 + $0x38] sm:$0xff]
      %v7530 = vld [vmem:[#allocation4 + $0x50] sm:$0xff]
      %v7531 = vld [vmem:[#allocation4 + $0x68] sm:$0xff]
      %v7532 = vld [vmem:[#allocation4 + $0x80] sm:$0xff]
      %v7533 = vld [vmem:[#allocation4 + $0x98] sm:$0xff]
      %v7534 = vld [vmem:[#allocation4 + $0xb0] sm:$0xff]
      %v7535 = vpack.c.bf16 %v7528, %v7527
      %v7536 = vpack.c.bf16 %v7530, %v7529
      %v7537 = vpack.c.bf16 %v7532, %v7531
      %v7538 = vpack.c.bf16 %v7534, %v7533
      %s7539 = scalar_lea.vmem %s7, 64
      %v7540 = vld [vmem:[%s7539] sm:$0xf]
      %v7541 = vld [vmem:[%s7539 + $0x4] sm:$0xf]
      %v7542 = vld [vmem:[%s7539 + $0x8] sm:$0xf]
      %v7543 = vld [vmem:[%s7539 + $0xc] sm:$0xf]
      %v7544 = vld [vmem:[%s7539 + $0x10] sm:$0xf]
      %v7545 = vld [vmem:[%s7539 + $0x14] sm:$0xf]
      %v7546 = vld [vmem:[%s7539 + $0x18] sm:$0xf]
      %v7547 = vld [vmem:[%s7539 + $0x1c] sm:$0xf]
      %v7548 = vld [vmem:[%s7539 + $0x20] sm:$0xf]
      %v7549 = vld [vmem:[%s7539 + $0x24] sm:$0xf]
      %v7550 = vld [vmem:[%s7539 + $0x28] sm:$0xf]
      %v7551 = vld [vmem:[%s7539 + $0x2c] sm:$0xf]
      %v7552 = vld [vmem:[%s7539 + $0x30] sm:$0xf]
      %v7553 = vld [vmem:[%s7539 + $0x34] sm:$0xf]
      %v7554 = vld [vmem:[%s7539 + $0x38] sm:$0xf]
      %v7555 = vld [vmem:[%s7539 + $0x3c] sm:$0xf]
      %v7572 = vunpack.c.l.b16 %v7540
      %v7573 = vunpack.c.l.b16 %v7541
      %v7574 = vunpack.c.l.b16 %v7542
      %v7575 = vunpack.c.l.b16 %v7543
      %v7576 = vunpack.c.l.b16 %v7544
      %v7577 = vunpack.c.l.b16 %v7545
      %v7578 = vunpack.c.l.b16 %v7546
      %v7579 = vunpack.c.l.b16 %v7547
      %v7580 = vunpack.c.l.b16 %v7548
      %v7581 = vunpack.c.l.b16 %v7549
      %v7582 = vunpack.c.l.b16 %v7550
      %v7583 = vunpack.c.l.b16 %v7551
      %v7584 = vunpack.c.l.b16 %v7552
      %v7585 = vunpack.c.l.b16 %v7553
      %v7586 = vunpack.c.l.b16 %v7554
      %v7587 = vunpack.c.l.b16 %v7555
      %v7588 = vpack.c.b16 %v7573, %v7572
      %v7589 = vpack.c.b16 %v7575, %v7574
      %v7590 = vpack.c.b16 %v7577, %v7576
      %v7591 = vpack.c.b16 %v7579, %v7578
      %v7592 = vpack.c.b16 %v7581, %v7580
      %v7593 = vpack.c.b16 %v7583, %v7582
      %v7594 = vpack.c.b16 %v7585, %v7584
      %v7595 = vpack.c.b16 %v7587, %v7586
      %7604 = vmatprep.subr.bf16.mxu0 0
      %7605 = vmatpush1.bf16.msra.mxu0 %v7595
      %7606 = vmatprep.subr.bf16.mxu0 0
      %7607 = vmatpush1.bf16.msra.mxu0 %v7594
      %7608 = vmatprep.subr.bf16.mxu0 0
      %7609 = vmatpush1.bf16.msra.mxu0 %v7593
      %7610 = vmatprep.subr.bf16.mxu0 0
      %7611 = vmatpush1.bf16.msra.mxu0 %v7592
      %7612 = vmatprep.subr.bf16.mxu0 0
      %7613 = vmatpush1.bf16.msra.mxu0 %v7591
      %7614 = vmatprep.subr.bf16.mxu0 0
      %7615 = vmatpush1.bf16.msra.mxu0 %v7590
      %7616 = vmatprep.subr.bf16.mxu0 0
      %7617 = vmatpush1.bf16.msra.mxu0 %v7589
      %7618 = vmatprep.subr.bf16.mxu0 0
      %7619 = vmatpush1.bf16.msra.mxu0 %v7588
      %7620 = vmatprep.subr.bf16.mxu0 0
      %7621 = vmatpush2.bf16.msra.mxu0 0
      %7622 = vmatprep.subr.bf16.mxu0 0
      %7623 = vmatpush2.bf16.msra.mxu0 0
      %7624 = vmatprep.subr.bf16.mxu0 0
      %7625 = vmatpush2.bf16.msra.mxu0 0
      %7626 = vmatprep.subr.bf16.mxu0 0
      %7627 = vmatpush2.bf16.msra.mxu0 0
      %7628 = vmatprep.subr.bf16.mxu0 0
      %7629 = vmatpush2.bf16.msra.mxu0 0
      %7630 = vmatprep.subr.bf16.mxu0 0
      %7631 = vmatpush2.bf16.msra.mxu0 0
      %7632 = vmatprep.subr.bf16.mxu0 0
      %7633 = vmatpush2.bf16.msra.mxu0 0
      %7634 = vmatprep.subr.bf16.mxu0 0
      %7635 = vmatpush2.bf16.msra.mxu0 0
      %7636 = vmatprep.mubr.bf16.mxu0 0
      %7637 = vmatmul.mubr.bf16.gmra.mxu0 %v7535
      %v7638 = vpop.f32.mrf.mxu0
      %v7639 = vadd.f32 0.0, %v7638
      %v7640 = vpop.f32.mrf.mxu0
      %v7641 = vpop.f32.mrf.mxu0
      %v7642 = vadd.f32 0.0, %v7641
      %v7643 = vpop.f32.mrf.mxu0
      %7644 = vmatprep.mubr.bf16.mxu0 0
      %7645 = vmatmul.mubr.bf16.gmra.mxu0 %v7536
      %v7646 = vpop.f32.mrf.mxu0
      %v7647 = vadd.f32 0.0, %v7646
      %v7648 = vpop.f32.mrf.mxu0
      %v7649 = vpop.f32.mrf.mxu0
      %v7650 = vadd.f32 0.0, %v7649
      %v7651 = vpop.f32.mrf.mxu0
      %7652 = vmatprep.mubr.bf16.mxu0 0
      %7653 = vmatmul.mubr.bf16.gmra.mxu0 %v7537
      %v7654 = vpop.f32.mrf.mxu0
      %v7655 = vadd.f32 0.0, %v7654
      %v7656 = vpop.f32.mrf.mxu0
      %v7657 = vpop.f32.mrf.mxu0
      %v7658 = vadd.f32 0.0, %v7657
      %v7659 = vpop.f32.mrf.mxu0
      %7660 = vmatprep.mubr.bf16.mxu0 0
      %7661 = vmatmul.mubr.bf16.gmra.mxu0 %v7538
      %v7662 = vpop.f32.mrf.mxu0
      %v7663 = vadd.f32 0.0, %v7662
      %v7664 = vpop.f32.mrf.mxu0
      %v7665 = vpop.f32.mrf.mxu0
      %v7666 = vadd.f32 0.0, %v7665
      %v7667 = vpop.f32.mrf.mxu0
      %7668 = vdwg.mxu0
      %v7685 = vunpack.c.l.b16 %v7511
      %v7686 = vunpack.c.l.b16 %v7512
      %v7687 = vunpack.c.l.b16 %v7513
      %v7688 = vunpack.c.l.b16 %v7514
      %v7689 = vunpack.c.l.b16 %v7515
      %v7690 = vunpack.c.l.b16 %v7516
      %v7691 = vunpack.c.l.b16 %v7517
      %v7692 = vunpack.c.l.b16 %v7518
      %v7693 = vunpack.c.l.b16 %v7519
      %v7694 = vunpack.c.l.b16 %v7520
      %v7695 = vunpack.c.l.b16 %v7521
      %v7696 = vunpack.c.l.b16 %v7522
      %v7697 = vunpack.c.l.b16 %v7523
      %v7698 = vunpack.c.l.b16 %v7524
      %v7699 = vunpack.c.l.b16 %v7525
      %v7700 = vunpack.c.l.b16 %v7526
      %v7701 = vpack.c.b16 %v7686, %v7685
      %v7702 = vpack.c.b16 %v7688, %v7687
      %v7703 = vpack.c.b16 %v7690, %v7689
      %v7704 = vpack.c.b16 %v7692, %v7691
      %v7705 = vpack.c.b16 %v7694, %v7693
      %v7706 = vpack.c.b16 %v7696, %v7695
      %v7707 = vpack.c.b16 %v7698, %v7697
      %v7708 = vpack.c.b16 %v7700, %v7699
      %7717 = vmatprep.subr.bf16.mxu0 0
      %7718 = vmatpush1.bf16.msra.mxu0 %v7708
      %7719 = vmatprep.subr.bf16.mxu0 0
      %7720 = vmatpush1.bf16.msra.mxu0 %v7707
      %7721 = vmatprep.subr.bf16.mxu0 0
      %7722 = vmatpush1.bf16.msra.mxu0 %v7706
      %7723 = vmatprep.subr.bf16.mxu0 0
      %7724 = vmatpush1.bf16.msra.mxu0 %v7705
      %7725 = vmatprep.subr.bf16.mxu0 0
      %7726 = vmatpush1.bf16.msra.mxu0 %v7704
      %7727 = vmatprep.subr.bf16.mxu0 0
      %7728 = vmatpush1.bf16.msra.mxu0 %v7703
      %7729 = vmatprep.subr.bf16.mxu0 0
      %7730 = vmatpush1.bf16.msra.mxu0 %v7702
      %7731 = vmatprep.subr.bf16.mxu0 0
      %7732 = vmatpush1.bf16.msra.mxu0 %v7701
      %7733 = vmatprep.subr.bf16.mxu0 0
      %7734 = vmatpush2.bf16.msra.mxu0 0
      %7735 = vmatprep.subr.bf16.mxu0 0
      %7736 = vmatpush2.bf16.msra.mxu0 0
      %7737 = vmatprep.subr.bf16.mxu0 0
      %7738 = vmatpush2.bf16.msra.mxu0 0
      %7739 = vmatprep.subr.bf16.mxu0 0
      %7740 = vmatpush2.bf16.msra.mxu0 0
      %7741 = vmatprep.subr.bf16.mxu0 0
      %7742 = vmatpush2.bf16.msra.mxu0 0
      %7743 = vmatprep.subr.bf16.mxu0 0
      %7744 = vmatpush2.bf16.msra.mxu0 0
      %7745 = vmatprep.subr.bf16.mxu0 0
      %7746 = vmatpush2.bf16.msra.mxu0 0
      %7747 = vmatprep.subr.bf16.mxu0 0
      %7748 = vmatpush2.bf16.msra.mxu0 0
      %7749 = vmatprep.mubr.bf16.mxu0 0
      %7750 = vmatmul.mubr.bf16.gmra.mxu0 %v7507
      %v7751 = vpop.f32.mrf.mxu0
      %v7752 = vadd.f32 %v7639, %v7751
      %v7753 = vpop.f32.mrf.mxu0
      %v7754 = vpop.f32.mrf.mxu0
      %v7755 = vadd.f32 %v7642, %v7754
      %v7756 = vpop.f32.mrf.mxu0
      %7757 = vmatprep.mubr.bf16.mxu0 0
      %7758 = vmatmul.mubr.bf16.gmra.mxu0 %v7508
      %v7759 = vpop.f32.mrf.mxu0
      %v7760 = vadd.f32 %v7647, %v7759
      %v7761 = vpop.f32.mrf.mxu0
      %v7762 = vpop.f32.mrf.mxu0
      %v7763 = vadd.f32 %v7650, %v7762
      %v7764 = vpop.f32.mrf.mxu0
      %7765 = vmatprep.mubr.bf16.mxu0 0
      %7766 = vmatmul.mubr.bf16.gmra.mxu0 %v7509
      %v7767 = vpop.f32.mrf.mxu0
      %v7768 = vadd.f32 %v7655, %v7767
      %v7769 = vpop.f32.mrf.mxu0
      %v7770 = vpop.f32.mrf.mxu0
      %v7771 = vadd.f32 %v7658, %v7770
      %v7772 = vpop.f32.mrf.mxu0
      %7773 = vmatprep.mubr.bf16.mxu0 0
      %7774 = vmatmul.mubr.bf16.gmra.mxu0 %v7510
      %v7775 = vpop.f32.mrf.mxu0
      %v7776 = vadd.f32 %v7663, %v7775
      %v7777 = vpop.f32.mrf.mxu0
      %v7778 = vpop.f32.mrf.mxu0
      %v7779 = vadd.f32 %v7666, %v7778
      %v7780 = vpop.f32.mrf.mxu0
      %7781 = vdwg.mxu0
      %v7782 = vld [vmem:[#allocation4 + $0x9] sm:$0xff]
      %v7783 = vld [vmem:[#allocation4 + $0x21] sm:$0xff]
      %v7784 = vld [vmem:[#allocation4 + $0x39] sm:$0xff]
      %v7785 = vld [vmem:[#allocation4 + $0x51] sm:$0xff]
      %v7786 = vld [vmem:[#allocation4 + $0x69] sm:$0xff]
      %v7787 = vld [vmem:[#allocation4 + $0x81] sm:$0xff]
      %v7788 = vld [vmem:[#allocation4 + $0x99] sm:$0xff]
      %v7789 = vld [vmem:[#allocation4 + $0xb1] sm:$0xff]
      %v7790 = vpack.c.bf16 %v7783, %v7782
      %v7791 = vpack.c.bf16 %v7785, %v7784
      %v7792 = vpack.c.bf16 %v7787, %v7786
      %v7793 = vpack.c.bf16 %v7789, %v7788
      %s7794 = scalar_lea.vmem %s7, 128
      %v7795 = vld [vmem:[%s7794] sm:$0xf]
      %v7796 = vld [vmem:[%s7794 + $0x4] sm:$0xf]
      %v7797 = vld [vmem:[%s7794 + $0x8] sm:$0xf]
      %v7798 = vld [vmem:[%s7794 + $0xc] sm:$0xf]
      %v7799 = vld [vmem:[%s7794 + $0x10] sm:$0xf]
      %v7800 = vld [vmem:[%s7794 + $0x14] sm:$0xf]
      %v7801 = vld [vmem:[%s7794 + $0x18] sm:$0xf]
      %v7802 = vld [vmem:[%s7794 + $0x1c] sm:$0xf]
      %v7803 = vld [vmem:[%s7794 + $0x20] sm:$0xf]
      %v7804 = vld [vmem:[%s7794 + $0x24] sm:$0xf]
      %v7805 = vld [vmem:[%s7794 + $0x28] sm:$0xf]
      %v7806 = vld [vmem:[%s7794 + $0x2c] sm:$0xf]
      %v7807 = vld [vmem:[%s7794 + $0x30] sm:$0xf]
      %v7808 = vld [vmem:[%s7794 + $0x34] sm:$0xf]
      %v7809 = vld [vmem:[%s7794 + $0x38] sm:$0xf]
      %v7810 = vld [vmem:[%s7794 + $0x3c] sm:$0xf]
      %v7827 = vunpack.c.l.b16 %v7795
      %v7828 = vunpack.c.l.b16 %v7796
      %v7829 = vunpack.c.l.b16 %v7797
      %v7830 = vunpack.c.l.b16 %v7798
      %v7831 = vunpack.c.l.b16 %v7799
      %v7832 = vunpack.c.l.b16 %v7800
      %v7833 = vunpack.c.l.b16 %v7801
      %v7834 = vunpack.c.l.b16 %v7802
      %v7835 = vunpack.c.l.b16 %v7803
      %v7836 = vunpack.c.l.b16 %v7804
      %v7837 = vunpack.c.l.b16 %v7805
      %v7838 = vunpack.c.l.b16 %v7806
      %v7839 = vunpack.c.l.b16 %v7807
      %v7840 = vunpack.c.l.b16 %v7808
      %v7841 = vunpack.c.l.b16 %v7809
      %v7842 = vunpack.c.l.b16 %v7810
      %v7843 = vpack.c.b16 %v7828, %v7827
      %v7844 = vpack.c.b16 %v7830, %v7829
      %v7845 = vpack.c.b16 %v7832, %v7831
      %v7846 = vpack.c.b16 %v7834, %v7833
      %v7847 = vpack.c.b16 %v7836, %v7835
      %v7848 = vpack.c.b16 %v7838, %v7837
      %v7849 = vpack.c.b16 %v7840, %v7839
      %v7850 = vpack.c.b16 %v7842, %v7841
      %7859 = vmatprep.subr.bf16.mxu0 0
      %7860 = vmatpush1.bf16.msra.mxu0 %v7850
      %7861 = vmatprep.subr.bf16.mxu0 0
      %7862 = vmatpush1.bf16.msra.mxu0 %v7849
      %7863 = vmatprep.subr.bf16.mxu0 0
      %7864 = vmatpush1.bf16.msra.mxu0 %v7848
      %7865 = vmatprep.subr.bf16.mxu0 0
      %7866 = vmatpush1.bf16.msra.mxu0 %v7847
      %7867 = vmatprep.subr.bf16.mxu0 0
      %7868 = vmatpush1.bf16.msra.mxu0 %v7846
      %7869 = vmatprep.subr.bf16.mxu0 0
      %7870 = vmatpush1.bf16.msra.mxu0 %v7845
      %7871 = vmatprep.subr.bf16.mxu0 0
      %7872 = vmatpush1.bf16.msra.mxu0 %v7844
      %7873 = vmatprep.subr.bf16.mxu0 0
      %7874 = vmatpush1.bf16.msra.mxu0 %v7843
      %7875 = vmatprep.subr.bf16.mxu0 0
      %7876 = vmatpush2.bf16.msra.mxu0 0
      %7877 = vmatprep.subr.bf16.mxu0 0
      %7878 = vmatpush2.bf16.msra.mxu0 0
      %7879 = vmatprep.subr.bf16.mxu0 0
      %7880 = vmatpush2.bf16.msra.mxu0 0
      %7881 = vmatprep.subr.bf16.mxu0 0
      %7882 = vmatpush2.bf16.msra.mxu0 0
      %7883 = vmatprep.subr.bf16.mxu0 0
      %7884 = vmatpush2.bf16.msra.mxu0 0
      %7885 = vmatprep.subr.bf16.mxu0 0
      %7886 = vmatpush2.bf16.msra.mxu0 0
      %7887 = vmatprep.subr.bf16.mxu0 0
      %7888 = vmatpush2.bf16.msra.mxu0 0
      %7889 = vmatprep.subr.bf16.mxu0 0
      %7890 = vmatpush2.bf16.msra.mxu0 0
      %7891 = vmatprep.mubr.bf16.mxu0 0
      %7892 = vmatmul.mubr.bf16.gmra.mxu0 %v7790
      %v7893 = vpop.f32.mrf.mxu0
      %v7894 = vadd.f32 0.0, %v7893
      %v7895 = vpop.f32.mrf.mxu0
      %v7896 = vpop.f32.mrf.mxu0
      %v7897 = vadd.f32 0.0, %v7896
      %v7898 = vpop.f32.mrf.mxu0
      %7899 = vmatprep.mubr.bf16.mxu0 0
      %7900 = vmatmul.mubr.bf16.gmra.mxu0 %v7791
      %v7901 = vpop.f32.mrf.mxu0
      %v7902 = vadd.f32 0.0, %v7901
      %v7903 = vpop.f32.mrf.mxu0
      %v7904 = vpop.f32.mrf.mxu0
      %v7905 = vadd.f32 0.0, %v7904
      %v7906 = vpop.f32.mrf.mxu0
      %7907 = vmatprep.mubr.bf16.mxu0 0
      %7908 = vmatmul.mubr.bf16.gmra.mxu0 %v7792
      %v7909 = vpop.f32.mrf.mxu0
      %v7910 = vadd.f32 0.0, %v7909
      %v7911 = vpop.f32.mrf.mxu0
      %v7912 = vpop.f32.mrf.mxu0
      %v7913 = vadd.f32 0.0, %v7912
      %v7914 = vpop.f32.mrf.mxu0
      %7915 = vmatprep.mubr.bf16.mxu0 0
      %7916 = vmatmul.mubr.bf16.gmra.mxu0 %v7793
      %v7917 = vpop.f32.mrf.mxu0
      %v7918 = vadd.f32 0.0, %v7917
      %v7919 = vpop.f32.mrf.mxu0
      %v7920 = vpop.f32.mrf.mxu0
      %v7921 = vadd.f32 0.0, %v7920
      %v7922 = vpop.f32.mrf.mxu0
      %7923 = vdwg.mxu0
      %v7924 = vadd.f32 %v7752, %v7894
      %v7925 = vadd.f32 %v7755, %v7897
      %v7926 = vadd.f32 %v7760, %v7902
      %v7927 = vadd.f32 %v7763, %v7905
      %v7928 = vadd.f32 %v7768, %v7910
      %v7929 = vadd.f32 %v7771, %v7913
      %v7930 = vadd.f32 %v7776, %v7918
      %v7931 = vadd.f32 %v7779, %v7921
      %v7932 = vld [vmem:[%s6125 + $0x7] sm:$0xff]
      %v7933 = vld [vmem:[%s6125 + $0x1f] sm:$0xff]
      %v7934 = vld [vmem:[%s6125 + $0x37] sm:$0xff]
      %v7935 = vld [vmem:[%s6125 + $0x4f] sm:$0xff]
      %v7936 = vld [vmem:[%s6125 + $0x67] sm:$0xff]
      %v7937 = vld [vmem:[%s6125 + $0x7f] sm:$0xff]
      %v7938 = vld [vmem:[%s6125 + $0x97] sm:$0xff]
      %v7939 = vld [vmem:[%s6125 + $0xaf] sm:$0xff]
      %v7940 = vpack.c.bf16 %v7933, %v7932
      %v7941 = vpack.c.bf16 %v7935, %v7934
      %v7942 = vpack.c.bf16 %v7937, %v7936
      %v7943 = vpack.c.bf16 %v7939, %v7938
      %s7944 = scalar_lea.vmem %s7, 192
      %v7945 = vld [vmem:[%s7944] sm:$0xf]
      %v7946 = vld [vmem:[%s7944 + $0x4] sm:$0xf]
      %v7947 = vld [vmem:[%s7944 + $0x8] sm:$0xf]
      %v7948 = vld [vmem:[%s7944 + $0xc] sm:$0xf]
      %v7949 = vld [vmem:[%s7944 + $0x10] sm:$0xf]
      %v7950 = vld [vmem:[%s7944 + $0x14] sm:$0xf]
      %v7951 = vld [vmem:[%s7944 + $0x18] sm:$0xf]
      %v7952 = vld [vmem:[%s7944 + $0x1c] sm:$0xf]
      %v7953 = vld [vmem:[%s7944 + $0x20] sm:$0xf]
      %v7954 = vld [vmem:[%s7944 + $0x24] sm:$0xf]
      %v7955 = vld [vmem:[%s7944 + $0x28] sm:$0xf]
      %v7956 = vld [vmem:[%s7944 + $0x2c] sm:$0xf]
      %v7957 = vld [vmem:[%s7944 + $0x30] sm:$0xf]
      %v7958 = vld [vmem:[%s7944 + $0x34] sm:$0xf]
      %v7959 = vld [vmem:[%s7944 + $0x38] sm:$0xf]
      %v7960 = vld [vmem:[%s7944 + $0x3c] sm:$0xf]
      %v7977 = vunpack.c.l.b16 %v7945
      %v7978 = vunpack.c.l.b16 %v7946
      %v7979 = vunpack.c.l.b16 %v7947
      %v7980 = vunpack.c.l.b16 %v7948
      %v7981 = vunpack.c.l.b16 %v7949
      %v7982 = vunpack.c.l.b16 %v7950
      %v7983 = vunpack.c.l.b16 %v7951
      %v7984 = vunpack.c.l.b16 %v7952
      %v7985 = vunpack.c.l.b16 %v7953
      %v7986 = vunpack.c.l.b16 %v7954
      %v7987 = vunpack.c.l.b16 %v7955
      %v7988 = vunpack.c.l.b16 %v7956
      %v7989 = vunpack.c.l.b16 %v7957
      %v7990 = vunpack.c.l.b16 %v7958
      %v7991 = vunpack.c.l.b16 %v7959
      %v7992 = vunpack.c.l.b16 %v7960
      %v7993 = vpack.c.b16 %v7978, %v7977
      %v7994 = vpack.c.b16 %v7980, %v7979
      %v7995 = vpack.c.b16 %v7982, %v7981
      %v7996 = vpack.c.b16 %v7984, %v7983
      %v7997 = vpack.c.b16 %v7986, %v7985
      %v7998 = vpack.c.b16 %v7988, %v7987
      %v7999 = vpack.c.b16 %v7990, %v7989
      %v8000 = vpack.c.b16 %v7992, %v7991
      %8009 = vmatprep.subr.bf16.mxu0 0
      %8010 = vmatpush1.bf16.msra.mxu0 %v8000
      %8011 = vmatprep.subr.bf16.mxu0 0
      %8012 = vmatpush1.bf16.msra.mxu0 %v7999
      %8013 = vmatprep.subr.bf16.mxu0 0
      %8014 = vmatpush1.bf16.msra.mxu0 %v7998
      %8015 = vmatprep.subr.bf16.mxu0 0
      %8016 = vmatpush1.bf16.msra.mxu0 %v7997
      %8017 = vmatprep.subr.bf16.mxu0 0
      %8018 = vmatpush1.bf16.msra.mxu0 %v7996
      %8019 = vmatprep.subr.bf16.mxu0 0
      %8020 = vmatpush1.bf16.msra.mxu0 %v7995
      %8021 = vmatprep.subr.bf16.mxu0 0
      %8022 = vmatpush1.bf16.msra.mxu0 %v7994
      %8023 = vmatprep.subr.bf16.mxu0 0
      %8024 = vmatpush1.bf16.msra.mxu0 %v7993
      %8025 = vmatprep.subr.bf16.mxu0 0
      %8026 = vmatpush2.bf16.msra.mxu0 0
      %8027 = vmatprep.subr.bf16.mxu0 0
      %8028 = vmatpush2.bf16.msra.mxu0 0
      %8029 = vmatprep.subr.bf16.mxu0 0
      %8030 = vmatpush2.bf16.msra.mxu0 0
      %8031 = vmatprep.subr.bf16.mxu0 0
      %8032 = vmatpush2.bf16.msra.mxu0 0
      %8033 = vmatprep.subr.bf16.mxu0 0
      %8034 = vmatpush2.bf16.msra.mxu0 0
      %8035 = vmatprep.subr.bf16.mxu0 0
      %8036 = vmatpush2.bf16.msra.mxu0 0
      %8037 = vmatprep.subr.bf16.mxu0 0
      %8038 = vmatpush2.bf16.msra.mxu0 0
      %8039 = vmatprep.subr.bf16.mxu0 0
      %8040 = vmatpush2.bf16.msra.mxu0 0
      %8041 = vmatprep.mubr.bf16.mxu0 0
      %8042 = vmatmul.mubr.bf16.gmra.mxu0 %v7940
      %v8043 = vpop.f32.mrf.mxu0
      %v8044 = vadd.f32 0.0, %v8043
      %v8045 = vpop.f32.mrf.mxu0
      %v8046 = vpop.f32.mrf.mxu0
      %v8047 = vadd.f32 0.0, %v8046
      %v8048 = vpop.f32.mrf.mxu0
      %8049 = vmatprep.mubr.bf16.mxu0 0
      %8050 = vmatmul.mubr.bf16.gmra.mxu0 %v7941
      %v8051 = vpop.f32.mrf.mxu0
      %v8052 = vadd.f32 0.0, %v8051
      %v8053 = vpop.f32.mrf.mxu0
      %v8054 = vpop.f32.mrf.mxu0
      %v8055 = vadd.f32 0.0, %v8054
      %v8056 = vpop.f32.mrf.mxu0
      %8057 = vmatprep.mubr.bf16.mxu0 0
      %8058 = vmatmul.mubr.bf16.gmra.mxu0 %v7942
      %v8059 = vpop.f32.mrf.mxu0
      %v8060 = vadd.f32 0.0, %v8059
      %v8061 = vpop.f32.mrf.mxu0
      %v8062 = vpop.f32.mrf.mxu0
      %v8063 = vadd.f32 0.0, %v8062
      %v8064 = vpop.f32.mrf.mxu0
      %8065 = vmatprep.mubr.bf16.mxu0 0
      %8066 = vmatmul.mubr.bf16.gmra.mxu0 %v7943
      %v8067 = vpop.f32.mrf.mxu0
      %v8068 = vadd.f32 0.0, %v8067
      %v8069 = vpop.f32.mrf.mxu0
      %v8070 = vpop.f32.mrf.mxu0
      %v8071 = vadd.f32 0.0, %v8070
      %v8072 = vpop.f32.mrf.mxu0
      %8073 = vdwg.mxu0
      %v8074 = vadd.f32 %v7924, %v8044
      %v8075 = vadd.f32 %v7925, %v8047
      %v8076 = vadd.f32 %v7926, %v8052
      %v8077 = vadd.f32 %v7927, %v8055
      %v8078 = vadd.f32 %v7928, %v8060
      %v8079 = vadd.f32 %v7929, %v8063
      %v8080 = vadd.f32 %v7930, %v8068
      %v8081 = vadd.f32 %v7931, %v8071
      %v8082 = vld [vmem:[%s6125 + $0x8] sm:$0xff]
      %v8083 = vld [vmem:[%s6125 + $0x20] sm:$0xff]
      %v8084 = vld [vmem:[%s6125 + $0x38] sm:$0xff]
      %v8085 = vld [vmem:[%s6125 + $0x50] sm:$0xff]
      %v8086 = vld [vmem:[%s6125 + $0x68] sm:$0xff]
      %v8087 = vld [vmem:[%s6125 + $0x80] sm:$0xff]
      %v8088 = vld [vmem:[%s6125 + $0x98] sm:$0xff]
      %v8089 = vld [vmem:[%s6125 + $0xb0] sm:$0xff]
      %v8090 = vpack.c.bf16 %v8083, %v8082
      %v8091 = vpack.c.bf16 %v8085, %v8084
      %v8092 = vpack.c.bf16 %v8087, %v8086
      %v8093 = vpack.c.bf16 %v8089, %v8088
      %s8094 = scalar_lea.vmem %s7, 256
      %v8095 = vld [vmem:[%s8094] sm:$0xf]
      %v8096 = vld [vmem:[%s8094 + $0x4] sm:$0xf]
      %v8097 = vld [vmem:[%s8094 + $0x8] sm:$0xf]
      %v8098 = vld [vmem:[%s8094 + $0xc] sm:$0xf]
      %v8099 = vld [vmem:[%s8094 + $0x10] sm:$0xf]
      %v8100 = vld [vmem:[%s8094 + $0x14] sm:$0xf]
      %v8101 = vld [vmem:[%s8094 + $0x18] sm:$0xf]
      %v8102 = vld [vmem:[%s8094 + $0x1c] sm:$0xf]
      %v8103 = vld [vmem:[%s8094 + $0x20] sm:$0xf]
      %v8104 = vld [vmem:[%s8094 + $0x24] sm:$0xf]
      %v8105 = vld [vmem:[%s8094 + $0x28] sm:$0xf]
      %v8106 = vld [vmem:[%s8094 + $0x2c] sm:$0xf]
      %v8107 = vld [vmem:[%s8094 + $0x30] sm:$0xf]
      %v8108 = vld [vmem:[%s8094 + $0x34] sm:$0xf]
      %v8109 = vld [vmem:[%s8094 + $0x38] sm:$0xf]
      %v8110 = vld [vmem:[%s8094 + $0x3c] sm:$0xf]
      %v8127 = vunpack.c.l.b16 %v8095
      %v8128 = vunpack.c.l.b16 %v8096
      %v8129 = vunpack.c.l.b16 %v8097
      %v8130 = vunpack.c.l.b16 %v8098
      %v8131 = vunpack.c.l.b16 %v8099
      %v8132 = vunpack.c.l.b16 %v8100
      %v8133 = vunpack.c.l.b16 %v8101
      %v8134 = vunpack.c.l.b16 %v8102
      %v8135 = vunpack.c.l.b16 %v8103
      %v8136 = vunpack.c.l.b16 %v8104
      %v8137 = vunpack.c.l.b16 %v8105
      %v8138 = vunpack.c.l.b16 %v8106
      %v8139 = vunpack.c.l.b16 %v8107
      %v8140 = vunpack.c.l.b16 %v8108
      %v8141 = vunpack.c.l.b16 %v8109
      %v8142 = vunpack.c.l.b16 %v8110
      %v8143 = vpack.c.b16 %v8128, %v8127
      %v8144 = vpack.c.b16 %v8130, %v8129
      %v8145 = vpack.c.b16 %v8132, %v8131
      %v8146 = vpack.c.b16 %v8134, %v8133
      %v8147 = vpack.c.b16 %v8136, %v8135
      %v8148 = vpack.c.b16 %v8138, %v8137
      %v8149 = vpack.c.b16 %v8140, %v8139
      %v8150 = vpack.c.b16 %v8142, %v8141
      %8159 = vmatprep.subr.bf16.mxu0 0
      %8160 = vmatpush1.bf16.msra.mxu0 %v8150
      %8161 = vmatprep.subr.bf16.mxu0 0
      %8162 = vmatpush1.bf16.msra.mxu0 %v8149
      %8163 = vmatprep.subr.bf16.mxu0 0
      %8164 = vmatpush1.bf16.msra.mxu0 %v8148
      %8165 = vmatprep.subr.bf16.mxu0 0
      %8166 = vmatpush1.bf16.msra.mxu0 %v8147
      %8167 = vmatprep.subr.bf16.mxu0 0
      %8168 = vmatpush1.bf16.msra.mxu0 %v8146
      %8169 = vmatprep.subr.bf16.mxu0 0
      %8170 = vmatpush1.bf16.msra.mxu0 %v8145
      %8171 = vmatprep.subr.bf16.mxu0 0
      %8172 = vmatpush1.bf16.msra.mxu0 %v8144
      %8173 = vmatprep.subr.bf16.mxu0 0
      %8174 = vmatpush1.bf16.msra.mxu0 %v8143
      %8175 = vmatprep.subr.bf16.mxu0 0
      %8176 = vmatpush2.bf16.msra.mxu0 0
      %8177 = vmatprep.subr.bf16.mxu0 0
      %8178 = vmatpush2.bf16.msra.mxu0 0
      %8179 = vmatprep.subr.bf16.mxu0 0
      %8180 = vmatpush2.bf16.msra.mxu0 0
      %8181 = vmatprep.subr.bf16.mxu0 0
      %8182 = vmatpush2.bf16.msra.mxu0 0
      %8183 = vmatprep.subr.bf16.mxu0 0
      %8184 = vmatpush2.bf16.msra.mxu0 0
      %8185 = vmatprep.subr.bf16.mxu0 0
      %8186 = vmatpush2.bf16.msra.mxu0 0
      %8187 = vmatprep.subr.bf16.mxu0 0
      %8188 = vmatpush2.bf16.msra.mxu0 0
      %8189 = vmatprep.subr.bf16.mxu0 0
      %8190 = vmatpush2.bf16.msra.mxu0 0
      %8191 = vmatprep.mubr.bf16.mxu0 0
      %8192 = vmatmul.mubr.bf16.gmra.mxu0 %v8090
      %v8193 = vpop.f32.mrf.mxu0
      %v8194 = vadd.f32 0.0, %v8193
      %v8195 = vpop.f32.mrf.mxu0
      %v8196 = vpop.f32.mrf.mxu0
      %v8197 = vadd.f32 0.0, %v8196
      %v8198 = vpop.f32.mrf.mxu0
      %8199 = vmatprep.mubr.bf16.mxu0 0
      %8200 = vmatmul.mubr.bf16.gmra.mxu0 %v8091
      %v8201 = vpop.f32.mrf.mxu0
      %v8202 = vadd.f32 0.0, %v8201
      %v8203 = vpop.f32.mrf.mxu0
      %v8204 = vpop.f32.mrf.mxu0
      %v8205 = vadd.f32 0.0, %v8204
      %v8206 = vpop.f32.mrf.mxu0
      %8207 = vmatprep.mubr.bf16.mxu0 0
      %8208 = vmatmul.mubr.bf16.gmra.mxu0 %v8092
      %v8209 = vpop.f32.mrf.mxu0
      %v8210 = vadd.f32 0.0, %v8209
      %v8211 = vpop.f32.mrf.mxu0
      %v8212 = vpop.f32.mrf.mxu0
      %v8213 = vadd.f32 0.0, %v8212
      %v8214 = vpop.f32.mrf.mxu0
      %8215 = vmatprep.mubr.bf16.mxu0 0
      %8216 = vmatmul.mubr.bf16.gmra.mxu0 %v8093
      %v8217 = vpop.f32.mrf.mxu0
      %v8218 = vadd.f32 0.0, %v8217
      %v8219 = vpop.f32.mrf.mxu0
      %v8220 = vpop.f32.mrf.mxu0
      %v8221 = vadd.f32 0.0, %v8220
      %v8222 = vpop.f32.mrf.mxu0
      %8223 = vdwg.mxu0
      %v8224 = vadd.f32 %v8074, %v8194
      %v8225 = vadd.f32 %v8075, %v8197
      %v8226 = vadd.f32 %v8076, %v8202
      %v8227 = vadd.f32 %v8077, %v8205
      %v8228 = vadd.f32 %v8078, %v8210
      %v8229 = vadd.f32 %v8079, %v8213
      %v8230 = vadd.f32 %v8080, %v8218
      %v8231 = vadd.f32 %v8081, %v8221
      %v8232 = vld [vmem:[%s6125 + $0x9] sm:$0xff]
      %v8233 = vld [vmem:[%s6125 + $0x21] sm:$0xff]
      %v8234 = vld [vmem:[%s6125 + $0x39] sm:$0xff]
      %v8235 = vld [vmem:[%s6125 + $0x51] sm:$0xff]
      %v8236 = vld [vmem:[%s6125 + $0x69] sm:$0xff]
      %v8237 = vld [vmem:[%s6125 + $0x81] sm:$0xff]
      %v8238 = vld [vmem:[%s6125 + $0x99] sm:$0xff]
      %v8239 = vld [vmem:[%s6125 + $0xb1] sm:$0xff]
      %v8240 = vpack.c.bf16 %v8233, %v8232
      %v8241 = vpack.c.bf16 %v8235, %v8234
      %v8242 = vpack.c.bf16 %v8237, %v8236
      %v8243 = vpack.c.bf16 %v8239, %v8238
      %s8244 = scalar_lea.vmem %s7, 320
      %v8245 = vld [vmem:[%s8244] sm:$0xf]
      %v8246 = vld [vmem:[%s8244 + $0x4] sm:$0xf]
      %v8247 = vld [vmem:[%s8244 + $0x8] sm:$0xf]
      %v8248 = vld [vmem:[%s8244 + $0xc] sm:$0xf]
      %v8249 = vld [vmem:[%s8244 + $0x10] sm:$0xf]
      %v8250 = vld [vmem:[%s8244 + $0x14] sm:$0xf]
      %v8251 = vld [vmem:[%s8244 + $0x18] sm:$0xf]
      %v8252 = vld [vmem:[%s8244 + $0x1c] sm:$0xf]
      %v8253 = vld [vmem:[%s8244 + $0x20] sm:$0xf]
      %v8254 = vld [vmem:[%s8244 + $0x24] sm:$0xf]
      %v8255 = vld [vmem:[%s8244 + $0x28] sm:$0xf]
      %v8256 = vld [vmem:[%s8244 + $0x2c] sm:$0xf]
      %v8257 = vld [vmem:[%s8244 + $0x30] sm:$0xf]
      %v8258 = vld [vmem:[%s8244 + $0x34] sm:$0xf]
      %v8259 = vld [vmem:[%s8244 + $0x38] sm:$0xf]
      %v8260 = vld [vmem:[%s8244 + $0x3c] sm:$0xf]
      %v8277 = vunpack.c.l.b16 %v8245
      %v8278 = vunpack.c.l.b16 %v8246
      %v8279 = vunpack.c.l.b16 %v8247
      %v8280 = vunpack.c.l.b16 %v8248
      %v8281 = vunpack.c.l.b16 %v8249
      %v8282 = vunpack.c.l.b16 %v8250
      %v8283 = vunpack.c.l.b16 %v8251
      %v8284 = vunpack.c.l.b16 %v8252
      %v8285 = vunpack.c.l.b16 %v8253
      %v8286 = vunpack.c.l.b16 %v8254
      %v8287 = vunpack.c.l.b16 %v8255
      %v8288 = vunpack.c.l.b16 %v8256
      %v8289 = vunpack.c.l.b16 %v8257
      %v8290 = vunpack.c.l.b16 %v8258
      %v8291 = vunpack.c.l.b16 %v8259
      %v8292 = vunpack.c.l.b16 %v8260
      %v8293 = vpack.c.b16 %v8278, %v8277
      %v8294 = vpack.c.b16 %v8280, %v8279
      %v8295 = vpack.c.b16 %v8282, %v8281
      %v8296 = vpack.c.b16 %v8284, %v8283
      %v8297 = vpack.c.b16 %v8286, %v8285
      %v8298 = vpack.c.b16 %v8288, %v8287
      %v8299 = vpack.c.b16 %v8290, %v8289
      %v8300 = vpack.c.b16 %v8292, %v8291
      %8309 = vmatprep.subr.bf16.mxu0 0
      %8310 = vmatpush1.bf16.msra.mxu0 %v8300
      %8311 = vmatprep.subr.bf16.mxu0 0
      %8312 = vmatpush1.bf16.msra.mxu0 %v8299
      %8313 = vmatprep.subr.bf16.mxu0 0
      %8314 = vmatpush1.bf16.msra.mxu0 %v8298
      %8315 = vmatprep.subr.bf16.mxu0 0
      %8316 = vmatpush1.bf16.msra.mxu0 %v8297
      %8317 = vmatprep.subr.bf16.mxu0 0
      %8318 = vmatpush1.bf16.msra.mxu0 %v8296
      %8319 = vmatprep.subr.bf16.mxu0 0
      %8320 = vmatpush1.bf16.msra.mxu0 %v8295
      %8321 = vmatprep.subr.bf16.mxu0 0
      %8322 = vmatpush1.bf16.msra.mxu0 %v8294
      %8323 = vmatprep.subr.bf16.mxu0 0
      %8324 = vmatpush1.bf16.msra.mxu0 %v8293
      %8325 = vmatprep.subr.bf16.mxu0 0
      %8326 = vmatpush2.bf16.msra.mxu0 0
      %8327 = vmatprep.subr.bf16.mxu0 0
      %8328 = vmatpush2.bf16.msra.mxu0 0
      %8329 = vmatprep.subr.bf16.mxu0 0
      %8330 = vmatpush2.bf16.msra.mxu0 0
      %8331 = vmatprep.subr.bf16.mxu0 0
      %8332 = vmatpush2.bf16.msra.mxu0 0
      %8333 = vmatprep.subr.bf16.mxu0 0
      %8334 = vmatpush2.bf16.msra.mxu0 0
      %8335 = vmatprep.subr.bf16.mxu0 0
      %8336 = vmatpush2.bf16.msra.mxu0 0
      %8337 = vmatprep.subr.bf16.mxu0 0
      %8338 = vmatpush2.bf16.msra.mxu0 0
      %8339 = vmatprep.subr.bf16.mxu0 0
      %8340 = vmatpush2.bf16.msra.mxu0 0
      %8341 = vmatprep.mubr.bf16.mxu0 0
      %8342 = vmatmul.mubr.bf16.gmra.mxu0 %v8240
      %v8343 = vpop.f32.mrf.mxu0
      %v8344 = vadd.f32 0.0, %v8343
      %v8345 = vpop.f32.mrf.mxu0
      %v8346 = vpop.f32.mrf.mxu0
      %v8347 = vadd.f32 0.0, %v8346
      %v8348 = vpop.f32.mrf.mxu0
      %8349 = vmatprep.mubr.bf16.mxu0 0
      %8350 = vmatmul.mubr.bf16.gmra.mxu0 %v8241
      %v8351 = vpop.f32.mrf.mxu0
      %v8352 = vadd.f32 0.0, %v8351
      %v8353 = vpop.f32.mrf.mxu0
      %v8354 = vpop.f32.mrf.mxu0
      %v8355 = vadd.f32 0.0, %v8354
      %v8356 = vpop.f32.mrf.mxu0
      %8357 = vmatprep.mubr.bf16.mxu0 0
      %8358 = vmatmul.mubr.bf16.gmra.mxu0 %v8242
      %v8359 = vpop.f32.mrf.mxu0
      %v8360 = vadd.f32 0.0, %v8359
      %v8361 = vpop.f32.mrf.mxu0
      %v8362 = vpop.f32.mrf.mxu0
      %v8363 = vadd.f32 0.0, %v8362
      %v8364 = vpop.f32.mrf.mxu0
      %8365 = vmatprep.mubr.bf16.mxu0 0
      %8366 = vmatmul.mubr.bf16.gmra.mxu0 %v8243
      %v8367 = vpop.f32.mrf.mxu0
      %v8368 = vadd.f32 0.0, %v8367
      %v8369 = vpop.f32.mrf.mxu0
      %v8370 = vpop.f32.mrf.mxu0
      %v8371 = vadd.f32 0.0, %v8370
      %v8372 = vpop.f32.mrf.mxu0
      %8373 = vdwg.mxu0
      %v8374 = vadd.f32 %v8224, %v8344
      %v8375 = vadd.f32 %v8225, %v8347
      %v8376 = vadd.f32 %v8226, %v8352
      %v8377 = vadd.f32 %v8227, %v8355
      %v8378 = vadd.f32 %v8228, %v8360
      %v8379 = vadd.f32 %v8229, %v8363
      %v8380 = vadd.f32 %v8230, %v8368
      %v8381 = vadd.f32 %v8231, %v8371
      %v8382 = vld [vmem:[%s7017 + $0x7] sm:$0xff]
      %v8383 = vld [vmem:[%s7017 + $0x1f] sm:$0xff]
      %v8384 = vld [vmem:[%s7017 + $0x37] sm:$0xff]
      %v8385 = vld [vmem:[%s7017 + $0x4f] sm:$0xff]
      %v8386 = vld [vmem:[%s7017 + $0x67] sm:$0xff]
      %v8387 = vld [vmem:[%s7017 + $0x7f] sm:$0xff]
      %v8388 = vld [vmem:[%s7017 + $0x97] sm:$0xff]
      %v8389 = vld [vmem:[%s7017 + $0xaf] sm:$0xff]
      %v8390 = vpack.c.bf16 %v8383, %v8382
      %v8391 = vpack.c.bf16 %v8385, %v8384
      %v8392 = vpack.c.bf16 %v8387, %v8386
      %v8393 = vpack.c.bf16 %v8389, %v8388
      %s8394 = scalar_lea.vmem %s7, 384
      %v8395 = vld [vmem:[%s8394] sm:$0xf]
      %v8396 = vld [vmem:[%s8394 + $0x4] sm:$0xf]
      %v8397 = vld [vmem:[%s8394 + $0x8] sm:$0xf]
      %v8398 = vld [vmem:[%s8394 + $0xc] sm:$0xf]
      %v8399 = vld [vmem:[%s8394 + $0x10] sm:$0xf]
      %v8400 = vld [vmem:[%s8394 + $0x14] sm:$0xf]
      %v8401 = vld [vmem:[%s8394 + $0x18] sm:$0xf]
      %v8402 = vld [vmem:[%s8394 + $0x1c] sm:$0xf]
      %v8403 = vld [vmem:[%s8394 + $0x20] sm:$0xf]
      %v8404 = vld [vmem:[%s8394 + $0x24] sm:$0xf]
      %v8405 = vld [vmem:[%s8394 + $0x28] sm:$0xf]
      %v8406 = vld [vmem:[%s8394 + $0x2c] sm:$0xf]
      %v8407 = vld [vmem:[%s8394 + $0x30] sm:$0xf]
      %v8408 = vld [vmem:[%s8394 + $0x34] sm:$0xf]
      %v8409 = vld [vmem:[%s8394 + $0x38] sm:$0xf]
      %v8410 = vld [vmem:[%s8394 + $0x3c] sm:$0xf]
      %v8427 = vunpack.c.l.b16 %v8395
      %v8428 = vunpack.c.l.b16 %v8396
      %v8429 = vunpack.c.l.b16 %v8397
      %v8430 = vunpack.c.l.b16 %v8398
      %v8431 = vunpack.c.l.b16 %v8399
      %v8432 = vunpack.c.l.b16 %v8400
      %v8433 = vunpack.c.l.b16 %v8401
      %v8434 = vunpack.c.l.b16 %v8402
      %v8435 = vunpack.c.l.b16 %v8403
      %v8436 = vunpack.c.l.b16 %v8404
      %v8437 = vunpack.c.l.b16 %v8405
      %v8438 = vunpack.c.l.b16 %v8406
      %v8439 = vunpack.c.l.b16 %v8407
      %v8440 = vunpack.c.l.b16 %v8408
      %v8441 = vunpack.c.l.b16 %v8409
      %v8442 = vunpack.c.l.b16 %v8410
      %v8443 = vpack.c.b16 %v8428, %v8427
      %v8444 = vpack.c.b16 %v8430, %v8429
      %v8445 = vpack.c.b16 %v8432, %v8431
      %v8446 = vpack.c.b16 %v8434, %v8433
      %v8447 = vpack.c.b16 %v8436, %v8435
      %v8448 = vpack.c.b16 %v8438, %v8437
      %v8449 = vpack.c.b16 %v8440, %v8439
      %v8450 = vpack.c.b16 %v8442, %v8441
      %8459 = vmatprep.subr.bf16.mxu0 0
      %8460 = vmatpush1.bf16.msra.mxu0 %v8450
      %8461 = vmatprep.subr.bf16.mxu0 0
      %8462 = vmatpush1.bf16.msra.mxu0 %v8449
      %8463 = vmatprep.subr.bf16.mxu0 0
      %8464 = vmatpush1.bf16.msra.mxu0 %v8448
      %8465 = vmatprep.subr.bf16.mxu0 0
      %8466 = vmatpush1.bf16.msra.mxu0 %v8447
      %8467 = vmatprep.subr.bf16.mxu0 0
      %8468 = vmatpush1.bf16.msra.mxu0 %v8446
      %8469 = vmatprep.subr.bf16.mxu0 0
      %8470 = vmatpush1.bf16.msra.mxu0 %v8445
      %8471 = vmatprep.subr.bf16.mxu0 0
      %8472 = vmatpush1.bf16.msra.mxu0 %v8444
      %8473 = vmatprep.subr.bf16.mxu0 0
      %8474 = vmatpush1.bf16.msra.mxu0 %v8443
      %8475 = vmatprep.subr.bf16.mxu0 0
      %8476 = vmatpush2.bf16.msra.mxu0 0
      %8477 = vmatprep.subr.bf16.mxu0 0
      %8478 = vmatpush2.bf16.msra.mxu0 0
      %8479 = vmatprep.subr.bf16.mxu0 0
      %8480 = vmatpush2.bf16.msra.mxu0 0
      %8481 = vmatprep.subr.bf16.mxu0 0
      %8482 = vmatpush2.bf16.msra.mxu0 0
      %8483 = vmatprep.subr.bf16.mxu0 0
      %8484 = vmatpush2.bf16.msra.mxu0 0
      %8485 = vmatprep.subr.bf16.mxu0 0
      %8486 = vmatpush2.bf16.msra.mxu0 0
      %8487 = vmatprep.subr.bf16.mxu0 0
      %8488 = vmatpush2.bf16.msra.mxu0 0
      %8489 = vmatprep.subr.bf16.mxu0 0
      %8490 = vmatpush2.bf16.msra.mxu0 0
      %8491 = vmatprep.mubr.bf16.mxu0 0
      %8492 = vmatmul.mubr.bf16.gmra.mxu0 %v8390
      %v8493 = vpop.f32.mrf.mxu0
      %v8494 = vadd.f32 0.0, %v8493
      %v8495 = vpop.f32.mrf.mxu0
      %v8496 = vpop.f32.mrf.mxu0
      %v8497 = vadd.f32 0.0, %v8496
      %v8498 = vpop.f32.mrf.mxu0
      %8499 = vmatprep.mubr.bf16.mxu0 0
      %8500 = vmatmul.mubr.bf16.gmra.mxu0 %v8391
      %v8501 = vpop.f32.mrf.mxu0
      %v8502 = vadd.f32 0.0, %v8501
      %v8503 = vpop.f32.mrf.mxu0
      %v8504 = vpop.f32.mrf.mxu0
      %v8505 = vadd.f32 0.0, %v8504
      %v8506 = vpop.f32.mrf.mxu0
      %8507 = vmatprep.mubr.bf16.mxu0 0
      %8508 = vmatmul.mubr.bf16.gmra.mxu0 %v8392
      %v8509 = vpop.f32.mrf.mxu0
      %v8510 = vadd.f32 0.0, %v8509
      %v8511 = vpop.f32.mrf.mxu0
      %v8512 = vpop.f32.mrf.mxu0
      %v8513 = vadd.f32 0.0, %v8512
      %v8514 = vpop.f32.mrf.mxu0
      %8515 = vmatprep.mubr.bf16.mxu0 0
      %8516 = vmatmul.mubr.bf16.gmra.mxu0 %v8393
      %v8517 = vpop.f32.mrf.mxu0
      %v8518 = vadd.f32 0.0, %v8517
      %v8519 = vpop.f32.mrf.mxu0
      %v8520 = vpop.f32.mrf.mxu0
      %v8521 = vadd.f32 0.0, %v8520
      %v8522 = vpop.f32.mrf.mxu0
      %8523 = vdwg.mxu0
      %v8524 = vadd.f32 %v8374, %v8494
      %v8525 = vadd.f32 %v8375, %v8497
      %v8526 = vadd.f32 %v8376, %v8502
      %v8527 = vadd.f32 %v8377, %v8505
      %v8528 = vadd.f32 %v8378, %v8510
      %v8529 = vadd.f32 %v8379, %v8513
      %v8530 = vadd.f32 %v8380, %v8518
      %v8531 = vadd.f32 %v8381, %v8521
      %v8532 = vld [vmem:[%s7017 + $0x8] sm:$0xff]
      %v8533 = vld [vmem:[%s7017 + $0x20] sm:$0xff]
      %v8534 = vld [vmem:[%s7017 + $0x38] sm:$0xff]
      %v8535 = vld [vmem:[%s7017 + $0x50] sm:$0xff]
      %v8536 = vld [vmem:[%s7017 + $0x68] sm:$0xff]
      %v8537 = vld [vmem:[%s7017 + $0x80] sm:$0xff]
      %v8538 = vld [vmem:[%s7017 + $0x98] sm:$0xff]
      %v8539 = vld [vmem:[%s7017 + $0xb0] sm:$0xff]
      %v8540 = vpack.c.bf16 %v8533, %v8532
      %v8541 = vpack.c.bf16 %v8535, %v8534
      %v8542 = vpack.c.bf16 %v8537, %v8536
      %v8543 = vpack.c.bf16 %v8539, %v8538
      %s8544 = scalar_lea.vmem %s7, 448
      %v8545 = vld [vmem:[%s8544] sm:$0xf]
      %v8546 = vld [vmem:[%s8544 + $0x4] sm:$0xf]
      %v8547 = vld [vmem:[%s8544 + $0x8] sm:$0xf]
      %v8548 = vld [vmem:[%s8544 + $0xc] sm:$0xf]
      %v8549 = vld [vmem:[%s8544 + $0x10] sm:$0xf]
      %v8550 = vld [vmem:[%s8544 + $0x14] sm:$0xf]
      %v8551 = vld [vmem:[%s8544 + $0x18] sm:$0xf]
      %v8552 = vld [vmem:[%s8544 + $0x1c] sm:$0xf]
      %v8553 = vld [vmem:[%s8544 + $0x20] sm:$0xf]
      %v8554 = vld [vmem:[%s8544 + $0x24] sm:$0xf]
      %v8555 = vld [vmem:[%s8544 + $0x28] sm:$0xf]
      %v8556 = vld [vmem:[%s8544 + $0x2c] sm:$0xf]
      %v8557 = vld [vmem:[%s8544 + $0x30] sm:$0xf]
      %v8558 = vld [vmem:[%s8544 + $0x34] sm:$0xf]
      %v8559 = vld [vmem:[%s8544 + $0x38] sm:$0xf]
      %v8560 = vld [vmem:[%s8544 + $0x3c] sm:$0xf]
      %v8577 = vunpack.c.l.b16 %v8545
      %v8578 = vunpack.c.l.b16 %v8546
      %v8579 = vunpack.c.l.b16 %v8547
      %v8580 = vunpack.c.l.b16 %v8548
      %v8581 = vunpack.c.l.b16 %v8549
      %v8582 = vunpack.c.l.b16 %v8550
      %v8583 = vunpack.c.l.b16 %v8551
      %v8584 = vunpack.c.l.b16 %v8552
      %v8585 = vunpack.c.l.b16 %v8553
      %v8586 = vunpack.c.l.b16 %v8554
      %v8587 = vunpack.c.l.b16 %v8555
      %v8588 = vunpack.c.l.b16 %v8556
      %v8589 = vunpack.c.l.b16 %v8557
      %v8590 = vunpack.c.l.b16 %v8558
      %v8591 = vunpack.c.l.b16 %v8559
      %v8592 = vunpack.c.l.b16 %v8560
      %v8593 = vpack.c.b16 %v8578, %v8577
      %v8594 = vpack.c.b16 %v8580, %v8579
      %v8595 = vpack.c.b16 %v8582, %v8581
      %v8596 = vpack.c.b16 %v8584, %v8583
      %v8597 = vpack.c.b16 %v8586, %v8585
      %v8598 = vpack.c.b16 %v8588, %v8587
      %v8599 = vpack.c.b16 %v8590, %v8589
      %v8600 = vpack.c.b16 %v8592, %v8591
      %8609 = vmatprep.subr.bf16.mxu0 0
      %8610 = vmatpush1.bf16.msra.mxu0 %v8600
      %8611 = vmatprep.subr.bf16.mxu0 0
      %8612 = vmatpush1.bf16.msra.mxu0 %v8599
      %8613 = vmatprep.subr.bf16.mxu0 0
      %8614 = vmatpush1.bf16.msra.mxu0 %v8598
      %8615 = vmatprep.subr.bf16.mxu0 0
      %8616 = vmatpush1.bf16.msra.mxu0 %v8597
      %8617 = vmatprep.subr.bf16.mxu0 0
      %8618 = vmatpush1.bf16.msra.mxu0 %v8596
      %8619 = vmatprep.subr.bf16.mxu0 0
      %8620 = vmatpush1.bf16.msra.mxu0 %v8595
      %8621 = vmatprep.subr.bf16.mxu0 0
      %8622 = vmatpush1.bf16.msra.mxu0 %v8594
      %8623 = vmatprep.subr.bf16.mxu0 0
      %8624 = vmatpush1.bf16.msra.mxu0 %v8593
      %8625 = vmatprep.subr.bf16.mxu0 0
      %8626 = vmatpush2.bf16.msra.mxu0 0
      %8627 = vmatprep.subr.bf16.mxu0 0
      %8628 = vmatpush2.bf16.msra.mxu0 0
      %8629 = vmatprep.subr.bf16.mxu0 0
      %8630 = vmatpush2.bf16.msra.mxu0 0
      %8631 = vmatprep.subr.bf16.mxu0 0
      %8632 = vmatpush2.bf16.msra.mxu0 0
      %8633 = vmatprep.subr.bf16.mxu0 0
      %8634 = vmatpush2.bf16.msra.mxu0 0
      %8635 = vmatprep.subr.bf16.mxu0 0
      %8636 = vmatpush2.bf16.msra.mxu0 0
      %8637 = vmatprep.subr.bf16.mxu0 0
      %8638 = vmatpush2.bf16.msra.mxu0 0
      %8639 = vmatprep.subr.bf16.mxu0 0
      %8640 = vmatpush2.bf16.msra.mxu0 0
      %8641 = vmatprep.mubr.bf16.mxu0 0
      %8642 = vmatmul.mubr.bf16.gmra.mxu0 %v8540
      %v8643 = vpop.f32.mrf.mxu0
      %v8644 = vadd.f32 0.0, %v8643
      %v8645 = vpop.f32.mrf.mxu0
      %v8646 = vpop.f32.mrf.mxu0
      %v8647 = vadd.f32 0.0, %v8646
      %v8648 = vpop.f32.mrf.mxu0
      %8649 = vmatprep.mubr.bf16.mxu0 0
      %8650 = vmatmul.mubr.bf16.gmra.mxu0 %v8541
      %v8651 = vpop.f32.mrf.mxu0
      %v8652 = vadd.f32 0.0, %v8651
      %v8653 = vpop.f32.mrf.mxu0
      %v8654 = vpop.f32.mrf.mxu0
      %v8655 = vadd.f32 0.0, %v8654
      %v8656 = vpop.f32.mrf.mxu0
      %8657 = vmatprep.mubr.bf16.mxu0 0
      %8658 = vmatmul.mubr.bf16.gmra.mxu0 %v8542
      %v8659 = vpop.f32.mrf.mxu0
      %v8660 = vadd.f32 0.0, %v8659
      %v8661 = vpop.f32.mrf.mxu0
      %v8662 = vpop.f32.mrf.mxu0
      %v8663 = vadd.f32 0.0, %v8662
      %v8664 = vpop.f32.mrf.mxu0
      %8665 = vmatprep.mubr.bf16.mxu0 0
      %8666 = vmatmul.mubr.bf16.gmra.mxu0 %v8543
      %v8667 = vpop.f32.mrf.mxu0
      %v8668 = vadd.f32 0.0, %v8667
      %v8669 = vpop.f32.mrf.mxu0
      %v8670 = vpop.f32.mrf.mxu0
      %v8671 = vadd.f32 0.0, %v8670
      %v8672 = vpop.f32.mrf.mxu0
      %8673 = vdwg.mxu0
      %v8674 = vadd.f32 %v8524, %v8644
      %v8675 = vadd.f32 %v8525, %v8647
      %v8676 = vadd.f32 %v8526, %v8652
      %v8677 = vadd.f32 %v8527, %v8655
      %v8678 = vadd.f32 %v8528, %v8660
      %v8679 = vadd.f32 %v8529, %v8663
      %v8680 = vadd.f32 %v8530, %v8668
      %v8681 = vadd.f32 %v8531, %v8671
      %v8682 = vld [vmem:[%s7017 + $0x9] sm:$0xff]
      %v8683 = vld [vmem:[%s7017 + $0x21] sm:$0xff]
      %v8684 = vld [vmem:[%s7017 + $0x39] sm:$0xff]
      %v8685 = vld [vmem:[%s7017 + $0x51] sm:$0xff]
      %v8686 = vld [vmem:[%s7017 + $0x69] sm:$0xff]
      %v8687 = vld [vmem:[%s7017 + $0x81] sm:$0xff]
      %v8688 = vld [vmem:[%s7017 + $0x99] sm:$0xff]
      %v8689 = vld [vmem:[%s7017 + $0xb1] sm:$0xff]
      %v8690 = vpack.c.bf16 %v8683, %v8682
      %v8691 = vpack.c.bf16 %v8685, %v8684
      %v8692 = vpack.c.bf16 %v8687, %v8686
      %v8693 = vpack.c.bf16 %v8689, %v8688
      %s8694 = scalar_lea.vmem %s7, 512
      %v8695 = vld [vmem:[%s8694] sm:$0xf]
      %v8696 = vld [vmem:[%s8694 + $0x4] sm:$0xf]
      %v8697 = vld [vmem:[%s8694 + $0x8] sm:$0xf]
      %v8698 = vld [vmem:[%s8694 + $0xc] sm:$0xf]
      %v8699 = vld [vmem:[%s8694 + $0x10] sm:$0xf]
      %v8700 = vld [vmem:[%s8694 + $0x14] sm:$0xf]
      %v8701 = vld [vmem:[%s8694 + $0x18] sm:$0xf]
      %v8702 = vld [vmem:[%s8694 + $0x1c] sm:$0xf]
      %v8703 = vld [vmem:[%s8694 + $0x20] sm:$0xf]
      %v8704 = vld [vmem:[%s8694 + $0x24] sm:$0xf]
      %v8705 = vld [vmem:[%s8694 + $0x28] sm:$0xf]
      %v8706 = vld [vmem:[%s8694 + $0x2c] sm:$0xf]
      %v8707 = vld [vmem:[%s8694 + $0x30] sm:$0xf]
      %v8708 = vld [vmem:[%s8694 + $0x34] sm:$0xf]
      %v8709 = vld [vmem:[%s8694 + $0x38] sm:$0xf]
      %v8710 = vld [vmem:[%s8694 + $0x3c] sm:$0xf]
      %v8727 = vunpack.c.l.b16 %v8695
      %v8728 = vunpack.c.l.b16 %v8696
      %v8729 = vunpack.c.l.b16 %v8697
      %v8730 = vunpack.c.l.b16 %v8698
      %v8731 = vunpack.c.l.b16 %v8699
      %v8732 = vunpack.c.l.b16 %v8700
      %v8733 = vunpack.c.l.b16 %v8701
      %v8734 = vunpack.c.l.b16 %v8702
      %v8735 = vunpack.c.l.b16 %v8703
      %v8736 = vunpack.c.l.b16 %v8704
      %v8737 = vunpack.c.l.b16 %v8705
      %v8738 = vunpack.c.l.b16 %v8706
      %v8739 = vunpack.c.l.b16 %v8707
      %v8740 = vunpack.c.l.b16 %v8708
      %v8741 = vunpack.c.l.b16 %v8709
      %v8742 = vunpack.c.l.b16 %v8710
      %v8743 = vpack.c.b16 %v8728, %v8727
      %v8744 = vpack.c.b16 %v8730, %v8729
      %v8745 = vpack.c.b16 %v8732, %v8731
      %v8746 = vpack.c.b16 %v8734, %v8733
      %v8747 = vpack.c.b16 %v8736, %v8735
      %v8748 = vpack.c.b16 %v8738, %v8737
      %v8749 = vpack.c.b16 %v8740, %v8739
      %v8750 = vpack.c.b16 %v8742, %v8741
      %8759 = vmatprep.subr.bf16.mxu0 0
      %8760 = vmatpush1.bf16.msra.mxu0 %v8750
      %8761 = vmatprep.subr.bf16.mxu0 0
      %8762 = vmatpush1.bf16.msra.mxu0 %v8749
      %8763 = vmatprep.subr.bf16.mxu0 0
      %8764 = vmatpush1.bf16.msra.mxu0 %v8748
      %8765 = vmatprep.subr.bf16.mxu0 0
      %8766 = vmatpush1.bf16.msra.mxu0 %v8747
      %8767 = vmatprep.subr.bf16.mxu0 0
      %8768 = vmatpush1.bf16.msra.mxu0 %v8746
      %8769 = vmatprep.subr.bf16.mxu0 0
      %8770 = vmatpush1.bf16.msra.mxu0 %v8745
      %8771 = vmatprep.subr.bf16.mxu0 0
      %8772 = vmatpush1.bf16.msra.mxu0 %v8744
      %8773 = vmatprep.subr.bf16.mxu0 0
      %8774 = vmatpush1.bf16.msra.mxu0 %v8743
      %8775 = vmatprep.subr.bf16.mxu0 0
      %8776 = vmatpush2.bf16.msra.mxu0 0
      %8777 = vmatprep.subr.bf16.mxu0 0
      %8778 = vmatpush2.bf16.msra.mxu0 0
      %8779 = vmatprep.subr.bf16.mxu0 0
      %8780 = vmatpush2.bf16.msra.mxu0 0
      %8781 = vmatprep.subr.bf16.mxu0 0
      %8782 = vmatpush2.bf16.msra.mxu0 0
      %8783 = vmatprep.subr.bf16.mxu0 0
      %8784 = vmatpush2.bf16.msra.mxu0 0
      %8785 = vmatprep.subr.bf16.mxu0 0
      %8786 = vmatpush2.bf16.msra.mxu0 0
      %8787 = vmatprep.subr.bf16.mxu0 0
      %8788 = vmatpush2.bf16.msra.mxu0 0
      %8789 = vmatprep.subr.bf16.mxu0 0
      %8790 = vmatpush2.bf16.msra.mxu0 0
      %8791 = vmatprep.mubr.bf16.mxu0 0
      %8792 = vmatmul.mubr.bf16.gmra.mxu0 %v8690
      %v8793 = vpop.f32.mrf.mxu0
      %v8794 = vadd.f32 0.0, %v8793
      %v8795 = vpop.f32.mrf.mxu0
      %v8796 = vpop.f32.mrf.mxu0
      %v8797 = vadd.f32 0.0, %v8796
      %v8798 = vpop.f32.mrf.mxu0
      %8799 = vmatprep.mubr.bf16.mxu0 0
      %8800 = vmatmul.mubr.bf16.gmra.mxu0 %v8691
      %v8801 = vpop.f32.mrf.mxu0
      %v8802 = vadd.f32 0.0, %v8801
      %v8803 = vpop.f32.mrf.mxu0
      %v8804 = vpop.f32.mrf.mxu0
      %v8805 = vadd.f32 0.0, %v8804
      %v8806 = vpop.f32.mrf.mxu0
      %8807 = vmatprep.mubr.bf16.mxu0 0
      %8808 = vmatmul.mubr.bf16.gmra.mxu0 %v8692
      %v8809 = vpop.f32.mrf.mxu0
      %v8810 = vadd.f32 0.0, %v8809
      %v8811 = vpop.f32.mrf.mxu0
      %v8812 = vpop.f32.mrf.mxu0
      %v8813 = vadd.f32 0.0, %v8812
      %v8814 = vpop.f32.mrf.mxu0
      %8815 = vmatprep.mubr.bf16.mxu0 0
      %8816 = vmatmul.mubr.bf16.gmra.mxu0 %v8693
      %v8817 = vpop.f32.mrf.mxu0
      %v8818 = vadd.f32 0.0, %v8817
      %v8819 = vpop.f32.mrf.mxu0
      %v8820 = vpop.f32.mrf.mxu0
      %v8821 = vadd.f32 0.0, %v8820
      %v8822 = vpop.f32.mrf.mxu0
      %8823 = vdwg.mxu0
      %v8824 = vadd.f32 %v8674, %v8794
      %v8825 = vadd.f32 %v8675, %v8797
      %v8826 = vadd.f32 %v8676, %v8802
      %v8827 = vadd.f32 %v8677, %v8805
      %v8828 = vadd.f32 %v8678, %v8810
      %v8829 = vadd.f32 %v8679, %v8813
      %v8830 = vadd.f32 %v8680, %v8818
      %v8831 = vadd.f32 %v8681, %v8821
      %v8832 = vld [vmem:[%s8] sm:$0x1]
      %v8834 = vlaneseq
      %v8835 = vshrl.u32 %v8834, 7
      %v8836 = vsub.s32 0, %v8835
      %v8837 = vrot.slane %v8832, %v8836
      %v8839 = vadd.f32 %v8824, %v8837
      %v8840 = vadd.f32 %v8825, %v8837
      %v8841 = vadd.f32 %v8826, %v8837
      %v8842 = vadd.f32 %v8827, %v8837
      %v8843 = vadd.f32 %v8828, %v8837
      %v8844 = vadd.f32 %v8829, %v8837
      %v8845 = vadd.f32 %v8830, %v8837
      %v8846 = vadd.f32 %v8831, %v8837
      %8847 = vst [vmem:[%s332] sm:$0xff] %v8839
      %8848 = vst [vmem:[%s332 + $0x8] sm:$0xff] %v8840
      %8849 = vst [vmem:[%s332 + $0x10] sm:$0xff] %v8841
      %8850 = vst [vmem:[%s332 + $0x18] sm:$0xff] %v8842
      %8851 = vst [vmem:[%s332 + $0x20] sm:$0xff] %v8843
      %8852 = vst [vmem:[%s332 + $0x28] sm:$0xff] %v8844
      %8853 = vst [vmem:[%s332 + $0x30] sm:$0xff] %v8845
      %8854 = vst [vmem:[%s332 + $0x38] sm:$0xff] %v8846
      %p8855 = scmp.lt.s32.totalorder %s20, 1
      %s8856 = scalar_select %p8855, %s20, 1
      %s8857 = smul.addr %s8856, 8
      %s8858 = smul.addr %s8857, 8
      %s8859 = scalar_lea.vmem %s9, %s8858
      // Predicated region
      $region57: #{openpose_inference_forward.1} parent=55 // pred_check
        %p8860 = pneg %p232
      $region58: #{openpose_inference_forward.1} parent=55 // pred_check_branch
        %8862 = sbr.rel (%p8860) target = $region60
      $region59: #{openpose_inference_forward.1} parent=55 // pred_region
        _
      $region60: #{openpose_inference_forward.1} parent=55 // pred_fallthru
        _
    $region56: #{openpose_inference_forward.1} parent=5 // pred_fallthru
      _
    %p8863 = scmp.le.s32.totalorder 2, %s15
    // Predicated region
    $region61: #{openpose_inference_forward.1} parent=5 // pred_check
      %p8864 = pneg %p8863
    $region62: #{openpose_inference_forward.1} parent=5 // pred_check_branch
      %8866 = sbr.rel (%p8864) target = $region64
    $region63: #{openpose_inference_forward.1} parent=5 // pred_region
      %s8867 = ssub.s32 %s15, 2
      // Predicated region
      $region65: #{openpose_inference_forward.1} parent=63 // pred_check
        %p8868 = pneg %p238
      $region66: #{openpose_inference_forward.1} parent=63 // pred_check_branch
        %8870 = sbr.rel (%p8868) target = $region68
      $region67: #{openpose_inference_forward.1} parent=63 // pred_region
        %p8871 = scmp.lt.s32.totalorder %s21, 1
        %s8872 = scalar_select %p8871, %s21, 1
        %s8873 = smul.addr %s8872, 8
        %s8874 = smul.addr %s8873, 8
        %s8875 = scalar_lea.vmem %s9, %s8874
      $region68: #{openpose_inference_forward.1} parent=63 // pred_fallthru
        _
    $region64: #{openpose_inference_forward.1} parent=5 // pred_fallthru
      _
  $region6: #{openpose_inference_forward.1} parent=0 // loop_footer
    %s19 = sadd.s32 1, %s15
  $region7: #{openpose_inference_forward.1} parent=0 // loop_footer_branch
    %14 = sbr.rel target = $region3
  $region8: #{openpose_inference_forward.1} parent=0 // loop_exit
    _

</llo_original>
